<compile_context>
chip_gen: v7x
topology: tpu7x:2x2x1
jax: 0.10.0
libtpu: 0.0.40
codegen_flags: <defaults>
</compile_context>

<pallas_src>
import functools

import numpy as np
import jax
import jax.numpy as jnp
from jax.experimental import pallas as pl
from jax.experimental.pallas import tpu as pltpu

# ---- model hyper-parameters (small, consistent with the module's forward) ----
BATCH = 2
SEQ = 4 * 12          # 48  (hard-coded by the forward's .view)
IN_DIM = 18 * 9       # 162 (hard-coded by the forward's .view)
FF_DIM = 32           # d_model == dim_feedforward == ff_dim
NUM_HEADS = 4
NUM_LAYERS = 2
HEAD_DIM = FF_DIM // NUM_HEADS
LN_EPS = 1e-5


# ------------------------------- Pallas kernel --------------------------------
def transformer_kernel(x_ref, posb_ref, pool_ref, embw_ref,
                       wqkv_ref, bqkv_ref, wop_ref, wffn_ref, vecs_ref,
                       o_ref, attn_scr, *, bc):
    """One grid step = `bc` sequences folded into a (bc*SEQ, .) activation matrix."""
    f32, bf16 = jnp.float32, jnp.bfloat16
    D, HD = FF_DIM, HEAD_DIM

    # embedding + (positional encoding + embedding bias, pre-folded by the wrapper)
    h = jnp.dot(x_ref[...].astype(bf16), embw_ref[...],
                preferred_element_type=f32) + posb_ref[...]            # (BS, D) f32

    def layer_norm(y, w, b):
        mu = jnp.mean(y, axis=-1, keepdims=True)
        var = jnp.mean(y * y, axis=-1, keepdims=True) - mu * mu        # one-pass stats
        return (y - mu) * jax.lax.rsqrt(var + LN_EPS) * w + b

    # statically unrolled encoder layers (post-norm, as in nn.TransformerEncoderLayer)
    for l in range(NUM_LAYERS):
        vl = vecs_ref[l]                    # (8, D): [opb, ln1w, ln1b, l1b, l2b, ln2w, ln2b, 0]

        # ---- fused QKV projection (q columns pre-scaled by 1/sqrt(HD)) ----
        qkv = jnp.dot(h.astype(bf16), wqkv_ref[l],
                      preferred_element_type=f32) + bqkv_ref[l]        # (BS, 3D) f32

        # ---- per-sequence, per-head attention: (SEQ,SEQ) scores only, no mask ----
        for c in range(bc):
            r0 = c * SEQ                                               # 48-row, sublane aligned
            qkv_c = qkv[r0:r0 + SEQ, :]                                # (SEQ, 3D)
            for hd in range(NUM_HEADS):
                c0 = hd * HD
                q = qkv_c[:, c0:c0 + HD].astype(bf16)                  # (SEQ, HD)
                k = qkv_c[:, D + c0:D + c0 + HD].astype(bf16)
                v = qkv_c[:, 2 * D + c0:2 * D + c0 + HD].astype(bf16)
                # contract q against k on the head dim (MXU handles the transpose)
                s = jax.lax.dot_general(q, k, (((1,), (1,)), ((), ())),
                                        preferred_element_type=f32)    # (SEQ, SEQ)
                s = s - jnp.max(s, axis=-1, keepdims=True)
                p = jnp.exp(s)
                p = p * pl.reciprocal(jnp.sum(p, axis=-1, keepdims=True), approx=True)
                oh = jnp.dot(p.astype(bf16), v, preferred_element_type=f32)  # (SEQ, HD)
                # heads are written into their 8-lane block; one fused out-proj below
                attn_scr[pl.ds(r0, SEQ), pl.ds(c0, HD)] = oh

        # ---- fused output projection + residual + post-LN ----
        attn = jnp.dot(attn_scr[...].astype(bf16), wop_ref[l],
                       preferred_element_type=f32) + vl[0:1]
        h = layer_norm(h + attn, vl[1:2], vl[2:3])

        # ---- feed-forward (relu) + residual + post-LN ----
        ff = jnp.dot(h.astype(bf16), wffn_ref[l, 0],
                     preferred_element_type=f32) + vl[3:4]
        ff = jnp.maximum(ff, 0.0)
        ff = jnp.dot(ff.astype(bf16), wffn_ref[l, 1],
                     preferred_element_type=f32) + vl[4:5]
        h = layer_norm(h + ff, vl[5:6], vl[6:7])

    # ---- mean pool per sequence via a tiny (BC, BS) @ (BS, D) f32 matmul ----
    o_ref[0] = jnp.dot(pool_ref[...], h, preferred_element_type=f32)   # (BC, D)


# ------------------------------- wrapper ---------------------------------------
def _full_spec(shape):
    n = len(shape)
    return pl.BlockSpec(shape, lambda b, n=n: (0,) * n)


def _pick_block_batch(B):
    """Sequences folded per grid step. Fold 2 on single-TC chips (v5e/v6e) for MXU
    fill; on dual-TC chips (v7x) keep the grid >= 2 wide so both cores get work."""
    try:
        kind = jax.devices()[0].device_kind.lower()
    except Exception:  # pragma: no cover - defensive
        kind = ""
    dual_tc = "v7" in kind
    if B % 2 == 0 and (not dual_tc or B >= 4):
        return 2
    return 1


def transformer_forward(x, params):
    """x: (B, num_channels, seq_len) with num_channels*seq_len == 48*162."""
    B = x.shape[0]
    x2 = x.reshape(B * SEQ, IN_DIM).astype(jnp.float32)             # folded (B*S, IN_DIM)

    BC = _pick_block_batch(B)
    G = B // BC
    BS = BC * SEQ
    L, D, H, HD = NUM_LAYERS, FF_DIM, NUM_HEADS, HEAD_DIM

    # ---- one-time layout prep (pure XLA, tiny, amortized across calls) ----
    # fold the 1/sqrt(HD) attention scale into the q columns of the fused QKV params
    qscale = jnp.concatenate([jnp.full((D,), 1.0 / np.sqrt(HD), jnp.float32),
                              jnp.ones((2 * D,), jnp.float32)])
    w_qkv = (params["ipw"] * qscale).astype(jnp.bfloat16)           # (L, D, 3D)
    b_qkv = (params["ipb"] * qscale).astype(jnp.float32)            # (L, 1, 3D)

    w_op = params["opw"].astype(jnp.bfloat16)                       # (L, D, D)
    w_ffn = jnp.stack([params["l1w"], params["l2w"]], axis=1).astype(jnp.bfloat16)  # (L,2,D,D)
    emb_w = params["emb_w"].astype(jnp.bfloat16)                    # (IN_DIM, D)

    # pack all per-layer (1, D) vectors into one (L, 8, D) array (exactly 8 sublanes)
    vecs = jnp.concatenate(
        [params["opb"], params["ln1w"], params["ln1b"], params["l1b"],
         params["l2b"], params["ln2w"], params["ln2b"],
         jnp.zeros((L, 1, D), jnp.float32)], axis=1)                # (L, 8, D)

    # positional encoding with the embedding bias folded in, tiled to the fold
    posb = jnp.tile(params["pos"] + params["emb_b"], (BC, 1)).astype(jnp.float32)  # (BS, D)
    # per-sequence mean pooling matrix
    pool_mat = jnp.asarray(np.kron(np.eye(BC, dtype=np.float32),
                                   np.full((1, SEQ), 1.0 / SEQ, np.float32)))      # (BC, BS)

    p_list = [posb, pool_mat, emb_w, w_qkv, b_qkv, w_op, w_ffn, vecs]

    in_specs = [pl.BlockSpec((BS, IN_DIM), lambda b: (b, 0))]
    in_specs += [_full_spec(p.shape) for p in p_list]

    kernel = functools.partial(transformer_kernel, bc=BC)

    pooled = pl.pallas_call(
        kernel,
        out_shape=jax.ShapeDtypeStruct((G, BC, D), jnp.float32),
        grid=(G,),
        in_specs=in_specs,
        out_specs=pl.BlockSpec((1, BC, D), lambda b: (b, 0, 0)),
        scratch_shapes=[pltpu.VMEM((BS, D), jnp.float32)],          # per-head attn slab
        compiler_params=pltpu.CompilerParams(dimension_semantics=("parallel",)),
    )(x2, *p_list)

    pooled = pooled.reshape(B, D)
    # tiny (D -> 1) head stays in the XLA wrapper: keeps the kernel output lane-dense
    return pooled @ params["fcw"] + params["fcb"]                   # (B, 1)


# ------------------------------- reference (pure JAX, f32) ---------------------
def reference_forward(x, p):
    B = x.shape[0]
    h = x.reshape(B, SEQ, IN_DIM).astype(jnp.float32) @ p["emb_w"] + p["emb_b"]
    h = h + p["pos"][None]
    scale = 1.0 / float(np.sqrt(HEAD_DIM))

    def ln(y, w, b):
        mu = jnp.mean(y, axis=-1, keepdims=True)
        var = jnp.mean((y - mu) ** 2, axis=-1, keepdims=True)
        return (y - mu) / jnp.sqrt(var + LN_EPS) * w + b

    for l in range(NUM_LAYERS):
        qkv = h @ p["ipw"][l] + p["ipb"][l]
        q, k, v = (qkv[..., :FF_DIM], qkv[..., FF_DIM:2 * FF_DIM], qkv[..., 2 * FF_DIM:])
        qh = q.reshape(B, SEQ, NUM_HEADS, HEAD_DIM)
        kh = k.reshape(B, SEQ, NUM_HEADS, HEAD_DIM)
        vh = v.reshape(B, SEQ, NUM_HEADS, HEAD_DIM)
        s = jnp.einsum("bqhd,bkhd->bhqk", qh, kh) * scale
        a = jax.nn.softmax(s, axis=-1)
        attn = jnp.einsum("bhqk,bkhd->bqhd", a, vh).reshape(B, SEQ, FF_DIM)
        attn = attn @ p["opw"][l] + p["opb"][l]
        h = ln(h + attn, p["ln1w"][l], p["ln1b"][l])
        ff = jax.nn.relu(h @ p["l1w"][l] + p["l1b"][l])
        ff = ff @ p["l2w"][l] + p["l2b"][l]
        h = ln(h + ff, p["ln2w"][l], p["ln2b"][l])
    pooled = jnp.mean(h, axis=1)
    return pooled @ p["fcw"] + p["fcb"]


# ------------------------------- param init ------------------------------------
def init_params(key):
    ks = jax.random.split(key, 16)
    s = 0.05
    L, D = NUM_LAYERS, FF_DIM
    p = {
        # weights stored as (in, out) — i.e. already transposed vs. PyTorch Linear.
        "emb_w": s * jax.random.normal(ks[0], (IN_DIM, D), jnp.float32),
        "emb_b": s * jax.random.normal(ks[1], (1, D), jnp.float32),
        "pos":   s * jax.random.normal(ks[2], (SEQ, D), jnp.float32),
        "ipw":   s * jax.random.normal(ks[3], (L, D, 3 * D), jnp.float32),
        "ipb":   s * jax.random.normal(ks[4], (L, 1, 3 * D), jnp.float32),
        "opw":   s * jax.random.normal(ks[5], (L, D, D), jnp.float32),
        "opb":   s * jax.random.normal(ks[6], (L, 1, D), jnp.float32),
        "ln1w":  jnp.ones((L, 1, D), jnp.float32),
        "ln1b":  jnp.zeros((L, 1, D), jnp.float32),
        "l1w":   s * jax.random.normal(ks[7], (L, D, D), jnp.float32),
        "l1b":   s * jax.random.normal(ks[8], (L, 1, D), jnp.float32),
        "l2w":   s * jax.random.normal(ks[9], (L, D, D), jnp.float32),
        "l2b":   s * jax.random.normal(ks[10], (L, 1, D), jnp.float32),
        "ln2w":  jnp.ones((L, 1, D), jnp.float32),
        "ln2b":  jnp.zeros((L, 1, D), jnp.float32),
        "fcw":   s * jax.random.normal(ks[11], (D, 1), jnp.float32),
        "fcb":   s * jax.random.normal(ks[12], (1, 1), jnp.float32),
    }
    return p


# ------------------------------- main -------------------------------------------
if __name__ == "__main__":
    key = jax.random.PRNGKey(0)
    kx, kp = jax.random.split(key)

    # input: (batch, num_channels, seq_len) with num_channels*seq_len = 48*162
    x = jax.random.normal(kx, (BATCH, SEQ, IN_DIM), jnp.float32)
    params = init_params(kp)

    out = jax.block_until_ready(transformer_forward(x, params))
    assert out.shape == (BATCH, 1), out.shape

    ref = jax.block_until_ready(reference_forward(x, params))
    err = float(jnp.max(jnp.abs(out - ref)))
    assert err < 5e-3, f"max abs error {err}"

    # TODO(synk): dropout layers are treated as identity (inference/eval mode).
    print("KERNEL_OK")
</pallas_src>

<mosaic_0001>
module attributes {stable_mosaic.version = 11 : i64} {
  func.func @transformer_kernel(%arg0: i32, %arg1: memref<96x162xf32, #tpu.memory_space<vmem>>, %arg2: memref<96x32xf32, #tpu.memory_space<vmem>>, %arg3: memref<2x96xf32, #tpu.memory_space<vmem>>, %arg4: memref<162x32xbf16, #tpu.memory_space<vmem>>, %arg5: memref<2x32x96xbf16, #tpu.memory_space<vmem>>, %arg6: memref<2x1x96xf32, #tpu.memory_space<vmem>>, %arg7: memref<2x32x32xbf16, #tpu.memory_space<vmem>>, %arg8: memref<2x2x32x32xbf16, #tpu.memory_space<vmem>>, %arg9: memref<2x8x32xf32, #tpu.memory_space<vmem>>, %arg10: memref<1x2x32xf32, #tpu.memory_space<vmem>>, %arg11: memref<96x32xf32, #tpu.memory_space<vmem>>) attributes {dimension_semantics = [#tpu.dimension_semantics<parallel>], iteration_bounds = array<i64: 1>, scalar_prefetch = 0 : i64, scratch_operands = 1 : i64, tpu.core_type = #tpu.core_type<tc>, window_params = [{transform_indices = @transform_0, window_bounds = array<i64: 96, 162>}, {pipeline_mode = #tpu.pipeline_mode<synchronous>, transform_indices = @transform_1, window_bounds = array<i64: 96, 32>}, {pipeline_mode = #tpu.pipeline_mode<synchronous>, transform_indices = @transform_2, window_bounds = array<i64: 2, 96>}, {pipeline_mode = #tpu.pipeline_mode<synchronous>, transform_indices = @transform_3, window_bounds = array<i64: 162, 32>}, {pipeline_mode = #tpu.pipeline_mode<synchronous>, transform_indices = @transform_4, window_bounds = array<i64: 2, 32, 96>}, {pipeline_mode = #tpu.pipeline_mode<synchronous>, transform_indices = @transform_5, window_bounds = array<i64: 2, 1, 96>}, {pipeline_mode = #tpu.pipeline_mode<synchronous>, transform_indices = @transform_6, window_bounds = array<i64: 2, 32, 32>}, {pipeline_mode = #tpu.pipeline_mode<synchronous>, transform_indices = @transform_7, window_bounds = array<i64: 2, 2, 32, 32>}, {pipeline_mode = #tpu.pipeline_mode<synchronous>, transform_indices = @transform_8, window_bounds = array<i64: 2, 8, 32>}, {transform_indices = @transform_9, window_bounds = array<i64: 1, 2, 32>}]} {
    %c0 = arith.constant 0 : index
    %c0_0 = arith.constant 0 : index
    %0 = vector.load %arg1[%c0, %c0_0] : memref<96x162xf32, #tpu.memory_space<vmem>>, vector<96x162xf32>
    %1 = arith.truncf %0 : vector<96x162xf32> to vector<96x162xbf16>
    %c0_1 = arith.constant 0 : index
    %c0_2 = arith.constant 0 : index
    %2 = vector.load %arg4[%c0_1, %c0_2] : memref<162x32xbf16, #tpu.memory_space<vmem>>, vector<162x32xbf16>
    %cst = arith.constant dense<0.000000e+00> : vector<96x32xf32>
    %3 = tpu.matmul %1, %2, %cst {dimension_numbers = #tpu.dot_dimension_numbers<[1], [0], [0], [1], [0, 0, 1, 1], [], []>} : vector<96x162xbf16>, vector<162x32xbf16>, vector<96x32xf32> -> vector<96x32xf32>
    %c0_3 = arith.constant 0 : index
    %c0_4 = arith.constant 0 : index
    %4 = vector.load %arg2[%c0_3, %c0_4] : memref<96x32xf32, #tpu.memory_space<vmem>>, vector<96x32xf32>
    %5 = arith.addf %3, %4 : vector<96x32xf32>
    %c0_5 = arith.constant 0 : index
    %c0_6 = arith.constant 0 : index
    %c0_7 = arith.constant 0 : index
    %6 = vector.load %arg9[%c0_5, %c0_6, %c0_7] : memref<2x8x32xf32, #tpu.memory_space<vmem>>, vector<1x8x32xf32>
    %7 = vector.shape_cast %6 : vector<1x8x32xf32> to vector<8x32xf32>
    %8 = arith.truncf %5 : vector<96x32xf32> to vector<96x32xbf16>
    %c0_8 = arith.constant 0 : index
    %c0_9 = arith.constant 0 : index
    %c0_10 = arith.constant 0 : index
    %9 = vector.load %arg5[%c0_8, %c0_9, %c0_10] : memref<2x32x96xbf16, #tpu.memory_space<vmem>>, vector<1x32x96xbf16>
    %10 = vector.shape_cast %9 : vector<1x32x96xbf16> to vector<32x96xbf16>
    %cst_11 = arith.constant dense<0.000000e+00> : vector<96x96xf32>
    %11 = tpu.matmul %8, %10, %cst_11 {dimension_numbers = #tpu.dot_dimension_numbers<[1], [0], [0], [1], [0, 0, 1, 1], [], []>} : vector<96x32xbf16>, vector<32x96xbf16>, vector<96x96xf32> -> vector<96x96xf32>
    %c0_12 = arith.constant 0 : index
    %c0_13 = arith.constant 0 : index
    %c0_14 = arith.constant 0 : index
    %12 = vector.load %arg6[%c0_12, %c0_13, %c0_14] : memref<2x1x96xf32, #tpu.memory_space<vmem>>, vector<1x1x96xf32>
    %13 = vector.shape_cast %12 : vector<1x1x96xf32> to vector<1x96xf32>
    %14 = vector.broadcast %13 : vector<1x96xf32> to vector<96x96xf32>
    %15 = arith.addf %11, %14 : vector<96x96xf32>
    %16 = vector.extract_strided_slice %15 {offsets = [0, 0], sizes = [48, 96], strides = [1, 1]} : vector<96x96xf32> to vector<48x96xf32>
    %17 = vector.extract_strided_slice %16 {offsets = [0, 0], sizes = [48, 8], strides = [1, 1]} : vector<48x96xf32> to vector<48x8xf32>
    %18 = arith.truncf %17 : vector<48x8xf32> to vector<48x8xbf16>
    %19 = vector.extract_strided_slice %16 {offsets = [0, 32], sizes = [48, 8], strides = [1, 1]} : vector<48x96xf32> to vector<48x8xf32>
    %20 = arith.truncf %19 : vector<48x8xf32> to vector<48x8xbf16>
    %21 = vector.extract_strided_slice %16 {offsets = [0, 64], sizes = [48, 8], strides = [1, 1]} : vector<48x96xf32> to vector<48x8xf32>
    %22 = arith.truncf %21 : vector<48x8xf32> to vector<48x8xbf16>
    %cst_15 = arith.constant dense<0.000000e+00> : vector<48x48xf32>
    %23 = tpu.matmul %18, %20, %cst_15 {dimension_numbers = #tpu.dot_dimension_numbers<[1], [1], [0], [0], [0, 0, 1, 0], [], []>} : vector<48x8xbf16>, vector<48x8xbf16>, vector<48x48xf32> -> vector<48x48xf32>
    %cst_16 = arith.constant dense<0xFF800000> : vector<48xf32>
    %24 = vector.multi_reduction <maximumf>, %23, %cst_16 [1] : vector<48x48xf32> to vector<48xf32>
    %25 = vector.shape_cast %24 : vector<48xf32> to vector<48x1xf32>
    %26 = vector.broadcast %25 : vector<48x1xf32> to vector<48x48xf32>
    %27 = arith.subf %23, %26 : vector<48x48xf32>
    %28 = math.exp %27 : vector<48x48xf32>
    %cst_17 = arith.constant dense<0.000000e+00> : vector<48xf32>
    %29 = vector.multi_reduction <add>, %28, %cst_17 [1] : vector<48x48xf32> to vector<48xf32>
    %30 = vector.shape_cast %29 : vector<48xf32> to vector<48x1xf32>
    %31 = tpu.reciprocal %30 {approx = true} : vector<48x1xf32> -> vector<48x1xf32>
    %32 = vector.broadcast %31 : vector<48x1xf32> to vector<48x48xf32>
    %33 = arith.mulf %28, %32 : vector<48x48xf32>
    %34 = arith.truncf %33 : vector<48x48xf32> to vector<48x48xbf16>
    %cst_18 = arith.constant dense<0.000000e+00> : vector<48x8xf32>
    %35 = tpu.matmul %34, %22, %cst_18 {dimension_numbers = #tpu.dot_dimension_numbers<[1], [0], [0], [1], [0, 0, 1, 1], [], []>} : vector<48x48xbf16>, vector<48x8xbf16>, vector<48x8xf32> -> vector<48x8xf32>
    %c0_19 = arith.constant 0 : index
    %c0_20 = arith.constant 0 : index
    %36 = vector.load %arg11[%c0_19, %c0_20] : memref<96x32xf32, #tpu.memory_space<vmem>>, vector<48x8xf32>
    tpu.vector_store %arg11[%c0_19, %c0_20], %35 {strides = array<i32>} : memref<96x32xf32, #tpu.memory_space<vmem>>, vector<48x8xf32>,
    %37 = vector.extract_strided_slice %16 {offsets = [0, 8], sizes = [48, 8], strides = [1, 1]} : vector<48x96xf32> to vector<48x8xf32>
    %38 = arith.truncf %37 : vector<48x8xf32> to vector<48x8xbf16>
    %39 = vector.extract_strided_slice %16 {offsets = [0, 40], sizes = [48, 8], strides = [1, 1]} : vector<48x96xf32> to vector<48x8xf32>
    %40 = arith.truncf %39 : vector<48x8xf32> to vector<48x8xbf16>
    %41 = vector.extract_strided_slice %16 {offsets = [0, 72], sizes = [48, 8], strides = [1, 1]} : vector<48x96xf32> to vector<48x8xf32>
    %42 = arith.truncf %41 : vector<48x8xf32> to vector<48x8xbf16>
    %cst_21 = arith.constant dense<0.000000e+00> : vector<48x48xf32>
    %43 = tpu.matmul %38, %40, %cst_21 {dimension_numbers = #tpu.dot_dimension_numbers<[1], [1], [0], [0], [0, 0, 1, 0], [], []>} : vector<48x8xbf16>, vector<48x8xbf16>, vector<48x48xf32> -> vector<48x48xf32>
    %cst_22 = arith.constant dense<0xFF800000> : vector<48xf32>
    %44 = vector.multi_reduction <maximumf>, %43, %cst_22 [1] : vector<48x48xf32> to vector<48xf32>
    %45 = vector.shape_cast %44 : vector<48xf32> to vector<48x1xf32>
    %46 = vector.broadcast %45 : vector<48x1xf32> to vector<48x48xf32>
    %47 = arith.subf %43, %46 : vector<48x48xf32>
    %48 = math.exp %47 : vector<48x48xf32>
    %cst_23 = arith.constant dense<0.000000e+00> : vector<48xf32>
    %49 = vector.multi_reduction <add>, %48, %cst_23 [1] : vector<48x48xf32> to vector<48xf32>
    %50 = vector.shape_cast %49 : vector<48xf32> to vector<48x1xf32>
    %51 = tpu.reciprocal %50 {approx = true} : vector<48x1xf32> -> vector<48x1xf32>
    %52 = vector.broadcast %51 : vector<48x1xf32> to vector<48x48xf32>
    %53 = arith.mulf %48, %52 : vector<48x48xf32>
    %54 = arith.truncf %53 : vector<48x48xf32> to vector<48x48xbf16>
    %cst_24 = arith.constant dense<0.000000e+00> : vector<48x8xf32>
    %55 = tpu.matmul %54, %42, %cst_24 {dimension_numbers = #tpu.dot_dimension_numbers<[1], [0], [0], [1], [0, 0, 1, 1], [], []>} : vector<48x48xbf16>, vector<48x8xbf16>, vector<48x8xf32> -> vector<48x8xf32>
    %c0_25 = arith.constant 0 : index
    %c8 = arith.constant 8 : index
    %56 = vector.load %arg11[%c0_25, %c8] : memref<96x32xf32, #tpu.memory_space<vmem>>, vector<48x8xf32>
    tpu.vector_store %arg11[%c0_25, %c8], %55 {strides = array<i32>} : memref<96x32xf32, #tpu.memory_space<vmem>>, vector<48x8xf32>,
    %57 = vector.extract_strided_slice %16 {offsets = [0, 16], sizes = [48, 8], strides = [1, 1]} : vector<48x96xf32> to vector<48x8xf32>
    %58 = arith.truncf %57 : vector<48x8xf32> to vector<48x8xbf16>
    %59 = vector.extract_strided_slice %16 {offsets = [0, 48], sizes = [48, 8], strides = [1, 1]} : vector<48x96xf32> to vector<48x8xf32>
    %60 = arith.truncf %59 : vector<48x8xf32> to vector<48x8xbf16>
    %61 = vector.extract_strided_slice %16 {offsets = [0, 80], sizes = [48, 8], strides = [1, 1]} : vector<48x96xf32> to vector<48x8xf32>
    %62 = arith.truncf %61 : vector<48x8xf32> to vector<48x8xbf16>
    %cst_26 = arith.constant dense<0.000000e+00> : vector<48x48xf32>
    %63 = tpu.matmul %58, %60, %cst_26 {dimension_numbers = #tpu.dot_dimension_numbers<[1], [1], [0], [0], [0, 0, 1, 0], [], []>} : vector<48x8xbf16>, vector<48x8xbf16>, vector<48x48xf32> -> vector<48x48xf32>
    %cst_27 = arith.constant dense<0xFF800000> : vector<48xf32>
    %64 = vector.multi_reduction <maximumf>, %63, %cst_27 [1] : vector<48x48xf32> to vector<48xf32>
    %65 = vector.shape_cast %64 : vector<48xf32> to vector<48x1xf32>
    %66 = vector.broadcast %65 : vector<48x1xf32> to vector<48x48xf32>
    %67 = arith.subf %63, %66 : vector<48x48xf32>
    %68 = math.exp %67 : vector<48x48xf32>
    %cst_28 = arith.constant dense<0.000000e+00> : vector<48xf32>
    %69 = vector.multi_reduction <add>, %68, %cst_28 [1] : vector<48x48xf32> to vector<48xf32>
    %70 = vector.shape_cast %69 : vector<48xf32> to vector<48x1xf32>
    %71 = tpu.reciprocal %70 {approx = true} : vector<48x1xf32> -> vector<48x1xf32>
    %72 = vector.broadcast %71 : vector<48x1xf32> to vector<48x48xf32>
    %73 = arith.mulf %68, %72 : vector<48x48xf32>
    %74 = arith.truncf %73 : vector<48x48xf32> to vector<48x48xbf16>
    %cst_29 = arith.constant dense<0.000000e+00> : vector<48x8xf32>
    %75 = tpu.matmul %74, %62, %cst_29 {dimension_numbers = #tpu.dot_dimension_numbers<[1], [0], [0], [1], [0, 0, 1, 1], [], []>} : vector<48x48xbf16>, vector<48x8xbf16>, vector<48x8xf32> -> vector<48x8xf32>
    %c0_30 = arith.constant 0 : index
    %c16 = arith.constant 16 : index
    %76 = vector.load %arg11[%c0_30, %c16] : memref<96x32xf32, #tpu.memory_space<vmem>>, vector<48x8xf32>
    tpu.vector_store %arg11[%c0_30, %c16], %75 {strides = array<i32>} : memref<96x32xf32, #tpu.memory_space<vmem>>, vector<48x8xf32>,
    %77 = vector.extract_strided_slice %16 {offsets = [0, 24], sizes = [48, 8], strides = [1, 1]} : vector<48x96xf32> to vector<48x8xf32>
    %78 = arith.truncf %77 : vector<48x8xf32> to vector<48x8xbf16>
    %79 = vector.extract_strided_slice %16 {offsets = [0, 56], sizes = [48, 8], strides = [1, 1]} : vector<48x96xf32> to vector<48x8xf32>
    %80 = arith.truncf %79 : vector<48x8xf32> to vector<48x8xbf16>
    %81 = vector.extract_strided_slice %16 {offsets = [0, 88], sizes = [48, 8], strides = [1, 1]} : vector<48x96xf32> to vector<48x8xf32>
    %82 = arith.truncf %81 : vector<48x8xf32> to vector<48x8xbf16>
    %cst_31 = arith.constant dense<0.000000e+00> : vector<48x48xf32>
    %83 = tpu.matmul %78, %80, %cst_31 {dimension_numbers = #tpu.dot_dimension_numbers<[1], [1], [0], [0], [0, 0, 1, 0], [], []>} : vector<48x8xbf16>, vector<48x8xbf16>, vector<48x48xf32> -> vector<48x48xf32>
    %cst_32 = arith.constant dense<0xFF800000> : vector<48xf32>
    %84 = vector.multi_reduction <maximumf>, %83, %cst_32 [1] : vector<48x48xf32> to vector<48xf32>
    %85 = vector.shape_cast %84 : vector<48xf32> to vector<48x1xf32>
    %86 = vector.broadcast %85 : vector<48x1xf32> to vector<48x48xf32>
    %87 = arith.subf %83, %86 : vector<48x48xf32>
    %88 = math.exp %87 : vector<48x48xf32>
    %cst_33 = arith.constant dense<0.000000e+00> : vector<48xf32>
    %89 = vector.multi_reduction <add>, %88, %cst_33 [1] : vector<48x48xf32> to vector<48xf32>
    %90 = vector.shape_cast %89 : vector<48xf32> to vector<48x1xf32>
    %91 = tpu.reciprocal %90 {approx = true} : vector<48x1xf32> -> vector<48x1xf32>
    %92 = vector.broadcast %91 : vector<48x1xf32> to vector<48x48xf32>
    %93 = arith.mulf %88, %92 : vector<48x48xf32>
    %94 = arith.truncf %93 : vector<48x48xf32> to vector<48x48xbf16>
    %cst_34 = arith.constant dense<0.000000e+00> : vector<48x8xf32>
    %95 = tpu.matmul %94, %82, %cst_34 {dimension_numbers = #tpu.dot_dimension_numbers<[1], [0], [0], [1], [0, 0, 1, 1], [], []>} : vector<48x48xbf16>, vector<48x8xbf16>, vector<48x8xf32> -> vector<48x8xf32>
    %c0_35 = arith.constant 0 : index
    %c24 = arith.constant 24 : index
    %96 = vector.load %arg11[%c0_35, %c24] : memref<96x32xf32, #tpu.memory_space<vmem>>, vector<48x8xf32>
    tpu.vector_store %arg11[%c0_35, %c24], %95 {strides = array<i32>} : memref<96x32xf32, #tpu.memory_space<vmem>>, vector<48x8xf32>,
    %97 = vector.extract_strided_slice %15 {offsets = [48, 0], sizes = [48, 96], strides = [1, 1]} : vector<96x96xf32> to vector<48x96xf32>
    %98 = vector.extract_strided_slice %97 {offsets = [0, 0], sizes = [48, 8], strides = [1, 1]} : vector<48x96xf32> to vector<48x8xf32>
    %99 = arith.truncf %98 : vector<48x8xf32> to vector<48x8xbf16>
    %100 = vector.extract_strided_slice %97 {offsets = [0, 32], sizes = [48, 8], strides = [1, 1]} : vector<48x96xf32> to vector<48x8xf32>
    %101 = arith.truncf %100 : vector<48x8xf32> to vector<48x8xbf16>
    %102 = vector.extract_strided_slice %97 {offsets = [0, 64], sizes = [48, 8], strides = [1, 1]} : vector<48x96xf32> to vector<48x8xf32>
    %103 = arith.truncf %102 : vector<48x8xf32> to vector<48x8xbf16>
    %cst_36 = arith.constant dense<0.000000e+00> : vector<48x48xf32>
    %104 = tpu.matmul %99, %101, %cst_36 {dimension_numbers = #tpu.dot_dimension_numbers<[1], [1], [0], [0], [0, 0, 1, 0], [], []>} : vector<48x8xbf16>, vector<48x8xbf16>, vector<48x48xf32> -> vector<48x48xf32>
    %cst_37 = arith.constant dense<0xFF800000> : vector<48xf32>
    %105 = vector.multi_reduction <maximumf>, %104, %cst_37 [1] : vector<48x48xf32> to vector<48xf32>
    %106 = vector.shape_cast %105 : vector<48xf32> to vector<48x1xf32>
    %107 = vector.broadcast %106 : vector<48x1xf32> to vector<48x48xf32>
    %108 = arith.subf %104, %107 : vector<48x48xf32>
    %109 = math.exp %108 : vector<48x48xf32>
    %cst_38 = arith.constant dense<0.000000e+00> : vector<48xf32>
    %110 = vector.multi_reduction <add>, %109, %cst_38 [1] : vector<48x48xf32> to vector<48xf32>
    %111 = vector.shape_cast %110 : vector<48xf32> to vector<48x1xf32>
    %112 = tpu.reciprocal %111 {approx = true} : vector<48x1xf32> -> vector<48x1xf32>
    %113 = vector.broadcast %112 : vector<48x1xf32> to vector<48x48xf32>
    %114 = arith.mulf %109, %113 : vector<48x48xf32>
    %115 = arith.truncf %114 : vector<48x48xf32> to vector<48x48xbf16>
    %cst_39 = arith.constant dense<0.000000e+00> : vector<48x8xf32>
    %116 = tpu.matmul %115, %103, %cst_39 {dimension_numbers = #tpu.dot_dimension_numbers<[1], [0], [0], [1], [0, 0, 1, 1], [], []>} : vector<48x48xbf16>, vector<48x8xbf16>, vector<48x8xf32> -> vector<48x8xf32>
    %c48 = arith.constant 48 : index
    %c0_40 = arith.constant 0 : index
    %117 = vector.load %arg11[%c48, %c0_40] : memref<96x32xf32, #tpu.memory_space<vmem>>, vector<48x8xf32>
    tpu.vector_store %arg11[%c48, %c0_40], %116 {strides = array<i32>} : memref<96x32xf32, #tpu.memory_space<vmem>>, vector<48x8xf32>,
    %118 = vector.extract_strided_slice %97 {offsets = [0, 8], sizes = [48, 8], strides = [1, 1]} : vector<48x96xf32> to vector<48x8xf32>
    %119 = arith.truncf %118 : vector<48x8xf32> to vector<48x8xbf16>
    %120 = vector.extract_strided_slice %97 {offsets = [0, 40], sizes = [48, 8], strides = [1, 1]} : vector<48x96xf32> to vector<48x8xf32>
    %121 = arith.truncf %120 : vector<48x8xf32> to vector<48x8xbf16>
    %122 = vector.extract_strided_slice %97 {offsets = [0, 72], sizes = [48, 8], strides = [1, 1]} : vector<48x96xf32> to vector<48x8xf32>
    %123 = arith.truncf %122 : vector<48x8xf32> to vector<48x8xbf16>
    %cst_41 = arith.constant dense<0.000000e+00> : vector<48x48xf32>
    %124 = tpu.matmul %119, %121, %cst_41 {dimension_numbers = #tpu.dot_dimension_numbers<[1], [1], [0], [0], [0, 0, 1, 0], [], []>} : vector<48x8xbf16>, vector<48x8xbf16>, vector<48x48xf32> -> vector<48x48xf32>
    %cst_42 = arith.constant dense<0xFF800000> : vector<48xf32>
    %125 = vector.multi_reduction <maximumf>, %124, %cst_42 [1] : vector<48x48xf32> to vector<48xf32>
    %126 = vector.shape_cast %125 : vector<48xf32> to vector<48x1xf32>
    %127 = vector.broadcast %126 : vector<48x1xf32> to vector<48x48xf32>
    %128 = arith.subf %124, %127 : vector<48x48xf32>
    %129 = math.exp %128 : vector<48x48xf32>
    %cst_43 = arith.constant dense<0.000000e+00> : vector<48xf32>
    %130 = vector.multi_reduction <add>, %129, %cst_43 [1] : vector<48x48xf32> to vector<48xf32>
    %131 = vector.shape_cast %130 : vector<48xf32> to vector<48x1xf32>
    %132 = tpu.reciprocal %131 {approx = true} : vector<48x1xf32> -> vector<48x1xf32>
    %133 = vector.broadcast %132 : vector<48x1xf32> to vector<48x48xf32>
    %134 = arith.mulf %129, %133 : vector<48x48xf32>
    %135 = arith.truncf %134 : vector<48x48xf32> to vector<48x48xbf16>
    %cst_44 = arith.constant dense<0.000000e+00> : vector<48x8xf32>
    %136 = tpu.matmul %135, %123, %cst_44 {dimension_numbers = #tpu.dot_dimension_numbers<[1], [0], [0], [1], [0, 0, 1, 1], [], []>} : vector<48x48xbf16>, vector<48x8xbf16>, vector<48x8xf32> -> vector<48x8xf32>
    %c48_45 = arith.constant 48 : index
    %c8_46 = arith.constant 8 : index
    %137 = vector.load %arg11[%c48_45, %c8_46] : memref<96x32xf32, #tpu.memory_space<vmem>>, vector<48x8xf32>
    tpu.vector_store %arg11[%c48_45, %c8_46], %136 {strides = array<i32>} : memref<96x32xf32, #tpu.memory_space<vmem>>, vector<48x8xf32>,
    %138 = vector.extract_strided_slice %97 {offsets = [0, 16], sizes = [48, 8], strides = [1, 1]} : vector<48x96xf32> to vector<48x8xf32>
    %139 = arith.truncf %138 : vector<48x8xf32> to vector<48x8xbf16>
    %140 = vector.extract_strided_slice %97 {offsets = [0, 48], sizes = [48, 8], strides = [1, 1]} : vector<48x96xf32> to vector<48x8xf32>
    %141 = arith.truncf %140 : vector<48x8xf32> to vector<48x8xbf16>
    %142 = vector.extract_strided_slice %97 {offsets = [0, 80], sizes = [48, 8], strides = [1, 1]} : vector<48x96xf32> to vector<48x8xf32>
    %143 = arith.truncf %142 : vector<48x8xf32> to vector<48x8xbf16>
    %cst_47 = arith.constant dense<0.000000e+00> : vector<48x48xf32>
    %144 = tpu.matmul %139, %141, %cst_47 {dimension_numbers = #tpu.dot_dimension_numbers<[1], [1], [0], [0], [0, 0, 1, 0], [], []>} : vector<48x8xbf16>, vector<48x8xbf16>, vector<48x48xf32> -> vector<48x48xf32>
    %cst_48 = arith.constant dense<0xFF800000> : vector<48xf32>
    %145 = vector.multi_reduction <maximumf>, %144, %cst_48 [1] : vector<48x48xf32> to vector<48xf32>
    %146 = vector.shape_cast %145 : vector<48xf32> to vector<48x1xf32>
    %147 = vector.broadcast %146 : vector<48x1xf32> to vector<48x48xf32>
    %148 = arith.subf %144, %147 : vector<48x48xf32>
    %149 = math.exp %148 : vector<48x48xf32>
    %cst_49 = arith.constant dense<0.000000e+00> : vector<48xf32>
    %150 = vector.multi_reduction <add>, %149, %cst_49 [1] : vector<48x48xf32> to vector<48xf32>
    %151 = vector.shape_cast %150 : vector<48xf32> to vector<48x1xf32>
    %152 = tpu.reciprocal %151 {approx = true} : vector<48x1xf32> -> vector<48x1xf32>
    %153 = vector.broadcast %152 : vector<48x1xf32> to vector<48x48xf32>
    %154 = arith.mulf %149, %153 : vector<48x48xf32>
    %155 = arith.truncf %154 : vector<48x48xf32> to vector<48x48xbf16>
    %cst_50 = arith.constant dense<0.000000e+00> : vector<48x8xf32>
    %156 = tpu.matmul %155, %143, %cst_50 {dimension_numbers = #tpu.dot_dimension_numbers<[1], [0], [0], [1], [0, 0, 1, 1], [], []>} : vector<48x48xbf16>, vector<48x8xbf16>, vector<48x8xf32> -> vector<48x8xf32>
    %c48_51 = arith.constant 48 : index
    %c16_52 = arith.constant 16 : index
    %157 = vector.load %arg11[%c48_51, %c16_52] : memref<96x32xf32, #tpu.memory_space<vmem>>, vector<48x8xf32>
    tpu.vector_store %arg11[%c48_51, %c16_52], %156 {strides = array<i32>} : memref<96x32xf32, #tpu.memory_space<vmem>>, vector<48x8xf32>,
    %158 = vector.extract_strided_slice %97 {offsets = [0, 24], sizes = [48, 8], strides = [1, 1]} : vector<48x96xf32> to vector<48x8xf32>
    %159 = arith.truncf %158 : vector<48x8xf32> to vector<48x8xbf16>
    %160 = vector.extract_strided_slice %97 {offsets = [0, 56], sizes = [48, 8], strides = [1, 1]} : vector<48x96xf32> to vector<48x8xf32>
    %161 = arith.truncf %160 : vector<48x8xf32> to vector<48x8xbf16>
    %162 = vector.extract_strided_slice %97 {offsets = [0, 88], sizes = [48, 8], strides = [1, 1]} : vector<48x96xf32> to vector<48x8xf32>
    %163 = arith.truncf %162 : vector<48x8xf32> to vector<48x8xbf16>
    %cst_53 = arith.constant dense<0.000000e+00> : vector<48x48xf32>
    %164 = tpu.matmul %159, %161, %cst_53 {dimension_numbers = #tpu.dot_dimension_numbers<[1], [1], [0], [0], [0, 0, 1, 0], [], []>} : vector<48x8xbf16>, vector<48x8xbf16>, vector<48x48xf32> -> vector<48x48xf32>
    %cst_54 = arith.constant dense<0xFF800000> : vector<48xf32>
    %165 = vector.multi_reduction <maximumf>, %164, %cst_54 [1] : vector<48x48xf32> to vector<48xf32>
    %166 = vector.shape_cast %165 : vector<48xf32> to vector<48x1xf32>
    %167 = vector.broadcast %166 : vector<48x1xf32> to vector<48x48xf32>
    %168 = arith.subf %164, %167 : vector<48x48xf32>
    %169 = math.exp %168 : vector<48x48xf32>
    %cst_55 = arith.constant dense<0.000000e+00> : vector<48xf32>
    %170 = vector.multi_reduction <add>, %169, %cst_55 [1] : vector<48x48xf32> to vector<48xf32>
    %171 = vector.shape_cast %170 : vector<48xf32> to vector<48x1xf32>
    %172 = tpu.reciprocal %171 {approx = true} : vector<48x1xf32> -> vector<48x1xf32>
    %173 = vector.broadcast %172 : vector<48x1xf32> to vector<48x48xf32>
    %174 = arith.mulf %169, %173 : vector<48x48xf32>
    %175 = arith.truncf %174 : vector<48x48xf32> to vector<48x48xbf16>
    %cst_56 = arith.constant dense<0.000000e+00> : vector<48x8xf32>
    %176 = tpu.matmul %175, %163, %cst_56 {dimension_numbers = #tpu.dot_dimension_numbers<[1], [0], [0], [1], [0, 0, 1, 1], [], []>} : vector<48x48xbf16>, vector<48x8xbf16>, vector<48x8xf32> -> vector<48x8xf32>
    %c48_57 = arith.constant 48 : index
    %c24_58 = arith.constant 24 : index
    %177 = vector.load %arg11[%c48_57, %c24_58] : memref<96x32xf32, #tpu.memory_space<vmem>>, vector<48x8xf32>
    tpu.vector_store %arg11[%c48_57, %c24_58], %176 {strides = array<i32>} : memref<96x32xf32, #tpu.memory_space<vmem>>, vector<48x8xf32>,
    %c0_59 = arith.constant 0 : index
    %c0_60 = arith.constant 0 : index
    %178 = vector.load %arg11[%c0_59, %c0_60] : memref<96x32xf32, #tpu.memory_space<vmem>>, vector<96x32xf32>
    %179 = arith.truncf %178 : vector<96x32xf32> to vector<96x32xbf16>
    %c0_61 = arith.constant 0 : index
    %c0_62 = arith.constant 0 : index
    %c0_63 = arith.constant 0 : index
    %180 = vector.load %arg7[%c0_61, %c0_62, %c0_63] : memref<2x32x32xbf16, #tpu.memory_space<vmem>>, vector<1x32x32xbf16>
    %181 = vector.shape_cast %180 : vector<1x32x32xbf16> to vector<32x32xbf16>
    %cst_64 = arith.constant dense<0.000000e+00> : vector<96x32xf32>
    %182 = tpu.matmul %179, %181, %cst_64 {dimension_numbers = #tpu.dot_dimension_numbers<[1], [0], [0], [1], [0, 0, 1, 1], [], []>} : vector<96x32xbf16>, vector<32x32xbf16>, vector<96x32xf32> -> vector<96x32xf32>
    %183 = vector.extract_strided_slice %7 {offsets = [0, 0], sizes = [1, 32], strides = [1, 1]} : vector<8x32xf32> to vector<1x32xf32>
    %184 = vector.broadcast %183 : vector<1x32xf32> to vector<96x32xf32>
    %185 = arith.addf %182, %184 : vector<96x32xf32>
    %186 = arith.addf %5, %185 : vector<96x32xf32>
    %187 = vector.extract_strided_slice %7 {offsets = [1, 0], sizes = [1, 32], strides = [1, 1]} : vector<8x32xf32> to vector<1x32xf32>
    %188 = vector.extract_strided_slice %7 {offsets = [2, 0], sizes = [1, 32], strides = [1, 1]} : vector<8x32xf32> to vector<1x32xf32>
    %cst_65 = arith.constant dense<0.000000e+00> : vector<96xf32>
    %189 = vector.multi_reduction <add>, %186, %cst_65 [1] : vector<96x32xf32> to vector<96xf32>
    %190 = vector.shape_cast %189 : vector<96xf32> to vector<96x1xf32>
    %cst_66 = arith.constant 3.200000e+01 : f32
    %191 = vector.broadcast %cst_66 : f32 to vector<96x1xf32>
    %192 = arith.divf %190, %191 : vector<96x1xf32>
    %193 = arith.mulf %186, %186 : vector<96x32xf32>
    %cst_67 = arith.constant dense<0.000000e+00> : vector<96xf32>
    %194 = vector.multi_reduction <add>, %193, %cst_67 [1] : vector<96x32xf32> to vector<96xf32>
    %195 = vector.shape_cast %194 : vector<96xf32> to vector<96x1xf32>
    %cst_68 = arith.constant 3.200000e+01 : f32
    %196 = vector.broadcast %cst_68 : f32 to vector<96x1xf32>
    %197 = arith.divf %195, %196 : vector<96x1xf32>
    %198 = arith.mulf %192, %192 : vector<96x1xf32>
    %199 = arith.subf %197, %198 : vector<96x1xf32>
    %200 = vector.broadcast %192 : vector<96x1xf32> to vector<96x32xf32>
    %201 = arith.subf %186, %200 : vector<96x32xf32>
    %cst_69 = arith.constant 9.99999974E-6 : f32
    %202 = vector.broadcast %cst_69 : f32 to vector<96x1xf32>
    %203 = arith.addf %199, %202 : vector<96x1xf32>
    %204 = math.rsqrt %203 : vector<96x1xf32>
    %205 = vector.broadcast %204 : vector<96x1xf32> to vector<96x32xf32>
    %206 = arith.mulf %201, %205 : vector<96x32xf32>
    %207 = vector.broadcast %187 : vector<1x32xf32> to vector<96x32xf32>
    %208 = arith.mulf %206, %207 : vector<96x32xf32>
    %209 = vector.broadcast %188 : vector<1x32xf32> to vector<96x32xf32>
    %210 = arith.addf %208, %209 : vector<96x32xf32>
    %211 = arith.truncf %210 : vector<96x32xf32> to vector<96x32xbf16>
    %c0_70 = arith.constant 0 : index
    %c0_71 = arith.constant 0 : index
    %c0_72 = arith.constant 0 : index
    %c0_73 = arith.constant 0 : index
    %212 = vector.load %arg8[%c0_70, %c0_71, %c0_72, %c0_73] : memref<2x2x32x32xbf16, #tpu.memory_space<vmem>>, vector<1x1x32x32xbf16>
    %213 = vector.shape_cast %212 : vector<1x1x32x32xbf16> to vector<32x32xbf16>
    %cst_74 = arith.constant dense<0.000000e+00> : vector<96x32xf32>
    %214 = tpu.matmul %211, %213, %cst_74 {dimension_numbers = #tpu.dot_dimension_numbers<[1], [0], [0], [1], [0, 0, 1, 1], [], []>} : vector<96x32xbf16>, vector<32x32xbf16>, vector<96x32xf32> -> vector<96x32xf32>
    %215 = vector.extract_strided_slice %7 {offsets = [3, 0], sizes = [1, 32], strides = [1, 1]} : vector<8x32xf32> to vector<1x32xf32>
    %216 = vector.broadcast %215 : vector<1x32xf32> to vector<96x32xf32>
    %217 = arith.addf %214, %216 : vector<96x32xf32>
    %cst_75 = arith.constant 0.000000e+00 : f32
    %218 = vector.broadcast %cst_75 : f32 to vector<96x32xf32>
    %219 = arith.maximumf %217, %218 : vector<96x32xf32>
    %220 = arith.truncf %219 : vector<96x32xf32> to vector<96x32xbf16>
    %c0_76 = arith.constant 0 : index
    %c1 = arith.constant 1 : index
    %c0_77 = arith.constant 0 : index
    %c0_78 = arith.constant 0 : index
    %221 = vector.load %arg8[%c0_76, %c1, %c0_77, %c0_78] : memref<2x2x32x32xbf16, #tpu.memory_space<vmem>>, vector<1x1x32x32xbf16>
    %222 = vector.shape_cast %221 : vector<1x1x32x32xbf16> to vector<32x32xbf16>
    %cst_79 = arith.constant dense<0.000000e+00> : vector<96x32xf32>
    %223 = tpu.matmul %220, %222, %cst_79 {dimension_numbers = #tpu.dot_dimension_numbers<[1], [0], [0], [1], [0, 0, 1, 1], [], []>} : vector<96x32xbf16>, vector<32x32xbf16>, vector<96x32xf32> -> vector<96x32xf32>
    %224 = vector.extract_strided_slice %7 {offsets = [4, 0], sizes = [1, 32], strides = [1, 1]} : vector<8x32xf32> to vector<1x32xf32>
    %225 = vector.broadcast %224 : vector<1x32xf32> to vector<96x32xf32>
    %226 = arith.addf %223, %225 : vector<96x32xf32>
    %227 = arith.addf %210, %226 : vector<96x32xf32>
    %228 = vector.extract_strided_slice %7 {offsets = [5, 0], sizes = [1, 32], strides = [1, 1]} : vector<8x32xf32> to vector<1x32xf32>
    %229 = vector.extract_strided_slice %7 {offsets = [6, 0], sizes = [1, 32], strides = [1, 1]} : vector<8x32xf32> to vector<1x32xf32>
    %cst_80 = arith.constant dense<0.000000e+00> : vector<96xf32>
    %230 = vector.multi_reduction <add>, %227, %cst_80 [1] : vector<96x32xf32> to vector<96xf32>
    %231 = vector.shape_cast %230 : vector<96xf32> to vector<96x1xf32>
    %cst_81 = arith.constant 3.200000e+01 : f32
    %232 = vector.broadcast %cst_81 : f32 to vector<96x1xf32>
    %233 = arith.divf %231, %232 : vector<96x1xf32>
    %234 = arith.mulf %227, %227 : vector<96x32xf32>
    %cst_82 = arith.constant dense<0.000000e+00> : vector<96xf32>
    %235 = vector.multi_reduction <add>, %234, %cst_82 [1] : vector<96x32xf32> to vector<96xf32>
    %236 = vector.shape_cast %235 : vector<96xf32> to vector<96x1xf32>
    %cst_83 = arith.constant 3.200000e+01 : f32
    %237 = vector.broadcast %cst_83 : f32 to vector<96x1xf32>
    %238 = arith.divf %236, %237 : vector<96x1xf32>
    %239 = arith.mulf %233, %233 : vector<96x1xf32>
    %240 = arith.subf %238, %239 : vector<96x1xf32>
    %241 = vector.broadcast %233 : vector<96x1xf32> to vector<96x32xf32>
    %242 = arith.subf %227, %241 : vector<96x32xf32>
    %cst_84 = arith.constant 9.99999974E-6 : f32
    %243 = vector.broadcast %cst_84 : f32 to vector<96x1xf32>
    %244 = arith.addf %240, %243 : vector<96x1xf32>
    %245 = math.rsqrt %244 : vector<96x1xf32>
    %246 = vector.broadcast %245 : vector<96x1xf32> to vector<96x32xf32>
    %247 = arith.mulf %242, %246 : vector<96x32xf32>
    %248 = vector.broadcast %228 : vector<1x32xf32> to vector<96x32xf32>
    %249 = arith.mulf %247, %248 : vector<96x32xf32>
    %250 = vector.broadcast %229 : vector<1x32xf32> to vector<96x32xf32>
    %251 = arith.addf %249, %250 : vector<96x32xf32>
    %c1_85 = arith.constant 1 : index
    %c0_86 = arith.constant 0 : index
    %c0_87 = arith.constant 0 : index
    %252 = vector.load %arg9[%c1_85, %c0_86, %c0_87] : memref<2x8x32xf32, #tpu.memory_space<vmem>>, vector<1x8x32xf32>
    %253 = vector.shape_cast %252 : vector<1x8x32xf32> to vector<8x32xf32>
    %254 = arith.truncf %251 : vector<96x32xf32> to vector<96x32xbf16>
    %c1_88 = arith.constant 1 : index
    %c0_89 = arith.constant 0 : index
    %c0_90 = arith.constant 0 : index
    %255 = vector.load %arg5[%c1_88, %c0_89, %c0_90] : memref<2x32x96xbf16, #tpu.memory_space<vmem>>, vector<1x32x96xbf16>
    %256 = vector.shape_cast %255 : vector<1x32x96xbf16> to vector<32x96xbf16>
    %cst_91 = arith.constant dense<0.000000e+00> : vector<96x96xf32>
    %257 = tpu.matmul %254, %256, %cst_91 {dimension_numbers = #tpu.dot_dimension_numbers<[1], [0], [0], [1], [0, 0, 1, 1], [], []>} : vector<96x32xbf16>, vector<32x96xbf16>, vector<96x96xf32> -> vector<96x96xf32>
    %c1_92 = arith.constant 1 : index
    %c0_93 = arith.constant 0 : index
    %c0_94 = arith.constant 0 : index
    %258 = vector.load %arg6[%c1_92, %c0_93, %c0_94] : memref<2x1x96xf32, #tpu.memory_space<vmem>>, vector<1x1x96xf32>
    %259 = vector.shape_cast %258 : vector<1x1x96xf32> to vector<1x96xf32>
    %260 = vector.broadcast %259 : vector<1x96xf32> to vector<96x96xf32>
    %261 = arith.addf %257, %260 : vector<96x96xf32>
    %262 = vector.extract_strided_slice %261 {offsets = [0, 0], sizes = [48, 96], strides = [1, 1]} : vector<96x96xf32> to vector<48x96xf32>
    %263 = vector.extract_strided_slice %262 {offsets = [0, 0], sizes = [48, 8], strides = [1, 1]} : vector<48x96xf32> to vector<48x8xf32>
    %264 = arith.truncf %263 : vector<48x8xf32> to vector<48x8xbf16>
    %265 = vector.extract_strided_slice %262 {offsets = [0, 32], sizes = [48, 8], strides = [1, 1]} : vector<48x96xf32> to vector<48x8xf32>
    %266 = arith.truncf %265 : vector<48x8xf32> to vector<48x8xbf16>
    %267 = vector.extract_strided_slice %262 {offsets = [0, 64], sizes = [48, 8], strides = [1, 1]} : vector<48x96xf32> to vector<48x8xf32>
    %268 = arith.truncf %267 : vector<48x8xf32> to vector<48x8xbf16>
    %cst_95 = arith.constant dense<0.000000e+00> : vector<48x48xf32>
    %269 = tpu.matmul %264, %266, %cst_95 {dimension_numbers = #tpu.dot_dimension_numbers<[1], [1], [0], [0], [0, 0, 1, 0], [], []>} : vector<48x8xbf16>, vector<48x8xbf16>, vector<48x48xf32> -> vector<48x48xf32>
    %cst_96 = arith.constant dense<0xFF800000> : vector<48xf32>
    %270 = vector.multi_reduction <maximumf>, %269, %cst_96 [1] : vector<48x48xf32> to vector<48xf32>
    %271 = vector.shape_cast %270 : vector<48xf32> to vector<48x1xf32>
    %272 = vector.broadcast %271 : vector<48x1xf32> to vector<48x48xf32>
    %273 = arith.subf %269, %272 : vector<48x48xf32>
    %274 = math.exp %273 : vector<48x48xf32>
    %cst_97 = arith.constant dense<0.000000e+00> : vector<48xf32>
    %275 = vector.multi_reduction <add>, %274, %cst_97 [1] : vector<48x48xf32> to vector<48xf32>
    %276 = vector.shape_cast %275 : vector<48xf32> to vector<48x1xf32>
    %277 = tpu.reciprocal %276 {approx = true} : vector<48x1xf32> -> vector<48x1xf32>
    %278 = vector.broadcast %277 : vector<48x1xf32> to vector<48x48xf32>
    %279 = arith.mulf %274, %278 : vector<48x48xf32>
    %280 = arith.truncf %279 : vector<48x48xf32> to vector<48x48xbf16>
    %cst_98 = arith.constant dense<0.000000e+00> : vector<48x8xf32>
    %281 = tpu.matmul %280, %268, %cst_98 {dimension_numbers = #tpu.dot_dimension_numbers<[1], [0], [0], [1], [0, 0, 1, 1], [], []>} : vector<48x48xbf16>, vector<48x8xbf16>, vector<48x8xf32> -> vector<48x8xf32>
    %c0_99 = arith.constant 0 : index
    %c0_100 = arith.constant 0 : index
    %282 = vector.load %arg11[%c0_99, %c0_100] : memref<96x32xf32, #tpu.memory_space<vmem>>, vector<48x8xf32>
    tpu.vector_store %arg11[%c0_99, %c0_100], %281 {strides = array<i32>} : memref<96x32xf32, #tpu.memory_space<vmem>>, vector<48x8xf32>,
    %283 = vector.extract_strided_slice %262 {offsets = [0, 8], sizes = [48, 8], strides = [1, 1]} : vector<48x96xf32> to vector<48x8xf32>
    %284 = arith.truncf %283 : vector<48x8xf32> to vector<48x8xbf16>
    %285 = vector.extract_strided_slice %262 {offsets = [0, 40], sizes = [48, 8], strides = [1, 1]} : vector<48x96xf32> to vector<48x8xf32>
    %286 = arith.truncf %285 : vector<48x8xf32> to vector<48x8xbf16>
    %287 = vector.extract_strided_slice %262 {offsets = [0, 72], sizes = [48, 8], strides = [1, 1]} : vector<48x96xf32> to vector<48x8xf32>
    %288 = arith.truncf %287 : vector<48x8xf32> to vector<48x8xbf16>
    %cst_101 = arith.constant dense<0.000000e+00> : vector<48x48xf32>
    %289 = tpu.matmul %284, %286, %cst_101 {dimension_numbers = #tpu.dot_dimension_numbers<[1], [1], [0], [0], [0, 0, 1, 0], [], []>} : vector<48x8xbf16>, vector<48x8xbf16>, vector<48x48xf32> -> vector<48x48xf32>
    %cst_102 = arith.constant dense<0xFF800000> : vector<48xf32>
    %290 = vector.multi_reduction <maximumf>, %289, %cst_102 [1] : vector<48x48xf32> to vector<48xf32>
    %291 = vector.shape_cast %290 : vector<48xf32> to vector<48x1xf32>
    %292 = vector.broadcast %291 : vector<48x1xf32> to vector<48x48xf32>
    %293 = arith.subf %289, %292 : vector<48x48xf32>
    %294 = math.exp %293 : vector<48x48xf32>
    %cst_103 = arith.constant dense<0.000000e+00> : vector<48xf32>
    %295 = vector.multi_reduction <add>, %294, %cst_103 [1] : vector<48x48xf32> to vector<48xf32>
    %296 = vector.shape_cast %295 : vector<48xf32> to vector<48x1xf32>
    %297 = tpu.reciprocal %296 {approx = true} : vector<48x1xf32> -> vector<48x1xf32>
    %298 = vector.broadcast %297 : vector<48x1xf32> to vector<48x48xf32>
    %299 = arith.mulf %294, %298 : vector<48x48xf32>
    %300 = arith.truncf %299 : vector<48x48xf32> to vector<48x48xbf16>
    %cst_104 = arith.constant dense<0.000000e+00> : vector<48x8xf32>
    %301 = tpu.matmul %300, %288, %cst_104 {dimension_numbers = #tpu.dot_dimension_numbers<[1], [0], [0], [1], [0, 0, 1, 1], [], []>} : vector<48x48xbf16>, vector<48x8xbf16>, vector<48x8xf32> -> vector<48x8xf32>
    %c0_105 = arith.constant 0 : index
    %c8_106 = arith.constant 8 : index
    %302 = vector.load %arg11[%c0_105, %c8_106] : memref<96x32xf32, #tpu.memory_space<vmem>>, vector<48x8xf32>
    tpu.vector_store %arg11[%c0_105, %c8_106], %301 {strides = array<i32>} : memref<96x32xf32, #tpu.memory_space<vmem>>, vector<48x8xf32>,
    %303 = vector.extract_strided_slice %262 {offsets = [0, 16], sizes = [48, 8], strides = [1, 1]} : vector<48x96xf32> to vector<48x8xf32>
    %304 = arith.truncf %303 : vector<48x8xf32> to vector<48x8xbf16>
    %305 = vector.extract_strided_slice %262 {offsets = [0, 48], sizes = [48, 8], strides = [1, 1]} : vector<48x96xf32> to vector<48x8xf32>
    %306 = arith.truncf %305 : vector<48x8xf32> to vector<48x8xbf16>
    %307 = vector.extract_strided_slice %262 {offsets = [0, 80], sizes = [48, 8], strides = [1, 1]} : vector<48x96xf32> to vector<48x8xf32>
    %308 = arith.truncf %307 : vector<48x8xf32> to vector<48x8xbf16>
    %cst_107 = arith.constant dense<0.000000e+00> : vector<48x48xf32>
    %309 = tpu.matmul %304, %306, %cst_107 {dimension_numbers = #tpu.dot_dimension_numbers<[1], [1], [0], [0], [0, 0, 1, 0], [], []>} : vector<48x8xbf16>, vector<48x8xbf16>, vector<48x48xf32> -> vector<48x48xf32>
    %cst_108 = arith.constant dense<0xFF800000> : vector<48xf32>
    %310 = vector.multi_reduction <maximumf>, %309, %cst_108 [1] : vector<48x48xf32> to vector<48xf32>
    %311 = vector.shape_cast %310 : vector<48xf32> to vector<48x1xf32>
    %312 = vector.broadcast %311 : vector<48x1xf32> to vector<48x48xf32>
    %313 = arith.subf %309, %312 : vector<48x48xf32>
    %314 = math.exp %313 : vector<48x48xf32>
    %cst_109 = arith.constant dense<0.000000e+00> : vector<48xf32>
    %315 = vector.multi_reduction <add>, %314, %cst_109 [1] : vector<48x48xf32> to vector<48xf32>
    %316 = vector.shape_cast %315 : vector<48xf32> to vector<48x1xf32>
    %317 = tpu.reciprocal %316 {approx = true} : vector<48x1xf32> -> vector<48x1xf32>
    %318 = vector.broadcast %317 : vector<48x1xf32> to vector<48x48xf32>
    %319 = arith.mulf %314, %318 : vector<48x48xf32>
    %320 = arith.truncf %319 : vector<48x48xf32> to vector<48x48xbf16>
    %cst_110 = arith.constant dense<0.000000e+00> : vector<48x8xf32>
    %321 = tpu.matmul %320, %308, %cst_110 {dimension_numbers = #tpu.dot_dimension_numbers<[1], [0], [0], [1], [0, 0, 1, 1], [], []>} : vector<48x48xbf16>, vector<48x8xbf16>, vector<48x8xf32> -> vector<48x8xf32>
    %c0_111 = arith.constant 0 : index
    %c16_112 = arith.constant 16 : index
    %322 = vector.load %arg11[%c0_111, %c16_112] : memref<96x32xf32, #tpu.memory_space<vmem>>, vector<48x8xf32>
    tpu.vector_store %arg11[%c0_111, %c16_112], %321 {strides = array<i32>} : memref<96x32xf32, #tpu.memory_space<vmem>>, vector<48x8xf32>,
    %323 = vector.extract_strided_slice %262 {offsets = [0, 24], sizes = [48, 8], strides = [1, 1]} : vector<48x96xf32> to vector<48x8xf32>
    %324 = arith.truncf %323 : vector<48x8xf32> to vector<48x8xbf16>
    %325 = vector.extract_strided_slice %262 {offsets = [0, 56], sizes = [48, 8], strides = [1, 1]} : vector<48x96xf32> to vector<48x8xf32>
    %326 = arith.truncf %325 : vector<48x8xf32> to vector<48x8xbf16>
    %327 = vector.extract_strided_slice %262 {offsets = [0, 88], sizes = [48, 8], strides = [1, 1]} : vector<48x96xf32> to vector<48x8xf32>
    %328 = arith.truncf %327 : vector<48x8xf32> to vector<48x8xbf16>
    %cst_113 = arith.constant dense<0.000000e+00> : vector<48x48xf32>
    %329 = tpu.matmul %324, %326, %cst_113 {dimension_numbers = #tpu.dot_dimension_numbers<[1], [1], [0], [0], [0, 0, 1, 0], [], []>} : vector<48x8xbf16>, vector<48x8xbf16>, vector<48x48xf32> -> vector<48x48xf32>
    %cst_114 = arith.constant dense<0xFF800000> : vector<48xf32>
    %330 = vector.multi_reduction <maximumf>, %329, %cst_114 [1] : vector<48x48xf32> to vector<48xf32>
    %331 = vector.shape_cast %330 : vector<48xf32> to vector<48x1xf32>
    %332 = vector.broadcast %331 : vector<48x1xf32> to vector<48x48xf32>
    %333 = arith.subf %329, %332 : vector<48x48xf32>
    %334 = math.exp %333 : vector<48x48xf32>
    %cst_115 = arith.constant dense<0.000000e+00> : vector<48xf32>
    %335 = vector.multi_reduction <add>, %334, %cst_115 [1] : vector<48x48xf32> to vector<48xf32>
    %336 = vector.shape_cast %335 : vector<48xf32> to vector<48x1xf32>
    %337 = tpu.reciprocal %336 {approx = true} : vector<48x1xf32> -> vector<48x1xf32>
    %338 = vector.broadcast %337 : vector<48x1xf32> to vector<48x48xf32>
    %339 = arith.mulf %334, %338 : vector<48x48xf32>
    %340 = arith.truncf %339 : vector<48x48xf32> to vector<48x48xbf16>
    %cst_116 = arith.constant dense<0.000000e+00> : vector<48x8xf32>
    %341 = tpu.matmul %340, %328, %cst_116 {dimension_numbers = #tpu.dot_dimension_numbers<[1], [0], [0], [1], [0, 0, 1, 1], [], []>} : vector<48x48xbf16>, vector<48x8xbf16>, vector<48x8xf32> -> vector<48x8xf32>
    %c0_117 = arith.constant 0 : index
    %c24_118 = arith.constant 24 : index
    %342 = vector.load %arg11[%c0_117, %c24_118] : memref<96x32xf32, #tpu.memory_space<vmem>>, vector<48x8xf32>
    tpu.vector_store %arg11[%c0_117, %c24_118], %341 {strides = array<i32>} : memref<96x32xf32, #tpu.memory_space<vmem>>, vector<48x8xf32>,
    %343 = vector.extract_strided_slice %261 {offsets = [48, 0], sizes = [48, 96], strides = [1, 1]} : vector<96x96xf32> to vector<48x96xf32>
    %344 = vector.extract_strided_slice %343 {offsets = [0, 0], sizes = [48, 8], strides = [1, 1]} : vector<48x96xf32> to vector<48x8xf32>
    %345 = arith.truncf %344 : vector<48x8xf32> to vector<48x8xbf16>
    %346 = vector.extract_strided_slice %343 {offsets = [0, 32], sizes = [48, 8], strides = [1, 1]} : vector<48x96xf32> to vector<48x8xf32>
    %347 = arith.truncf %346 : vector<48x8xf32> to vector<48x8xbf16>
    %348 = vector.extract_strided_slice %343 {offsets = [0, 64], sizes = [48, 8], strides = [1, 1]} : vector<48x96xf32> to vector<48x8xf32>
    %349 = arith.truncf %348 : vector<48x8xf32> to vector<48x8xbf16>
    %cst_119 = arith.constant dense<0.000000e+00> : vector<48x48xf32>
    %350 = tpu.matmul %345, %347, %cst_119 {dimension_numbers = #tpu.dot_dimension_numbers<[1], [1], [0], [0], [0, 0, 1, 0], [], []>} : vector<48x8xbf16>, vector<48x8xbf16>, vector<48x48xf32> -> vector<48x48xf32>
    %cst_120 = arith.constant dense<0xFF800000> : vector<48xf32>
    %351 = vector.multi_reduction <maximumf>, %350, %cst_120 [1] : vector<48x48xf32> to vector<48xf32>
    %352 = vector.shape_cast %351 : vector<48xf32> to vector<48x1xf32>
    %353 = vector.broadcast %352 : vector<48x1xf32> to vector<48x48xf32>
    %354 = arith.subf %350, %353 : vector<48x48xf32>
    %355 = math.exp %354 : vector<48x48xf32>
    %cst_121 = arith.constant dense<0.000000e+00> : vector<48xf32>
    %356 = vector.multi_reduction <add>, %355, %cst_121 [1] : vector<48x48xf32> to vector<48xf32>
    %357 = vector.shape_cast %356 : vector<48xf32> to vector<48x1xf32>
    %358 = tpu.reciprocal %357 {approx = true} : vector<48x1xf32> -> vector<48x1xf32>
    %359 = vector.broadcast %358 : vector<48x1xf32> to vector<48x48xf32>
    %360 = arith.mulf %355, %359 : vector<48x48xf32>
    %361 = arith.truncf %360 : vector<48x48xf32> to vector<48x48xbf16>
    %cst_122 = arith.constant dense<0.000000e+00> : vector<48x8xf32>
    %362 = tpu.matmul %361, %349, %cst_122 {dimension_numbers = #tpu.dot_dimension_numbers<[1], [0], [0], [1], [0, 0, 1, 1], [], []>} : vector<48x48xbf16>, vector<48x8xbf16>, vector<48x8xf32> -> vector<48x8xf32>
    %c48_123 = arith.constant 48 : index
    %c0_124 = arith.constant 0 : index
    %363 = vector.load %arg11[%c48_123, %c0_124] : memref<96x32xf32, #tpu.memory_space<vmem>>, vector<48x8xf32>
    tpu.vector_store %arg11[%c48_123, %c0_124], %362 {strides = array<i32>} : memref<96x32xf32, #tpu.memory_space<vmem>>, vector<48x8xf32>,
    %364 = vector.extract_strided_slice %343 {offsets = [0, 8], sizes = [48, 8], strides = [1, 1]} : vector<48x96xf32> to vector<48x8xf32>
    %365 = arith.truncf %364 : vector<48x8xf32> to vector<48x8xbf16>
    %366 = vector.extract_strided_slice %343 {offsets = [0, 40], sizes = [48, 8], strides = [1, 1]} : vector<48x96xf32> to vector<48x8xf32>
    %367 = arith.truncf %366 : vector<48x8xf32> to vector<48x8xbf16>
    %368 = vector.extract_strided_slice %343 {offsets = [0, 72], sizes = [48, 8], strides = [1, 1]} : vector<48x96xf32> to vector<48x8xf32>
    %369 = arith.truncf %368 : vector<48x8xf32> to vector<48x8xbf16>
    %cst_125 = arith.constant dense<0.000000e+00> : vector<48x48xf32>
    %370 = tpu.matmul %365, %367, %cst_125 {dimension_numbers = #tpu.dot_dimension_numbers<[1], [1], [0], [0], [0, 0, 1, 0], [], []>} : vector<48x8xbf16>, vector<48x8xbf16>, vector<48x48xf32> -> vector<48x48xf32>
    %cst_126 = arith.constant dense<0xFF800000> : vector<48xf32>
    %371 = vector.multi_reduction <maximumf>, %370, %cst_126 [1] : vector<48x48xf32> to vector<48xf32>
    %372 = vector.shape_cast %371 : vector<48xf32> to vector<48x1xf32>
    %373 = vector.broadcast %372 : vector<48x1xf32> to vector<48x48xf32>
    %374 = arith.subf %370, %373 : vector<48x48xf32>
    %375 = math.exp %374 : vector<48x48xf32>
    %cst_127 = arith.constant dense<0.000000e+00> : vector<48xf32>
    %376 = vector.multi_reduction <add>, %375, %cst_127 [1] : vector<48x48xf32> to vector<48xf32>
    %377 = vector.shape_cast %376 : vector<48xf32> to vector<48x1xf32>
    %378 = tpu.reciprocal %377 {approx = true} : vector<48x1xf32> -> vector<48x1xf32>
    %379 = vector.broadcast %378 : vector<48x1xf32> to vector<48x48xf32>
    %380 = arith.mulf %375, %379 : vector<48x48xf32>
    %381 = arith.truncf %380 : vector<48x48xf32> to vector<48x48xbf16>
    %cst_128 = arith.constant dense<0.000000e+00> : vector<48x8xf32>
    %382 = tpu.matmul %381, %369, %cst_128 {dimension_numbers = #tpu.dot_dimension_numbers<[1], [0], [0], [1], [0, 0, 1, 1], [], []>} : vector<48x48xbf16>, vector<48x8xbf16>, vector<48x8xf32> -> vector<48x8xf32>
    %c48_129 = arith.constant 48 : index
    %c8_130 = arith.constant 8 : index
    %383 = vector.load %arg11[%c48_129, %c8_130] : memref<96x32xf32, #tpu.memory_space<vmem>>, vector<48x8xf32>
    tpu.vector_store %arg11[%c48_129, %c8_130], %382 {strides = array<i32>} : memref<96x32xf32, #tpu.memory_space<vmem>>, vector<48x8xf32>,
    %384 = vector.extract_strided_slice %343 {offsets = [0, 16], sizes = [48, 8], strides = [1, 1]} : vector<48x96xf32> to vector<48x8xf32>
    %385 = arith.truncf %384 : vector<48x8xf32> to vector<48x8xbf16>
    %386 = vector.extract_strided_slice %343 {offsets = [0, 48], sizes = [48, 8], strides = [1, 1]} : vector<48x96xf32> to vector<48x8xf32>
    %387 = arith.truncf %386 : vector<48x8xf32> to vector<48x8xbf16>
    %388 = vector.extract_strided_slice %343 {offsets = [0, 80], sizes = [48, 8], strides = [1, 1]} : vector<48x96xf32> to vector<48x8xf32>
    %389 = arith.truncf %388 : vector<48x8xf32> to vector<48x8xbf16>
    %cst_131 = arith.constant dense<0.000000e+00> : vector<48x48xf32>
    %390 = tpu.matmul %385, %387, %cst_131 {dimension_numbers = #tpu.dot_dimension_numbers<[1], [1], [0], [0], [0, 0, 1, 0], [], []>} : vector<48x8xbf16>, vector<48x8xbf16>, vector<48x48xf32> -> vector<48x48xf32>
    %cst_132 = arith.constant dense<0xFF800000> : vector<48xf32>
    %391 = vector.multi_reduction <maximumf>, %390, %cst_132 [1] : vector<48x48xf32> to vector<48xf32>
    %392 = vector.shape_cast %391 : vector<48xf32> to vector<48x1xf32>
    %393 = vector.broadcast %392 : vector<48x1xf32> to vector<48x48xf32>
    %394 = arith.subf %390, %393 : vector<48x48xf32>
    %395 = math.exp %394 : vector<48x48xf32>
    %cst_133 = arith.constant dense<0.000000e+00> : vector<48xf32>
    %396 = vector.multi_reduction <add>, %395, %cst_133 [1] : vector<48x48xf32> to vector<48xf32>
    %397 = vector.shape_cast %396 : vector<48xf32> to vector<48x1xf32>
    %398 = tpu.reciprocal %397 {approx = true} : vector<48x1xf32> -> vector<48x1xf32>
    %399 = vector.broadcast %398 : vector<48x1xf32> to vector<48x48xf32>
    %400 = arith.mulf %395, %399 : vector<48x48xf32>
    %401 = arith.truncf %400 : vector<48x48xf32> to vector<48x48xbf16>
    %cst_134 = arith.constant dense<0.000000e+00> : vector<48x8xf32>
    %402 = tpu.matmul %401, %389, %cst_134 {dimension_numbers = #tpu.dot_dimension_numbers<[1], [0], [0], [1], [0, 0, 1, 1], [], []>} : vector<48x48xbf16>, vector<48x8xbf16>, vector<48x8xf32> -> vector<48x8xf32>
    %c48_135 = arith.constant 48 : index
    %c16_136 = arith.constant 16 : index
    %403 = vector.load %arg11[%c48_135, %c16_136] : memref<96x32xf32, #tpu.memory_space<vmem>>, vector<48x8xf32>
    tpu.vector_store %arg11[%c48_135, %c16_136], %402 {strides = array<i32>} : memref<96x32xf32, #tpu.memory_space<vmem>>, vector<48x8xf32>,
    %404 = vector.extract_strided_slice %343 {offsets = [0, 24], sizes = [48, 8], strides = [1, 1]} : vector<48x96xf32> to vector<48x8xf32>
    %405 = arith.truncf %404 : vector<48x8xf32> to vector<48x8xbf16>
    %406 = vector.extract_strided_slice %343 {offsets = [0, 56], sizes = [48, 8], strides = [1, 1]} : vector<48x96xf32> to vector<48x8xf32>
    %407 = arith.truncf %406 : vector<48x8xf32> to vector<48x8xbf16>
    %408 = vector.extract_strided_slice %343 {offsets = [0, 88], sizes = [48, 8], strides = [1, 1]} : vector<48x96xf32> to vector<48x8xf32>
    %409 = arith.truncf %408 : vector<48x8xf32> to vector<48x8xbf16>
    %cst_137 = arith.constant dense<0.000000e+00> : vector<48x48xf32>
    %410 = tpu.matmul %405, %407, %cst_137 {dimension_numbers = #tpu.dot_dimension_numbers<[1], [1], [0], [0], [0, 0, 1, 0], [], []>} : vector<48x8xbf16>, vector<48x8xbf16>, vector<48x48xf32> -> vector<48x48xf32>
    %cst_138 = arith.constant dense<0xFF800000> : vector<48xf32>
    %411 = vector.multi_reduction <maximumf>, %410, %cst_138 [1] : vector<48x48xf32> to vector<48xf32>
    %412 = vector.shape_cast %411 : vector<48xf32> to vector<48x1xf32>
    %413 = vector.broadcast %412 : vector<48x1xf32> to vector<48x48xf32>
    %414 = arith.subf %410, %413 : vector<48x48xf32>
    %415 = math.exp %414 : vector<48x48xf32>
    %cst_139 = arith.constant dense<0.000000e+00> : vector<48xf32>
    %416 = vector.multi_reduction <add>, %415, %cst_139 [1] : vector<48x48xf32> to vector<48xf32>
    %417 = vector.shape_cast %416 : vector<48xf32> to vector<48x1xf32>
    %418 = tpu.reciprocal %417 {approx = true} : vector<48x1xf32> -> vector<48x1xf32>
    %419 = vector.broadcast %418 : vector<48x1xf32> to vector<48x48xf32>
    %420 = arith.mulf %415, %419 : vector<48x48xf32>
    %421 = arith.truncf %420 : vector<48x48xf32> to vector<48x48xbf16>
    %cst_140 = arith.constant dense<0.000000e+00> : vector<48x8xf32>
    %422 = tpu.matmul %421, %409, %cst_140 {dimension_numbers = #tpu.dot_dimension_numbers<[1], [0], [0], [1], [0, 0, 1, 1], [], []>} : vector<48x48xbf16>, vector<48x8xbf16>, vector<48x8xf32> -> vector<48x8xf32>
    %c48_141 = arith.constant 48 : index
    %c24_142 = arith.constant 24 : index
    %423 = vector.load %arg11[%c48_141, %c24_142] : memref<96x32xf32, #tpu.memory_space<vmem>>, vector<48x8xf32>
    tpu.vector_store %arg11[%c48_141, %c24_142], %422 {strides = array<i32>} : memref<96x32xf32, #tpu.memory_space<vmem>>, vector<48x8xf32>,
    %c0_143 = arith.constant 0 : index
    %c0_144 = arith.constant 0 : index
    %424 = vector.load %arg11[%c0_143, %c0_144] : memref<96x32xf32, #tpu.memory_space<vmem>>, vector<96x32xf32>
    %425 = arith.truncf %424 : vector<96x32xf32> to vector<96x32xbf16>
    %c1_145 = arith.constant 1 : index
    %c0_146 = arith.constant 0 : index
    %c0_147 = arith.constant 0 : index
    %426 = vector.load %arg7[%c1_145, %c0_146, %c0_147] : memref<2x32x32xbf16, #tpu.memory_space<vmem>>, vector<1x32x32xbf16>
    %427 = vector.shape_cast %426 : vector<1x32x32xbf16> to vector<32x32xbf16>
    %cst_148 = arith.constant dense<0.000000e+00> : vector<96x32xf32>
    %428 = tpu.matmul %425, %427, %cst_148 {dimension_numbers = #tpu.dot_dimension_numbers<[1], [0], [0], [1], [0, 0, 1, 1], [], []>} : vector<96x32xbf16>, vector<32x32xbf16>, vector<96x32xf32> -> vector<96x32xf32>
    %429 = vector.extract_strided_slice %253 {offsets = [0, 0], sizes = [1, 32], strides = [1, 1]} : vector<8x32xf32> to vector<1x32xf32>
    %430 = vector.broadcast %429 : vector<1x32xf32> to vector<96x32xf32>
    %431 = arith.addf %428, %430 : vector<96x32xf32>
    %432 = arith.addf %251, %431 : vector<96x32xf32>
    %433 = vector.extract_strided_slice %253 {offsets = [1, 0], sizes = [1, 32], strides = [1, 1]} : vector<8x32xf32> to vector<1x32xf32>
    %434 = vector.extract_strided_slice %253 {offsets = [2, 0], sizes = [1, 32], strides = [1, 1]} : vector<8x32xf32> to vector<1x32xf32>
    %cst_149 = arith.constant dense<0.000000e+00> : vector<96xf32>
    %435 = vector.multi_reduction <add>, %432, %cst_149 [1] : vector<96x32xf32> to vector<96xf32>
    %436 = vector.shape_cast %435 : vector<96xf32> to vector<96x1xf32>
    %cst_150 = arith.constant 3.200000e+01 : f32
    %437 = vector.broadcast %cst_150 : f32 to vector<96x1xf32>
    %438 = arith.divf %436, %437 : vector<96x1xf32>
    %439 = arith.mulf %432, %432 : vector<96x32xf32>
    %cst_151 = arith.constant dense<0.000000e+00> : vector<96xf32>
    %440 = vector.multi_reduction <add>, %439, %cst_151 [1] : vector<96x32xf32> to vector<96xf32>
    %441 = vector.shape_cast %440 : vector<96xf32> to vector<96x1xf32>
    %cst_152 = arith.constant 3.200000e+01 : f32
    %442 = vector.broadcast %cst_152 : f32 to vector<96x1xf32>
    %443 = arith.divf %441, %442 : vector<96x1xf32>
    %444 = arith.mulf %438, %438 : vector<96x1xf32>
    %445 = arith.subf %443, %444 : vector<96x1xf32>
    %446 = vector.broadcast %438 : vector<96x1xf32> to vector<96x32xf32>
    %447 = arith.subf %432, %446 : vector<96x32xf32>
    %cst_153 = arith.constant 9.99999974E-6 : f32
    %448 = vector.broadcast %cst_153 : f32 to vector<96x1xf32>
    %449 = arith.addf %445, %448 : vector<96x1xf32>
    %450 = math.rsqrt %449 : vector<96x1xf32>
    %451 = vector.broadcast %450 : vector<96x1xf32> to vector<96x32xf32>
    %452 = arith.mulf %447, %451 : vector<96x32xf32>
    %453 = vector.broadcast %433 : vector<1x32xf32> to vector<96x32xf32>
    %454 = arith.mulf %452, %453 : vector<96x32xf32>
    %455 = vector.broadcast %434 : vector<1x32xf32> to vector<96x32xf32>
    %456 = arith.addf %454, %455 : vector<96x32xf32>
    %457 = arith.truncf %456 : vector<96x32xf32> to vector<96x32xbf16>
    %c1_154 = arith.constant 1 : index
    %c0_155 = arith.constant 0 : index
    %c0_156 = arith.constant 0 : index
    %c0_157 = arith.constant 0 : index
    %458 = vector.load %arg8[%c1_154, %c0_155, %c0_156, %c0_157] : memref<2x2x32x32xbf16, #tpu.memory_space<vmem>>, vector<1x1x32x32xbf16>
    %459 = vector.shape_cast %458 : vector<1x1x32x32xbf16> to vector<32x32xbf16>
    %cst_158 = arith.constant dense<0.000000e+00> : vector<96x32xf32>
    %460 = tpu.matmul %457, %459, %cst_158 {dimension_numbers = #tpu.dot_dimension_numbers<[1], [0], [0], [1], [0, 0, 1, 1], [], []>} : vector<96x32xbf16>, vector<32x32xbf16>, vector<96x32xf32> -> vector<96x32xf32>
    %461 = vector.extract_strided_slice %253 {offsets = [3, 0], sizes = [1, 32], strides = [1, 1]} : vector<8x32xf32> to vector<1x32xf32>
    %462 = vector.broadcast %461 : vector<1x32xf32> to vector<96x32xf32>
    %463 = arith.addf %460, %462 : vector<96x32xf32>
    %cst_159 = arith.constant 0.000000e+00 : f32
    %464 = vector.broadcast %cst_159 : f32 to vector<96x32xf32>
    %465 = arith.maximumf %463, %464 : vector<96x32xf32>
    %466 = arith.truncf %465 : vector<96x32xf32> to vector<96x32xbf16>
    %c1_160 = arith.constant 1 : index
    %c1_161 = arith.constant 1 : index
    %c0_162 = arith.constant 0 : index
    %c0_163 = arith.constant 0 : index
    %467 = vector.load %arg8[%c1_160, %c1_161, %c0_162, %c0_163] : memref<2x2x32x32xbf16, #tpu.memory_space<vmem>>, vector<1x1x32x32xbf16>
    %468 = vector.shape_cast %467 : vector<1x1x32x32xbf16> to vector<32x32xbf16>
    %cst_164 = arith.constant dense<0.000000e+00> : vector<96x32xf32>
    %469 = tpu.matmul %466, %468, %cst_164 {dimension_numbers = #tpu.dot_dimension_numbers<[1], [0], [0], [1], [0, 0, 1, 1], [], []>} : vector<96x32xbf16>, vector<32x32xbf16>, vector<96x32xf32> -> vector<96x32xf32>
    %470 = vector.extract_strided_slice %253 {offsets = [4, 0], sizes = [1, 32], strides = [1, 1]} : vector<8x32xf32> to vector<1x32xf32>
    %471 = vector.broadcast %470 : vector<1x32xf32> to vector<96x32xf32>
    %472 = arith.addf %469, %471 : vector<96x32xf32>
    %473 = arith.addf %456, %472 : vector<96x32xf32>
    %474 = vector.extract_strided_slice %253 {offsets = [5, 0], sizes = [1, 32], strides = [1, 1]} : vector<8x32xf32> to vector<1x32xf32>
    %475 = vector.extract_strided_slice %253 {offsets = [6, 0], sizes = [1, 32], strides = [1, 1]} : vector<8x32xf32> to vector<1x32xf32>
    %cst_165 = arith.constant dense<0.000000e+00> : vector<96xf32>
    %476 = vector.multi_reduction <add>, %473, %cst_165 [1] : vector<96x32xf32> to vector<96xf32>
    %477 = vector.shape_cast %476 : vector<96xf32> to vector<96x1xf32>
    %cst_166 = arith.constant 3.200000e+01 : f32
    %478 = vector.broadcast %cst_166 : f32 to vector<96x1xf32>
    %479 = arith.divf %477, %478 : vector<96x1xf32>
    %480 = arith.mulf %473, %473 : vector<96x32xf32>
    %cst_167 = arith.constant dense<0.000000e+00> : vector<96xf32>
    %481 = vector.multi_reduction <add>, %480, %cst_167 [1] : vector<96x32xf32> to vector<96xf32>
    %482 = vector.shape_cast %481 : vector<96xf32> to vector<96x1xf32>
    %cst_168 = arith.constant 3.200000e+01 : f32
    %483 = vector.broadcast %cst_168 : f32 to vector<96x1xf32>
    %484 = arith.divf %482, %483 : vector<96x1xf32>
    %485 = arith.mulf %479, %479 : vector<96x1xf32>
    %486 = arith.subf %484, %485 : vector<96x1xf32>
    %487 = vector.broadcast %479 : vector<96x1xf32> to vector<96x32xf32>
    %488 = arith.subf %473, %487 : vector<96x32xf32>
    %cst_169 = arith.constant 9.99999974E-6 : f32
    %489 = vector.broadcast %cst_169 : f32 to vector<96x1xf32>
    %490 = arith.addf %486, %489 : vector<96x1xf32>
    %491 = math.rsqrt %490 : vector<96x1xf32>
    %492 = vector.broadcast %491 : vector<96x1xf32> to vector<96x32xf32>
    %493 = arith.mulf %488, %492 : vector<96x32xf32>
    %494 = vector.broadcast %474 : vector<1x32xf32> to vector<96x32xf32>
    %495 = arith.mulf %493, %494 : vector<96x32xf32>
    %496 = vector.broadcast %475 : vector<1x32xf32> to vector<96x32xf32>
    %497 = arith.addf %495, %496 : vector<96x32xf32>
    %c0_170 = arith.constant 0 : index
    %c0_171 = arith.constant 0 : index
    %498 = vector.load %arg3[%c0_170, %c0_171] : memref<2x96xf32, #tpu.memory_space<vmem>>, vector<2x96xf32>
    %cst_172 = arith.constant dense<0.000000e+00> : vector<2x32xf32>
    %499 = tpu.matmul %498, %497, %cst_172 {dimension_numbers = #tpu.dot_dimension_numbers<[1], [0], [0], [1], [0, 0, 1, 1], [], []>} : vector<2x96xf32>, vector<96x32xf32>, vector<2x32xf32> -> vector<2x32xf32>
    %c0_173 = arith.constant 0 : index
    %c0_174 = arith.constant 0 : index
    %c0_175 = arith.constant 0 : index
    %500 = vector.load %arg10[%c0_173, %c0_174, %c0_175] : memref<1x2x32xf32, #tpu.memory_space<vmem>>, vector<1x2x32xf32>
    %501 = vector.shape_cast %500 : vector<1x2x32xf32> to vector<2x32xf32>
    %502 = vector.shape_cast %499 : vector<2x32xf32> to vector<1x2x32xf32>
    tpu.vector_store %arg10[%c0_173, %c0_174, %c0_175], %502 {strides = array<i32>} : memref<1x2x32xf32, #tpu.memory_space<vmem>>, vector<1x2x32xf32>,
    return
  }
  func.func @transform_0(%arg0: i32) -> (i32, i32) {
    %c0_i32 = arith.constant 0 : i32
    %c0_i32_0 = arith.constant 0 : i32
    return %arg0, %c0_i32 : i32, i32
  }
  func.func @transform_1(%arg0: i32) -> (i32, i32) {
    %c0_i32 = arith.constant 0 : i32
    %c0_i32_0 = arith.constant 0 : i32
    %c0_i32_1 = arith.constant 0 : i32
    return %c0_i32, %c0_i32_0 : i32, i32
  }
  func.func @transform_2(%arg0: i32) -> (i32, i32) {
    %c0_i32 = arith.constant 0 : i32
    %c0_i32_0 = arith.constant 0 : i32
    %c0_i32_1 = arith.constant 0 : i32
    return %c0_i32, %c0_i32_0 : i32, i32
  }
  func.func @transform_3(%arg0: i32) -> (i32, i32) {
    %c0_i32 = arith.constant 0 : i32
    %c0_i32_0 = arith.constant 0 : i32
    %c0_i32_1 = arith.constant 0 : i32
    return %c0_i32, %c0_i32_0 : i32, i32
  }
  func.func @transform_4(%arg0: i32) -> (i32, i32, i32) {
    %c0_i32 = arith.constant 0 : i32
    %c0_i32_0 = arith.constant 0 : i32
    %c0_i32_1 = arith.constant 0 : i32
    %c0_i32_2 = arith.constant 0 : i32
    return %c0_i32, %c0_i32_0, %c0_i32_1 : i32, i32, i32
  }
  func.func @transform_5(%arg0: i32) -> (i32, i32, i32) {
    %c0_i32 = arith.constant 0 : i32
    %c0_i32_0 = arith.constant 0 : i32
    %c0_i32_1 = arith.constant 0 : i32
    %c0_i32_2 = arith.constant 0 : i32
    return %c0_i32, %c0_i32_0, %c0_i32_1 : i32, i32, i32
  }
  func.func @transform_6(%arg0: i32) -> (i32, i32, i32) {
    %c0_i32 = arith.constant 0 : i32
    %c0_i32_0 = arith.constant 0 : i32
    %c0_i32_1 = arith.constant 0 : i32
    %c0_i32_2 = arith.constant 0 : i32
    return %c0_i32, %c0_i32_0, %c0_i32_1 : i32, i32, i32
  }
  func.func @transform_7(%arg0: i32) -> (i32, i32, i32, i32) {
    %c0_i32 = arith.constant 0 : i32
    %c0_i32_0 = arith.constant 0 : i32
    %c0_i32_1 = arith.constant 0 : i32
    %c0_i32_2 = arith.constant 0 : i32
    %c0_i32_3 = arith.constant 0 : i32
    return %c0_i32, %c0_i32_0, %c0_i32_1, %c0_i32_2 : i32, i32, i32, i32
  }
  func.func @transform_8(%arg0: i32) -> (i32, i32, i32) {
    %c0_i32 = arith.constant 0 : i32
    %c0_i32_0 = arith.constant 0 : i32
    %c0_i32_1 = arith.constant 0 : i32
    %c0_i32_2 = arith.constant 0 : i32
    return %c0_i32, %c0_i32_0, %c0_i32_1 : i32, i32, i32
  }
  func.func @transform_9(%arg0: i32) -> (i32, i32, i32) {
    %c0_i32 = arith.constant 0 : i32
    %c0_i32_0 = arith.constant 0 : i32
    %c0_i32_1 = arith.constant 0 : i32
    return %arg0, %c0_i32, %c0_i32_0 : i32, i32, i32
  }
}

</mosaic_0001>

<llo_original>
// kernel: tpu_custom_call.1
$region0: #{tpu_custom_call.1}
  #allocation0 [shape = 'u32[]', space=smem, size = 0x4, offset = 0x4, fixed_abs, tag = 'smem constant byte address 0x4 - core index']
  #allocation1 [shape = 'u32[144,128]{1,0:T(1,128)}', space=vmem, size = 0x12000, scoped, tag = 'internal scratch']
  #allocation2 [shape = 'f32[96,32]{1,0:T(8,128)}', space=vmem, size = 0xc000, scoped, tag = 'scratch operand']
  %s0 = inlined_call_operand.vmem [shape: f32[96,162], index: 0, kind: input, shape index: {}]
  %s1 = inlined_call_operand.vmem [shape: f32[96,32], index: 1, kind: input, shape index: {}]
  %s2 = inlined_call_operand.vmem [shape: f32[2,96], index: 2, kind: input, shape index: {}]
  %s3 = inlined_call_operand.vmem [shape: bf16[162,32], index: 3, kind: input, shape index: {}]
  %s4 = inlined_call_operand.vmem [shape: bf16[2,32,96], index: 4, kind: input, shape index: {}]
  %s5 = inlined_call_operand.vmem [shape: f32[2,1,96], index: 5, kind: input, shape index: {}]
  %s6 = inlined_call_operand.vmem [shape: bf16[2,32,32], index: 6, kind: input, shape index: {}]
  %s7 = inlined_call_operand.vmem [shape: bf16[2,2,32,32], index: 7, kind: input, shape index: {}]
  %s8 = inlined_call_operand.vmem [shape: f32[2,8,32], index: 8, kind: input, shape index: {}]
  %s9 = inlined_call_operand.hbm [shape: f32[1,2,32], index: 9, kind: output, shape index: {}]
  %s10 = sld [smem:[#allocation0]]
  $region46: #{tpu_custom_call.1} parent=0
    _
  %s12 = ssub.s32 1, %s10
  %s13 = scalar_select 0, %s12, %s10
  $region1: #{tpu_custom_call.1} parent=0
    #allocation3 [shape = 'u8[1024]{0}', space=vmem, size = 0x400, scoped, tag = 'output window, operand 0, single buffered']
    #allocation4 [shape = 's32[1]{0}', space=sflag, size = 0x4, scoped, tag = 'scoped memory for tpu_custom_call.1']
    %14 = vsyncpa [#allocation4], 0
    // Predicated region
    $region2: #{tpu_custom_call.1} parent=1 // pred_check
      _
    $region3: #{tpu_custom_call.1} parent=1 // pred_check_branch
      %16 = sbr.rel (0) target = $region5
    $region4: #{tpu_custom_call.1} parent=1 // pred_region
      _
    $region5: #{tpu_custom_call.1} parent=1 // pred_fallthru
      _
    // Predicated region
    $region6: #{tpu_custom_call.1} parent=1 // pred_check
      _
    $region7: #{tpu_custom_call.1} parent=1 // pred_check_branch
      %18 = sbr.rel (0) target = $region9
    $region8: #{tpu_custom_call.1} parent=1 // pred_region
      _
    $region9: #{tpu_custom_call.1} parent=1 // pred_fallthru
      _
    // Predicated region
    $region10: #{tpu_custom_call.1} parent=1 // pred_check
      _
    $region11: #{tpu_custom_call.1} parent=1 // pred_check_branch
      %20 = sbr.rel (0) target = $region13
    $region12: #{tpu_custom_call.1} parent=1 // pred_region
      _
    $region13: #{tpu_custom_call.1} parent=1 // pred_fallthru
      _
    // Predicated region
    $region14: #{tpu_custom_call.1} parent=1 // pred_check
      _
    $region15: #{tpu_custom_call.1} parent=1 // pred_check_branch
      %22 = sbr.rel (0) target = $region17
    $region16: #{tpu_custom_call.1} parent=1 // pred_region
      _
    $region17: #{tpu_custom_call.1} parent=1 // pred_fallthru
      _
    // Predicated region
    $region18: #{tpu_custom_call.1} parent=1 // pred_check
      _
    $region19: #{tpu_custom_call.1} parent=1 // pred_check_branch
      %24 = sbr.rel (0) target = $region21
    $region20: #{tpu_custom_call.1} parent=1 // pred_region
      _
    $region21: #{tpu_custom_call.1} parent=1 // pred_fallthru
      _
    // Predicated region
    $region22: #{tpu_custom_call.1} parent=1 // pred_check
      _
    $region23: #{tpu_custom_call.1} parent=1 // pred_check_branch
      %26 = sbr.rel (0) target = $region25
    $region24: #{tpu_custom_call.1} parent=1 // pred_region
      _
    $region25: #{tpu_custom_call.1} parent=1 // pred_fallthru
      _
    // Predicated region
    $region26: #{tpu_custom_call.1} parent=1 // pred_check
      _
    $region27: #{tpu_custom_call.1} parent=1 // pred_check_branch
      %28 = sbr.rel (0) target = $region29
    $region28: #{tpu_custom_call.1} parent=1 // pred_region
      _
    $region29: #{tpu_custom_call.1} parent=1 // pred_fallthru
      _
    // Predicated region
    $region30: #{tpu_custom_call.1} parent=1 // pred_check
      _
    $region31: #{tpu_custom_call.1} parent=1 // pred_check_branch
      %30 = sbr.rel (0) target = $region33
    $region32: #{tpu_custom_call.1} parent=1 // pred_region
      _
    $region33: #{tpu_custom_call.1} parent=1 // pred_fallthru
      _
    // Predicated region
    $region34: #{tpu_custom_call.1} parent=1 // pred_check
      _
    $region35: #{tpu_custom_call.1} parent=1 // pred_check_branch
      %32 = sbr.rel (0) target = $region37
    $region36: #{tpu_custom_call.1} parent=1 // pred_region
      _
    $region37: #{tpu_custom_call.1} parent=1 // pred_fallthru
      _
    %v34 = vld [vmem:[%s0] sm:$0xff]
    %v35 = vld [vmem:[%s0 + $0x8] sm:$0xff]
    %v36 = vld [vmem:[%s0 + $0x10] sm:$0xff]
    %v37 = vld [vmem:[%s0 + $0x18] sm:$0xff]
    %v38 = vld [vmem:[%s0 + $0x20] sm:$0xff]
    %v39 = vld [vmem:[%s0 + $0x28] sm:$0xff]
    %v40 = vld [vmem:[%s0 + $0x30] sm:$0xff]
    %v41 = vld [vmem:[%s0 + $0x38] sm:$0xff]
    %v42 = vld [vmem:[%s0 + $0x40] sm:$0xff]
    %v43 = vld [vmem:[%s0 + $0x48] sm:$0xff]
    %v44 = vld [vmem:[%s0 + $0x50] sm:$0xff]
    %v45 = vld [vmem:[%s0 + $0x58] sm:$0xff]
    %v46 = vld [vmem:[%s0 + $0x60] sm:$0xff]
    %v47 = vld [vmem:[%s0 + $0x68] sm:$0xff]
    %v48 = vld [vmem:[%s0 + $0x70] sm:$0xff]
    %v49 = vld [vmem:[%s0 + $0x78] sm:$0xff]
    %v50 = vld [vmem:[%s0 + $0x80] sm:$0xff]
    %v51 = vld [vmem:[%s0 + $0x88] sm:$0xff]
    %v52 = vld [vmem:[%s0 + $0x90] sm:$0xff]
    %v53 = vld [vmem:[%s0 + $0x98] sm:$0xff]
    %v54 = vld [vmem:[%s0 + $0xa0] sm:$0xff]
    %v55 = vld [vmem:[%s0 + $0xa8] sm:$0xff]
    %v56 = vld [vmem:[%s0 + $0xb0] sm:$0xff]
    %v57 = vld [vmem:[%s0 + $0xb8] sm:$0xff]
    %v58 = vpack.c.bf16 %v36, %v34
    %v59 = vpack.c.bf16 %v37, %v35
    %v60 = vpack.c.bf16 %v40, %v38
    %v61 = vpack.c.bf16 %v41, %v39
    %v62 = vpack.c.bf16 %v44, %v42
    %v63 = vpack.c.bf16 %v45, %v43
    %v64 = vpack.c.bf16 %v48, %v46
    %v65 = vpack.c.bf16 %v49, %v47
    %v66 = vpack.c.bf16 %v52, %v50
    %v67 = vpack.c.bf16 %v53, %v51
    %v68 = vpack.c.bf16 %v56, %v54
    %v69 = vpack.c.bf16 %v57, %v55
    %v70 = vld [vmem:[%s3] sm:$0xf]
    %v71 = vld [vmem:[%s3 + $0x4] sm:$0xf]
    %v72 = vld [vmem:[%s3 + $0x8] sm:$0xf]
    %v73 = vld [vmem:[%s3 + $0xc] sm:$0xf]
    %v74 = vld [vmem:[%s3 + $0x10] sm:$0xf]
    %v75 = vld [vmem:[%s3 + $0x14] sm:$0xf]
    %v76 = vld [vmem:[%s3 + $0x18] sm:$0xf]
    %v77 = vld [vmem:[%s3 + $0x1c] sm:$0xf]
    %v78 = vld [vmem:[%s3 + $0x20] sm:$0xf]
    %v79 = vld [vmem:[%s3 + $0x24] sm:$0xf]
    %v80 = vld [vmem:[%s3 + $0x28] sm:$0xf]
    %v81 = vld [vmem:[%s3 + $0x2c] sm:$0xf]
    %v82 = vld [vmem:[%s3 + $0x30] sm:$0xf]
    %v83 = vld [vmem:[%s3 + $0x34] sm:$0xf]
    %v84 = vld [vmem:[%s3 + $0x38] sm:$0xf]
    %v85 = vld [vmem:[%s3 + $0x3c] sm:$0xf]
    %v86 = vld [vmem:[%s3 + $0x40] sm:$0xf]
    %v87 = vld [vmem:[%s3 + $0x44] sm:$0xf]
    %v88 = vld [vmem:[%s3 + $0x48] sm:$0xf]
    %v89 = vld [vmem:[%s3 + $0x4c] sm:$0xf]
    %v90 = vld [vmem:[%s3 + $0x50] sm:$0x1]
    %v91 = vld [vmem:[%s1] sm:$0xff]
    %v92 = vld [vmem:[%s1 + $0x8] sm:$0xff]
    %v93 = vld [vmem:[%s1 + $0x10] sm:$0xff]
    %v94 = vld [vmem:[%s1 + $0x18] sm:$0xff]
    %v95 = vld [vmem:[%s1 + $0x20] sm:$0xff]
    %v96 = vld [vmem:[%s1 + $0x28] sm:$0xff]
    %v97 = vld [vmem:[%s1 + $0x30] sm:$0xff]
    %v98 = vld [vmem:[%s1 + $0x38] sm:$0xff]
    %v99 = vld [vmem:[%s1 + $0x40] sm:$0xff]
    %v100 = vld [vmem:[%s1 + $0x48] sm:$0xff]
    %v101 = vld [vmem:[%s1 + $0x50] sm:$0xff]
    %v102 = vld [vmem:[%s1 + $0x58] sm:$0xff]
    %v124 = vunpack.c.l.b16 %v70
    %v125 = vunpack.c.l.b16 %v71
    %v126 = vunpack.c.l.b16 %v72
    %v127 = vunpack.c.l.b16 %v73
    %v128 = vunpack.c.l.b16 %v74
    %v129 = vunpack.c.l.b16 %v75
    %v130 = vunpack.c.l.b16 %v76
    %v131 = vunpack.c.l.b16 %v77
    %v132 = vunpack.c.l.b16 %v78
    %v133 = vunpack.c.l.b16 %v79
    %v134 = vunpack.c.l.b16 %v80
    %v135 = vunpack.c.l.b16 %v81
    %v136 = vunpack.c.l.b16 %v82
    %v137 = vunpack.c.l.b16 %v83
    %v138 = vunpack.c.l.b16 %v84
    %v139 = vunpack.c.l.b16 %v85
    %v140 = vunpack.c.l.b16 %v86
    %v141 = vunpack.c.l.b16 %v87
    %v142 = vunpack.c.l.b16 %v88
    %v143 = vunpack.c.l.b16 %v89
    %v144 = vunpack.c.l.b16 %v90
    %v145 = vpack.c.b16 %v125, %v124
    %v146 = vpack.c.b16 %v127, %v126
    %v147 = vpack.c.b16 %v129, %v128
    %v148 = vpack.c.b16 %v131, %v130
    %v149 = vpack.c.b16 %v133, %v132
    %v150 = vpack.c.b16 %v135, %v134
    %v151 = vpack.c.b16 %v137, %v136
    %v152 = vpack.c.b16 %v139, %v138
    %v153 = vpack.c.b16 %v141, %v140
    %v154 = vpack.c.b16 %v143, %v142
    %v155 = vpack.c.b16 %v144, %v144
    %vm166 = vcmask 277504
    %v168 = vsel %vm166, %v59, 0
    %v171 = vsel %vm166, %v61, 0
    %v174 = vsel %vm166, %v63, 0
    %v177 = vsel %vm166, %v65, 0
    %v180 = vsel %vm166, %v67, 0
    %v183 = vsel %vm166, %v69, 0
    %vm185 = vcmask 1040384
    %v187 = vsel %vm185, %v155, 0
    %189 = vmatprep.subr.bf16.mxu0 0
    %190 = vmatpush1.bf16.msra.mxu0 %v145
    %191 = vmatprep.subr.bf16.mxu0 0
    %192 = vmatpush1.bf16.msra.mxu0 %v146
    %193 = vmatprep.subr.bf16.mxu0 0
    %194 = vmatpush1.bf16.msra.mxu0 %v147
    %195 = vmatprep.subr.bf16.mxu0 0
    %196 = vmatpush1.bf16.msra.mxu0 %v148
    %197 = vmatprep.subr.bf16.mxu0 0
    %198 = vmatpush1.bf16.msra.mxu0 %v149
    %199 = vmatprep.subr.bf16.mxu0 0
    %200 = vmatpush1.bf16.msra.mxu0 %v150
    %201 = vmatprep.subr.bf16.mxu0 0
    %202 = vmatpush1.bf16.msra.mxu0 %v151
    %203 = vmatprep.subr.bf16.mxu0 0
    %204 = vmatpush1.bf16.msra.mxu0 %v152
    %205 = vmatprep.subr.bf16.mxu0 0
    %206 = vmatpush1.bf16.msra.mxu0 %v153
    %207 = vmatprep.subr.bf16.mxu0 0
    %208 = vmatpush1.bf16.msra.mxu0 %v154
    %209 = vmatprep.subr.bf16.mxu0 0
    %210 = vmatpush1.bf16.msra.mxu0 %v187
    %211 = vmatprep.subr.bf16.mxu0 0
    %212 = vmatpush1.bf16.msra.mxu0 0
    %213 = vmatprep.subr.bf16.mxu0 0
    %214 = vmatpush1.bf16.msra.mxu0 0
    %215 = vmatprep.subr.bf16.mxu0 0
    %216 = vmatpush1.bf16.msra.mxu0 0
    %217 = vmatprep.subr.bf16.mxu0 0
    %218 = vmatpush1.bf16.msra.mxu0 0
    %219 = vmatprep.subr.bf16.mxu0 0
    %220 = vmatpush1.bf16.msra.mxu0 0
    %221 = vmatprep.mubr.bf16.mxu0 %v168
    %222 = vmatmul.mubr.bf16.gmra.mrb[0].mxu0 %v58
    %v223 = vpop.f32.mrb[0].mxu0
    %v224 = vadd.f32 %v91, %v223
    %v225 = vpop.f32.mrb[0].mxu0
    %v226 = vpop.f32.mrb[0].mxu0
    %v227 = vadd.f32 %v92, %v226
    %v228 = vpop.f32.mrb[0].mxu0
    %229 = vmatprep.mubr.bf16.mxu0 %v171
    %230 = vmatmul.mubr.bf16.gmra.mrb[0].mxu0 %v60
    %v231 = vpop.f32.mrb[0].mxu0
    %v232 = vadd.f32 %v93, %v231
    %v233 = vpop.f32.mrb[0].mxu0
    %v234 = vpop.f32.mrb[0].mxu0
    %v235 = vadd.f32 %v94, %v234
    %v236 = vpop.f32.mrb[0].mxu0
    %237 = vmatprep.mubr.bf16.mxu0 %v174
    %238 = vmatmul.mubr.bf16.gmra.mrb[0].mxu0 %v62
    %v239 = vpop.f32.mrb[0].mxu0
    %v240 = vadd.f32 %v95, %v239
    %v241 = vpop.f32.mrb[0].mxu0
    %v242 = vpop.f32.mrb[0].mxu0
    %v243 = vadd.f32 %v96, %v242
    %v244 = vpop.f32.mrb[0].mxu0
    %245 = vmatprep.mubr.bf16.mxu0 %v177
    %246 = vmatmul.mubr.bf16.gmra.mrb[0].mxu0 %v64
    %v247 = vpop.f32.mrb[0].mxu0
    %v248 = vadd.f32 %v97, %v247
    %v249 = vpop.f32.mrb[0].mxu0
    %v250 = vpop.f32.mrb[0].mxu0
    %v251 = vadd.f32 %v98, %v250
    %v252 = vpop.f32.mrb[0].mxu0
    %253 = vmatprep.mubr.bf16.mxu0 %v180
    %254 = vmatmul.mubr.bf16.gmra.mrb[0].mxu0 %v66
    %v255 = vpop.f32.mrb[0].mxu0
    %v256 = vadd.f32 %v99, %v255
    %v257 = vpop.f32.mrb[0].mxu0
    %v258 = vpop.f32.mrb[0].mxu0
    %v259 = vadd.f32 %v100, %v258
    %v260 = vpop.f32.mrb[0].mxu0
    %261 = vmatprep.mubr.bf16.mxu0 %v183
    %262 = vmatmul.mubr.bf16.gmra.mrb[0].mxu0 %v68
    %v263 = vpop.f32.mrb[0].mxu0
    %v264 = vadd.f32 %v101, %v263
    %v265 = vpop.f32.mrb[0].mxu0
    %v266 = vpop.f32.mrb[0].mxu0
    %v267 = vadd.f32 %v102, %v266
    %v268 = vpop.f32.mrb[0].mxu0
    %269 = vdwg.mxu0
    %v270 = vld [vmem:[%s8] sm:$0xff]
    %v271 = vpack.c.bf16 %v227, %v224
    %v272 = vpack.c.bf16 %v235, %v232
    %v273 = vpack.c.bf16 %v243, %v240
    %v274 = vpack.c.bf16 %v251, %v248
    %v275 = vpack.c.bf16 %v259, %v256
    %v276 = vpack.c.bf16 %v267, %v264
    %v277 = vld [vmem:[%s4] sm:$0xf]
    %v278 = vld [vmem:[%s4 + $0x4] sm:$0xf]
    %v279 = vld [vmem:[%s4 + $0x8] sm:$0xf]
    %v280 = vld [vmem:[%s4 + $0xc] sm:$0xf]
    %v281 = vld [vmem:[%s5] sm:$0x1]
    %v283 = vlaneseq
    %v284 = vshrl.u32 %v283, 7
    %v285 = vsub.s32 0, %v284
    %v286 = vrot.slane %v281, %v285
    %v292 = vunpack.c.l.b16 %v277
    %v293 = vunpack.c.l.b16 %v278
    %v294 = vunpack.c.l.b16 %v279
    %v295 = vunpack.c.l.b16 %v280
    %v296 = vpack.c.b16 %v293, %v292
    %v297 = vpack.c.b16 %v295, %v294
    %vm300 = vcmask 261120
    %v302 = vsel %vm300, %v271, 0
    %v305 = vsel %vm300, %v272, 0
    %v308 = vsel %vm300, %v273, 0
    %v311 = vsel %vm300, %v274, 0
    %v314 = vsel %vm300, %v275, 0
    %v317 = vsel %vm300, %v276, 0
    %319 = vmatprep.subr.bf16.mxu0 0
    %320 = vmatpush1.bf16.msra.mxu0 %v296
    %321 = vmatprep.subr.bf16.mxu0 0
    %322 = vmatpush1.bf16.msra.mxu0 %v297
    %323 = vmatprep.subr.bf16.mxu0 0
    %324 = vmatpush1.bf16.msra.mxu0 0
    %325 = vmatprep.subr.bf16.mxu0 0
    %326 = vmatpush1.bf16.msra.mxu0 0
    %327 = vmatprep.subr.bf16.mxu0 0
    %328 = vmatpush1.bf16.msra.mxu0 0
    %329 = vmatprep.subr.bf16.mxu0 0
    %330 = vmatpush1.bf16.msra.mxu0 0
    %331 = vmatprep.subr.bf16.mxu0 0
    %332 = vmatpush1.bf16.msra.mxu0 0
    %333 = vmatprep.subr.bf16.mxu0 0
    %334 = vmatpush1.bf16.msra.mxu0 0
    %335 = vmatprep.subr.bf16.mxu0 0
    %336 = vmatpush1.bf16.msra.mxu0 0
    %337 = vmatprep.subr.bf16.mxu0 0
    %338 = vmatpush1.bf16.msra.mxu0 0
    %339 = vmatprep.subr.bf16.mxu0 0
    %340 = vmatpush1.bf16.msra.mxu0 0
    %341 = vmatprep.subr.bf16.mxu0 0
    %342 = vmatpush1.bf16.msra.mxu0 0
    %343 = vmatprep.subr.bf16.mxu0 0
    %344 = vmatpush1.bf16.msra.mxu0 0
    %345 = vmatprep.subr.bf16.mxu0 0
    %346 = vmatpush1.bf16.msra.mxu0 0
    %347 = vmatprep.subr.bf16.mxu0 0
    %348 = vmatpush1.bf16.msra.mxu0 0
    %349 = vmatprep.subr.bf16.mxu0 0
    %350 = vmatpush1.bf16.msra.mxu0 0
    %351 = vmatprep.mubr.bf16.mxu0 0
    %352 = vmatmul.mubr.bf16.gmra.mrb[0].mxu0 %v302
    %v353 = vpop.f32.mrb[0].mxu0
    %v354 = vadd.f32 %v286, %v353
    %v355 = vpop.f32.mrb[0].mxu0
    %v356 = vpop.f32.mrb[0].mxu0
    %v357 = vadd.f32 %v286, %v356
    %v358 = vpop.f32.mrb[0].mxu0
    %359 = vmatprep.mubr.bf16.mxu0 0
    %360 = vmatmul.mubr.bf16.gmra.mrb[0].mxu0 %v305
    %v361 = vpop.f32.mrb[0].mxu0
    %v362 = vadd.f32 %v286, %v361
    %v363 = vpop.f32.mrb[0].mxu0
    %v364 = vpop.f32.mrb[0].mxu0
    %v365 = vadd.f32 %v286, %v364
    %v366 = vpop.f32.mrb[0].mxu0
    %367 = vmatprep.mubr.bf16.mxu0 0
    %368 = vmatmul.mubr.bf16.gmra.mrb[0].mxu0 %v308
    %v369 = vpop.f32.mrb[0].mxu0
    %v370 = vadd.f32 %v286, %v369
    %v371 = vpop.f32.mrb[0].mxu0
    %v372 = vpop.f32.mrb[0].mxu0
    %v373 = vadd.f32 %v286, %v372
    %v374 = vpop.f32.mrb[0].mxu0
    %375 = vmatprep.mubr.bf16.mxu0 0
    %376 = vmatmul.mubr.bf16.gmra.mrb[0].mxu0 %v311
    %v377 = vpop.f32.mrb[0].mxu0
    %v378 = vadd.f32 %v286, %v377
    %v379 = vpop.f32.mrb[0].mxu0
    %v380 = vpop.f32.mrb[0].mxu0
    %v381 = vadd.f32 %v286, %v380
    %v382 = vpop.f32.mrb[0].mxu0
    %383 = vmatprep.mubr.bf16.mxu0 0
    %384 = vmatmul.mubr.bf16.gmra.mrb[0].mxu0 %v314
    %v385 = vpop.f32.mrb[0].mxu0
    %v386 = vadd.f32 %v286, %v385
    %v387 = vpop.f32.mrb[0].mxu0
    %v388 = vpop.f32.mrb[0].mxu0
    %v389 = vadd.f32 %v286, %v388
    %v390 = vpop.f32.mrb[0].mxu0
    %391 = vmatprep.mubr.bf16.mxu0 0
    %392 = vmatmul.mubr.bf16.gmra.mrb[0].mxu0 %v317
    %v393 = vpop.f32.mrb[0].mxu0
    %v394 = vadd.f32 %v286, %v393
    %v395 = vpop.f32.mrb[0].mxu0
    %v396 = vpop.f32.mrb[0].mxu0
    %v397 = vadd.f32 %v286, %v396
    %v398 = vpop.f32.mrb[0].mxu0
    %399 = vdwg.mxu0
    %v400 = vpack.c.bf16 %v357, %v354
    %v401 = vpack.c.bf16 %v365, %v362
    %v402 = vpack.c.bf16 %v373, %v370
    %406 = vrot.lane.b32.xlu0 %v400, 96
    %v407 = vpop.permute.xlu0 %406
    %408 = vrot.lane.b32.xlu0 %v401, 96
    %v409 = vpop.permute.xlu0 %408
    %410 = vrot.lane.b32.xlu0 %v402, 96
    %v411 = vpop.permute.xlu0 %410
    %vm412 = vcmask 64512
    %v414 = vsel %vm412, %v400, 0
    %v417 = vsel %vm412, %v401, 0
    %v420 = vsel %vm412, %v402, 0
    %v423 = vsel %vm412, %v407, 0
    %v426 = vsel %vm412, %v409, 0
    %v429 = vsel %vm412, %v411, 0
    %431 = vmatprep.subr.bf16.mxu0 0
    %432 = vmatpush1.bf16.xpose.msra.mxu0 %v423
    %433 = vmatprep.subr.bf16.mxu0 0
    %434 = vmatpush1.bf16.xpose.msra.mxu0 %v426
    %435 = vmatprep.subr.bf16.mxu0 0
    %436 = vmatpush1.bf16.xpose.msra.mxu0 %v429
    %437 = vmatprep.subr.bf16.mxu0 0
    %438 = vmatpush1.bf16.xpose.msra.mxu0 0
    %439 = vmatprep.subr.bf16.mxu0 0
    %440 = vmatpush1.bf16.xpose.msra.mxu0 0
    %441 = vmatprep.subr.bf16.mxu0 0
    %442 = vmatpush1.bf16.xpose.msra.mxu0 0
    %443 = vmatprep.subr.bf16.mxu0 0
    %444 = vmatpush1.bf16.xpose.msra.mxu0 0
    %445 = vmatprep.subr.bf16.mxu0 0
    %446 = vmatpush1.bf16.xpose.msra.mxu0 0
    %447 = vmatprep.subr.bf16.mxu0 0
    %448 = vmatpush1.bf16.xpose.msra.mxu0 0
    %449 = vmatprep.subr.bf16.mxu0 0
    %450 = vmatpush1.bf16.xpose.msra.mxu0 0
    %451 = vmatprep.subr.bf16.mxu0 0
    %452 = vmatpush1.bf16.xpose.msra.mxu0 0
    %453 = vmatprep.subr.bf16.mxu0 0
    %454 = vmatpush1.bf16.xpose.msra.mxu0 0
    %455 = vmatprep.subr.bf16.mxu0 0
    %456 = vmatpush1.bf16.xpose.msra.mxu0 0
    %457 = vmatprep.subr.bf16.mxu0 0
    %458 = vmatpush1.bf16.xpose.msra.mxu0 0
    %459 = vmatprep.subr.bf16.mxu0 0
    %460 = vmatpush1.bf16.xpose.msra.mxu0 0
    %461 = vmatprep.subr.bf16.mxu0 0
    %462 = vmatpush1.bf16.xpose.msra.mxu0 0
    %463 = vmatprep.mubr.bf16.mxu0 0
    %464 = vmatmul.mubr.bf16.gmra.mrb[0].mxu0 %v414
    %v465 = vpop.f32.mrb[0].mxu0
    %v466 = vadd.f32 0.0, %v465
    %v467 = vpop.f32.mrb[0].mxu0
    %v468 = vpop.f32.mrb[0].mxu0
    %v469 = vadd.f32 0.0, %v468
    %v470 = vpop.f32.mrb[0].mxu0
    %471 = vmatprep.mubr.bf16.mxu0 0
    %472 = vmatmul.mubr.bf16.gmra.mrb[0].mxu0 %v417
    %v473 = vpop.f32.mrb[0].mxu0
    %v474 = vadd.f32 0.0, %v473
    %v475 = vpop.f32.mrb[0].mxu0
    %v476 = vpop.f32.mrb[0].mxu0
    %v477 = vadd.f32 0.0, %v476
    %v478 = vpop.f32.mrb[0].mxu0
    %479 = vmatprep.mubr.bf16.mxu0 0
    %480 = vmatmul.mubr.bf16.gmra.mrb[0].mxu0 %v420
    %v481 = vpop.f32.mrb[0].mxu0
    %v482 = vadd.f32 0.0, %v481
    %v483 = vpop.f32.mrb[0].mxu0
    %v484 = vpop.f32.mrb[0].mxu0
    %v485 = vadd.f32 0.0, %v484
    %v486 = vpop.f32.mrb[0].mxu0
    %487 = vdwg.mxu0
    %vm488 = vcmask 392192
    %v489 = vsel %vm488, %v466, -inf
    %490 = vmax.xlane.f32.xlu0 %v489
    %v491 = vpop.xlane.xlu0 %490
    %v492 = vsel %vm488, %v469, -inf
    %493 = vmax.xlane.f32.xlu0 %v492
    %v494 = vpop.xlane.xlu0 %493
    %v495 = vsel %vm488, %v474, -inf
    %496 = vmax.xlane.f32.xlu0 %v495
    %v497 = vpop.xlane.xlu0 %496
    %v498 = vsel %vm488, %v477, -inf
    %499 = vmax.xlane.f32.xlu0 %v498
    %v500 = vpop.xlane.xlu0 %499
    %v501 = vsel %vm488, %v482, -inf
    %502 = vmax.xlane.f32.xlu0 %v501
    %v503 = vpop.xlane.xlu0 %502
    %v504 = vsel %vm488, %v485, -inf
    %505 = vmax.xlane.f32.xlu0 %v504
    %v506 = vpop.xlane.xlu0 %505
    %v507 = vsub.f32 %v466, %v491
    %v508 = vsub.f32 %v469, %v494
    %v509 = vsub.f32 %v474, %v497
    %v510 = vsub.f32 %v477, %v500
    %v511 = vsub.f32 %v482, %v503
    %v512 = vsub.f32 %v485, %v506
    %v513 = vmul.f32 %v507, 1.442695
    %v514 = vpow.pop %v513
    %v515 = vmul.f32 %v508, 1.442695
    %v516 = vpow.pop %v515
    %v517 = vmul.f32 %v509, 1.442695
    %v518 = vpow.pop %v517
    %v519 = vmul.f32 %v510, 1.442695
    %v520 = vpow.pop %v519
    %v521 = vmul.f32 %v511, 1.442695
    %v522 = vpow.pop %v521
    %v523 = vmul.f32 %v512, 1.442695
    %v524 = vpow.pop %v523
    %v525 = vsel %vm488, %v514, 0.0
    %526 = vadd.xlane.f32.xlu0 %v525
    %v527 = vpop.xlane.xlu0 %526
    %v528 = vsel %vm488, %v516, 0.0
    %529 = vadd.xlane.f32.xlu0 %v528
    %v530 = vpop.xlane.xlu0 %529
    %v531 = vsel %vm488, %v518, 0.0
    %532 = vadd.xlane.f32.xlu0 %v531
    %v533 = vpop.xlane.xlu0 %532
    %v534 = vsel %vm488, %v520, 0.0
    %535 = vadd.xlane.f32.xlu0 %v534
    %v536 = vpop.xlane.xlu0 %535
    %v537 = vsel %vm488, %v522, 0.0
    %538 = vadd.xlane.f32.xlu0 %v537
    %v539 = vpop.xlane.xlu0 %538
    %v540 = vsel %vm488, %v524, 0.0
    %541 = vadd.xlane.f32.xlu0 %v540
    %v542 = vpop.xlane.xlu0 %541
    %v543 = vrcp.pop %v527
    %v544 = vrcp.pop %v530
    %v545 = vrcp.pop %v533
    %v546 = vrcp.pop %v536
    %v547 = vrcp.pop %v539
    %v548 = vrcp.pop %v542
    %v549 = vmul.f32 %v514, %v543
    %v550 = vmul.f32 %v516, %v544
    %v551 = vmul.f32 %v518, %v545
    %v552 = vmul.f32 %v520, %v546
    %v553 = vmul.f32 %v522, %v547
    %v554 = vmul.f32 %v524, %v548
    %v555 = vpack.c.bf16 %v550, %v549
    %v556 = vpack.c.bf16 %v552, %v551
    %v557 = vpack.c.bf16 %v554, %v553
    %558 = vrot.lane.b32.xlu0 %v400, 64
    %v559 = vpop.permute.xlu0 %558
    %560 = vrot.lane.b32.xlu0 %v401, 64
    %v561 = vpop.permute.xlu0 %560
    %562 = vrot.lane.b32.xlu0 %v402, 64
    %v563 = vpop.permute.xlu0 %562
    %v568 = vsel %vm488, %v555, 0
    %v571 = vsel %vm488, %v556, 0
    %v574 = vsel %vm488, %v557, 0
    %576 = vmatprep.subr.bf16.mxu0 0
    %577 = vmatpush1.bf16.msra.mxu0 %v559
    %578 = vmatprep.subr.bf16.mxu0 0
    %579 = vmatpush1.bf16.msra.mxu0 %v561
    %580 = vmatprep.subr.bf16.mxu0 0
    %581 = vmatpush1.bf16.msra.mxu0 %v563
    %582 = vmatprep.subr.bf16.mxu0 0
    %583 = vmatpush1.bf16.msra.mxu0 0
    %584 = vmatprep.subr.bf16.mxu0 0
    %585 = vmatpush1.bf16.msra.mxu0 0
    %586 = vmatprep.subr.bf16.mxu0 0
    %587 = vmatpush1.bf16.msra.mxu0 0
    %588 = vmatprep.subr.bf16.mxu0 0
    %589 = vmatpush1.bf16.msra.mxu0 0
    %590 = vmatprep.subr.bf16.mxu0 0
    %591 = vmatpush1.bf16.msra.mxu0 0
    %592 = vmatprep.subr.bf16.mxu0 0
    %593 = vmatpush1.bf16.msra.mxu0 0
    %594 = vmatprep.subr.bf16.mxu0 0
    %595 = vmatpush1.bf16.msra.mxu0 0
    %596 = vmatprep.subr.bf16.mxu0 0
    %597 = vmatpush1.bf16.msra.mxu0 0
    %598 = vmatprep.subr.bf16.mxu0 0
    %599 = vmatpush1.bf16.msra.mxu0 0
    %600 = vmatprep.subr.bf16.mxu0 0
    %601 = vmatpush1.bf16.msra.mxu0 0
    %602 = vmatprep.subr.bf16.mxu0 0
    %603 = vmatpush1.bf16.msra.mxu0 0
    %604 = vmatprep.subr.bf16.mxu0 0
    %605 = vmatpush1.bf16.msra.mxu0 0
    %606 = vmatprep.subr.bf16.mxu0 0
    %607 = vmatpush1.bf16.msra.mxu0 0
    %608 = vmatprep.mubr.bf16.mxu0 0
    %609 = vmatmul.mubr.bf16.gmra.mrb[0].mxu0 %v568
    %v610 = vpop.f32.mrb[0].mxu0
    %v611 = vadd.f32 0.0, %v610
    %v612 = vpop.f32.mrb[0].mxu0
    %v613 = vpop.f32.mrb[0].mxu0
    %v614 = vadd.f32 0.0, %v613
    %v615 = vpop.f32.mrb[0].mxu0
    %616 = vmatprep.mubr.bf16.mxu0 0
    %617 = vmatmul.mubr.bf16.gmra.mrb[0].mxu0 %v571
    %v618 = vpop.f32.mrb[0].mxu0
    %v619 = vadd.f32 0.0, %v618
    %v620 = vpop.f32.mrb[0].mxu0
    %v621 = vpop.f32.mrb[0].mxu0
    %v622 = vadd.f32 0.0, %v621
    %v623 = vpop.f32.mrb[0].mxu0
    %624 = vmatprep.mubr.bf16.mxu0 0
    %625 = vmatmul.mubr.bf16.gmra.mrb[0].mxu0 %v574
    %v626 = vpop.f32.mrb[0].mxu0
    %v627 = vadd.f32 0.0, %v626
    %v628 = vpop.f32.mrb[0].mxu0
    %v629 = vpop.f32.mrb[0].mxu0
    %v630 = vadd.f32 0.0, %v629
    %v631 = vpop.f32.mrb[0].mxu0
    %632 = vdwg.mxu0
    %633 = vst.msk [vmem:[#allocation2] sm:$0xff] %vm412, %v611
    %634 = vst.msk [vmem:[#allocation2 + $0x8] sm:$0xff] %vm412, %v614
    %635 = vst.msk [vmem:[#allocation2 + $0x10] sm:$0xff] %vm412, %v619
    %636 = vst.msk [vmem:[#allocation2 + $0x18] sm:$0xff] %vm412, %v622
    %637 = vst.msk [vmem:[#allocation2 + $0x20] sm:$0xff] %vm412, %v627
    %638 = vst.msk [vmem:[#allocation2 + $0x28] sm:$0xff] %vm412, %v630
    %639 = vrot.lane.b32.xlu0 %v400, 120
    %v640 = vpop.permute.xlu0 %639
    %641 = vrot.lane.b32.xlu0 %v401, 120
    %v642 = vpop.permute.xlu0 %641
    %643 = vrot.lane.b32.xlu0 %v402, 120
    %v644 = vpop.permute.xlu0 %643
    %645 = vrot.lane.b32.xlu0 %v400, 88
    %v646 = vpop.permute.xlu0 %645
    %647 = vrot.lane.b32.xlu0 %v401, 88
    %v648 = vpop.permute.xlu0 %647
    %649 = vrot.lane.b32.xlu0 %v402, 88
    %v650 = vpop.permute.xlu0 %649
    %v652 = vsel %vm412, %v640, 0
    %v655 = vsel %vm412, %v642, 0
    %v658 = vsel %vm412, %v644, 0
    %v661 = vsel %vm412, %v646, 0
    %v664 = vsel %vm412, %v648, 0
    %v667 = vsel %vm412, %v650, 0
    %669 = vmatprep.subr.bf16.mxu0 0
    %670 = vmatpush1.bf16.xpose.msra.mxu0 %v661
    %671 = vmatprep.subr.bf16.mxu0 0
    %672 = vmatpush1.bf16.xpose.msra.mxu0 %v664
    %673 = vmatprep.subr.bf16.mxu0 0
    %674 = vmatpush1.bf16.xpose.msra.mxu0 %v667
    %675 = vmatprep.subr.bf16.mxu0 0
    %676 = vmatpush1.bf16.xpose.msra.mxu0 0
    %677 = vmatprep.subr.bf16.mxu0 0
    %678 = vmatpush1.bf16.xpose.msra.mxu0 0
    %679 = vmatprep.subr.bf16.mxu0 0
    %680 = vmatpush1.bf16.xpose.msra.mxu0 0
    %681 = vmatprep.subr.bf16.mxu0 0
    %682 = vmatpush1.bf16.xpose.msra.mxu0 0
    %683 = vmatprep.subr.bf16.mxu0 0
    %684 = vmatpush1.bf16.xpose.msra.mxu0 0
    %685 = vmatprep.subr.bf16.mxu0 0
    %686 = vmatpush1.bf16.xpose.msra.mxu0 0
    %687 = vmatprep.subr.bf16.mxu0 0
    %688 = vmatpush1.bf16.xpose.msra.mxu0 0
    %689 = vmatprep.subr.bf16.mxu0 0
    %690 = vmatpush1.bf16.xpose.msra.mxu0 0
    %691 = vmatprep.subr.bf16.mxu0 0
    %692 = vmatpush1.bf16.xpose.msra.mxu0 0
    %693 = vmatprep.subr.bf16.mxu0 0
    %694 = vmatpush1.bf16.xpose.msra.mxu0 0
    %695 = vmatprep.subr.bf16.mxu0 0
    %696 = vmatpush1.bf16.xpose.msra.mxu0 0
    %697 = vmatprep.subr.bf16.mxu0 0
    %698 = vmatpush1.bf16.xpose.msra.mxu0 0
    %699 = vmatprep.subr.bf16.mxu0 0
    %700 = vmatpush1.bf16.xpose.msra.mxu0 0
    %701 = vmatprep.mubr.bf16.mxu0 0
    %702 = vmatmul.mubr.bf16.gmra.mrb[0].mxu0 %v652
    %v703 = vpop.f32.mrb[0].mxu0
    %v704 = vadd.f32 0.0, %v703
    %v705 = vpop.f32.mrb[0].mxu0
    %v706 = vpop.f32.mrb[0].mxu0
    %v707 = vadd.f32 0.0, %v706
    %v708 = vpop.f32.mrb[0].mxu0
    %709 = vmatprep.mubr.bf16.mxu0 0
    %710 = vmatmul.mubr.bf16.gmra.mrb[0].mxu0 %v655
    %v711 = vpop.f32.mrb[0].mxu0
    %v712 = vadd.f32 0.0, %v711
    %v713 = vpop.f32.mrb[0].mxu0
    %v714 = vpop.f32.mrb[0].mxu0
    %v715 = vadd.f32 0.0, %v714
    %v716 = vpop.f32.mrb[0].mxu0
    %717 = vmatprep.mubr.bf16.mxu0 0
    %718 = vmatmul.mubr.bf16.gmra.mrb[0].mxu0 %v658
    %v719 = vpop.f32.mrb[0].mxu0
    %v720 = vadd.f32 0.0, %v719
    %v721 = vpop.f32.mrb[0].mxu0
    %v722 = vpop.f32.mrb[0].mxu0
    %v723 = vadd.f32 0.0, %v722
    %v724 = vpop.f32.mrb[0].mxu0
    %725 = vdwg.mxu0
    %v726 = vsel %vm488, %v704, -inf
    %727 = vmax.xlane.f32.xlu0 %v726
    %v728 = vpop.xlane.xlu0 %727
    %v729 = vsel %vm488, %v707, -inf
    %730 = vmax.xlane.f32.xlu0 %v729
    %v731 = vpop.xlane.xlu0 %730
    %v732 = vsel %vm488, %v712, -inf
    %733 = vmax.xlane.f32.xlu0 %v732
    %v734 = vpop.xlane.xlu0 %733
    %v735 = vsel %vm488, %v715, -inf
    %736 = vmax.xlane.f32.xlu0 %v735
    %v737 = vpop.xlane.xlu0 %736
    %v738 = vsel %vm488, %v720, -inf
    %739 = vmax.xlane.f32.xlu0 %v738
    %v740 = vpop.xlane.xlu0 %739
    %v741 = vsel %vm488, %v723, -inf
    %742 = vmax.xlane.f32.xlu0 %v741
    %v743 = vpop.xlane.xlu0 %742
    %v744 = vsub.f32 %v704, %v728
    %v745 = vsub.f32 %v707, %v731
    %v746 = vsub.f32 %v712, %v734
    %v747 = vsub.f32 %v715, %v737
    %v748 = vsub.f32 %v720, %v740
    %v749 = vsub.f32 %v723, %v743
    %v750 = vmul.f32 %v744, 1.442695
    %v751 = vpow.pop %v750
    %v752 = vmul.f32 %v745, 1.442695
    %v753 = vpow.pop %v752
    %v754 = vmul.f32 %v746, 1.442695
    %v755 = vpow.pop %v754
    %v756 = vmul.f32 %v747, 1.442695
    %v757 = vpow.pop %v756
    %v758 = vmul.f32 %v748, 1.442695
    %v759 = vpow.pop %v758
    %v760 = vmul.f32 %v749, 1.442695
    %v761 = vpow.pop %v760
    %v762 = vsel %vm488, %v751, 0.0
    %763 = vadd.xlane.f32.xlu0 %v762
    %v764 = vpop.xlane.xlu0 %763
    %v765 = vsel %vm488, %v753, 0.0
    %766 = vadd.xlane.f32.xlu0 %v765
    %v767 = vpop.xlane.xlu0 %766
    %v768 = vsel %vm488, %v755, 0.0
    %769 = vadd.xlane.f32.xlu0 %v768
    %v770 = vpop.xlane.xlu0 %769
    %v771 = vsel %vm488, %v757, 0.0
    %772 = vadd.xlane.f32.xlu0 %v771
    %v773 = vpop.xlane.xlu0 %772
    %v774 = vsel %vm488, %v759, 0.0
    %775 = vadd.xlane.f32.xlu0 %v774
    %v776 = vpop.xlane.xlu0 %775
    %v777 = vsel %vm488, %v761, 0.0
    %778 = vadd.xlane.f32.xlu0 %v777
    %v779 = vpop.xlane.xlu0 %778
    %v780 = vrcp.pop %v764
    %v781 = vrcp.pop %v767
    %v782 = vrcp.pop %v770
    %v783 = vrcp.pop %v773
    %v784 = vrcp.pop %v776
    %v785 = vrcp.pop %v779
    %v786 = vmul.f32 %v751, %v780
    %v787 = vmul.f32 %v753, %v781
    %v788 = vmul.f32 %v755, %v782
    %v789 = vmul.f32 %v757, %v783
    %v790 = vmul.f32 %v759, %v784
    %v791 = vmul.f32 %v761, %v785
    %v792 = vpack.c.bf16 %v787, %v786
    %v793 = vpack.c.bf16 %v789, %v788
    %v794 = vpack.c.bf16 %v791, %v790
    %795 = vrot.lane.b32.xlu0 %v400, 56
    %v796 = vpop.permute.xlu0 %795
    %797 = vrot.lane.b32.xlu0 %v401, 56
    %v798 = vpop.permute.xlu0 %797
    %799 = vrot.lane.b32.xlu0 %v402, 56
    %v800 = vpop.permute.xlu0 %799
    %v805 = vsel %vm488, %v792, 0
    %v808 = vsel %vm488, %v793, 0
    %v811 = vsel %vm488, %v794, 0
    %813 = vmatprep.subr.bf16.mxu0 0
    %814 = vmatpush1.bf16.msra.mxu0 %v796
    %815 = vmatprep.subr.bf16.mxu0 0
    %816 = vmatpush1.bf16.msra.mxu0 %v798
    %817 = vmatprep.subr.bf16.mxu0 0
    %818 = vmatpush1.bf16.msra.mxu0 %v800
    %819 = vmatprep.subr.bf16.mxu0 0
    %820 = vmatpush1.bf16.msra.mxu0 0
    %821 = vmatprep.subr.bf16.mxu0 0
    %822 = vmatpush1.bf16.msra.mxu0 0
    %823 = vmatprep.subr.bf16.mxu0 0
    %824 = vmatpush1.bf16.msra.mxu0 0
    %825 = vmatprep.subr.bf16.mxu0 0
    %826 = vmatpush1.bf16.msra.mxu0 0
    %827 = vmatprep.subr.bf16.mxu0 0
    %828 = vmatpush1.bf16.msra.mxu0 0
    %829 = vmatprep.subr.bf16.mxu0 0
    %830 = vmatpush1.bf16.msra.mxu0 0
    %831 = vmatprep.subr.bf16.mxu0 0
    %832 = vmatpush1.bf16.msra.mxu0 0
    %833 = vmatprep.subr.bf16.mxu0 0
    %834 = vmatpush1.bf16.msra.mxu0 0
    %835 = vmatprep.subr.bf16.mxu0 0
    %836 = vmatpush1.bf16.msra.mxu0 0
    %837 = vmatprep.subr.bf16.mxu0 0
    %838 = vmatpush1.bf16.msra.mxu0 0
    %839 = vmatprep.subr.bf16.mxu0 0
    %840 = vmatpush1.bf16.msra.mxu0 0
    %841 = vmatprep.subr.bf16.mxu0 0
    %842 = vmatpush1.bf16.msra.mxu0 0
    %843 = vmatprep.subr.bf16.mxu0 0
    %844 = vmatpush1.bf16.msra.mxu0 0
    %845 = vmatprep.mubr.bf16.mxu0 0
    %846 = vmatmul.mubr.bf16.gmra.mrb[0].mxu0 %v805
    %v847 = vpop.f32.mrb[0].mxu0
    %v848 = vadd.f32 0.0, %v847
    %v849 = vpop.f32.mrb[0].mxu0
    %v850 = vpop.f32.mrb[0].mxu0
    %v851 = vadd.f32 0.0, %v850
    %v852 = vpop.f32.mrb[0].mxu0
    %853 = vmatprep.mubr.bf16.mxu0 0
    %854 = vmatmul.mubr.bf16.gmra.mrb[0].mxu0 %v808
    %v855 = vpop.f32.mrb[0].mxu0
    %v856 = vadd.f32 0.0, %v855
    %v857 = vpop.f32.mrb[0].mxu0
    %v858 = vpop.f32.mrb[0].mxu0
    %v859 = vadd.f32 0.0, %v858
    %v860 = vpop.f32.mrb[0].mxu0
    %861 = vmatprep.mubr.bf16.mxu0 0
    %862 = vmatmul.mubr.bf16.gmra.mrb[0].mxu0 %v811
    %v863 = vpop.f32.mrb[0].mxu0
    %v864 = vadd.f32 0.0, %v863
    %v865 = vpop.f32.mrb[0].mxu0
    %v866 = vpop.f32.mrb[0].mxu0
    %v867 = vadd.f32 0.0, %v866
    %v868 = vpop.f32.mrb[0].mxu0
    %869 = vdwg.mxu0
    %876 = vrot.lane.b32.xlu0 %v848, 8
    %v877 = vpop.permute.xlu0 %876
    %878 = vrot.lane.b32.xlu0 %v851, 8
    %v879 = vpop.permute.xlu0 %878
    %880 = vrot.lane.b32.xlu0 %v856, 8
    %v881 = vpop.permute.xlu0 %880
    %882 = vrot.lane.b32.xlu0 %v859, 8
    %v883 = vpop.permute.xlu0 %882
    %884 = vrot.lane.b32.xlu0 %v864, 8
    %v885 = vpop.permute.xlu0 %884
    %886 = vrot.lane.b32.xlu0 %v867, 8
    %v887 = vpop.permute.xlu0 %886
    %vm894 = vcmask 130112
    %895 = vst.msk [vmem:[#allocation2] sm:$0xff] %vm894, %v877
    %896 = vst.msk [vmem:[#allocation2 + $0x8] sm:$0xff] %vm894, %v879
    %897 = vst.msk [vmem:[#allocation2 + $0x10] sm:$0xff] %vm894, %v881
    %898 = vst.msk [vmem:[#allocation2 + $0x18] sm:$0xff] %vm894, %v883
    %899 = vst.msk [vmem:[#allocation2 + $0x20] sm:$0xff] %vm894, %v885
    %900 = vst.msk [vmem:[#allocation2 + $0x28] sm:$0xff] %vm894, %v887
    %901 = vrot.lane.b32.xlu0 %v400, 112
    %v902 = vpop.permute.xlu0 %901
    %903 = vrot.lane.b32.xlu0 %v401, 112
    %v904 = vpop.permute.xlu0 %903
    %905 = vrot.lane.b32.xlu0 %v402, 112
    %v906 = vpop.permute.xlu0 %905
    %907 = vrot.lane.b32.xlu0 %v400, 80
    %v908 = vpop.permute.xlu0 %907
    %909 = vrot.lane.b32.xlu0 %v401, 80
    %v910 = vpop.permute.xlu0 %909
    %911 = vrot.lane.b32.xlu0 %v402, 80
    %v912 = vpop.permute.xlu0 %911
    %v914 = vsel %vm412, %v902, 0
    %v917 = vsel %vm412, %v904, 0
    %v920 = vsel %vm412, %v906, 0
    %v923 = vsel %vm412, %v908, 0
    %v926 = vsel %vm412, %v910, 0
    %v929 = vsel %vm412, %v912, 0
    %931 = vmatprep.subr.bf16.mxu0 0
    %932 = vmatpush1.bf16.xpose.msra.mxu0 %v923
    %933 = vmatprep.subr.bf16.mxu0 0
    %934 = vmatpush1.bf16.xpose.msra.mxu0 %v926
    %935 = vmatprep.subr.bf16.mxu0 0
    %936 = vmatpush1.bf16.xpose.msra.mxu0 %v929
    %937 = vmatprep.subr.bf16.mxu0 0
    %938 = vmatpush1.bf16.xpose.msra.mxu0 0
    %939 = vmatprep.subr.bf16.mxu0 0
    %940 = vmatpush1.bf16.xpose.msra.mxu0 0
    %941 = vmatprep.subr.bf16.mxu0 0
    %942 = vmatpush1.bf16.xpose.msra.mxu0 0
    %943 = vmatprep.subr.bf16.mxu0 0
    %944 = vmatpush1.bf16.xpose.msra.mxu0 0
    %945 = vmatprep.subr.bf16.mxu0 0
    %946 = vmatpush1.bf16.xpose.msra.mxu0 0
    %947 = vmatprep.subr.bf16.mxu0 0
    %948 = vmatpush1.bf16.xpose.msra.mxu0 0
    %949 = vmatprep.subr.bf16.mxu0 0
    %950 = vmatpush1.bf16.xpose.msra.mxu0 0
    %951 = vmatprep.subr.bf16.mxu0 0
    %952 = vmatpush1.bf16.xpose.msra.mxu0 0
    %953 = vmatprep.subr.bf16.mxu0 0
    %954 = vmatpush1.bf16.xpose.msra.mxu0 0
    %955 = vmatprep.subr.bf16.mxu0 0
    %956 = vmatpush1.bf16.xpose.msra.mxu0 0
    %957 = vmatprep.subr.bf16.mxu0 0
    %958 = vmatpush1.bf16.xpose.msra.mxu0 0
    %959 = vmatprep.subr.bf16.mxu0 0
    %960 = vmatpush1.bf16.xpose.msra.mxu0 0
    %961 = vmatprep.subr.bf16.mxu0 0
    %962 = vmatpush1.bf16.xpose.msra.mxu0 0
    %963 = vmatprep.mubr.bf16.mxu0 0
    %964 = vmatmul.mubr.bf16.gmra.mrb[0].mxu0 %v914
    %v965 = vpop.f32.mrb[0].mxu0
    %v966 = vadd.f32 0.0, %v965
    %v967 = vpop.f32.mrb[0].mxu0
    %v968 = vpop.f32.mrb[0].mxu0
    %v969 = vadd.f32 0.0, %v968
    %v970 = vpop.f32.mrb[0].mxu0
    %971 = vmatprep.mubr.bf16.mxu0 0
    %972 = vmatmul.mubr.bf16.gmra.mrb[0].mxu0 %v917
    %v973 = vpop.f32.mrb[0].mxu0
    %v974 = vadd.f32 0.0, %v973
    %v975 = vpop.f32.mrb[0].mxu0
    %v976 = vpop.f32.mrb[0].mxu0
    %v977 = vadd.f32 0.0, %v976
    %v978 = vpop.f32.mrb[0].mxu0
    %979 = vmatprep.mubr.bf16.mxu0 0
    %980 = vmatmul.mubr.bf16.gmra.mrb[0].mxu0 %v920
    %v981 = vpop.f32.mrb[0].mxu0
    %v982 = vadd.f32 0.0, %v981
    %v983 = vpop.f32.mrb[0].mxu0
    %v984 = vpop.f32.mrb[0].mxu0
    %v985 = vadd.f32 0.0, %v984
    %v986 = vpop.f32.mrb[0].mxu0
    %987 = vdwg.mxu0
    %v988 = vsel %vm488, %v966, -inf
    %989 = vmax.xlane.f32.xlu0 %v988
    %v990 = vpop.xlane.xlu0 %989
    %v991 = vsel %vm488, %v969, -inf
    %992 = vmax.xlane.f32.xlu0 %v991
    %v993 = vpop.xlane.xlu0 %992
    %v994 = vsel %vm488, %v974, -inf
    %995 = vmax.xlane.f32.xlu0 %v994
    %v996 = vpop.xlane.xlu0 %995
    %v997 = vsel %vm488, %v977, -inf
    %998 = vmax.xlane.f32.xlu0 %v997
    %v999 = vpop.xlane.xlu0 %998
    %v1000 = vsel %vm488, %v982, -inf
    %1001 = vmax.xlane.f32.xlu0 %v1000
    %v1002 = vpop.xlane.xlu0 %1001
    %v1003 = vsel %vm488, %v985, -inf
    %1004 = vmax.xlane.f32.xlu0 %v1003
    %v1005 = vpop.xlane.xlu0 %1004
    %v1006 = vsub.f32 %v966, %v990
    %v1007 = vsub.f32 %v969, %v993
    %v1008 = vsub.f32 %v974, %v996
    %v1009 = vsub.f32 %v977, %v999
    %v1010 = vsub.f32 %v982, %v1002
    %v1011 = vsub.f32 %v985, %v1005
    %v1012 = vmul.f32 %v1006, 1.442695
    %v1013 = vpow.pop %v1012
    %v1014 = vmul.f32 %v1007, 1.442695
    %v1015 = vpow.pop %v1014
    %v1016 = vmul.f32 %v1008, 1.442695
    %v1017 = vpow.pop %v1016
    %v1018 = vmul.f32 %v1009, 1.442695
    %v1019 = vpow.pop %v1018
    %v1020 = vmul.f32 %v1010, 1.442695
    %v1021 = vpow.pop %v1020
    %v1022 = vmul.f32 %v1011, 1.442695
    %v1023 = vpow.pop %v1022
    %v1024 = vsel %vm488, %v1013, 0.0
    %1025 = vadd.xlane.f32.xlu0 %v1024
    %v1026 = vpop.xlane.xlu0 %1025
    %v1027 = vsel %vm488, %v1015, 0.0
    %1028 = vadd.xlane.f32.xlu0 %v1027
    %v1029 = vpop.xlane.xlu0 %1028
    %v1030 = vsel %vm488, %v1017, 0.0
    %1031 = vadd.xlane.f32.xlu0 %v1030
    %v1032 = vpop.xlane.xlu0 %1031
    %v1033 = vsel %vm488, %v1019, 0.0
    %1034 = vadd.xlane.f32.xlu0 %v1033
    %v1035 = vpop.xlane.xlu0 %1034
    %v1036 = vsel %vm488, %v1021, 0.0
    %1037 = vadd.xlane.f32.xlu0 %v1036
    %v1038 = vpop.xlane.xlu0 %1037
    %v1039 = vsel %vm488, %v1023, 0.0
    %1040 = vadd.xlane.f32.xlu0 %v1039
    %v1041 = vpop.xlane.xlu0 %1040
    %v1042 = vrcp.pop %v1026
    %v1043 = vrcp.pop %v1029
    %v1044 = vrcp.pop %v1032
    %v1045 = vrcp.pop %v1035
    %v1046 = vrcp.pop %v1038
    %v1047 = vrcp.pop %v1041
    %v1048 = vmul.f32 %v1013, %v1042
    %v1049 = vmul.f32 %v1015, %v1043
    %v1050 = vmul.f32 %v1017, %v1044
    %v1051 = vmul.f32 %v1019, %v1045
    %v1052 = vmul.f32 %v1021, %v1046
    %v1053 = vmul.f32 %v1023, %v1047
    %v1054 = vpack.c.bf16 %v1049, %v1048
    %v1055 = vpack.c.bf16 %v1051, %v1050
    %v1056 = vpack.c.bf16 %v1053, %v1052
    %1057 = vrot.lane.b32.xlu0 %v400, 48
    %v1058 = vpop.permute.xlu0 %1057
    %1059 = vrot.lane.b32.xlu0 %v401, 48
    %v1060 = vpop.permute.xlu0 %1059
    %1061 = vrot.lane.b32.xlu0 %v402, 48
    %v1062 = vpop.permute.xlu0 %1061
    %v1067 = vsel %vm488, %v1054, 0
    %v1070 = vsel %vm488, %v1055, 0
    %v1073 = vsel %vm488, %v1056, 0
    %1075 = vmatprep.subr.bf16.mxu0 0
    %1076 = vmatpush1.bf16.msra.mxu0 %v1058
    %1077 = vmatprep.subr.bf16.mxu0 0
    %1078 = vmatpush1.bf16.msra.mxu0 %v1060
    %1079 = vmatprep.subr.bf16.mxu0 0
    %1080 = vmatpush1.bf16.msra.mxu0 %v1062
    %1081 = vmatprep.subr.bf16.mxu0 0
    %1082 = vmatpush1.bf16.msra.mxu0 0
    %1083 = vmatprep.subr.bf16.mxu0 0
    %1084 = vmatpush1.bf16.msra.mxu0 0
    %1085 = vmatprep.subr.bf16.mxu0 0
    %1086 = vmatpush1.bf16.msra.mxu0 0
    %1087 = vmatprep.subr.bf16.mxu0 0
    %1088 = vmatpush1.bf16.msra.mxu0 0
    %1089 = vmatprep.subr.bf16.mxu0 0
    %1090 = vmatpush1.bf16.msra.mxu0 0
    %1091 = vmatprep.subr.bf16.mxu0 0
    %1092 = vmatpush1.bf16.msra.mxu0 0
    %1093 = vmatprep.subr.bf16.mxu0 0
    %1094 = vmatpush1.bf16.msra.mxu0 0
    %1095 = vmatprep.subr.bf16.mxu0 0
    %1096 = vmatpush1.bf16.msra.mxu0 0
    %1097 = vmatprep.subr.bf16.mxu0 0
    %1098 = vmatpush1.bf16.msra.mxu0 0
    %1099 = vmatprep.subr.bf16.mxu0 0
    %1100 = vmatpush1.bf16.msra.mxu0 0
    %1101 = vmatprep.subr.bf16.mxu0 0
    %1102 = vmatpush1.bf16.msra.mxu0 0
    %1103 = vmatprep.subr.bf16.mxu0 0
    %1104 = vmatpush1.bf16.msra.mxu0 0
    %1105 = vmatprep.subr.bf16.mxu0 0
    %1106 = vmatpush1.bf16.msra.mxu0 0
    %1107 = vmatprep.mubr.bf16.mxu0 0
    %1108 = vmatmul.mubr.bf16.gmra.mrb[0].mxu0 %v1067
    %v1109 = vpop.f32.mrb[0].mxu0
    %v1110 = vadd.f32 0.0, %v1109
    %v1111 = vpop.f32.mrb[0].mxu0
    %v1112 = vpop.f32.mrb[0].mxu0
    %v1113 = vadd.f32 0.0, %v1112
    %v1114 = vpop.f32.mrb[0].mxu0
    %1115 = vmatprep.mubr.bf16.mxu0 0
    %1116 = vmatmul.mubr.bf16.gmra.mrb[0].mxu0 %v1070
    %v1117 = vpop.f32.mrb[0].mxu0
    %v1118 = vadd.f32 0.0, %v1117
    %v1119 = vpop.f32.mrb[0].mxu0
    %v1120 = vpop.f32.mrb[0].mxu0
    %v1121 = vadd.f32 0.0, %v1120
    %v1122 = vpop.f32.mrb[0].mxu0
    %1123 = vmatprep.mubr.bf16.mxu0 0
    %1124 = vmatmul.mubr.bf16.gmra.mrb[0].mxu0 %v1073
    %v1125 = vpop.f32.mrb[0].mxu0
    %v1126 = vadd.f32 0.0, %v1125
    %v1127 = vpop.f32.mrb[0].mxu0
    %v1128 = vpop.f32.mrb[0].mxu0
    %v1129 = vadd.f32 0.0, %v1128
    %v1130 = vpop.f32.mrb[0].mxu0
    %1131 = vdwg.mxu0
    %1138 = vrot.lane.b32.xlu0 %v1110, 16
    %v1139 = vpop.permute.xlu0 %1138
    %1140 = vrot.lane.b32.xlu0 %v1113, 16
    %v1141 = vpop.permute.xlu0 %1140
    %1142 = vrot.lane.b32.xlu0 %v1118, 16
    %v1143 = vpop.permute.xlu0 %1142
    %1144 = vrot.lane.b32.xlu0 %v1121, 16
    %v1145 = vpop.permute.xlu0 %1144
    %1146 = vrot.lane.b32.xlu0 %v1126, 16
    %v1147 = vpop.permute.xlu0 %1146
    %1148 = vrot.lane.b32.xlu0 %v1129, 16
    %v1149 = vpop.permute.xlu0 %1148
    %vm1156 = vcmask 195712
    %1157 = vst.msk [vmem:[#allocation2] sm:$0xff] %vm1156, %v1139
    %1158 = vst.msk [vmem:[#allocation2 + $0x8] sm:$0xff] %vm1156, %v1141
    %1159 = vst.msk [vmem:[#allocation2 + $0x10] sm:$0xff] %vm1156, %v1143
    %1160 = vst.msk [vmem:[#allocation2 + $0x18] sm:$0xff] %vm1156, %v1145
    %1161 = vst.msk [vmem:[#allocation2 + $0x20] sm:$0xff] %vm1156, %v1147
    %1162 = vst.msk [vmem:[#allocation2 + $0x28] sm:$0xff] %vm1156, %v1149
    %1163 = vrot.lane.b32.xlu0 %v400, 104
    %v1164 = vpop.permute.xlu0 %1163
    %1165 = vrot.lane.b32.xlu0 %v401, 104
    %v1166 = vpop.permute.xlu0 %1165
    %1167 = vrot.lane.b32.xlu0 %v402, 104
    %v1168 = vpop.permute.xlu0 %1167
    %1169 = vrot.lane.b32.xlu0 %v400, 72
    %v1170 = vpop.permute.xlu0 %1169
    %1171 = vrot.lane.b32.xlu0 %v401, 72
    %v1172 = vpop.permute.xlu0 %1171
    %1173 = vrot.lane.b32.xlu0 %v402, 72
    %v1174 = vpop.permute.xlu0 %1173
    %v1176 = vsel %vm412, %v1164, 0
    %v1179 = vsel %vm412, %v1166, 0
    %v1182 = vsel %vm412, %v1168, 0
    %v1185 = vsel %vm412, %v1170, 0
    %v1188 = vsel %vm412, %v1172, 0
    %v1191 = vsel %vm412, %v1174, 0
    %1193 = vmatprep.subr.bf16.mxu0 0
    %1194 = vmatpush1.bf16.xpose.msra.mxu0 %v1185
    %1195 = vmatprep.subr.bf16.mxu0 0
    %1196 = vmatpush1.bf16.xpose.msra.mxu0 %v1188
    %1197 = vmatprep.subr.bf16.mxu0 0
    %1198 = vmatpush1.bf16.xpose.msra.mxu0 %v1191
    %1199 = vmatprep.subr.bf16.mxu0 0
    %1200 = vmatpush1.bf16.xpose.msra.mxu0 0
    %1201 = vmatprep.subr.bf16.mxu0 0
    %1202 = vmatpush1.bf16.xpose.msra.mxu0 0
    %1203 = vmatprep.subr.bf16.mxu0 0
    %1204 = vmatpush1.bf16.xpose.msra.mxu0 0
    %1205 = vmatprep.subr.bf16.mxu0 0
    %1206 = vmatpush1.bf16.xpose.msra.mxu0 0
    %1207 = vmatprep.subr.bf16.mxu0 0
    %1208 = vmatpush1.bf16.xpose.msra.mxu0 0
    %1209 = vmatprep.subr.bf16.mxu0 0
    %1210 = vmatpush1.bf16.xpose.msra.mxu0 0
    %1211 = vmatprep.subr.bf16.mxu0 0
    %1212 = vmatpush1.bf16.xpose.msra.mxu0 0
    %1213 = vmatprep.subr.bf16.mxu0 0
    %1214 = vmatpush1.bf16.xpose.msra.mxu0 0
    %1215 = vmatprep.subr.bf16.mxu0 0
    %1216 = vmatpush1.bf16.xpose.msra.mxu0 0
    %1217 = vmatprep.subr.bf16.mxu0 0
    %1218 = vmatpush1.bf16.xpose.msra.mxu0 0
    %1219 = vmatprep.subr.bf16.mxu0 0
    %1220 = vmatpush1.bf16.xpose.msra.mxu0 0
    %1221 = vmatprep.subr.bf16.mxu0 0
    %1222 = vmatpush1.bf16.xpose.msra.mxu0 0
    %1223 = vmatprep.subr.bf16.mxu0 0
    %1224 = vmatpush1.bf16.xpose.msra.mxu0 0
    %1225 = vmatprep.mubr.bf16.mxu0 0
    %1226 = vmatmul.mubr.bf16.gmra.mrb[0].mxu0 %v1176
    %v1227 = vpop.f32.mrb[0].mxu0
    %v1228 = vadd.f32 0.0, %v1227
    %v1229 = vpop.f32.mrb[0].mxu0
    %v1230 = vpop.f32.mrb[0].mxu0
    %v1231 = vadd.f32 0.0, %v1230
    %v1232 = vpop.f32.mrb[0].mxu0
    %1233 = vmatprep.mubr.bf16.mxu0 0
    %1234 = vmatmul.mubr.bf16.gmra.mrb[0].mxu0 %v1179
    %v1235 = vpop.f32.mrb[0].mxu0
    %v1236 = vadd.f32 0.0, %v1235
    %v1237 = vpop.f32.mrb[0].mxu0
    %v1238 = vpop.f32.mrb[0].mxu0
    %v1239 = vadd.f32 0.0, %v1238
    %v1240 = vpop.f32.mrb[0].mxu0
    %1241 = vmatprep.mubr.bf16.mxu0 0
    %1242 = vmatmul.mubr.bf16.gmra.mrb[0].mxu0 %v1182
    %v1243 = vpop.f32.mrb[0].mxu0
    %v1244 = vadd.f32 0.0, %v1243
    %v1245 = vpop.f32.mrb[0].mxu0
    %v1246 = vpop.f32.mrb[0].mxu0
    %v1247 = vadd.f32 0.0, %v1246
    %v1248 = vpop.f32.mrb[0].mxu0
    %1249 = vdwg.mxu0
    %v1250 = vsel %vm488, %v1228, -inf
    %1251 = vmax.xlane.f32.xlu0 %v1250
    %v1252 = vpop.xlane.xlu0 %1251
    %v1253 = vsel %vm488, %v1231, -inf
    %1254 = vmax.xlane.f32.xlu0 %v1253
    %v1255 = vpop.xlane.xlu0 %1254
    %v1256 = vsel %vm488, %v1236, -inf
    %1257 = vmax.xlane.f32.xlu0 %v1256
    %v1258 = vpop.xlane.xlu0 %1257
    %v1259 = vsel %vm488, %v1239, -inf
    %1260 = vmax.xlane.f32.xlu0 %v1259
    %v1261 = vpop.xlane.xlu0 %1260
    %v1262 = vsel %vm488, %v1244, -inf
    %1263 = vmax.xlane.f32.xlu0 %v1262
    %v1264 = vpop.xlane.xlu0 %1263
    %v1265 = vsel %vm488, %v1247, -inf
    %1266 = vmax.xlane.f32.xlu0 %v1265
    %v1267 = vpop.xlane.xlu0 %1266
    %v1268 = vsub.f32 %v1228, %v1252
    %v1269 = vsub.f32 %v1231, %v1255
    %v1270 = vsub.f32 %v1236, %v1258
    %v1271 = vsub.f32 %v1239, %v1261
    %v1272 = vsub.f32 %v1244, %v1264
    %v1273 = vsub.f32 %v1247, %v1267
    %v1274 = vmul.f32 %v1268, 1.442695
    %v1275 = vpow.pop %v1274
    %v1276 = vmul.f32 %v1269, 1.442695
    %v1277 = vpow.pop %v1276
    %v1278 = vmul.f32 %v1270, 1.442695
    %v1279 = vpow.pop %v1278
    %v1280 = vmul.f32 %v1271, 1.442695
    %v1281 = vpow.pop %v1280
    %v1282 = vmul.f32 %v1272, 1.442695
    %v1283 = vpow.pop %v1282
    %v1284 = vmul.f32 %v1273, 1.442695
    %v1285 = vpow.pop %v1284
    %v1286 = vsel %vm488, %v1275, 0.0
    %1287 = vadd.xlane.f32.xlu0 %v1286
    %v1288 = vpop.xlane.xlu0 %1287
    %v1289 = vsel %vm488, %v1277, 0.0
    %1290 = vadd.xlane.f32.xlu0 %v1289
    %v1291 = vpop.xlane.xlu0 %1290
    %v1292 = vsel %vm488, %v1279, 0.0
    %1293 = vadd.xlane.f32.xlu0 %v1292
    %v1294 = vpop.xlane.xlu0 %1293
    %v1295 = vsel %vm488, %v1281, 0.0
    %1296 = vadd.xlane.f32.xlu0 %v1295
    %v1297 = vpop.xlane.xlu0 %1296
    %v1298 = vsel %vm488, %v1283, 0.0
    %1299 = vadd.xlane.f32.xlu0 %v1298
    %v1300 = vpop.xlane.xlu0 %1299
    %v1301 = vsel %vm488, %v1285, 0.0
    %1302 = vadd.xlane.f32.xlu0 %v1301
    %v1303 = vpop.xlane.xlu0 %1302
    %v1304 = vrcp.pop %v1288
    %v1305 = vrcp.pop %v1291
    %v1306 = vrcp.pop %v1294
    %v1307 = vrcp.pop %v1297
    %v1308 = vrcp.pop %v1300
    %v1309 = vrcp.pop %v1303
    %v1310 = vmul.f32 %v1275, %v1304
    %v1311 = vmul.f32 %v1277, %v1305
    %v1312 = vmul.f32 %v1279, %v1306
    %v1313 = vmul.f32 %v1281, %v1307
    %v1314 = vmul.f32 %v1283, %v1308
    %v1315 = vmul.f32 %v1285, %v1309
    %v1316 = vpack.c.bf16 %v1311, %v1310
    %v1317 = vpack.c.bf16 %v1313, %v1312
    %v1318 = vpack.c.bf16 %v1315, %v1314
    %1319 = vrot.lane.b32.xlu0 %v400, 40
    %v1320 = vpop.permute.xlu0 %1319
    %1321 = vrot.lane.b32.xlu0 %v401, 40
    %v1322 = vpop.permute.xlu0 %1321
    %1323 = vrot.lane.b32.xlu0 %v402, 40
    %v1324 = vpop.permute.xlu0 %1323
    %v1329 = vsel %vm488, %v1316, 0
    %v1332 = vsel %vm488, %v1317, 0
    %v1335 = vsel %vm488, %v1318, 0
    %1337 = vmatprep.subr.bf16.mxu0 0
    %1338 = vmatpush1.bf16.msra.mxu0 %v1320
    %1339 = vmatprep.subr.bf16.mxu0 0
    %1340 = vmatpush1.bf16.msra.mxu0 %v1322
    %1341 = vmatprep.subr.bf16.mxu0 0
    %1342 = vmatpush1.bf16.msra.mxu0 %v1324
    %1343 = vmatprep.subr.bf16.mxu0 0
    %1344 = vmatpush1.bf16.msra.mxu0 0
    %1345 = vmatprep.subr.bf16.mxu0 0
    %1346 = vmatpush1.bf16.msra.mxu0 0
    %1347 = vmatprep.subr.bf16.mxu0 0
    %1348 = vmatpush1.bf16.msra.mxu0 0
    %1349 = vmatprep.subr.bf16.mxu0 0
    %1350 = vmatpush1.bf16.msra.mxu0 0
    %1351 = vmatprep.subr.bf16.mxu0 0
    %1352 = vmatpush1.bf16.msra.mxu0 0
    %1353 = vmatprep.subr.bf16.mxu0 0
    %1354 = vmatpush1.bf16.msra.mxu0 0
    %1355 = vmatprep.subr.bf16.mxu0 0
    %1356 = vmatpush1.bf16.msra.mxu0 0
    %1357 = vmatprep.subr.bf16.mxu0 0
    %1358 = vmatpush1.bf16.msra.mxu0 0
    %1359 = vmatprep.subr.bf16.mxu0 0
    %1360 = vmatpush1.bf16.msra.mxu0 0
    %1361 = vmatprep.subr.bf16.mxu0 0
    %1362 = vmatpush1.bf16.msra.mxu0 0
    %1363 = vmatprep.subr.bf16.mxu0 0
    %1364 = vmatpush1.bf16.msra.mxu0 0
    %1365 = vmatprep.subr.bf16.mxu0 0
    %1366 = vmatpush1.bf16.msra.mxu0 0
    %1367 = vmatprep.subr.bf16.mxu0 0
    %1368 = vmatpush1.bf16.msra.mxu0 0
    %1369 = vmatprep.mubr.bf16.mxu0 0
    %1370 = vmatmul.mubr.bf16.gmra.mrb[0].mxu0 %v1329
    %v1371 = vpop.f32.mrb[0].mxu0
    %v1372 = vadd.f32 0.0, %v1371
    %v1373 = vpop.f32.mrb[0].mxu0
    %v1374 = vpop.f32.mrb[0].mxu0
    %v1375 = vadd.f32 0.0, %v1374
    %v1376 = vpop.f32.mrb[0].mxu0
    %1377 = vmatprep.mubr.bf16.mxu0 0
    %1378 = vmatmul.mubr.bf16.gmra.mrb[0].mxu0 %v1332
    %v1379 = vpop.f32.mrb[0].mxu0
    %v1380 = vadd.f32 0.0, %v1379
    %v1381 = vpop.f32.mrb[0].mxu0
    %v1382 = vpop.f32.mrb[0].mxu0
    %v1383 = vadd.f32 0.0, %v1382
    %v1384 = vpop.f32.mrb[0].mxu0
    %1385 = vmatprep.mubr.bf16.mxu0 0
    %1386 = vmatmul.mubr.bf16.gmra.mrb[0].mxu0 %v1335
    %v1387 = vpop.f32.mrb[0].mxu0
    %v1388 = vadd.f32 0.0, %v1387
    %v1389 = vpop.f32.mrb[0].mxu0
    %v1390 = vpop.f32.mrb[0].mxu0
    %v1391 = vadd.f32 0.0, %v1390
    %v1392 = vpop.f32.mrb[0].mxu0
    %1393 = vdwg.mxu0
    %1400 = vrot.lane.b32.xlu0 %v1372, 24
    %v1401 = vpop.permute.xlu0 %1400
    %1402 = vrot.lane.b32.xlu0 %v1375, 24
    %v1403 = vpop.permute.xlu0 %1402
    %1404 = vrot.lane.b32.xlu0 %v1380, 24
    %v1405 = vpop.permute.xlu0 %1404
    %1406 = vrot.lane.b32.xlu0 %v1383, 24
    %v1407 = vpop.permute.xlu0 %1406
    %1408 = vrot.lane.b32.xlu0 %v1388, 24
    %v1409 = vpop.permute.xlu0 %1408
    %1410 = vrot.lane.b32.xlu0 %v1391, 24
    %v1411 = vpop.permute.xlu0 %1410
    %vm1418 = vcmask 261312
    %1419 = vst.msk [vmem:[#allocation2] sm:$0xff] %vm1418, %v1401
    %1420 = vst.msk [vmem:[#allocation2 + $0x8] sm:$0xff] %vm1418, %v1403
    %1421 = vst.msk [vmem:[#allocation2 + $0x10] sm:$0xff] %vm1418, %v1405
    %1422 = vst.msk [vmem:[#allocation2 + $0x18] sm:$0xff] %vm1418, %v1407
    %1423 = vst.msk [vmem:[#allocation2 + $0x20] sm:$0xff] %vm1418, %v1409
    %1424 = vst.msk [vmem:[#allocation2 + $0x28] sm:$0xff] %vm1418, %v1411
    %v1425 = vpack.c.bf16 %v381, %v378
    %v1426 = vpack.c.bf16 %v389, %v386
    %v1427 = vpack.c.bf16 %v397, %v394
    %1431 = vrot.lane.b32.xlu0 %v1425, 96
    %v1432 = vpop.permute.xlu0 %1431
    %1433 = vrot.lane.b32.xlu0 %v1426, 96
    %v1434 = vpop.permute.xlu0 %1433
    %1435 = vrot.lane.b32.xlu0 %v1427, 96
    %v1436 = vpop.permute.xlu0 %1435
    %v1438 = vsel %vm412, %v1425, 0
    %v1441 = vsel %vm412, %v1426, 0
    %v1444 = vsel %vm412, %v1427, 0
    %v1447 = vsel %vm412, %v1432, 0
    %v1450 = vsel %vm412, %v1434, 0
    %v1453 = vsel %vm412, %v1436, 0
    %1455 = vmatprep.subr.bf16.mxu0 0
    %1456 = vmatpush1.bf16.xpose.msra.mxu0 %v1447
    %1457 = vmatprep.subr.bf16.mxu0 0
    %1458 = vmatpush1.bf16.xpose.msra.mxu0 %v1450
    %1459 = vmatprep.subr.bf16.mxu0 0
    %1460 = vmatpush1.bf16.xpose.msra.mxu0 %v1453
    %1461 = vmatprep.subr.bf16.mxu0 0
    %1462 = vmatpush1.bf16.xpose.msra.mxu0 0
    %1463 = vmatprep.subr.bf16.mxu0 0
    %1464 = vmatpush1.bf16.xpose.msra.mxu0 0
    %1465 = vmatprep.subr.bf16.mxu0 0
    %1466 = vmatpush1.bf16.xpose.msra.mxu0 0
    %1467 = vmatprep.subr.bf16.mxu0 0
    %1468 = vmatpush1.bf16.xpose.msra.mxu0 0
    %1469 = vmatprep.subr.bf16.mxu0 0
    %1470 = vmatpush1.bf16.xpose.msra.mxu0 0
    %1471 = vmatprep.subr.bf16.mxu0 0
    %1472 = vmatpush1.bf16.xpose.msra.mxu0 0
    %1473 = vmatprep.subr.bf16.mxu0 0
    %1474 = vmatpush1.bf16.xpose.msra.mxu0 0
    %1475 = vmatprep.subr.bf16.mxu0 0
    %1476 = vmatpush1.bf16.xpose.msra.mxu0 0
    %1477 = vmatprep.subr.bf16.mxu0 0
    %1478 = vmatpush1.bf16.xpose.msra.mxu0 0
    %1479 = vmatprep.subr.bf16.mxu0 0
    %1480 = vmatpush1.bf16.xpose.msra.mxu0 0
    %1481 = vmatprep.subr.bf16.mxu0 0
    %1482 = vmatpush1.bf16.xpose.msra.mxu0 0
    %1483 = vmatprep.subr.bf16.mxu0 0
    %1484 = vmatpush1.bf16.xpose.msra.mxu0 0
    %1485 = vmatprep.subr.bf16.mxu0 0
    %1486 = vmatpush1.bf16.xpose.msra.mxu0 0
    %1487 = vmatprep.mubr.bf16.mxu0 0
    %1488 = vmatmul.mubr.bf16.gmra.mrb[0].mxu0 %v1438
    %v1489 = vpop.f32.mrb[0].mxu0
    %v1490 = vadd.f32 0.0, %v1489
    %v1491 = vpop.f32.mrb[0].mxu0
    %v1492 = vpop.f32.mrb[0].mxu0
    %v1493 = vadd.f32 0.0, %v1492
    %v1494 = vpop.f32.mrb[0].mxu0
    %1495 = vmatprep.mubr.bf16.mxu0 0
    %1496 = vmatmul.mubr.bf16.gmra.mrb[0].mxu0 %v1441
    %v1497 = vpop.f32.mrb[0].mxu0
    %v1498 = vadd.f32 0.0, %v1497
    %v1499 = vpop.f32.mrb[0].mxu0
    %v1500 = vpop.f32.mrb[0].mxu0
    %v1501 = vadd.f32 0.0, %v1500
    %v1502 = vpop.f32.mrb[0].mxu0
    %1503 = vmatprep.mubr.bf16.mxu0 0
    %1504 = vmatmul.mubr.bf16.gmra.mrb[0].mxu0 %v1444
    %v1505 = vpop.f32.mrb[0].mxu0
    %v1506 = vadd.f32 0.0, %v1505
    %v1507 = vpop.f32.mrb[0].mxu0
    %v1508 = vpop.f32.mrb[0].mxu0
    %v1509 = vadd.f32 0.0, %v1508
    %v1510 = vpop.f32.mrb[0].mxu0
    %1511 = vdwg.mxu0
    %v1512 = vsel %vm488, %v1490, -inf
    %1513 = vmax.xlane.f32.xlu0 %v1512
    %v1514 = vpop.xlane.xlu0 %1513
    %v1515 = vsel %vm488, %v1493, -inf
    %1516 = vmax.xlane.f32.xlu0 %v1515
    %v1517 = vpop.xlane.xlu0 %1516
    %v1518 = vsel %vm488, %v1498, -inf
    %1519 = vmax.xlane.f32.xlu0 %v1518
    %v1520 = vpop.xlane.xlu0 %1519
    %v1521 = vsel %vm488, %v1501, -inf
    %1522 = vmax.xlane.f32.xlu0 %v1521
    %v1523 = vpop.xlane.xlu0 %1522
    %v1524 = vsel %vm488, %v1506, -inf
    %1525 = vmax.xlane.f32.xlu0 %v1524
    %v1526 = vpop.xlane.xlu0 %1525
    %v1527 = vsel %vm488, %v1509, -inf
    %1528 = vmax.xlane.f32.xlu0 %v1527
    %v1529 = vpop.xlane.xlu0 %1528
    %v1530 = vsub.f32 %v1490, %v1514
    %v1531 = vsub.f32 %v1493, %v1517
    %v1532 = vsub.f32 %v1498, %v1520
    %v1533 = vsub.f32 %v1501, %v1523
    %v1534 = vsub.f32 %v1506, %v1526
    %v1535 = vsub.f32 %v1509, %v1529
    %v1536 = vmul.f32 %v1530, 1.442695
    %v1537 = vpow.pop %v1536
    %v1538 = vmul.f32 %v1531, 1.442695
    %v1539 = vpow.pop %v1538
    %v1540 = vmul.f32 %v1532, 1.442695
    %v1541 = vpow.pop %v1540
    %v1542 = vmul.f32 %v1533, 1.442695
    %v1543 = vpow.pop %v1542
    %v1544 = vmul.f32 %v1534, 1.442695
    %v1545 = vpow.pop %v1544
    %v1546 = vmul.f32 %v1535, 1.442695
    %v1547 = vpow.pop %v1546
    %v1548 = vsel %vm488, %v1537, 0.0
    %1549 = vadd.xlane.f32.xlu0 %v1548
    %v1550 = vpop.xlane.xlu0 %1549
    %v1551 = vsel %vm488, %v1539, 0.0
    %1552 = vadd.xlane.f32.xlu0 %v1551
    %v1553 = vpop.xlane.xlu0 %1552
    %v1554 = vsel %vm488, %v1541, 0.0
    %1555 = vadd.xlane.f32.xlu0 %v1554
    %v1556 = vpop.xlane.xlu0 %1555
    %v1557 = vsel %vm488, %v1543, 0.0
    %1558 = vadd.xlane.f32.xlu0 %v1557
    %v1559 = vpop.xlane.xlu0 %1558
    %v1560 = vsel %vm488, %v1545, 0.0
    %1561 = vadd.xlane.f32.xlu0 %v1560
    %v1562 = vpop.xlane.xlu0 %1561
    %v1563 = vsel %vm488, %v1547, 0.0
    %1564 = vadd.xlane.f32.xlu0 %v1563
    %v1565 = vpop.xlane.xlu0 %1564
    %v1566 = vrcp.pop %v1550
    %v1567 = vrcp.pop %v1553
    %v1568 = vrcp.pop %v1556
    %v1569 = vrcp.pop %v1559
    %v1570 = vrcp.pop %v1562
    %v1571 = vrcp.pop %v1565
    %v1572 = vmul.f32 %v1537, %v1566
    %v1573 = vmul.f32 %v1539, %v1567
    %v1574 = vmul.f32 %v1541, %v1568
    %v1575 = vmul.f32 %v1543, %v1569
    %v1576 = vmul.f32 %v1545, %v1570
    %v1577 = vmul.f32 %v1547, %v1571
    %v1578 = vpack.c.bf16 %v1573, %v1572
    %v1579 = vpack.c.bf16 %v1575, %v1574
    %v1580 = vpack.c.bf16 %v1577, %v1576
    %1581 = vrot.lane.b32.xlu0 %v1425, 64
    %v1582 = vpop.permute.xlu0 %1581
    %1583 = vrot.lane.b32.xlu0 %v1426, 64
    %v1584 = vpop.permute.xlu0 %1583
    %1585 = vrot.lane.b32.xlu0 %v1427, 64
    %v1586 = vpop.permute.xlu0 %1585
    %v1591 = vsel %vm488, %v1578, 0
    %v1594 = vsel %vm488, %v1579, 0
    %v1597 = vsel %vm488, %v1580, 0
    %1599 = vmatprep.subr.bf16.mxu0 0
    %1600 = vmatpush1.bf16.msra.mxu0 %v1582
    %1601 = vmatprep.subr.bf16.mxu0 0
    %1602 = vmatpush1.bf16.msra.mxu0 %v1584
    %1603 = vmatprep.subr.bf16.mxu0 0
    %1604 = vmatpush1.bf16.msra.mxu0 %v1586
    %1605 = vmatprep.subr.bf16.mxu0 0
    %1606 = vmatpush1.bf16.msra.mxu0 0
    %1607 = vmatprep.subr.bf16.mxu0 0
    %1608 = vmatpush1.bf16.msra.mxu0 0
    %1609 = vmatprep.subr.bf16.mxu0 0
    %1610 = vmatpush1.bf16.msra.mxu0 0
    %1611 = vmatprep.subr.bf16.mxu0 0
    %1612 = vmatpush1.bf16.msra.mxu0 0
    %1613 = vmatprep.subr.bf16.mxu0 0
    %1614 = vmatpush1.bf16.msra.mxu0 0
    %1615 = vmatprep.subr.bf16.mxu0 0
    %1616 = vmatpush1.bf16.msra.mxu0 0
    %1617 = vmatprep.subr.bf16.mxu0 0
    %1618 = vmatpush1.bf16.msra.mxu0 0
    %1619 = vmatprep.subr.bf16.mxu0 0
    %1620 = vmatpush1.bf16.msra.mxu0 0
    %1621 = vmatprep.subr.bf16.mxu0 0
    %1622 = vmatpush1.bf16.msra.mxu0 0
    %1623 = vmatprep.subr.bf16.mxu0 0
    %1624 = vmatpush1.bf16.msra.mxu0 0
    %1625 = vmatprep.subr.bf16.mxu0 0
    %1626 = vmatpush1.bf16.msra.mxu0 0
    %1627 = vmatprep.subr.bf16.mxu0 0
    %1628 = vmatpush1.bf16.msra.mxu0 0
    %1629 = vmatprep.subr.bf16.mxu0 0
    %1630 = vmatpush1.bf16.msra.mxu0 0
    %1631 = vmatprep.mubr.bf16.mxu0 0
    %1632 = vmatmul.mubr.bf16.gmra.mrb[0].mxu0 %v1591
    %v1633 = vpop.f32.mrb[0].mxu0
    %v1634 = vadd.f32 0.0, %v1633
    %v1635 = vpop.f32.mrb[0].mxu0
    %v1636 = vpop.f32.mrb[0].mxu0
    %v1637 = vadd.f32 0.0, %v1636
    %v1638 = vpop.f32.mrb[0].mxu0
    %1639 = vmatprep.mubr.bf16.mxu0 0
    %1640 = vmatmul.mubr.bf16.gmra.mrb[0].mxu0 %v1594
    %v1641 = vpop.f32.mrb[0].mxu0
    %v1642 = vadd.f32 0.0, %v1641
    %v1643 = vpop.f32.mrb[0].mxu0
    %v1644 = vpop.f32.mrb[0].mxu0
    %v1645 = vadd.f32 0.0, %v1644
    %v1646 = vpop.f32.mrb[0].mxu0
    %1647 = vmatprep.mubr.bf16.mxu0 0
    %1648 = vmatmul.mubr.bf16.gmra.mrb[0].mxu0 %v1597
    %v1649 = vpop.f32.mrb[0].mxu0
    %v1650 = vadd.f32 0.0, %v1649
    %v1651 = vpop.f32.mrb[0].mxu0
    %v1652 = vpop.f32.mrb[0].mxu0
    %v1653 = vadd.f32 0.0, %v1652
    %v1654 = vpop.f32.mrb[0].mxu0
    %1655 = vdwg.mxu0
    %1656 = vst.msk [vmem:[#allocation2 + $0x30] sm:$0xff] %vm412, %v1634
    %1657 = vst.msk [vmem:[#allocation2 + $0x38] sm:$0xff] %vm412, %v1637
    %1658 = vst.msk [vmem:[#allocation2 + $0x40] sm:$0xff] %vm412, %v1642
    %1659 = vst.msk [vmem:[#allocation2 + $0x48] sm:$0xff] %vm412, %v1645
    %1660 = vst.msk [vmem:[#allocation2 + $0x50] sm:$0xff] %vm412, %v1650
    %1661 = vst.msk [vmem:[#allocation2 + $0x58] sm:$0xff] %vm412, %v1653
    %1662 = vrot.lane.b32.xlu0 %v1425, 120
    %v1663 = vpop.permute.xlu0 %1662
    %1664 = vrot.lane.b32.xlu0 %v1426, 120
    %v1665 = vpop.permute.xlu0 %1664
    %1666 = vrot.lane.b32.xlu0 %v1427, 120
    %v1667 = vpop.permute.xlu0 %1666
    %1668 = vrot.lane.b32.xlu0 %v1425, 88
    %v1669 = vpop.permute.xlu0 %1668
    %1670 = vrot.lane.b32.xlu0 %v1426, 88
    %v1671 = vpop.permute.xlu0 %1670
    %1672 = vrot.lane.b32.xlu0 %v1427, 88
    %v1673 = vpop.permute.xlu0 %1672
    %v1675 = vsel %vm412, %v1663, 0
    %v1678 = vsel %vm412, %v1665, 0
    %v1681 = vsel %vm412, %v1667, 0
    %v1684 = vsel %vm412, %v1669, 0
    %v1687 = vsel %vm412, %v1671, 0
    %v1690 = vsel %vm412, %v1673, 0
    %1692 = vmatprep.subr.bf16.mxu0 0
    %1693 = vmatpush1.bf16.xpose.msra.mxu0 %v1684
    %1694 = vmatprep.subr.bf16.mxu0 0
    %1695 = vmatpush1.bf16.xpose.msra.mxu0 %v1687
    %1696 = vmatprep.subr.bf16.mxu0 0
    %1697 = vmatpush1.bf16.xpose.msra.mxu0 %v1690
    %1698 = vmatprep.subr.bf16.mxu0 0
    %1699 = vmatpush1.bf16.xpose.msra.mxu0 0
    %1700 = vmatprep.subr.bf16.mxu0 0
    %1701 = vmatpush1.bf16.xpose.msra.mxu0 0
    %1702 = vmatprep.subr.bf16.mxu0 0
    %1703 = vmatpush1.bf16.xpose.msra.mxu0 0
    %1704 = vmatprep.subr.bf16.mxu0 0
    %1705 = vmatpush1.bf16.xpose.msra.mxu0 0
    %1706 = vmatprep.subr.bf16.mxu0 0
    %1707 = vmatpush1.bf16.xpose.msra.mxu0 0
    %1708 = vmatprep.subr.bf16.mxu0 0
    %1709 = vmatpush1.bf16.xpose.msra.mxu0 0
    %1710 = vmatprep.subr.bf16.mxu0 0
    %1711 = vmatpush1.bf16.xpose.msra.mxu0 0
    %1712 = vmatprep.subr.bf16.mxu0 0
    %1713 = vmatpush1.bf16.xpose.msra.mxu0 0
    %1714 = vmatprep.subr.bf16.mxu0 0
    %1715 = vmatpush1.bf16.xpose.msra.mxu0 0
    %1716 = vmatprep.subr.bf16.mxu0 0
    %1717 = vmatpush1.bf16.xpose.msra.mxu0 0
    %1718 = vmatprep.subr.bf16.mxu0 0
    %1719 = vmatpush1.bf16.xpose.msra.mxu0 0
    %1720 = vmatprep.subr.bf16.mxu0 0
    %1721 = vmatpush1.bf16.xpose.msra.mxu0 0
    %1722 = vmatprep.subr.bf16.mxu0 0
    %1723 = vmatpush1.bf16.xpose.msra.mxu0 0
    %1724 = vmatprep.mubr.bf16.mxu0 0
    %1725 = vmatmul.mubr.bf16.gmra.mrb[0].mxu0 %v1675
    %v1726 = vpop.f32.mrb[0].mxu0
    %v1727 = vadd.f32 0.0, %v1726
    %v1728 = vpop.f32.mrb[0].mxu0
    %v1729 = vpop.f32.mrb[0].mxu0
    %v1730 = vadd.f32 0.0, %v1729
    %v1731 = vpop.f32.mrb[0].mxu0
    %1732 = vmatprep.mubr.bf16.mxu0 0
    %1733 = vmatmul.mubr.bf16.gmra.mrb[0].mxu0 %v1678
    %v1734 = vpop.f32.mrb[0].mxu0
    %v1735 = vadd.f32 0.0, %v1734
    %v1736 = vpop.f32.mrb[0].mxu0
    %v1737 = vpop.f32.mrb[0].mxu0
    %v1738 = vadd.f32 0.0, %v1737
    %v1739 = vpop.f32.mrb[0].mxu0
    %1740 = vmatprep.mubr.bf16.mxu0 0
    %1741 = vmatmul.mubr.bf16.gmra.mrb[0].mxu0 %v1681
    %v1742 = vpop.f32.mrb[0].mxu0
    %v1743 = vadd.f32 0.0, %v1742
    %v1744 = vpop.f32.mrb[0].mxu0
    %v1745 = vpop.f32.mrb[0].mxu0
    %v1746 = vadd.f32 0.0, %v1745
    %v1747 = vpop.f32.mrb[0].mxu0
    %1748 = vdwg.mxu0
    %v1749 = vsel %vm488, %v1727, -inf
    %1750 = vmax.xlane.f32.xlu0 %v1749
    %v1751 = vpop.xlane.xlu0 %1750
    %v1752 = vsel %vm488, %v1730, -inf
    %1753 = vmax.xlane.f32.xlu0 %v1752
    %v1754 = vpop.xlane.xlu0 %1753
    %v1755 = vsel %vm488, %v1735, -inf
    %1756 = vmax.xlane.f32.xlu0 %v1755
    %v1757 = vpop.xlane.xlu0 %1756
    %v1758 = vsel %vm488, %v1738, -inf
    %1759 = vmax.xlane.f32.xlu0 %v1758
    %v1760 = vpop.xlane.xlu0 %1759
    %v1761 = vsel %vm488, %v1743, -inf
    %1762 = vmax.xlane.f32.xlu0 %v1761
    %v1763 = vpop.xlane.xlu0 %1762
    %v1764 = vsel %vm488, %v1746, -inf
    %1765 = vmax.xlane.f32.xlu0 %v1764
    %v1766 = vpop.xlane.xlu0 %1765
    %v1767 = vsub.f32 %v1727, %v1751
    %v1768 = vsub.f32 %v1730, %v1754
    %v1769 = vsub.f32 %v1735, %v1757
    %v1770 = vsub.f32 %v1738, %v1760
    %v1771 = vsub.f32 %v1743, %v1763
    %v1772 = vsub.f32 %v1746, %v1766
    %v1773 = vmul.f32 %v1767, 1.442695
    %v1774 = vpow.pop %v1773
    %v1775 = vmul.f32 %v1768, 1.442695
    %v1776 = vpow.pop %v1775
    %v1777 = vmul.f32 %v1769, 1.442695
    %v1778 = vpow.pop %v1777
    %v1779 = vmul.f32 %v1770, 1.442695
    %v1780 = vpow.pop %v1779
    %v1781 = vmul.f32 %v1771, 1.442695
    %v1782 = vpow.pop %v1781
    %v1783 = vmul.f32 %v1772, 1.442695
    %v1784 = vpow.pop %v1783
    %v1785 = vsel %vm488, %v1774, 0.0
    %1786 = vadd.xlane.f32.xlu0 %v1785
    %v1787 = vpop.xlane.xlu0 %1786
    %v1788 = vsel %vm488, %v1776, 0.0
    %1789 = vadd.xlane.f32.xlu0 %v1788
    %v1790 = vpop.xlane.xlu0 %1789
    %v1791 = vsel %vm488, %v1778, 0.0
    %1792 = vadd.xlane.f32.xlu0 %v1791
    %v1793 = vpop.xlane.xlu0 %1792
    %v1794 = vsel %vm488, %v1780, 0.0
    %1795 = vadd.xlane.f32.xlu0 %v1794
    %v1796 = vpop.xlane.xlu0 %1795
    %v1797 = vsel %vm488, %v1782, 0.0
    %1798 = vadd.xlane.f32.xlu0 %v1797
    %v1799 = vpop.xlane.xlu0 %1798
    %v1800 = vsel %vm488, %v1784, 0.0
    %1801 = vadd.xlane.f32.xlu0 %v1800
    %v1802 = vpop.xlane.xlu0 %1801
    %v1803 = vrcp.pop %v1787
    %v1804 = vrcp.pop %v1790
    %v1805 = vrcp.pop %v1793
    %v1806 = vrcp.pop %v1796
    %v1807 = vrcp.pop %v1799
    %v1808 = vrcp.pop %v1802
    %v1809 = vmul.f32 %v1774, %v1803
    %v1810 = vmul.f32 %v1776, %v1804
    %v1811 = vmul.f32 %v1778, %v1805
    %v1812 = vmul.f32 %v1780, %v1806
    %v1813 = vmul.f32 %v1782, %v1807
    %v1814 = vmul.f32 %v1784, %v1808
    %v1815 = vpack.c.bf16 %v1810, %v1809
    %v1816 = vpack.c.bf16 %v1812, %v1811
    %v1817 = vpack.c.bf16 %v1814, %v1813
    %1818 = vrot.lane.b32.xlu0 %v1425, 56
    %v1819 = vpop.permute.xlu0 %1818
    %1820 = vrot.lane.b32.xlu0 %v1426, 56
    %v1821 = vpop.permute.xlu0 %1820
    %1822 = vrot.lane.b32.xlu0 %v1427, 56
    %v1823 = vpop.permute.xlu0 %1822
    %v1828 = vsel %vm488, %v1815, 0
    %v1831 = vsel %vm488, %v1816, 0
    %v1834 = vsel %vm488, %v1817, 0
    %1836 = vmatprep.subr.bf16.mxu0 0
    %1837 = vmatpush1.bf16.msra.mxu0 %v1819
    %1838 = vmatprep.subr.bf16.mxu0 0
    %1839 = vmatpush1.bf16.msra.mxu0 %v1821
    %1840 = vmatprep.subr.bf16.mxu0 0
    %1841 = vmatpush1.bf16.msra.mxu0 %v1823
    %1842 = vmatprep.subr.bf16.mxu0 0
    %1843 = vmatpush1.bf16.msra.mxu0 0
    %1844 = vmatprep.subr.bf16.mxu0 0
    %1845 = vmatpush1.bf16.msra.mxu0 0
    %1846 = vmatprep.subr.bf16.mxu0 0
    %1847 = vmatpush1.bf16.msra.mxu0 0
    %1848 = vmatprep.subr.bf16.mxu0 0
    %1849 = vmatpush1.bf16.msra.mxu0 0
    %1850 = vmatprep.subr.bf16.mxu0 0
    %1851 = vmatpush1.bf16.msra.mxu0 0
    %1852 = vmatprep.subr.bf16.mxu0 0
    %1853 = vmatpush1.bf16.msra.mxu0 0
    %1854 = vmatprep.subr.bf16.mxu0 0
    %1855 = vmatpush1.bf16.msra.mxu0 0
    %1856 = vmatprep.subr.bf16.mxu0 0
    %1857 = vmatpush1.bf16.msra.mxu0 0
    %1858 = vmatprep.subr.bf16.mxu0 0
    %1859 = vmatpush1.bf16.msra.mxu0 0
    %1860 = vmatprep.subr.bf16.mxu0 0
    %1861 = vmatpush1.bf16.msra.mxu0 0
    %1862 = vmatprep.subr.bf16.mxu0 0
    %1863 = vmatpush1.bf16.msra.mxu0 0
    %1864 = vmatprep.subr.bf16.mxu0 0
    %1865 = vmatpush1.bf16.msra.mxu0 0
    %1866 = vmatprep.subr.bf16.mxu0 0
    %1867 = vmatpush1.bf16.msra.mxu0 0
    %1868 = vmatprep.mubr.bf16.mxu0 0
    %1869 = vmatmul.mubr.bf16.gmra.mrb[0].mxu0 %v1828
    %v1870 = vpop.f32.mrb[0].mxu0
    %v1871 = vadd.f32 0.0, %v1870
    %v1872 = vpop.f32.mrb[0].mxu0
    %v1873 = vpop.f32.mrb[0].mxu0
    %v1874 = vadd.f32 0.0, %v1873
    %v1875 = vpop.f32.mrb[0].mxu0
    %1876 = vmatprep.mubr.bf16.mxu0 0
    %1877 = vmatmul.mubr.bf16.gmra.mrb[0].mxu0 %v1831
    %v1878 = vpop.f32.mrb[0].mxu0
    %v1879 = vadd.f32 0.0, %v1878
    %v1880 = vpop.f32.mrb[0].mxu0
    %v1881 = vpop.f32.mrb[0].mxu0
    %v1882 = vadd.f32 0.0, %v1881
    %v1883 = vpop.f32.mrb[0].mxu0
    %1884 = vmatprep.mubr.bf16.mxu0 0
    %1885 = vmatmul.mubr.bf16.gmra.mrb[0].mxu0 %v1834
    %v1886 = vpop.f32.mrb[0].mxu0
    %v1887 = vadd.f32 0.0, %v1886
    %v1888 = vpop.f32.mrb[0].mxu0
    %v1889 = vpop.f32.mrb[0].mxu0
    %v1890 = vadd.f32 0.0, %v1889
    %v1891 = vpop.f32.mrb[0].mxu0
    %1892 = vdwg.mxu0
    %1899 = vrot.lane.b32.xlu0 %v1871, 8
    %v1900 = vpop.permute.xlu0 %1899
    %1901 = vrot.lane.b32.xlu0 %v1874, 8
    %v1902 = vpop.permute.xlu0 %1901
    %1903 = vrot.lane.b32.xlu0 %v1879, 8
    %v1904 = vpop.permute.xlu0 %1903
    %1905 = vrot.lane.b32.xlu0 %v1882, 8
    %v1906 = vpop.permute.xlu0 %1905
    %1907 = vrot.lane.b32.xlu0 %v1887, 8
    %v1908 = vpop.permute.xlu0 %1907
    %1909 = vrot.lane.b32.xlu0 %v1890, 8
    %v1910 = vpop.permute.xlu0 %1909
    %1917 = vst.msk [vmem:[#allocation2 + $0x30] sm:$0xff] %vm894, %v1900
    %1918 = vst.msk [vmem:[#allocation2 + $0x38] sm:$0xff] %vm894, %v1902
    %1919 = vst.msk [vmem:[#allocation2 + $0x40] sm:$0xff] %vm894, %v1904
    %1920 = vst.msk [vmem:[#allocation2 + $0x48] sm:$0xff] %vm894, %v1906
    %1921 = vst.msk [vmem:[#allocation2 + $0x50] sm:$0xff] %vm894, %v1908
    %1922 = vst.msk [vmem:[#allocation2 + $0x58] sm:$0xff] %vm894, %v1910
    %1923 = vrot.lane.b32.xlu0 %v1425, 112
    %v1924 = vpop.permute.xlu0 %1923
    %1925 = vrot.lane.b32.xlu0 %v1426, 112
    %v1926 = vpop.permute.xlu0 %1925
    %1927 = vrot.lane.b32.xlu0 %v1427, 112
    %v1928 = vpop.permute.xlu0 %1927
    %1929 = vrot.lane.b32.xlu0 %v1425, 80
    %v1930 = vpop.permute.xlu0 %1929
    %1931 = vrot.lane.b32.xlu0 %v1426, 80
    %v1932 = vpop.permute.xlu0 %1931
    %1933 = vrot.lane.b32.xlu0 %v1427, 80
    %v1934 = vpop.permute.xlu0 %1933
    %v1936 = vsel %vm412, %v1924, 0
    %v1939 = vsel %vm412, %v1926, 0
    %v1942 = vsel %vm412, %v1928, 0
    %v1945 = vsel %vm412, %v1930, 0
    %v1948 = vsel %vm412, %v1932, 0
    %v1951 = vsel %vm412, %v1934, 0
    %1953 = vmatprep.subr.bf16.mxu0 0
    %1954 = vmatpush1.bf16.xpose.msra.mxu0 %v1945
    %1955 = vmatprep.subr.bf16.mxu0 0
    %1956 = vmatpush1.bf16.xpose.msra.mxu0 %v1948
    %1957 = vmatprep.subr.bf16.mxu0 0
    %1958 = vmatpush1.bf16.xpose.msra.mxu0 %v1951
    %1959 = vmatprep.subr.bf16.mxu0 0
    %1960 = vmatpush1.bf16.xpose.msra.mxu0 0
    %1961 = vmatprep.subr.bf16.mxu0 0
    %1962 = vmatpush1.bf16.xpose.msra.mxu0 0
    %1963 = vmatprep.subr.bf16.mxu0 0
    %1964 = vmatpush1.bf16.xpose.msra.mxu0 0
    %1965 = vmatprep.subr.bf16.mxu0 0
    %1966 = vmatpush1.bf16.xpose.msra.mxu0 0
    %1967 = vmatprep.subr.bf16.mxu0 0
    %1968 = vmatpush1.bf16.xpose.msra.mxu0 0
    %1969 = vmatprep.subr.bf16.mxu0 0
    %1970 = vmatpush1.bf16.xpose.msra.mxu0 0
    %1971 = vmatprep.subr.bf16.mxu0 0
    %1972 = vmatpush1.bf16.xpose.msra.mxu0 0
    %1973 = vmatprep.subr.bf16.mxu0 0
    %1974 = vmatpush1.bf16.xpose.msra.mxu0 0
    %1975 = vmatprep.subr.bf16.mxu0 0
    %1976 = vmatpush1.bf16.xpose.msra.mxu0 0
    %1977 = vmatprep.subr.bf16.mxu0 0
    %1978 = vmatpush1.bf16.xpose.msra.mxu0 0
    %1979 = vmatprep.subr.bf16.mxu0 0
    %1980 = vmatpush1.bf16.xpose.msra.mxu0 0
    %1981 = vmatprep.subr.bf16.mxu0 0
    %1982 = vmatpush1.bf16.xpose.msra.mxu0 0
    %1983 = vmatprep.subr.bf16.mxu0 0
    %1984 = vmatpush1.bf16.xpose.msra.mxu0 0
    %1985 = vmatprep.mubr.bf16.mxu0 0
    %1986 = vmatmul.mubr.bf16.gmra.mrb[0].mxu0 %v1936
    %v1987 = vpop.f32.mrb[0].mxu0
    %v1988 = vadd.f32 0.0, %v1987
    %v1989 = vpop.f32.mrb[0].mxu0
    %v1990 = vpop.f32.mrb[0].mxu0
    %v1991 = vadd.f32 0.0, %v1990
    %v1992 = vpop.f32.mrb[0].mxu0
    %1993 = vmatprep.mubr.bf16.mxu0 0
    %1994 = vmatmul.mubr.bf16.gmra.mrb[0].mxu0 %v1939
    %v1995 = vpop.f32.mrb[0].mxu0
    %v1996 = vadd.f32 0.0, %v1995
    %v1997 = vpop.f32.mrb[0].mxu0
    %v1998 = vpop.f32.mrb[0].mxu0
    %v1999 = vadd.f32 0.0, %v1998
    %v2000 = vpop.f32.mrb[0].mxu0
    %2001 = vmatprep.mubr.bf16.mxu0 0
    %2002 = vmatmul.mubr.bf16.gmra.mrb[0].mxu0 %v1942
    %v2003 = vpop.f32.mrb[0].mxu0
    %v2004 = vadd.f32 0.0, %v2003
    %v2005 = vpop.f32.mrb[0].mxu0
    %v2006 = vpop.f32.mrb[0].mxu0
    %v2007 = vadd.f32 0.0, %v2006
    %v2008 = vpop.f32.mrb[0].mxu0
    %2009 = vdwg.mxu0
    %v2010 = vsel %vm488, %v1988, -inf
    %2011 = vmax.xlane.f32.xlu0 %v2010
    %v2012 = vpop.xlane.xlu0 %2011
    %v2013 = vsel %vm488, %v1991, -inf
    %2014 = vmax.xlane.f32.xlu0 %v2013
    %v2015 = vpop.xlane.xlu0 %2014
    %v2016 = vsel %vm488, %v1996, -inf
    %2017 = vmax.xlane.f32.xlu0 %v2016
    %v2018 = vpop.xlane.xlu0 %2017
    %v2019 = vsel %vm488, %v1999, -inf
    %2020 = vmax.xlane.f32.xlu0 %v2019
    %v2021 = vpop.xlane.xlu0 %2020
    %v2022 = vsel %vm488, %v2004, -inf
    %2023 = vmax.xlane.f32.xlu0 %v2022
    %v2024 = vpop.xlane.xlu0 %2023
    %v2025 = vsel %vm488, %v2007, -inf
    %2026 = vmax.xlane.f32.xlu0 %v2025
    %v2027 = vpop.xlane.xlu0 %2026
    %v2028 = vsub.f32 %v1988, %v2012
    %v2029 = vsub.f32 %v1991, %v2015
    %v2030 = vsub.f32 %v1996, %v2018
    %v2031 = vsub.f32 %v1999, %v2021
    %v2032 = vsub.f32 %v2004, %v2024
    %v2033 = vsub.f32 %v2007, %v2027
    %v2034 = vmul.f32 %v2028, 1.442695
    %v2035 = vpow.pop %v2034
    %v2036 = vmul.f32 %v2029, 1.442695
    %v2037 = vpow.pop %v2036
    %v2038 = vmul.f32 %v2030, 1.442695
    %v2039 = vpow.pop %v2038
    %v2040 = vmul.f32 %v2031, 1.442695
    %v2041 = vpow.pop %v2040
    %v2042 = vmul.f32 %v2032, 1.442695
    %v2043 = vpow.pop %v2042
    %v2044 = vmul.f32 %v2033, 1.442695
    %v2045 = vpow.pop %v2044
    %v2046 = vsel %vm488, %v2035, 0.0
    %2047 = vadd.xlane.f32.xlu0 %v2046
    %v2048 = vpop.xlane.xlu0 %2047
    %v2049 = vsel %vm488, %v2037, 0.0
    %2050 = vadd.xlane.f32.xlu0 %v2049
    %v2051 = vpop.xlane.xlu0 %2050
    %v2052 = vsel %vm488, %v2039, 0.0
    %2053 = vadd.xlane.f32.xlu0 %v2052
    %v2054 = vpop.xlane.xlu0 %2053
    %v2055 = vsel %vm488, %v2041, 0.0
    %2056 = vadd.xlane.f32.xlu0 %v2055
    %v2057 = vpop.xlane.xlu0 %2056
    %v2058 = vsel %vm488, %v2043, 0.0
    %2059 = vadd.xlane.f32.xlu0 %v2058
    %v2060 = vpop.xlane.xlu0 %2059
    %v2061 = vsel %vm488, %v2045, 0.0
    %2062 = vadd.xlane.f32.xlu0 %v2061
    %v2063 = vpop.xlane.xlu0 %2062
    %v2064 = vrcp.pop %v2048
    %v2065 = vrcp.pop %v2051
    %v2066 = vrcp.pop %v2054
    %v2067 = vrcp.pop %v2057
    %v2068 = vrcp.pop %v2060
    %v2069 = vrcp.pop %v2063
    %v2070 = vmul.f32 %v2035, %v2064
    %v2071 = vmul.f32 %v2037, %v2065
    %v2072 = vmul.f32 %v2039, %v2066
    %v2073 = vmul.f32 %v2041, %v2067
    %v2074 = vmul.f32 %v2043, %v2068
    %v2075 = vmul.f32 %v2045, %v2069
    %v2076 = vpack.c.bf16 %v2071, %v2070
    %v2077 = vpack.c.bf16 %v2073, %v2072
    %v2078 = vpack.c.bf16 %v2075, %v2074
    %2079 = vrot.lane.b32.xlu0 %v1425, 48
    %v2080 = vpop.permute.xlu0 %2079
    %2081 = vrot.lane.b32.xlu0 %v1426, 48
    %v2082 = vpop.permute.xlu0 %2081
    %2083 = vrot.lane.b32.xlu0 %v1427, 48
    %v2084 = vpop.permute.xlu0 %2083
    %v2089 = vsel %vm488, %v2076, 0
    %v2092 = vsel %vm488, %v2077, 0
    %v2095 = vsel %vm488, %v2078, 0
    %2097 = vmatprep.subr.bf16.mxu0 0
    %2098 = vmatpush1.bf16.msra.mxu0 %v2080
    %2099 = vmatprep.subr.bf16.mxu0 0
    %2100 = vmatpush1.bf16.msra.mxu0 %v2082
    %2101 = vmatprep.subr.bf16.mxu0 0
    %2102 = vmatpush1.bf16.msra.mxu0 %v2084
    %2103 = vmatprep.subr.bf16.mxu0 0
    %2104 = vmatpush1.bf16.msra.mxu0 0
    %2105 = vmatprep.subr.bf16.mxu0 0
    %2106 = vmatpush1.bf16.msra.mxu0 0
    %2107 = vmatprep.subr.bf16.mxu0 0
    %2108 = vmatpush1.bf16.msra.mxu0 0
    %2109 = vmatprep.subr.bf16.mxu0 0
    %2110 = vmatpush1.bf16.msra.mxu0 0
    %2111 = vmatprep.subr.bf16.mxu0 0
    %2112 = vmatpush1.bf16.msra.mxu0 0
    %2113 = vmatprep.subr.bf16.mxu0 0
    %2114 = vmatpush1.bf16.msra.mxu0 0
    %2115 = vmatprep.subr.bf16.mxu0 0
    %2116 = vmatpush1.bf16.msra.mxu0 0
    %2117 = vmatprep.subr.bf16.mxu0 0
    %2118 = vmatpush1.bf16.msra.mxu0 0
    %2119 = vmatprep.subr.bf16.mxu0 0
    %2120 = vmatpush1.bf16.msra.mxu0 0
    %2121 = vmatprep.subr.bf16.mxu0 0
    %2122 = vmatpush1.bf16.msra.mxu0 0
    %2123 = vmatprep.subr.bf16.mxu0 0
    %2124 = vmatpush1.bf16.msra.mxu0 0
    %2125 = vmatprep.subr.bf16.mxu0 0
    %2126 = vmatpush1.bf16.msra.mxu0 0
    %2127 = vmatprep.subr.bf16.mxu0 0
    %2128 = vmatpush1.bf16.msra.mxu0 0
    %2129 = vmatprep.mubr.bf16.mxu0 0
    %2130 = vmatmul.mubr.bf16.gmra.mrb[0].mxu0 %v2089
    %v2131 = vpop.f32.mrb[0].mxu0
    %v2132 = vadd.f32 0.0, %v2131
    %v2133 = vpop.f32.mrb[0].mxu0
    %v2134 = vpop.f32.mrb[0].mxu0
    %v2135 = vadd.f32 0.0, %v2134
    %v2136 = vpop.f32.mrb[0].mxu0
    %2137 = vmatprep.mubr.bf16.mxu0 0
    %2138 = vmatmul.mubr.bf16.gmra.mrb[0].mxu0 %v2092
    %v2139 = vpop.f32.mrb[0].mxu0
    %v2140 = vadd.f32 0.0, %v2139
    %v2141 = vpop.f32.mrb[0].mxu0
    %v2142 = vpop.f32.mrb[0].mxu0
    %v2143 = vadd.f32 0.0, %v2142
    %v2144 = vpop.f32.mrb[0].mxu0
    %2145 = vmatprep.mubr.bf16.mxu0 0
    %2146 = vmatmul.mubr.bf16.gmra.mrb[0].mxu0 %v2095
    %v2147 = vpop.f32.mrb[0].mxu0
    %v2148 = vadd.f32 0.0, %v2147
    %v2149 = vpop.f32.mrb[0].mxu0
    %v2150 = vpop.f32.mrb[0].mxu0
    %v2151 = vadd.f32 0.0, %v2150
    %v2152 = vpop.f32.mrb[0].mxu0
    %2153 = vdwg.mxu0
    %2160 = vrot.lane.b32.xlu0 %v2132, 16
    %v2161 = vpop.permute.xlu0 %2160
    %2162 = vrot.lane.b32.xlu0 %v2135, 16
    %v2163 = vpop.permute.xlu0 %2162
    %2164 = vrot.lane.b32.xlu0 %v2140, 16
    %v2165 = vpop.permute.xlu0 %2164
    %2166 = vrot.lane.b32.xlu0 %v2143, 16
    %v2167 = vpop.permute.xlu0 %2166
    %2168 = vrot.lane.b32.xlu0 %v2148, 16
    %v2169 = vpop.permute.xlu0 %2168
    %2170 = vrot.lane.b32.xlu0 %v2151, 16
    %v2171 = vpop.permute.xlu0 %2170
    %2178 = vst.msk [vmem:[#allocation2 + $0x30] sm:$0xff] %vm1156, %v2161
    %2179 = vst.msk [vmem:[#allocation2 + $0x38] sm:$0xff] %vm1156, %v2163
    %2180 = vst.msk [vmem:[#allocation2 + $0x40] sm:$0xff] %vm1156, %v2165
    %2181 = vst.msk [vmem:[#allocation2 + $0x48] sm:$0xff] %vm1156, %v2167
    %2182 = vst.msk [vmem:[#allocation2 + $0x50] sm:$0xff] %vm1156, %v2169
    %2183 = vst.msk [vmem:[#allocation2 + $0x58] sm:$0xff] %vm1156, %v2171
    %2184 = vrot.lane.b32.xlu0 %v1425, 104
    %v2185 = vpop.permute.xlu0 %2184
    %2186 = vrot.lane.b32.xlu0 %v1426, 104
    %v2187 = vpop.permute.xlu0 %2186
    %2188 = vrot.lane.b32.xlu0 %v1427, 104
    %v2189 = vpop.permute.xlu0 %2188
    %2190 = vrot.lane.b32.xlu0 %v1425, 72
    %v2191 = vpop.permute.xlu0 %2190
    %2192 = vrot.lane.b32.xlu0 %v1426, 72
    %v2193 = vpop.permute.xlu0 %2192
    %2194 = vrot.lane.b32.xlu0 %v1427, 72
    %v2195 = vpop.permute.xlu0 %2194
    %v2197 = vsel %vm412, %v2185, 0
    %v2200 = vsel %vm412, %v2187, 0
    %v2203 = vsel %vm412, %v2189, 0
    %v2206 = vsel %vm412, %v2191, 0
    %v2209 = vsel %vm412, %v2193, 0
    %v2212 = vsel %vm412, %v2195, 0
    %2214 = vmatprep.subr.bf16.mxu0 0
    %2215 = vmatpush1.bf16.xpose.msra.mxu0 %v2206
    %2216 = vmatprep.subr.bf16.mxu0 0
    %2217 = vmatpush1.bf16.xpose.msra.mxu0 %v2209
    %2218 = vmatprep.subr.bf16.mxu0 0
    %2219 = vmatpush1.bf16.xpose.msra.mxu0 %v2212
    %2220 = vmatprep.subr.bf16.mxu0 0
    %2221 = vmatpush1.bf16.xpose.msra.mxu0 0
    %2222 = vmatprep.subr.bf16.mxu0 0
    %2223 = vmatpush1.bf16.xpose.msra.mxu0 0
    %2224 = vmatprep.subr.bf16.mxu0 0
    %2225 = vmatpush1.bf16.xpose.msra.mxu0 0
    %2226 = vmatprep.subr.bf16.mxu0 0
    %2227 = vmatpush1.bf16.xpose.msra.mxu0 0
    %2228 = vmatprep.subr.bf16.mxu0 0
    %2229 = vmatpush1.bf16.xpose.msra.mxu0 0
    %2230 = vmatprep.subr.bf16.mxu0 0
    %2231 = vmatpush1.bf16.xpose.msra.mxu0 0
    %2232 = vmatprep.subr.bf16.mxu0 0
    %2233 = vmatpush1.bf16.xpose.msra.mxu0 0
    %2234 = vmatprep.subr.bf16.mxu0 0
    %2235 = vmatpush1.bf16.xpose.msra.mxu0 0
    %2236 = vmatprep.subr.bf16.mxu0 0
    %2237 = vmatpush1.bf16.xpose.msra.mxu0 0
    %2238 = vmatprep.subr.bf16.mxu0 0
    %2239 = vmatpush1.bf16.xpose.msra.mxu0 0
    %2240 = vmatprep.subr.bf16.mxu0 0
    %2241 = vmatpush1.bf16.xpose.msra.mxu0 0
    %2242 = vmatprep.subr.bf16.mxu0 0
    %2243 = vmatpush1.bf16.xpose.msra.mxu0 0
    %2244 = vmatprep.subr.bf16.mxu0 0
    %2245 = vmatpush1.bf16.xpose.msra.mxu0 0
    %2246 = vmatprep.mubr.bf16.mxu0 0
    %2247 = vmatmul.mubr.bf16.gmra.mrb[0].mxu0 %v2197
    %v2248 = vpop.f32.mrb[0].mxu0
    %v2249 = vadd.f32 0.0, %v2248
    %v2250 = vpop.f32.mrb[0].mxu0
    %v2251 = vpop.f32.mrb[0].mxu0
    %v2252 = vadd.f32 0.0, %v2251
    %v2253 = vpop.f32.mrb[0].mxu0
    %2254 = vmatprep.mubr.bf16.mxu0 0
    %2255 = vmatmul.mubr.bf16.gmra.mrb[0].mxu0 %v2200
    %v2256 = vpop.f32.mrb[0].mxu0
    %v2257 = vadd.f32 0.0, %v2256
    %v2258 = vpop.f32.mrb[0].mxu0
    %v2259 = vpop.f32.mrb[0].mxu0
    %v2260 = vadd.f32 0.0, %v2259
    %v2261 = vpop.f32.mrb[0].mxu0
    %2262 = vmatprep.mubr.bf16.mxu0 0
    %2263 = vmatmul.mubr.bf16.gmra.mrb[0].mxu0 %v2203
    %v2264 = vpop.f32.mrb[0].mxu0
    %v2265 = vadd.f32 0.0, %v2264
    %v2266 = vpop.f32.mrb[0].mxu0
    %v2267 = vpop.f32.mrb[0].mxu0
    %v2268 = vadd.f32 0.0, %v2267
    %v2269 = vpop.f32.mrb[0].mxu0
    %2270 = vdwg.mxu0
    %v2271 = vsel %vm488, %v2249, -inf
    %2272 = vmax.xlane.f32.xlu0 %v2271
    %v2273 = vpop.xlane.xlu0 %2272
    %v2274 = vsel %vm488, %v2252, -inf
    %2275 = vmax.xlane.f32.xlu0 %v2274
    %v2276 = vpop.xlane.xlu0 %2275
    %v2277 = vsel %vm488, %v2257, -inf
    %2278 = vmax.xlane.f32.xlu0 %v2277
    %v2279 = vpop.xlane.xlu0 %2278
    %v2280 = vsel %vm488, %v2260, -inf
    %2281 = vmax.xlane.f32.xlu0 %v2280
    %v2282 = vpop.xlane.xlu0 %2281
    %v2283 = vsel %vm488, %v2265, -inf
    %2284 = vmax.xlane.f32.xlu0 %v2283
    %v2285 = vpop.xlane.xlu0 %2284
    %v2286 = vsel %vm488, %v2268, -inf
    %2287 = vmax.xlane.f32.xlu0 %v2286
    %v2288 = vpop.xlane.xlu0 %2287
    %v2289 = vsub.f32 %v2249, %v2273
    %v2290 = vsub.f32 %v2252, %v2276
    %v2291 = vsub.f32 %v2257, %v2279
    %v2292 = vsub.f32 %v2260, %v2282
    %v2293 = vsub.f32 %v2265, %v2285
    %v2294 = vsub.f32 %v2268, %v2288
    %v2295 = vmul.f32 %v2289, 1.442695
    %v2296 = vpow.pop %v2295
    %v2297 = vmul.f32 %v2290, 1.442695
    %v2298 = vpow.pop %v2297
    %v2299 = vmul.f32 %v2291, 1.442695
    %v2300 = vpow.pop %v2299
    %v2301 = vmul.f32 %v2292, 1.442695
    %v2302 = vpow.pop %v2301
    %v2303 = vmul.f32 %v2293, 1.442695
    %v2304 = vpow.pop %v2303
    %v2305 = vmul.f32 %v2294, 1.442695
    %v2306 = vpow.pop %v2305
    %v2307 = vsel %vm488, %v2296, 0.0
    %2308 = vadd.xlane.f32.xlu0 %v2307
    %v2309 = vpop.xlane.xlu0 %2308
    %v2310 = vsel %vm488, %v2298, 0.0
    %2311 = vadd.xlane.f32.xlu0 %v2310
    %v2312 = vpop.xlane.xlu0 %2311
    %v2313 = vsel %vm488, %v2300, 0.0
    %2314 = vadd.xlane.f32.xlu0 %v2313
    %v2315 = vpop.xlane.xlu0 %2314
    %v2316 = vsel %vm488, %v2302, 0.0
    %2317 = vadd.xlane.f32.xlu0 %v2316
    %v2318 = vpop.xlane.xlu0 %2317
    %v2319 = vsel %vm488, %v2304, 0.0
    %2320 = vadd.xlane.f32.xlu0 %v2319
    %v2321 = vpop.xlane.xlu0 %2320
    %v2322 = vsel %vm488, %v2306, 0.0
    %2323 = vadd.xlane.f32.xlu0 %v2322
    %v2324 = vpop.xlane.xlu0 %2323
    %v2325 = vrcp.pop %v2309
    %v2326 = vrcp.pop %v2312
    %v2327 = vrcp.pop %v2315
    %v2328 = vrcp.pop %v2318
    %v2329 = vrcp.pop %v2321
    %v2330 = vrcp.pop %v2324
    %v2331 = vmul.f32 %v2296, %v2325
    %v2332 = vmul.f32 %v2298, %v2326
    %v2333 = vmul.f32 %v2300, %v2327
    %v2334 = vmul.f32 %v2302, %v2328
    %v2335 = vmul.f32 %v2304, %v2329
    %v2336 = vmul.f32 %v2306, %v2330
    %v2337 = vpack.c.bf16 %v2332, %v2331
    %v2338 = vpack.c.bf16 %v2334, %v2333
    %v2339 = vpack.c.bf16 %v2336, %v2335
    %2340 = vrot.lane.b32.xlu0 %v1425, 40
    %v2341 = vpop.permute.xlu0 %2340
    %2342 = vrot.lane.b32.xlu0 %v1426, 40
    %v2343 = vpop.permute.xlu0 %2342
    %2344 = vrot.lane.b32.xlu0 %v1427, 40
    %v2345 = vpop.permute.xlu0 %2344
    %v2350 = vsel %vm488, %v2337, 0
    %v2353 = vsel %vm488, %v2338, 0
    %v2356 = vsel %vm488, %v2339, 0
    %2358 = vmatprep.subr.bf16.mxu0 0
    %2359 = vmatpush1.bf16.msra.mxu0 %v2341
    %2360 = vmatprep.subr.bf16.mxu0 0
    %2361 = vmatpush1.bf16.msra.mxu0 %v2343
    %2362 = vmatprep.subr.bf16.mxu0 0
    %2363 = vmatpush1.bf16.msra.mxu0 %v2345
    %2364 = vmatprep.subr.bf16.mxu0 0
    %2365 = vmatpush1.bf16.msra.mxu0 0
    %2366 = vmatprep.subr.bf16.mxu0 0
    %2367 = vmatpush1.bf16.msra.mxu0 0
    %2368 = vmatprep.subr.bf16.mxu0 0
    %2369 = vmatpush1.bf16.msra.mxu0 0
    %2370 = vmatprep.subr.bf16.mxu0 0
    %2371 = vmatpush1.bf16.msra.mxu0 0
    %2372 = vmatprep.subr.bf16.mxu0 0
    %2373 = vmatpush1.bf16.msra.mxu0 0
    %2374 = vmatprep.subr.bf16.mxu0 0
    %2375 = vmatpush1.bf16.msra.mxu0 0
    %2376 = vmatprep.subr.bf16.mxu0 0
    %2377 = vmatpush1.bf16.msra.mxu0 0
    %2378 = vmatprep.subr.bf16.mxu0 0
    %2379 = vmatpush1.bf16.msra.mxu0 0
    %2380 = vmatprep.subr.bf16.mxu0 0
    %2381 = vmatpush1.bf16.msra.mxu0 0
    %2382 = vmatprep.subr.bf16.mxu0 0
    %2383 = vmatpush1.bf16.msra.mxu0 0
    %2384 = vmatprep.subr.bf16.mxu0 0
    %2385 = vmatpush1.bf16.msra.mxu0 0
    %2386 = vmatprep.subr.bf16.mxu0 0
    %2387 = vmatpush1.bf16.msra.mxu0 0
    %2388 = vmatprep.subr.bf16.mxu0 0
    %2389 = vmatpush1.bf16.msra.mxu0 0
    %2390 = vmatprep.mubr.bf16.mxu0 0
    %2391 = vmatmul.mubr.bf16.gmra.mrb[0].mxu0 %v2350
    %v2392 = vpop.f32.mrb[0].mxu0
    %v2393 = vadd.f32 0.0, %v2392
    %v2394 = vpop.f32.mrb[0].mxu0
    %v2395 = vpop.f32.mrb[0].mxu0
    %v2396 = vadd.f32 0.0, %v2395
    %v2397 = vpop.f32.mrb[0].mxu0
    %2398 = vmatprep.mubr.bf16.mxu0 0
    %2399 = vmatmul.mubr.bf16.gmra.mrb[0].mxu0 %v2353
    %v2400 = vpop.f32.mrb[0].mxu0
    %v2401 = vadd.f32 0.0, %v2400
    %v2402 = vpop.f32.mrb[0].mxu0
    %v2403 = vpop.f32.mrb[0].mxu0
    %v2404 = vadd.f32 0.0, %v2403
    %v2405 = vpop.f32.mrb[0].mxu0
    %2406 = vmatprep.mubr.bf16.mxu0 0
    %2407 = vmatmul.mubr.bf16.gmra.mrb[0].mxu0 %v2356
    %v2408 = vpop.f32.mrb[0].mxu0
    %v2409 = vadd.f32 0.0, %v2408
    %v2410 = vpop.f32.mrb[0].mxu0
    %v2411 = vpop.f32.mrb[0].mxu0
    %v2412 = vadd.f32 0.0, %v2411
    %v2413 = vpop.f32.mrb[0].mxu0
    %2414 = vdwg.mxu0
    %2421 = vrot.lane.b32.xlu0 %v2393, 24
    %v2422 = vpop.permute.xlu0 %2421
    %2423 = vrot.lane.b32.xlu0 %v2396, 24
    %v2424 = vpop.permute.xlu0 %2423
    %2425 = vrot.lane.b32.xlu0 %v2401, 24
    %v2426 = vpop.permute.xlu0 %2425
    %2427 = vrot.lane.b32.xlu0 %v2404, 24
    %v2428 = vpop.permute.xlu0 %2427
    %2429 = vrot.lane.b32.xlu0 %v2409, 24
    %v2430 = vpop.permute.xlu0 %2429
    %2431 = vrot.lane.b32.xlu0 %v2412, 24
    %v2432 = vpop.permute.xlu0 %2431
    %2439 = vst.msk [vmem:[#allocation2 + $0x30] sm:$0xff] %vm1418, %v2422
    %2440 = vst.msk [vmem:[#allocation2 + $0x38] sm:$0xff] %vm1418, %v2424
    %2441 = vst.msk [vmem:[#allocation2 + $0x40] sm:$0xff] %vm1418, %v2426
    %2442 = vst.msk [vmem:[#allocation2 + $0x48] sm:$0xff] %vm1418, %v2428
    %2443 = vst.msk [vmem:[#allocation2 + $0x50] sm:$0xff] %vm1418, %v2430
    %2444 = vst.msk [vmem:[#allocation2 + $0x58] sm:$0xff] %vm1418, %v2432
    %v2445 = vld [vmem:[#allocation2] sm:$0xff]
    %v2446 = vld [vmem:[#allocation2 + $0x8] sm:$0xff]
    %v2447 = vld [vmem:[#allocation2 + $0x10] sm:$0xff]
    %v2448 = vld [vmem:[#allocation2 + $0x18] sm:$0xff]
    %v2449 = vld [vmem:[#allocation2 + $0x20] sm:$0xff]
    %v2450 = vld [vmem:[#allocation2 + $0x28] sm:$0xff]
    %v2451 = vld [vmem:[#allocation2 + $0x30] sm:$0xff]
    %v2452 = vld [vmem:[#allocation2 + $0x38] sm:$0xff]
    %v2453 = vld [vmem:[#allocation2 + $0x40] sm:$0xff]
    %v2454 = vld [vmem:[#allocation2 + $0x48] sm:$0xff]
    %v2455 = vld [vmem:[#allocation2 + $0x50] sm:$0xff]
    %v2456 = vld [vmem:[#allocation2 + $0x58] sm:$0xff]
    %v2457 = vpack.c.bf16 %v2446, %v2445
    %v2458 = vpack.c.bf16 %v2448, %v2447
    %v2459 = vpack.c.bf16 %v2450, %v2449
    %v2460 = vpack.c.bf16 %v2452, %v2451
    %v2461 = vpack.c.bf16 %v2454, %v2453
    %v2462 = vpack.c.bf16 %v2456, %v2455
    %v2463 = vld [vmem:[%s6] sm:$0xf]
    %v2464 = vld [vmem:[%s6 + $0x4] sm:$0xf]
    %v2465 = vld [vmem:[%s6 + $0x8] sm:$0xf]
    %v2466 = vld [vmem:[%s6 + $0xc] sm:$0xf]
    %v2467 = vlaneseq
    %v2468 = vshrl.u32 %v2467, 7
    %v2469 = vsub.s32 0, %v2468
    %v2470 = vrot.slane %v270, %v2469
    %v2475 = vunpack.c.l.b16 %v2463
    %v2476 = vunpack.c.l.b16 %v2464
    %v2477 = vunpack.c.l.b16 %v2465
    %v2478 = vunpack.c.l.b16 %v2466
    %v2479 = vpack.c.b16 %v2476, %v2475
    %v2480 = vpack.c.b16 %v2478, %v2477
    %v2484 = vsel %vm300, %v2457, 0
    %v2487 = vsel %vm300, %v2458, 0
    %v2490 = vsel %vm300, %v2459, 0
    %v2493 = vsel %vm300, %v2460, 0
    %v2496 = vsel %vm300, %v2461, 0
    %v2499 = vsel %vm300, %v2462, 0
    %2501 = vmatprep.subr.bf16.mxu0 0
    %2502 = vmatpush1.bf16.msra.mxu0 %v2479
    %2503 = vmatprep.subr.bf16.mxu0 0
    %2504 = vmatpush1.bf16.msra.mxu0 %v2480
    %2505 = vmatprep.subr.bf16.mxu0 0
    %2506 = vmatpush1.bf16.msra.mxu0 0
    %2507 = vmatprep.subr.bf16.mxu0 0
    %2508 = vmatpush1.bf16.msra.mxu0 0
    %2509 = vmatprep.subr.bf16.mxu0 0
    %2510 = vmatpush1.bf16.msra.mxu0 0
    %2511 = vmatprep.subr.bf16.mxu0 0
    %2512 = vmatpush1.bf16.msra.mxu0 0
    %2513 = vmatprep.subr.bf16.mxu0 0
    %2514 = vmatpush1.bf16.msra.mxu0 0
    %2515 = vmatprep.subr.bf16.mxu0 0
    %2516 = vmatpush1.bf16.msra.mxu0 0
    %2517 = vmatprep.subr.bf16.mxu0 0
    %2518 = vmatpush1.bf16.msra.mxu0 0
    %2519 = vmatprep.subr.bf16.mxu0 0
    %2520 = vmatpush1.bf16.msra.mxu0 0
    %2521 = vmatprep.subr.bf16.mxu0 0
    %2522 = vmatpush1.bf16.msra.mxu0 0
    %2523 = vmatprep.subr.bf16.mxu0 0
    %2524 = vmatpush1.bf16.msra.mxu0 0
    %2525 = vmatprep.subr.bf16.mxu0 0
    %2526 = vmatpush1.bf16.msra.mxu0 0
    %2527 = vmatprep.subr.bf16.mxu0 0
    %2528 = vmatpush1.bf16.msra.mxu0 0
    %2529 = vmatprep.subr.bf16.mxu0 0
    %2530 = vmatpush1.bf16.msra.mxu0 0
    %2531 = vmatprep.subr.bf16.mxu0 0
    %2532 = vmatpush1.bf16.msra.mxu0 0
    %2533 = vmatprep.mubr.bf16.mxu0 0
    %2534 = vmatmul.mubr.bf16.gmra.mrb[0].mxu0 %v2484
    %v2535 = vpop.f32.mrb[0].mxu0
    %v2536 = vadd.f32 %v2470, %v2535
    %v2537 = vpop.f32.mrb[0].mxu0
    %v2538 = vpop.f32.mrb[0].mxu0
    %v2539 = vadd.f32 %v2470, %v2538
    %v2540 = vpop.f32.mrb[0].mxu0
    %2541 = vmatprep.mubr.bf16.mxu0 0
    %2542 = vmatmul.mubr.bf16.gmra.mrb[0].mxu0 %v2487
    %v2543 = vpop.f32.mrb[0].mxu0
    %v2544 = vadd.f32 %v2470, %v2543
    %v2545 = vpop.f32.mrb[0].mxu0
    %v2546 = vpop.f32.mrb[0].mxu0
    %v2547 = vadd.f32 %v2470, %v2546
    %v2548 = vpop.f32.mrb[0].mxu0
    %2549 = vmatprep.mubr.bf16.mxu0 0
    %2550 = vmatmul.mubr.bf16.gmra.mrb[0].mxu0 %v2490
    %v2551 = vpop.f32.mrb[0].mxu0
    %v2552 = vadd.f32 %v2470, %v2551
    %v2553 = vpop.f32.mrb[0].mxu0
    %v2554 = vpop.f32.mrb[0].mxu0
    %v2555 = vadd.f32 %v2470, %v2554
    %v2556 = vpop.f32.mrb[0].mxu0
    %2557 = vmatprep.mubr.bf16.mxu0 0
    %2558 = vmatmul.mubr.bf16.gmra.mrb[0].mxu0 %v2493
    %v2559 = vpop.f32.mrb[0].mxu0
    %v2560 = vadd.f32 %v2470, %v2559
    %v2561 = vpop.f32.mrb[0].mxu0
    %v2562 = vpop.f32.mrb[0].mxu0
    %v2563 = vadd.f32 %v2470, %v2562
    %v2564 = vpop.f32.mrb[0].mxu0
    %2565 = vmatprep.mubr.bf16.mxu0 0
    %2566 = vmatmul.mubr.bf16.gmra.mrb[0].mxu0 %v2496
    %v2567 = vpop.f32.mrb[0].mxu0
    %v2568 = vadd.f32 %v2470, %v2567
    %v2569 = vpop.f32.mrb[0].mxu0
    %v2570 = vpop.f32.mrb[0].mxu0
    %v2571 = vadd.f32 %v2470, %v2570
    %v2572 = vpop.f32.mrb[0].mxu0
    %2573 = vmatprep.mubr.bf16.mxu0 0
    %2574 = vmatmul.mubr.bf16.gmra.mrb[0].mxu0 %v2499
    %v2575 = vpop.f32.mrb[0].mxu0
    %v2576 = vadd.f32 %v2470, %v2575
    %v2577 = vpop.f32.mrb[0].mxu0
    %v2578 = vpop.f32.mrb[0].mxu0
    %v2579 = vadd.f32 %v2470, %v2578
    %v2580 = vpop.f32.mrb[0].mxu0
    %2581 = vdwg.mxu0
    %v2582 = vadd.f32 %v224, %v2536
    %v2583 = vadd.f32 %v227, %v2539
    %v2584 = vadd.f32 %v232, %v2544
    %v2585 = vadd.f32 %v235, %v2547
    %v2586 = vadd.f32 %v240, %v2552
    %v2587 = vadd.f32 %v243, %v2555
    %v2588 = vadd.f32 %v248, %v2560
    %v2589 = vadd.f32 %v251, %v2563
    %v2590 = vadd.f32 %v256, %v2568
    %v2591 = vadd.f32 %v259, %v2571
    %v2592 = vadd.f32 %v264, %v2576
    %v2593 = vadd.f32 %v267, %v2579
    %v2594 = vsel %vm300, %v2582, 0.0
    %2595 = vadd.xlane.f32.xlu0 %v2594
    %v2596 = vpop.xlane.xlu0 %2595
    %v2597 = vsel %vm300, %v2583, 0.0
    %2598 = vadd.xlane.f32.xlu0 %v2597
    %v2599 = vpop.xlane.xlu0 %2598
    %v2600 = vsel %vm300, %v2584, 0.0
    %2601 = vadd.xlane.f32.xlu0 %v2600
    %v2602 = vpop.xlane.xlu0 %2601
    %v2603 = vsel %vm300, %v2585, 0.0
    %2604 = vadd.xlane.f32.xlu0 %v2603
    %v2605 = vpop.xlane.xlu0 %2604
    %v2606 = vsel %vm300, %v2586, 0.0
    %2607 = vadd.xlane.f32.xlu0 %v2606
    %v2608 = vpop.xlane.xlu0 %2607
    %v2609 = vsel %vm300, %v2587, 0.0
    %2610 = vadd.xlane.f32.xlu0 %v2609
    %v2611 = vpop.xlane.xlu0 %2610
    %v2612 = vsel %vm300, %v2588, 0.0
    %2613 = vadd.xlane.f32.xlu0 %v2612
    %v2614 = vpop.xlane.xlu0 %2613
    %v2615 = vsel %vm300, %v2589, 0.0
    %2616 = vadd.xlane.f32.xlu0 %v2615
    %v2617 = vpop.xlane.xlu0 %2616
    %v2618 = vsel %vm300, %v2590, 0.0
    %2619 = vadd.xlane.f32.xlu0 %v2618
    %v2620 = vpop.xlane.xlu0 %2619
    %v2621 = vsel %vm300, %v2591, 0.0
    %2622 = vadd.xlane.f32.xlu0 %v2621
    %v2623 = vpop.xlane.xlu0 %2622
    %v2624 = vsel %vm300, %v2592, 0.0
    %2625 = vadd.xlane.f32.xlu0 %v2624
    %v2626 = vpop.xlane.xlu0 %2625
    %v2627 = vsel %vm300, %v2593, 0.0
    %2628 = vadd.xlane.f32.xlu0 %v2627
    %v2629 = vpop.xlane.xlu0 %2628
    %v2630 = vrcp.pop 32.0
    %v2631 = vmul.f32 %v2596, %v2630
    %v2632 = vmul.f32 %v2599, %v2630
    %v2633 = vmul.f32 %v2602, %v2630
    %v2634 = vmul.f32 %v2605, %v2630
    %v2635 = vmul.f32 %v2608, %v2630
    %v2636 = vmul.f32 %v2611, %v2630
    %v2637 = vmul.f32 %v2614, %v2630
    %v2638 = vmul.f32 %v2617, %v2630
    %v2639 = vmul.f32 %v2620, %v2630
    %v2640 = vmul.f32 %v2623, %v2630
    %v2641 = vmul.f32 %v2626, %v2630
    %v2642 = vmul.f32 %v2629, %v2630
    %v2643 = vmul.f32 %v2582, %v2582
    %v2644 = vmul.f32 %v2583, %v2583
    %v2645 = vmul.f32 %v2584, %v2584
    %v2646 = vmul.f32 %v2585, %v2585
    %v2647 = vmul.f32 %v2586, %v2586
    %v2648 = vmul.f32 %v2587, %v2587
    %v2649 = vmul.f32 %v2588, %v2588
    %v2650 = vmul.f32 %v2589, %v2589
    %v2651 = vmul.f32 %v2590, %v2590
    %v2652 = vmul.f32 %v2591, %v2591
    %v2653 = vmul.f32 %v2592, %v2592
    %v2654 = vmul.f32 %v2593, %v2593
    %v2655 = vsel %vm300, %v2643, 0.0
    %2656 = vadd.xlane.f32.xlu0 %v2655
    %v2657 = vpop.xlane.xlu0 %2656
    %v2658 = vsel %vm300, %v2644, 0.0
    %2659 = vadd.xlane.f32.xlu0 %v2658
    %v2660 = vpop.xlane.xlu0 %2659
    %v2661 = vsel %vm300, %v2645, 0.0
    %2662 = vadd.xlane.f32.xlu0 %v2661
    %v2663 = vpop.xlane.xlu0 %2662
    %v2664 = vsel %vm300, %v2646, 0.0
    %2665 = vadd.xlane.f32.xlu0 %v2664
    %v2666 = vpop.xlane.xlu0 %2665
    %v2667 = vsel %vm300, %v2647, 0.0
    %2668 = vadd.xlane.f32.xlu0 %v2667
    %v2669 = vpop.xlane.xlu0 %2668
    %v2670 = vsel %vm300, %v2648, 0.0
    %2671 = vadd.xlane.f32.xlu0 %v2670
    %v2672 = vpop.xlane.xlu0 %2671
    %v2673 = vsel %vm300, %v2649, 0.0
    %2674 = vadd.xlane.f32.xlu0 %v2673
    %v2675 = vpop.xlane.xlu0 %2674
    %v2676 = vsel %vm300, %v2650, 0.0
    %2677 = vadd.xlane.f32.xlu0 %v2676
    %v2678 = vpop.xlane.xlu0 %2677
    %v2679 = vsel %vm300, %v2651, 0.0
    %2680 = vadd.xlane.f32.xlu0 %v2679
    %v2681 = vpop.xlane.xlu0 %2680
    %v2682 = vsel %vm300, %v2652, 0.0
    %2683 = vadd.xlane.f32.xlu0 %v2682
    %v2684 = vpop.xlane.xlu0 %2683
    %v2685 = vsel %vm300, %v2653, 0.0
    %2686 = vadd.xlane.f32.xlu0 %v2685
    %v2687 = vpop.xlane.xlu0 %2686
    %v2688 = vsel %vm300, %v2654, 0.0
    %2689 = vadd.xlane.f32.xlu0 %v2688
    %v2690 = vpop.xlane.xlu0 %2689
    %v2691 = vmul.f32 %v2657, %v2630
    %v2692 = vmul.f32 %v2660, %v2630
    %v2693 = vmul.f32 %v2663, %v2630
    %v2694 = vmul.f32 %v2666, %v2630
    %v2695 = vmul.f32 %v2669, %v2630
    %v2696 = vmul.f32 %v2672, %v2630
    %v2697 = vmul.f32 %v2675, %v2630
    %v2698 = vmul.f32 %v2678, %v2630
    %v2699 = vmul.f32 %v2681, %v2630
    %v2700 = vmul.f32 %v2684, %v2630
    %v2701 = vmul.f32 %v2687, %v2630
    %v2702 = vmul.f32 %v2690, %v2630
    %v2703 = vmul.f32 %v2631, %v2631
    %v2704 = vmul.f32 %v2632, %v2632
    %v2705 = vmul.f32 %v2633, %v2633
    %v2706 = vmul.f32 %v2634, %v2634
    %v2707 = vmul.f32 %v2635, %v2635
    %v2708 = vmul.f32 %v2636, %v2636
    %v2709 = vmul.f32 %v2637, %v2637
    %v2710 = vmul.f32 %v2638, %v2638
    %v2711 = vmul.f32 %v2639, %v2639
    %v2712 = vmul.f32 %v2640, %v2640
    %v2713 = vmul.f32 %v2641, %v2641
    %v2714 = vmul.f32 %v2642, %v2642
    %v2715 = vsub.f32 %v2691, %v2703
    %v2716 = vsub.f32 %v2692, %v2704
    %v2717 = vsub.f32 %v2693, %v2705
    %v2718 = vsub.f32 %v2694, %v2706
    %v2719 = vsub.f32 %v2695, %v2707
    %v2720 = vsub.f32 %v2696, %v2708
    %v2721 = vsub.f32 %v2697, %v2709
    %v2722 = vsub.f32 %v2698, %v2710
    %v2723 = vsub.f32 %v2699, %v2711
    %v2724 = vsub.f32 %v2700, %v2712
    %v2725 = vsub.f32 %v2701, %v2713
    %v2726 = vsub.f32 %v2702, %v2714
    %v2727 = vsub.f32 %v2582, %v2631
    %v2728 = vsub.f32 %v2583, %v2632
    %v2729 = vsub.f32 %v2584, %v2633
    %v2730 = vsub.f32 %v2585, %v2634
    %v2731 = vsub.f32 %v2586, %v2635
    %v2732 = vsub.f32 %v2587, %v2636
    %v2733 = vsub.f32 %v2588, %v2637
    %v2734 = vsub.f32 %v2589, %v2638
    %v2735 = vsub.f32 %v2590, %v2639
    %v2736 = vsub.f32 %v2591, %v2640
    %v2737 = vsub.f32 %v2592, %v2641
    %v2738 = vsub.f32 %v2593, %v2642
    %v2739 = vadd.f32 %v2715, 1e-05
    %v2740 = vadd.f32 %v2716, 1e-05
    %v2741 = vadd.f32 %v2717, 1e-05
    %v2742 = vadd.f32 %v2718, 1e-05
    %v2743 = vadd.f32 %v2719, 1e-05
    %v2744 = vadd.f32 %v2720, 1e-05
    %v2745 = vadd.f32 %v2721, 1e-05
    %v2746 = vadd.f32 %v2722, 1e-05
    %v2747 = vadd.f32 %v2723, 1e-05
    %v2748 = vadd.f32 %v2724, 1e-05
    %v2749 = vadd.f32 %v2725, 1e-05
    %v2750 = vadd.f32 %v2726, 1e-05
    %v2751 = vrsqrt.pop %v2739
    %v2752 = vrsqrt.pop %v2740
    %v2753 = vrsqrt.pop %v2741
    %v2754 = vrsqrt.pop %v2742
    %v2755 = vrsqrt.pop %v2743
    %v2756 = vrsqrt.pop %v2744
    %v2757 = vrsqrt.pop %v2745
    %v2758 = vrsqrt.pop %v2746
    %v2759 = vrsqrt.pop %v2747
    %v2760 = vrsqrt.pop %v2748
    %v2761 = vrsqrt.pop %v2749
    %v2762 = vrsqrt.pop %v2750
    %v2763 = vmul.f32 %v2727, %v2751
    %v2764 = vmul.f32 %v2728, %v2752
    %v2765 = vmul.f32 %v2729, %v2753
    %v2766 = vmul.f32 %v2730, %v2754
    %v2767 = vmul.f32 %v2731, %v2755
    %v2768 = vmul.f32 %v2732, %v2756
    %v2769 = vmul.f32 %v2733, %v2757
    %v2770 = vmul.f32 %v2734, %v2758
    %v2771 = vmul.f32 %v2735, %v2759
    %v2772 = vmul.f32 %v2736, %v2760
    %v2773 = vmul.f32 %v2737, %v2761
    %v2774 = vmul.f32 %v2738, %v2762
    %v2775 = vlaneseq
    %v2776 = vshrl.u32 %v2775, 7
    %v2777 = vsub.s32 1, %v2776
    %v2778 = vrot.slane %v270, %v2777
    %v2779 = vmul.f32 %v2763, %v2778
    %v2780 = vmul.f32 %v2764, %v2778
    %v2781 = vmul.f32 %v2765, %v2778
    %v2782 = vmul.f32 %v2766, %v2778
    %v2783 = vmul.f32 %v2767, %v2778
    %v2784 = vmul.f32 %v2768, %v2778
    %v2785 = vmul.f32 %v2769, %v2778
    %v2786 = vmul.f32 %v2770, %v2778
    %v2787 = vmul.f32 %v2771, %v2778
    %v2788 = vmul.f32 %v2772, %v2778
    %v2789 = vmul.f32 %v2773, %v2778
    %v2790 = vmul.f32 %v2774, %v2778
    %v2791 = vlaneseq
    %v2792 = vshrl.u32 %v2791, 7
    %v2793 = vsub.s32 2, %v2792
    %v2794 = vrot.slane %v270, %v2793
    %v2795 = vadd.f32 %v2779, %v2794
    %v2796 = vadd.f32 %v2780, %v2794
    %v2797 = vadd.f32 %v2781, %v2794
    %v2798 = vadd.f32 %v2782, %v2794
    %v2799 = vadd.f32 %v2783, %v2794
    %v2800 = vadd.f32 %v2784, %v2794
    %v2801 = vadd.f32 %v2785, %v2794
    %v2802 = vadd.f32 %v2786, %v2794
    %v2803 = vadd.f32 %v2787, %v2794
    %v2804 = vadd.f32 %v2788, %v2794
    %v2805 = vadd.f32 %v2789, %v2794
    %v2806 = vadd.f32 %v2790, %v2794
    %v2807 = vpack.c.bf16 %v2796, %v2795
    %v2808 = vpack.c.bf16 %v2798, %v2797
    %v2809 = vpack.c.bf16 %v2800, %v2799
    %v2810 = vpack.c.bf16 %v2802, %v2801
    %v2811 = vpack.c.bf16 %v2804, %v2803
    %v2812 = vpack.c.bf16 %v2806, %v2805
    %v2813 = vld [vmem:[%s7] sm:$0xf]
    %v2814 = vld [vmem:[%s7 + $0x4] sm:$0xf]
    %v2815 = vld [vmem:[%s7 + $0x8] sm:$0xf]
    %v2816 = vld [vmem:[%s7 + $0xc] sm:$0xf]
    %v2817 = vlaneseq
    %v2818 = vshrl.u32 %v2817, 7
    %v2819 = vsub.s32 3, %v2818
    %v2820 = vrot.slane %v270, %v2819
    %v2825 = vunpack.c.l.b16 %v2813
    %v2826 = vunpack.c.l.b16 %v2814
    %v2827 = vunpack.c.l.b16 %v2815
    %v2828 = vunpack.c.l.b16 %v2816
    %v2829 = vpack.c.b16 %v2826, %v2825
    %v2830 = vpack.c.b16 %v2828, %v2827
    %v2834 = vsel %vm300, %v2807, 0
    %v2837 = vsel %vm300, %v2808, 0
    %v2840 = vsel %vm300, %v2809, 0
    %v2843 = vsel %vm300, %v2810, 0
    %v2846 = vsel %vm300, %v2811, 0
    %v2849 = vsel %vm300, %v2812, 0
    %2851 = vmatprep.subr.bf16.mxu0 0
    %2852 = vmatpush1.bf16.msra.mxu0 %v2829
    %2853 = vmatprep.subr.bf16.mxu0 0
    %2854 = vmatpush1.bf16.msra.mxu0 %v2830
    %2855 = vmatprep.subr.bf16.mxu0 0
    %2856 = vmatpush1.bf16.msra.mxu0 0
    %2857 = vmatprep.subr.bf16.mxu0 0
    %2858 = vmatpush1.bf16.msra.mxu0 0
    %2859 = vmatprep.subr.bf16.mxu0 0
    %2860 = vmatpush1.bf16.msra.mxu0 0
    %2861 = vmatprep.subr.bf16.mxu0 0
    %2862 = vmatpush1.bf16.msra.mxu0 0
    %2863 = vmatprep.subr.bf16.mxu0 0
    %2864 = vmatpush1.bf16.msra.mxu0 0
    %2865 = vmatprep.subr.bf16.mxu0 0
    %2866 = vmatpush1.bf16.msra.mxu0 0
    %2867 = vmatprep.subr.bf16.mxu0 0
    %2868 = vmatpush1.bf16.msra.mxu0 0
    %2869 = vmatprep.subr.bf16.mxu0 0
    %2870 = vmatpush1.bf16.msra.mxu0 0
    %2871 = vmatprep.subr.bf16.mxu0 0
    %2872 = vmatpush1.bf16.msra.mxu0 0
    %2873 = vmatprep.subr.bf16.mxu0 0
    %2874 = vmatpush1.bf16.msra.mxu0 0
    %2875 = vmatprep.subr.bf16.mxu0 0
    %2876 = vmatpush1.bf16.msra.mxu0 0
    %2877 = vmatprep.subr.bf16.mxu0 0
    %2878 = vmatpush1.bf16.msra.mxu0 0
    %2879 = vmatprep.subr.bf16.mxu0 0
    %2880 = vmatpush1.bf16.msra.mxu0 0
    %2881 = vmatprep.subr.bf16.mxu0 0
    %2882 = vmatpush1.bf16.msra.mxu0 0
    %2883 = vmatprep.mubr.bf16.mxu0 0
    %2884 = vmatmul.mubr.bf16.gmra.mrb[0].mxu0 %v2834
    %v2885 = vpop.f32.mrb[0].mxu0
    %v2886 = vadd.f32 %v2820, %v2885
    %v2887 = vpop.f32.mrb[0].mxu0
    %v2888 = vpop.f32.mrb[0].mxu0
    %v2889 = vadd.f32 %v2820, %v2888
    %v2890 = vpop.f32.mrb[0].mxu0
    %2891 = vmatprep.mubr.bf16.mxu0 0
    %2892 = vmatmul.mubr.bf16.gmra.mrb[0].mxu0 %v2837
    %v2893 = vpop.f32.mrb[0].mxu0
    %v2894 = vadd.f32 %v2820, %v2893
    %v2895 = vpop.f32.mrb[0].mxu0
    %v2896 = vpop.f32.mrb[0].mxu0
    %v2897 = vadd.f32 %v2820, %v2896
    %v2898 = vpop.f32.mrb[0].mxu0
    %2899 = vmatprep.mubr.bf16.mxu0 0
    %2900 = vmatmul.mubr.bf16.gmra.mrb[0].mxu0 %v2840
    %v2901 = vpop.f32.mrb[0].mxu0
    %v2902 = vadd.f32 %v2820, %v2901
    %v2903 = vpop.f32.mrb[0].mxu0
    %v2904 = vpop.f32.mrb[0].mxu0
    %v2905 = vadd.f32 %v2820, %v2904
    %v2906 = vpop.f32.mrb[0].mxu0
    %2907 = vmatprep.mubr.bf16.mxu0 0
    %2908 = vmatmul.mubr.bf16.gmra.mrb[0].mxu0 %v2843
    %v2909 = vpop.f32.mrb[0].mxu0
    %v2910 = vadd.f32 %v2820, %v2909
    %v2911 = vpop.f32.mrb[0].mxu0
    %v2912 = vpop.f32.mrb[0].mxu0
    %v2913 = vadd.f32 %v2820, %v2912
    %v2914 = vpop.f32.mrb[0].mxu0
    %2915 = vmatprep.mubr.bf16.mxu0 0
    %2916 = vmatmul.mubr.bf16.gmra.mrb[0].mxu0 %v2846
    %v2917 = vpop.f32.mrb[0].mxu0
    %v2918 = vadd.f32 %v2820, %v2917
    %v2919 = vpop.f32.mrb[0].mxu0
    %v2920 = vpop.f32.mrb[0].mxu0
    %v2921 = vadd.f32 %v2820, %v2920
    %v2922 = vpop.f32.mrb[0].mxu0
    %2923 = vmatprep.mubr.bf16.mxu0 0
    %2924 = vmatmul.mubr.bf16.gmra.mrb[0].mxu0 %v2849
    %v2925 = vpop.f32.mrb[0].mxu0
    %v2926 = vadd.f32 %v2820, %v2925
    %v2927 = vpop.f32.mrb[0].mxu0
    %v2928 = vpop.f32.mrb[0].mxu0
    %v2929 = vadd.f32 %v2820, %v2928
    %v2930 = vpop.f32.mrb[0].mxu0
    %2931 = vdwg.mxu0
    %v2932 = vmax.f32 %v2886, 0.0
    %v2933 = vmax.f32 %v2889, 0.0
    %v2934 = vmax.f32 %v2894, 0.0
    %v2935 = vmax.f32 %v2897, 0.0
    %v2936 = vmax.f32 %v2902, 0.0
    %v2937 = vmax.f32 %v2905, 0.0
    %v2938 = vmax.f32 %v2910, 0.0
    %v2939 = vmax.f32 %v2913, 0.0
    %v2940 = vmax.f32 %v2918, 0.0
    %v2941 = vmax.f32 %v2921, 0.0
    %v2942 = vmax.f32 %v2926, 0.0
    %v2943 = vmax.f32 %v2929, 0.0
    %v2944 = vpack.c.bf16 %v2933, %v2932
    %v2945 = vpack.c.bf16 %v2935, %v2934
    %v2946 = vpack.c.bf16 %v2937, %v2936
    %v2947 = vpack.c.bf16 %v2939, %v2938
    %v2948 = vpack.c.bf16 %v2941, %v2940
    %v2949 = vpack.c.bf16 %v2943, %v2942
    %s2950 = scalar_lea.vmem %s7, 16
    %v2951 = vld [vmem:[%s2950] sm:$0xf]
    %v2952 = vld [vmem:[%s2950 + $0x4] sm:$0xf]
    %v2953 = vld [vmem:[%s2950 + $0x8] sm:$0xf]
    %v2954 = vld [vmem:[%s2950 + $0xc] sm:$0xf]
    %v2955 = vlaneseq
    %v2956 = vshrl.u32 %v2955, 7
    %v2957 = vsub.s32 4, %v2956
    %v2958 = vrot.slane %v270, %v2957
    %v2963 = vunpack.c.l.b16 %v2951
    %v2964 = vunpack.c.l.b16 %v2952
    %v2965 = vunpack.c.l.b16 %v2953
    %v2966 = vunpack.c.l.b16 %v2954
    %v2967 = vpack.c.b16 %v2964, %v2963
    %v2968 = vpack.c.b16 %v2966, %v2965
    %v2972 = vsel %vm300, %v2944, 0
    %v2975 = vsel %vm300, %v2945, 0
    %v2978 = vsel %vm300, %v2946, 0
    %v2981 = vsel %vm300, %v2947, 0
    %v2984 = vsel %vm300, %v2948, 0
    %v2987 = vsel %vm300, %v2949, 0
    %2989 = vmatprep.subr.bf16.mxu0 0
    %2990 = vmatpush1.bf16.msra.mxu0 %v2967
    %2991 = vmatprep.subr.bf16.mxu0 0
    %2992 = vmatpush1.bf16.msra.mxu0 %v2968
    %2993 = vmatprep.subr.bf16.mxu0 0
    %2994 = vmatpush1.bf16.msra.mxu0 0
    %2995 = vmatprep.subr.bf16.mxu0 0
    %2996 = vmatpush1.bf16.msra.mxu0 0
    %2997 = vmatprep.subr.bf16.mxu0 0
    %2998 = vmatpush1.bf16.msra.mxu0 0
    %2999 = vmatprep.subr.bf16.mxu0 0
    %3000 = vmatpush1.bf16.msra.mxu0 0
    %3001 = vmatprep.subr.bf16.mxu0 0
    %3002 = vmatpush1.bf16.msra.mxu0 0
    %3003 = vmatprep.subr.bf16.mxu0 0
    %3004 = vmatpush1.bf16.msra.mxu0 0
    %3005 = vmatprep.subr.bf16.mxu0 0
    %3006 = vmatpush1.bf16.msra.mxu0 0
    %3007 = vmatprep.subr.bf16.mxu0 0
    %3008 = vmatpush1.bf16.msra.mxu0 0
    %3009 = vmatprep.subr.bf16.mxu0 0
    %3010 = vmatpush1.bf16.msra.mxu0 0
    %3011 = vmatprep.subr.bf16.mxu0 0
    %3012 = vmatpush1.bf16.msra.mxu0 0
    %3013 = vmatprep.subr.bf16.mxu0 0
    %3014 = vmatpush1.bf16.msra.mxu0 0
    %3015 = vmatprep.subr.bf16.mxu0 0
    %3016 = vmatpush1.bf16.msra.mxu0 0
    %3017 = vmatprep.subr.bf16.mxu0 0
    %3018 = vmatpush1.bf16.msra.mxu0 0
    %3019 = vmatprep.subr.bf16.mxu0 0
    %3020 = vmatpush1.bf16.msra.mxu0 0
    %3021 = vmatprep.mubr.bf16.mxu0 0
    %3022 = vmatmul.mubr.bf16.gmra.mrb[0].mxu0 %v2972
    %v3023 = vpop.f32.mrb[0].mxu0
    %v3024 = vadd.f32 %v2958, %v3023
    %v3025 = vpop.f32.mrb[0].mxu0
    %v3026 = vpop.f32.mrb[0].mxu0
    %v3027 = vadd.f32 %v2958, %v3026
    %v3028 = vpop.f32.mrb[0].mxu0
    %3029 = vmatprep.mubr.bf16.mxu0 0
    %3030 = vmatmul.mubr.bf16.gmra.mrb[0].mxu0 %v2975
    %v3031 = vpop.f32.mrb[0].mxu0
    %v3032 = vadd.f32 %v2958, %v3031
    %v3033 = vpop.f32.mrb[0].mxu0
    %v3034 = vpop.f32.mrb[0].mxu0
    %v3035 = vadd.f32 %v2958, %v3034
    %v3036 = vpop.f32.mrb[0].mxu0
    %3037 = vmatprep.mubr.bf16.mxu0 0
    %3038 = vmatmul.mubr.bf16.gmra.mrb[0].mxu0 %v2978
    %v3039 = vpop.f32.mrb[0].mxu0
    %v3040 = vadd.f32 %v2958, %v3039
    %v3041 = vpop.f32.mrb[0].mxu0
    %v3042 = vpop.f32.mrb[0].mxu0
    %v3043 = vadd.f32 %v2958, %v3042
    %v3044 = vpop.f32.mrb[0].mxu0
    %3045 = vmatprep.mubr.bf16.mxu0 0
    %3046 = vmatmul.mubr.bf16.gmra.mrb[0].mxu0 %v2981
    %v3047 = vpop.f32.mrb[0].mxu0
    %v3048 = vadd.f32 %v2958, %v3047
    %v3049 = vpop.f32.mrb[0].mxu0
    %v3050 = vpop.f32.mrb[0].mxu0
    %v3051 = vadd.f32 %v2958, %v3050
    %v3052 = vpop.f32.mrb[0].mxu0
    %3053 = vmatprep.mubr.bf16.mxu0 0
    %3054 = vmatmul.mubr.bf16.gmra.mrb[0].mxu0 %v2984
    %v3055 = vpop.f32.mrb[0].mxu0
    %v3056 = vadd.f32 %v2958, %v3055
    %v3057 = vpop.f32.mrb[0].mxu0
    %v3058 = vpop.f32.mrb[0].mxu0
    %v3059 = vadd.f32 %v2958, %v3058
    %v3060 = vpop.f32.mrb[0].mxu0
    %3061 = vmatprep.mubr.bf16.mxu0 0
    %3062 = vmatmul.mubr.bf16.gmra.mrb[0].mxu0 %v2987
    %v3063 = vpop.f32.mrb[0].mxu0
    %v3064 = vadd.f32 %v2958, %v3063
    %v3065 = vpop.f32.mrb[0].mxu0
    %v3066 = vpop.f32.mrb[0].mxu0
    %v3067 = vadd.f32 %v2958, %v3066
    %v3068 = vpop.f32.mrb[0].mxu0
    %3069 = vdwg.mxu0
    %v3070 = vadd.f32 %v2795, %v3024
    %v3071 = vadd.f32 %v2796, %v3027
    %v3072 = vadd.f32 %v2797, %v3032
    %v3073 = vadd.f32 %v2798, %v3035
    %v3074 = vadd.f32 %v2799, %v3040
    %v3075 = vadd.f32 %v2800, %v3043
    %v3076 = vadd.f32 %v2801, %v3048
    %v3077 = vadd.f32 %v2802, %v3051
    %v3078 = vadd.f32 %v2803, %v3056
    %v3079 = vadd.f32 %v2804, %v3059
    %v3080 = vadd.f32 %v2805, %v3064
    %v3081 = vadd.f32 %v2806, %v3067
    %v3082 = vsel %vm300, %v3070, 0.0
    %3083 = vadd.xlane.f32.xlu0 %v3082
    %v3084 = vpop.xlane.xlu0 %3083
    %v3085 = vsel %vm300, %v3071, 0.0
    %3086 = vadd.xlane.f32.xlu0 %v3085
    %v3087 = vpop.xlane.xlu0 %3086
    %v3088 = vsel %vm300, %v3072, 0.0
    %3089 = vadd.xlane.f32.xlu0 %v3088
    %v3090 = vpop.xlane.xlu0 %3089
    %v3091 = vsel %vm300, %v3073, 0.0
    %3092 = vadd.xlane.f32.xlu0 %v3091
    %v3093 = vpop.xlane.xlu0 %3092
    %v3094 = vsel %vm300, %v3074, 0.0
    %3095 = vadd.xlane.f32.xlu0 %v3094
    %v3096 = vpop.xlane.xlu0 %3095
    %v3097 = vsel %vm300, %v3075, 0.0
    %3098 = vadd.xlane.f32.xlu0 %v3097
    %v3099 = vpop.xlane.xlu0 %3098
    %v3100 = vsel %vm300, %v3076, 0.0
    %3101 = vadd.xlane.f32.xlu0 %v3100
    %v3102 = vpop.xlane.xlu0 %3101
    %v3103 = vsel %vm300, %v3077, 0.0
    %3104 = vadd.xlane.f32.xlu0 %v3103
    %v3105 = vpop.xlane.xlu0 %3104
    %v3106 = vsel %vm300, %v3078, 0.0
    %3107 = vadd.xlane.f32.xlu0 %v3106
    %v3108 = vpop.xlane.xlu0 %3107
    %v3109 = vsel %vm300, %v3079, 0.0
    %3110 = vadd.xlane.f32.xlu0 %v3109
    %v3111 = vpop.xlane.xlu0 %3110
    %v3112 = vsel %vm300, %v3080, 0.0
    %3113 = vadd.xlane.f32.xlu0 %v3112
    %v3114 = vpop.xlane.xlu0 %3113
    %v3115 = vsel %vm300, %v3081, 0.0
    %3116 = vadd.xlane.f32.xlu0 %v3115
    %v3117 = vpop.xlane.xlu0 %3116
    %v3118 = vmul.f32 %v3084, %v2630
    %v3119 = vmul.f32 %v3087, %v2630
    %v3120 = vmul.f32 %v3090, %v2630
    %v3121 = vmul.f32 %v3093, %v2630
    %v3122 = vmul.f32 %v3096, %v2630
    %v3123 = vmul.f32 %v3099, %v2630
    %v3124 = vmul.f32 %v3102, %v2630
    %v3125 = vmul.f32 %v3105, %v2630
    %v3126 = vmul.f32 %v3108, %v2630
    %v3127 = vmul.f32 %v3111, %v2630
    %v3128 = vmul.f32 %v3114, %v2630
    %v3129 = vmul.f32 %v3117, %v2630
    %v3130 = vmul.f32 %v3070, %v3070
    %v3131 = vmul.f32 %v3071, %v3071
    %v3132 = vmul.f32 %v3072, %v3072
    %v3133 = vmul.f32 %v3073, %v3073
    %v3134 = vmul.f32 %v3074, %v3074
    %v3135 = vmul.f32 %v3075, %v3075
    %v3136 = vmul.f32 %v3076, %v3076
    %v3137 = vmul.f32 %v3077, %v3077
    %v3138 = vmul.f32 %v3078, %v3078
    %v3139 = vmul.f32 %v3079, %v3079
    %v3140 = vmul.f32 %v3080, %v3080
    %v3141 = vmul.f32 %v3081, %v3081
    %v3142 = vsel %vm300, %v3130, 0.0
    %3143 = vadd.xlane.f32.xlu0 %v3142
    %v3144 = vpop.xlane.xlu0 %3143
    %v3145 = vsel %vm300, %v3131, 0.0
    %3146 = vadd.xlane.f32.xlu0 %v3145
    %v3147 = vpop.xlane.xlu0 %3146
    %v3148 = vsel %vm300, %v3132, 0.0
    %3149 = vadd.xlane.f32.xlu0 %v3148
    %v3150 = vpop.xlane.xlu0 %3149
    %v3151 = vsel %vm300, %v3133, 0.0
    %3152 = vadd.xlane.f32.xlu0 %v3151
    %v3153 = vpop.xlane.xlu0 %3152
    %v3154 = vsel %vm300, %v3134, 0.0
    %3155 = vadd.xlane.f32.xlu0 %v3154
    %v3156 = vpop.xlane.xlu0 %3155
    %v3157 = vsel %vm300, %v3135, 0.0
    %3158 = vadd.xlane.f32.xlu0 %v3157
    %v3159 = vpop.xlane.xlu0 %3158
    %v3160 = vsel %vm300, %v3136, 0.0
    %3161 = vadd.xlane.f32.xlu0 %v3160
    %v3162 = vpop.xlane.xlu0 %3161
    %v3163 = vsel %vm300, %v3137, 0.0
    %3164 = vadd.xlane.f32.xlu0 %v3163
    %v3165 = vpop.xlane.xlu0 %3164
    %v3166 = vsel %vm300, %v3138, 0.0
    %3167 = vadd.xlane.f32.xlu0 %v3166
    %v3168 = vpop.xlane.xlu0 %3167
    %v3169 = vsel %vm300, %v3139, 0.0
    %3170 = vadd.xlane.f32.xlu0 %v3169
    %v3171 = vpop.xlane.xlu0 %3170
    %v3172 = vsel %vm300, %v3140, 0.0
    %3173 = vadd.xlane.f32.xlu0 %v3172
    %v3174 = vpop.xlane.xlu0 %3173
    %v3175 = vsel %vm300, %v3141, 0.0
    %3176 = vadd.xlane.f32.xlu0 %v3175
    %v3177 = vpop.xlane.xlu0 %3176
    %v3178 = vmul.f32 %v3144, %v2630
    %v3179 = vmul.f32 %v3147, %v2630
    %v3180 = vmul.f32 %v3150, %v2630
    %v3181 = vmul.f32 %v3153, %v2630
    %v3182 = vmul.f32 %v3156, %v2630
    %v3183 = vmul.f32 %v3159, %v2630
    %v3184 = vmul.f32 %v3162, %v2630
    %v3185 = vmul.f32 %v3165, %v2630
    %v3186 = vmul.f32 %v3168, %v2630
    %v3187 = vmul.f32 %v3171, %v2630
    %v3188 = vmul.f32 %v3174, %v2630
    %v3189 = vmul.f32 %v3177, %v2630
    %v3190 = vmul.f32 %v3118, %v3118
    %v3191 = vmul.f32 %v3119, %v3119
    %v3192 = vmul.f32 %v3120, %v3120
    %v3193 = vmul.f32 %v3121, %v3121
    %v3194 = vmul.f32 %v3122, %v3122
    %v3195 = vmul.f32 %v3123, %v3123
    %v3196 = vmul.f32 %v3124, %v3124
    %v3197 = vmul.f32 %v3125, %v3125
    %v3198 = vmul.f32 %v3126, %v3126
    %v3199 = vmul.f32 %v3127, %v3127
    %v3200 = vmul.f32 %v3128, %v3128
    %v3201 = vmul.f32 %v3129, %v3129
    %v3202 = vsub.f32 %v3178, %v3190
    %v3203 = vsub.f32 %v3179, %v3191
    %v3204 = vsub.f32 %v3180, %v3192
    %v3205 = vsub.f32 %v3181, %v3193
    %v3206 = vsub.f32 %v3182, %v3194
    %v3207 = vsub.f32 %v3183, %v3195
    %v3208 = vsub.f32 %v3184, %v3196
    %v3209 = vsub.f32 %v3185, %v3197
    %v3210 = vsub.f32 %v3186, %v3198
    %v3211 = vsub.f32 %v3187, %v3199
    %v3212 = vsub.f32 %v3188, %v3200
    %v3213 = vsub.f32 %v3189, %v3201
    %v3214 = vsub.f32 %v3070, %v3118
    %v3215 = vsub.f32 %v3071, %v3119
    %v3216 = vsub.f32 %v3072, %v3120
    %v3217 = vsub.f32 %v3073, %v3121
    %v3218 = vsub.f32 %v3074, %v3122
    %v3219 = vsub.f32 %v3075, %v3123
    %v3220 = vsub.f32 %v3076, %v3124
    %v3221 = vsub.f32 %v3077, %v3125
    %v3222 = vsub.f32 %v3078, %v3126
    %v3223 = vsub.f32 %v3079, %v3127
    %v3224 = vsub.f32 %v3080, %v3128
    %v3225 = vsub.f32 %v3081, %v3129
    %v3226 = vadd.f32 %v3202, 1e-05
    %v3227 = vadd.f32 %v3203, 1e-05
    %v3228 = vadd.f32 %v3204, 1e-05
    %v3229 = vadd.f32 %v3205, 1e-05
    %v3230 = vadd.f32 %v3206, 1e-05
    %v3231 = vadd.f32 %v3207, 1e-05
    %v3232 = vadd.f32 %v3208, 1e-05
    %v3233 = vadd.f32 %v3209, 1e-05
    %v3234 = vadd.f32 %v3210, 1e-05
    %v3235 = vadd.f32 %v3211, 1e-05
    %v3236 = vadd.f32 %v3212, 1e-05
    %v3237 = vadd.f32 %v3213, 1e-05
    %v3238 = vrsqrt.pop %v3226
    %v3239 = vrsqrt.pop %v3227
    %v3240 = vrsqrt.pop %v3228
    %v3241 = vrsqrt.pop %v3229
    %v3242 = vrsqrt.pop %v3230
    %v3243 = vrsqrt.pop %v3231
    %v3244 = vrsqrt.pop %v3232
    %v3245 = vrsqrt.pop %v3233
    %v3246 = vrsqrt.pop %v3234
    %v3247 = vrsqrt.pop %v3235
    %v3248 = vrsqrt.pop %v3236
    %v3249 = vrsqrt.pop %v3237
    %v3250 = vmul.f32 %v3214, %v3238
    %v3251 = vmul.f32 %v3215, %v3239
    %v3252 = vmul.f32 %v3216, %v3240
    %v3253 = vmul.f32 %v3217, %v3241
    %v3254 = vmul.f32 %v3218, %v3242
    %v3255 = vmul.f32 %v3219, %v3243
    %v3256 = vmul.f32 %v3220, %v3244
    %v3257 = vmul.f32 %v3221, %v3245
    %v3258 = vmul.f32 %v3222, %v3246
    %v3259 = vmul.f32 %v3223, %v3247
    %v3260 = vmul.f32 %v3224, %v3248
    %v3261 = vmul.f32 %v3225, %v3249
    %v3262 = vlaneseq
    %v3263 = vshrl.u32 %v3262, 7
    %v3264 = vsub.s32 5, %v3263
    %v3265 = vrot.slane %v270, %v3264
    %v3266 = vmul.f32 %v3250, %v3265
    %v3267 = vmul.f32 %v3251, %v3265
    %v3268 = vmul.f32 %v3252, %v3265
    %v3269 = vmul.f32 %v3253, %v3265
    %v3270 = vmul.f32 %v3254, %v3265
    %v3271 = vmul.f32 %v3255, %v3265
    %v3272 = vmul.f32 %v3256, %v3265
    %v3273 = vmul.f32 %v3257, %v3265
    %v3274 = vmul.f32 %v3258, %v3265
    %v3275 = vmul.f32 %v3259, %v3265
    %v3276 = vmul.f32 %v3260, %v3265
    %v3277 = vmul.f32 %v3261, %v3265
    %v3278 = vlaneseq
    %v3279 = vshrl.u32 %v3278, 7
    %v3280 = vsub.s32 6, %v3279
    %v3281 = vrot.slane %v270, %v3280
    %v3282 = vadd.f32 %v3266, %v3281
    %v3283 = vadd.f32 %v3267, %v3281
    %v3284 = vadd.f32 %v3268, %v3281
    %v3285 = vadd.f32 %v3269, %v3281
    %v3286 = vadd.f32 %v3270, %v3281
    %v3287 = vadd.f32 %v3271, %v3281
    %v3288 = vadd.f32 %v3272, %v3281
    %v3289 = vadd.f32 %v3273, %v3281
    %v3290 = vadd.f32 %v3274, %v3281
    %v3291 = vadd.f32 %v3275, %v3281
    %v3292 = vadd.f32 %v3276, %v3281
    %v3293 = vadd.f32 %v3277, %v3281
    %s3294 = scalar_lea.vmem %s8, 8
    %v3295 = vld [vmem:[%s3294] sm:$0xff]
    %v3296 = vpack.c.bf16 %v3283, %v3282
    %v3297 = vpack.c.bf16 %v3285, %v3284
    %v3298 = vpack.c.bf16 %v3287, %v3286
    %v3299 = vpack.c.bf16 %v3289, %v3288
    %v3300 = vpack.c.bf16 %v3291, %v3290
    %v3301 = vpack.c.bf16 %v3293, %v3292
    %s3302 = scalar_lea.vmem %s4, 16
    %v3303 = vld [vmem:[%s3302] sm:$0xf]
    %v3304 = vld [vmem:[%s3302 + $0x4] sm:$0xf]
    %v3305 = vld [vmem:[%s3302 + $0x8] sm:$0xf]
    %v3306 = vld [vmem:[%s3302 + $0xc] sm:$0xf]
    %s3307 = scalar_lea.vmem %s5, 1
    %v3308 = vld [vmem:[%s3307] sm:$0x1]
    %v3310 = vlaneseq
    %v3311 = vshrl.u32 %v3310, 7
    %v3312 = vsub.s32 0, %v3311
    %v3313 = vrot.slane %v3308, %v3312
    %v3319 = vunpack.c.l.b16 %v3303
    %v3320 = vunpack.c.l.b16 %v3304
    %v3321 = vunpack.c.l.b16 %v3305
    %v3322 = vunpack.c.l.b16 %v3306
    %v3323 = vpack.c.b16 %v3320, %v3319
    %v3324 = vpack.c.b16 %v3322, %v3321
    %v3328 = vsel %vm300, %v3296, 0
    %v3331 = vsel %vm300, %v3297, 0
    %v3334 = vsel %vm300, %v3298, 0
    %v3337 = vsel %vm300, %v3299, 0
    %v3340 = vsel %vm300, %v3300, 0
    %v3343 = vsel %vm300, %v3301, 0
    %3345 = vmatprep.subr.bf16.mxu0 0
    %3346 = vmatpush1.bf16.msra.mxu0 %v3323
    %3347 = vmatprep.subr.bf16.mxu0 0
    %3348 = vmatpush1.bf16.msra.mxu0 %v3324
    %3349 = vmatprep.subr.bf16.mxu0 0
    %3350 = vmatpush1.bf16.msra.mxu0 0
    %3351 = vmatprep.subr.bf16.mxu0 0
    %3352 = vmatpush1.bf16.msra.mxu0 0
    %3353 = vmatprep.subr.bf16.mxu0 0
    %3354 = vmatpush1.bf16.msra.mxu0 0
    %3355 = vmatprep.subr.bf16.mxu0 0
    %3356 = vmatpush1.bf16.msra.mxu0 0
    %3357 = vmatprep.subr.bf16.mxu0 0
    %3358 = vmatpush1.bf16.msra.mxu0 0
    %3359 = vmatprep.subr.bf16.mxu0 0
    %3360 = vmatpush1.bf16.msra.mxu0 0
    %3361 = vmatprep.subr.bf16.mxu0 0
    %3362 = vmatpush1.bf16.msra.mxu0 0
    %3363 = vmatprep.subr.bf16.mxu0 0
    %3364 = vmatpush1.bf16.msra.mxu0 0
    %3365 = vmatprep.subr.bf16.mxu0 0
    %3366 = vmatpush1.bf16.msra.mxu0 0
    %3367 = vmatprep.subr.bf16.mxu0 0
    %3368 = vmatpush1.bf16.msra.mxu0 0
    %3369 = vmatprep.subr.bf16.mxu0 0
    %3370 = vmatpush1.bf16.msra.mxu0 0
    %3371 = vmatprep.subr.bf16.mxu0 0
    %3372 = vmatpush1.bf16.msra.mxu0 0
    %3373 = vmatprep.subr.bf16.mxu0 0
    %3374 = vmatpush1.bf16.msra.mxu0 0
    %3375 = vmatprep.subr.bf16.mxu0 0
    %3376 = vmatpush1.bf16.msra.mxu0 0
    %3377 = vmatprep.mubr.bf16.mxu0 0
    %3378 = vmatmul.mubr.bf16.gmra.mrb[0].mxu0 %v3328
    %v3379 = vpop.f32.mrb[0].mxu0
    %v3380 = vadd.f32 %v3313, %v3379
    %v3381 = vpop.f32.mrb[0].mxu0
    %v3382 = vpop.f32.mrb[0].mxu0
    %v3383 = vadd.f32 %v3313, %v3382
    %v3384 = vpop.f32.mrb[0].mxu0
    %3385 = vmatprep.mubr.bf16.mxu0 0
    %3386 = vmatmul.mubr.bf16.gmra.mrb[0].mxu0 %v3331
    %v3387 = vpop.f32.mrb[0].mxu0
    %v3388 = vadd.f32 %v3313, %v3387
    %v3389 = vpop.f32.mrb[0].mxu0
    %v3390 = vpop.f32.mrb[0].mxu0
    %v3391 = vadd.f32 %v3313, %v3390
    %v3392 = vpop.f32.mrb[0].mxu0
    %3393 = vmatprep.mubr.bf16.mxu0 0
    %3394 = vmatmul.mubr.bf16.gmra.mrb[0].mxu0 %v3334
    %v3395 = vpop.f32.mrb[0].mxu0
    %v3396 = vadd.f32 %v3313, %v3395
    %v3397 = vpop.f32.mrb[0].mxu0
    %v3398 = vpop.f32.mrb[0].mxu0
    %v3399 = vadd.f32 %v3313, %v3398
    %v3400 = vpop.f32.mrb[0].mxu0
    %3401 = vmatprep.mubr.bf16.mxu0 0
    %3402 = vmatmul.mubr.bf16.gmra.mrb[0].mxu0 %v3337
    %v3403 = vpop.f32.mrb[0].mxu0
    %v3404 = vadd.f32 %v3313, %v3403
    %v3405 = vpop.f32.mrb[0].mxu0
    %v3406 = vpop.f32.mrb[0].mxu0
    %v3407 = vadd.f32 %v3313, %v3406
    %v3408 = vpop.f32.mrb[0].mxu0
    %3409 = vmatprep.mubr.bf16.mxu0 0
    %3410 = vmatmul.mubr.bf16.gmra.mrb[0].mxu0 %v3340
    %v3411 = vpop.f32.mrb[0].mxu0
    %v3412 = vadd.f32 %v3313, %v3411
    %v3413 = vpop.f32.mrb[0].mxu0
    %v3414 = vpop.f32.mrb[0].mxu0
    %v3415 = vadd.f32 %v3313, %v3414
    %v3416 = vpop.f32.mrb[0].mxu0
    %3417 = vmatprep.mubr.bf16.mxu0 0
    %3418 = vmatmul.mubr.bf16.gmra.mrb[0].mxu0 %v3343
    %v3419 = vpop.f32.mrb[0].mxu0
    %v3420 = vadd.f32 %v3313, %v3419
    %v3421 = vpop.f32.mrb[0].mxu0
    %v3422 = vpop.f32.mrb[0].mxu0
    %v3423 = vadd.f32 %v3313, %v3422
    %v3424 = vpop.f32.mrb[0].mxu0
    %3425 = vdwg.mxu0
    %v3426 = vpack.c.bf16 %v3383, %v3380
    %v3427 = vpack.c.bf16 %v3391, %v3388
    %v3428 = vpack.c.bf16 %v3399, %v3396
    %3432 = vrot.lane.b32.xlu0 %v3426, 96
    %v3433 = vpop.permute.xlu0 %3432
    %3434 = vrot.lane.b32.xlu0 %v3427, 96
    %v3435 = vpop.permute.xlu0 %3434
    %3436 = vrot.lane.b32.xlu0 %v3428, 96
    %v3437 = vpop.permute.xlu0 %3436
    %v3439 = vsel %vm412, %v3426, 0
    %v3442 = vsel %vm412, %v3427, 0
    %v3445 = vsel %vm412, %v3428, 0
    %v3448 = vsel %vm412, %v3433, 0
    %v3451 = vsel %vm412, %v3435, 0
    %v3454 = vsel %vm412, %v3437, 0
    %3456 = vmatprep.subr.bf16.mxu0 0
    %3457 = vmatpush1.bf16.xpose.msra.mxu0 %v3448
    %3458 = vmatprep.subr.bf16.mxu0 0
    %3459 = vmatpush1.bf16.xpose.msra.mxu0 %v3451
    %3460 = vmatprep.subr.bf16.mxu0 0
    %3461 = vmatpush1.bf16.xpose.msra.mxu0 %v3454
    %3462 = vmatprep.subr.bf16.mxu0 0
    %3463 = vmatpush1.bf16.xpose.msra.mxu0 0
    %3464 = vmatprep.subr.bf16.mxu0 0
    %3465 = vmatpush1.bf16.xpose.msra.mxu0 0
    %3466 = vmatprep.subr.bf16.mxu0 0
    %3467 = vmatpush1.bf16.xpose.msra.mxu0 0
    %3468 = vmatprep.subr.bf16.mxu0 0
    %3469 = vmatpush1.bf16.xpose.msra.mxu0 0
    %3470 = vmatprep.subr.bf16.mxu0 0
    %3471 = vmatpush1.bf16.xpose.msra.mxu0 0
    %3472 = vmatprep.subr.bf16.mxu0 0
    %3473 = vmatpush1.bf16.xpose.msra.mxu0 0
    %3474 = vmatprep.subr.bf16.mxu0 0
    %3475 = vmatpush1.bf16.xpose.msra.mxu0 0
    %3476 = vmatprep.subr.bf16.mxu0 0
    %3477 = vmatpush1.bf16.xpose.msra.mxu0 0
    %3478 = vmatprep.subr.bf16.mxu0 0
    %3479 = vmatpush1.bf16.xpose.msra.mxu0 0
    %3480 = vmatprep.subr.bf16.mxu0 0
    %3481 = vmatpush1.bf16.xpose.msra.mxu0 0
    %3482 = vmatprep.subr.bf16.mxu0 0
    %3483 = vmatpush1.bf16.xpose.msra.mxu0 0
    %3484 = vmatprep.subr.bf16.mxu0 0
    %3485 = vmatpush1.bf16.xpose.msra.mxu0 0
    %3486 = vmatprep.subr.bf16.mxu0 0
    %3487 = vmatpush1.bf16.xpose.msra.mxu0 0
    %3488 = vmatprep.mubr.bf16.mxu0 0
    %3489 = vmatmul.mubr.bf16.gmra.mrb[0].mxu0 %v3439
    %v3490 = vpop.f32.mrb[0].mxu0
    %v3491 = vadd.f32 0.0, %v3490
    %v3492 = vpop.f32.mrb[0].mxu0
    %v3493 = vpop.f32.mrb[0].mxu0
    %v3494 = vadd.f32 0.0, %v3493
    %v3495 = vpop.f32.mrb[0].mxu0
    %3496 = vmatprep.mubr.bf16.mxu0 0
    %3497 = vmatmul.mubr.bf16.gmra.mrb[0].mxu0 %v3442
    %v3498 = vpop.f32.mrb[0].mxu0
    %v3499 = vadd.f32 0.0, %v3498
    %v3500 = vpop.f32.mrb[0].mxu0
    %v3501 = vpop.f32.mrb[0].mxu0
    %v3502 = vadd.f32 0.0, %v3501
    %v3503 = vpop.f32.mrb[0].mxu0
    %3504 = vmatprep.mubr.bf16.mxu0 0
    %3505 = vmatmul.mubr.bf16.gmra.mrb[0].mxu0 %v3445
    %v3506 = vpop.f32.mrb[0].mxu0
    %v3507 = vadd.f32 0.0, %v3506
    %v3508 = vpop.f32.mrb[0].mxu0
    %v3509 = vpop.f32.mrb[0].mxu0
    %v3510 = vadd.f32 0.0, %v3509
    %v3511 = vpop.f32.mrb[0].mxu0
    %3512 = vdwg.mxu0
    %v3513 = vsel %vm488, %v3491, -inf
    %3514 = vmax.xlane.f32.xlu0 %v3513
    %v3515 = vpop.xlane.xlu0 %3514
    %v3516 = vsel %vm488, %v3494, -inf
    %3517 = vmax.xlane.f32.xlu0 %v3516
    %v3518 = vpop.xlane.xlu0 %3517
    %v3519 = vsel %vm488, %v3499, -inf
    %3520 = vmax.xlane.f32.xlu0 %v3519
    %v3521 = vpop.xlane.xlu0 %3520
    %v3522 = vsel %vm488, %v3502, -inf
    %3523 = vmax.xlane.f32.xlu0 %v3522
    %v3524 = vpop.xlane.xlu0 %3523
    %v3525 = vsel %vm488, %v3507, -inf
    %3526 = vmax.xlane.f32.xlu0 %v3525
    %v3527 = vpop.xlane.xlu0 %3526
    %v3528 = vsel %vm488, %v3510, -inf
    %3529 = vmax.xlane.f32.xlu0 %v3528
    %v3530 = vpop.xlane.xlu0 %3529
    %v3531 = vsub.f32 %v3491, %v3515
    %v3532 = vsub.f32 %v3494, %v3518
    %v3533 = vsub.f32 %v3499, %v3521
    %v3534 = vsub.f32 %v3502, %v3524
    %v3535 = vsub.f32 %v3507, %v3527
    %v3536 = vsub.f32 %v3510, %v3530
    %v3537 = vmul.f32 %v3531, 1.442695
    %v3538 = vpow.pop %v3537
    %v3539 = vmul.f32 %v3532, 1.442695
    %v3540 = vpow.pop %v3539
    %v3541 = vmul.f32 %v3533, 1.442695
    %v3542 = vpow.pop %v3541
    %v3543 = vmul.f32 %v3534, 1.442695
    %v3544 = vpow.pop %v3543
    %v3545 = vmul.f32 %v3535, 1.442695
    %v3546 = vpow.pop %v3545
    %v3547 = vmul.f32 %v3536, 1.442695
    %v3548 = vpow.pop %v3547
    %v3549 = vsel %vm488, %v3538, 0.0
    %3550 = vadd.xlane.f32.xlu0 %v3549
    %v3551 = vpop.xlane.xlu0 %3550
    %v3552 = vsel %vm488, %v3540, 0.0
    %3553 = vadd.xlane.f32.xlu0 %v3552
    %v3554 = vpop.xlane.xlu0 %3553
    %v3555 = vsel %vm488, %v3542, 0.0
    %3556 = vadd.xlane.f32.xlu0 %v3555
    %v3557 = vpop.xlane.xlu0 %3556
    %v3558 = vsel %vm488, %v3544, 0.0
    %3559 = vadd.xlane.f32.xlu0 %v3558
    %v3560 = vpop.xlane.xlu0 %3559
    %v3561 = vsel %vm488, %v3546, 0.0
    %3562 = vadd.xlane.f32.xlu0 %v3561
    %v3563 = vpop.xlane.xlu0 %3562
    %v3564 = vsel %vm488, %v3548, 0.0
    %3565 = vadd.xlane.f32.xlu0 %v3564
    %v3566 = vpop.xlane.xlu0 %3565
    %v3567 = vrcp.pop %v3551
    %v3568 = vrcp.pop %v3554
    %v3569 = vrcp.pop %v3557
    %v3570 = vrcp.pop %v3560
    %v3571 = vrcp.pop %v3563
    %v3572 = vrcp.pop %v3566
    %v3573 = vmul.f32 %v3538, %v3567
    %v3574 = vmul.f32 %v3540, %v3568
    %v3575 = vmul.f32 %v3542, %v3569
    %v3576 = vmul.f32 %v3544, %v3570
    %v3577 = vmul.f32 %v3546, %v3571
    %v3578 = vmul.f32 %v3548, %v3572
    %v3579 = vpack.c.bf16 %v3574, %v3573
    %v3580 = vpack.c.bf16 %v3576, %v3575
    %v3581 = vpack.c.bf16 %v3578, %v3577
    %3582 = vrot.lane.b32.xlu0 %v3426, 64
    %v3583 = vpop.permute.xlu0 %3582
    %3584 = vrot.lane.b32.xlu0 %v3427, 64
    %v3585 = vpop.permute.xlu0 %3584
    %3586 = vrot.lane.b32.xlu0 %v3428, 64
    %v3587 = vpop.permute.xlu0 %3586
    %v3592 = vsel %vm488, %v3579, 0
    %v3595 = vsel %vm488, %v3580, 0
    %v3598 = vsel %vm488, %v3581, 0
    %3600 = vmatprep.subr.bf16.mxu0 0
    %3601 = vmatpush1.bf16.msra.mxu0 %v3583
    %3602 = vmatprep.subr.bf16.mxu0 0
    %3603 = vmatpush1.bf16.msra.mxu0 %v3585
    %3604 = vmatprep.subr.bf16.mxu0 0
    %3605 = vmatpush1.bf16.msra.mxu0 %v3587
    %3606 = vmatprep.subr.bf16.mxu0 0
    %3607 = vmatpush1.bf16.msra.mxu0 0
    %3608 = vmatprep.subr.bf16.mxu0 0
    %3609 = vmatpush1.bf16.msra.mxu0 0
    %3610 = vmatprep.subr.bf16.mxu0 0
    %3611 = vmatpush1.bf16.msra.mxu0 0
    %3612 = vmatprep.subr.bf16.mxu0 0
    %3613 = vmatpush1.bf16.msra.mxu0 0
    %3614 = vmatprep.subr.bf16.mxu0 0
    %3615 = vmatpush1.bf16.msra.mxu0 0
    %3616 = vmatprep.subr.bf16.mxu0 0
    %3617 = vmatpush1.bf16.msra.mxu0 0
    %3618 = vmatprep.subr.bf16.mxu0 0
    %3619 = vmatpush1.bf16.msra.mxu0 0
    %3620 = vmatprep.subr.bf16.mxu0 0
    %3621 = vmatpush1.bf16.msra.mxu0 0
    %3622 = vmatprep.subr.bf16.mxu0 0
    %3623 = vmatpush1.bf16.msra.mxu0 0
    %3624 = vmatprep.subr.bf16.mxu0 0
    %3625 = vmatpush1.bf16.msra.mxu0 0
    %3626 = vmatprep.subr.bf16.mxu0 0
    %3627 = vmatpush1.bf16.msra.mxu0 0
    %3628 = vmatprep.subr.bf16.mxu0 0
    %3629 = vmatpush1.bf16.msra.mxu0 0
    %3630 = vmatprep.subr.bf16.mxu0 0
    %3631 = vmatpush1.bf16.msra.mxu0 0
    %3632 = vmatprep.mubr.bf16.mxu0 0
    %3633 = vmatmul.mubr.bf16.gmra.mrb[0].mxu0 %v3592
    %v3634 = vpop.f32.mrb[0].mxu0
    %v3635 = vadd.f32 0.0, %v3634
    %v3636 = vpop.f32.mrb[0].mxu0
    %v3637 = vpop.f32.mrb[0].mxu0
    %v3638 = vadd.f32 0.0, %v3637
    %v3639 = vpop.f32.mrb[0].mxu0
    %3640 = vmatprep.mubr.bf16.mxu0 0
    %3641 = vmatmul.mubr.bf16.gmra.mrb[0].mxu0 %v3595
    %v3642 = vpop.f32.mrb[0].mxu0
    %v3643 = vadd.f32 0.0, %v3642
    %v3644 = vpop.f32.mrb[0].mxu0
    %v3645 = vpop.f32.mrb[0].mxu0
    %v3646 = vadd.f32 0.0, %v3645
    %v3647 = vpop.f32.mrb[0].mxu0
    %3648 = vmatprep.mubr.bf16.mxu0 0
    %3649 = vmatmul.mubr.bf16.gmra.mrb[0].mxu0 %v3598
    %v3650 = vpop.f32.mrb[0].mxu0
    %v3651 = vadd.f32 0.0, %v3650
    %v3652 = vpop.f32.mrb[0].mxu0
    %v3653 = vpop.f32.mrb[0].mxu0
    %v3654 = vadd.f32 0.0, %v3653
    %v3655 = vpop.f32.mrb[0].mxu0
    %3656 = vdwg.mxu0
    %3657 = vst.msk [vmem:[#allocation2] sm:$0xff] %vm412, %v3635
    %3658 = vst.msk [vmem:[#allocation2 + $0x8] sm:$0xff] %vm412, %v3638
    %3659 = vst.msk [vmem:[#allocation2 + $0x10] sm:$0xff] %vm412, %v3643
    %3660 = vst.msk [vmem:[#allocation2 + $0x18] sm:$0xff] %vm412, %v3646
    %3661 = vst.msk [vmem:[#allocation2 + $0x20] sm:$0xff] %vm412, %v3651
    %3662 = vst.msk [vmem:[#allocation2 + $0x28] sm:$0xff] %vm412, %v3654
    %3663 = vrot.lane.b32.xlu0 %v3426, 120
    %v3664 = vpop.permute.xlu0 %3663
    %3665 = vrot.lane.b32.xlu0 %v3427, 120
    %v3666 = vpop.permute.xlu0 %3665
    %3667 = vrot.lane.b32.xlu0 %v3428, 120
    %v3668 = vpop.permute.xlu0 %3667
    %3669 = vrot.lane.b32.xlu0 %v3426, 88
    %v3670 = vpop.permute.xlu0 %3669
    %3671 = vrot.lane.b32.xlu0 %v3427, 88
    %v3672 = vpop.permute.xlu0 %3671
    %3673 = vrot.lane.b32.xlu0 %v3428, 88
    %v3674 = vpop.permute.xlu0 %3673
    %v3676 = vsel %vm412, %v3664, 0
    %v3679 = vsel %vm412, %v3666, 0
    %v3682 = vsel %vm412, %v3668, 0
    %v3685 = vsel %vm412, %v3670, 0
    %v3688 = vsel %vm412, %v3672, 0
    %v3691 = vsel %vm412, %v3674, 0
    %3693 = vmatprep.subr.bf16.mxu0 0
    %3694 = vmatpush1.bf16.xpose.msra.mxu0 %v3685
    %3695 = vmatprep.subr.bf16.mxu0 0
    %3696 = vmatpush1.bf16.xpose.msra.mxu0 %v3688
    %3697 = vmatprep.subr.bf16.mxu0 0
    %3698 = vmatpush1.bf16.xpose.msra.mxu0 %v3691
    %3699 = vmatprep.subr.bf16.mxu0 0
    %3700 = vmatpush1.bf16.xpose.msra.mxu0 0
    %3701 = vmatprep.subr.bf16.mxu0 0
    %3702 = vmatpush1.bf16.xpose.msra.mxu0 0
    %3703 = vmatprep.subr.bf16.mxu0 0
    %3704 = vmatpush1.bf16.xpose.msra.mxu0 0
    %3705 = vmatprep.subr.bf16.mxu0 0
    %3706 = vmatpush1.bf16.xpose.msra.mxu0 0
    %3707 = vmatprep.subr.bf16.mxu0 0
    %3708 = vmatpush1.bf16.xpose.msra.mxu0 0
    %3709 = vmatprep.subr.bf16.mxu0 0
    %3710 = vmatpush1.bf16.xpose.msra.mxu0 0
    %3711 = vmatprep.subr.bf16.mxu0 0
    %3712 = vmatpush1.bf16.xpose.msra.mxu0 0
    %3713 = vmatprep.subr.bf16.mxu0 0
    %3714 = vmatpush1.bf16.xpose.msra.mxu0 0
    %3715 = vmatprep.subr.bf16.mxu0 0
    %3716 = vmatpush1.bf16.xpose.msra.mxu0 0
    %3717 = vmatprep.subr.bf16.mxu0 0
    %3718 = vmatpush1.bf16.xpose.msra.mxu0 0
    %3719 = vmatprep.subr.bf16.mxu0 0
    %3720 = vmatpush1.bf16.xpose.msra.mxu0 0
    %3721 = vmatprep.subr.bf16.mxu0 0
    %3722 = vmatpush1.bf16.xpose.msra.mxu0 0
    %3723 = vmatprep.subr.bf16.mxu0 0
    %3724 = vmatpush1.bf16.xpose.msra.mxu0 0
    %3725 = vmatprep.mubr.bf16.mxu0 0
    %3726 = vmatmul.mubr.bf16.gmra.mrb[0].mxu0 %v3676
    %v3727 = vpop.f32.mrb[0].mxu0
    %v3728 = vadd.f32 0.0, %v3727
    %v3729 = vpop.f32.mrb[0].mxu0
    %v3730 = vpop.f32.mrb[0].mxu0
    %v3731 = vadd.f32 0.0, %v3730
    %v3732 = vpop.f32.mrb[0].mxu0
    %3733 = vmatprep.mubr.bf16.mxu0 0
    %3734 = vmatmul.mubr.bf16.gmra.mrb[0].mxu0 %v3679
    %v3735 = vpop.f32.mrb[0].mxu0
    %v3736 = vadd.f32 0.0, %v3735
    %v3737 = vpop.f32.mrb[0].mxu0
    %v3738 = vpop.f32.mrb[0].mxu0
    %v3739 = vadd.f32 0.0, %v3738
    %v3740 = vpop.f32.mrb[0].mxu0
    %3741 = vmatprep.mubr.bf16.mxu0 0
    %3742 = vmatmul.mubr.bf16.gmra.mrb[0].mxu0 %v3682
    %v3743 = vpop.f32.mrb[0].mxu0
    %v3744 = vadd.f32 0.0, %v3743
    %v3745 = vpop.f32.mrb[0].mxu0
    %v3746 = vpop.f32.mrb[0].mxu0
    %v3747 = vadd.f32 0.0, %v3746
    %v3748 = vpop.f32.mrb[0].mxu0
    %3749 = vdwg.mxu0
    %v3750 = vsel %vm488, %v3728, -inf
    %3751 = vmax.xlane.f32.xlu0 %v3750
    %v3752 = vpop.xlane.xlu0 %3751
    %v3753 = vsel %vm488, %v3731, -inf
    %3754 = vmax.xlane.f32.xlu0 %v3753
    %v3755 = vpop.xlane.xlu0 %3754
    %v3756 = vsel %vm488, %v3736, -inf
    %3757 = vmax.xlane.f32.xlu0 %v3756
    %v3758 = vpop.xlane.xlu0 %3757
    %v3759 = vsel %vm488, %v3739, -inf
    %3760 = vmax.xlane.f32.xlu0 %v3759
    %v3761 = vpop.xlane.xlu0 %3760
    %v3762 = vsel %vm488, %v3744, -inf
    %3763 = vmax.xlane.f32.xlu0 %v3762
    %v3764 = vpop.xlane.xlu0 %3763
    %v3765 = vsel %vm488, %v3747, -inf
    %3766 = vmax.xlane.f32.xlu0 %v3765
    %v3767 = vpop.xlane.xlu0 %3766
    %v3768 = vsub.f32 %v3728, %v3752
    %v3769 = vsub.f32 %v3731, %v3755
    %v3770 = vsub.f32 %v3736, %v3758
    %v3771 = vsub.f32 %v3739, %v3761
    %v3772 = vsub.f32 %v3744, %v3764
    %v3773 = vsub.f32 %v3747, %v3767
    %v3774 = vmul.f32 %v3768, 1.442695
    %v3775 = vpow.pop %v3774
    %v3776 = vmul.f32 %v3769, 1.442695
    %v3777 = vpow.pop %v3776
    %v3778 = vmul.f32 %v3770, 1.442695
    %v3779 = vpow.pop %v3778
    %v3780 = vmul.f32 %v3771, 1.442695
    %v3781 = vpow.pop %v3780
    %v3782 = vmul.f32 %v3772, 1.442695
    %v3783 = vpow.pop %v3782
    %v3784 = vmul.f32 %v3773, 1.442695
    %v3785 = vpow.pop %v3784
    %v3786 = vsel %vm488, %v3775, 0.0
    %3787 = vadd.xlane.f32.xlu0 %v3786
    %v3788 = vpop.xlane.xlu0 %3787
    %v3789 = vsel %vm488, %v3777, 0.0
    %3790 = vadd.xlane.f32.xlu0 %v3789
    %v3791 = vpop.xlane.xlu0 %3790
    %v3792 = vsel %vm488, %v3779, 0.0
    %3793 = vadd.xlane.f32.xlu0 %v3792
    %v3794 = vpop.xlane.xlu0 %3793
    %v3795 = vsel %vm488, %v3781, 0.0
    %3796 = vadd.xlane.f32.xlu0 %v3795
    %v3797 = vpop.xlane.xlu0 %3796
    %v3798 = vsel %vm488, %v3783, 0.0
    %3799 = vadd.xlane.f32.xlu0 %v3798
    %v3800 = vpop.xlane.xlu0 %3799
    %v3801 = vsel %vm488, %v3785, 0.0
    %3802 = vadd.xlane.f32.xlu0 %v3801
    %v3803 = vpop.xlane.xlu0 %3802
    %v3804 = vrcp.pop %v3788
    %v3805 = vrcp.pop %v3791
    %v3806 = vrcp.pop %v3794
    %v3807 = vrcp.pop %v3797
    %v3808 = vrcp.pop %v3800
    %v3809 = vrcp.pop %v3803
    %v3810 = vmul.f32 %v3775, %v3804
    %v3811 = vmul.f32 %v3777, %v3805
    %v3812 = vmul.f32 %v3779, %v3806
    %v3813 = vmul.f32 %v3781, %v3807
    %v3814 = vmul.f32 %v3783, %v3808
    %v3815 = vmul.f32 %v3785, %v3809
    %v3816 = vpack.c.bf16 %v3811, %v3810
    %v3817 = vpack.c.bf16 %v3813, %v3812
    %v3818 = vpack.c.bf16 %v3815, %v3814
    %3819 = vrot.lane.b32.xlu0 %v3426, 56
    %v3820 = vpop.permute.xlu0 %3819
    %3821 = vrot.lane.b32.xlu0 %v3427, 56
    %v3822 = vpop.permute.xlu0 %3821
    %3823 = vrot.lane.b32.xlu0 %v3428, 56
    %v3824 = vpop.permute.xlu0 %3823
    %v3829 = vsel %vm488, %v3816, 0
    %v3832 = vsel %vm488, %v3817, 0
    %v3835 = vsel %vm488, %v3818, 0
    %3837 = vmatprep.subr.bf16.mxu0 0
    %3838 = vmatpush1.bf16.msra.mxu0 %v3820
    %3839 = vmatprep.subr.bf16.mxu0 0
    %3840 = vmatpush1.bf16.msra.mxu0 %v3822
    %3841 = vmatprep.subr.bf16.mxu0 0
    %3842 = vmatpush1.bf16.msra.mxu0 %v3824
    %3843 = vmatprep.subr.bf16.mxu0 0
    %3844 = vmatpush1.bf16.msra.mxu0 0
    %3845 = vmatprep.subr.bf16.mxu0 0
    %3846 = vmatpush1.bf16.msra.mxu0 0
    %3847 = vmatprep.subr.bf16.mxu0 0
    %3848 = vmatpush1.bf16.msra.mxu0 0
    %3849 = vmatprep.subr.bf16.mxu0 0
    %3850 = vmatpush1.bf16.msra.mxu0 0
    %3851 = vmatprep.subr.bf16.mxu0 0
    %3852 = vmatpush1.bf16.msra.mxu0 0
    %3853 = vmatprep.subr.bf16.mxu0 0
    %3854 = vmatpush1.bf16.msra.mxu0 0
    %3855 = vmatprep.subr.bf16.mxu0 0
    %3856 = vmatpush1.bf16.msra.mxu0 0
    %3857 = vmatprep.subr.bf16.mxu0 0
    %3858 = vmatpush1.bf16.msra.mxu0 0
    %3859 = vmatprep.subr.bf16.mxu0 0
    %3860 = vmatpush1.bf16.msra.mxu0 0
    %3861 = vmatprep.subr.bf16.mxu0 0
    %3862 = vmatpush1.bf16.msra.mxu0 0
    %3863 = vmatprep.subr.bf16.mxu0 0
    %3864 = vmatpush1.bf16.msra.mxu0 0
    %3865 = vmatprep.subr.bf16.mxu0 0
    %3866 = vmatpush1.bf16.msra.mxu0 0
    %3867 = vmatprep.subr.bf16.mxu0 0
    %3868 = vmatpush1.bf16.msra.mxu0 0
    %3869 = vmatprep.mubr.bf16.mxu0 0
    %3870 = vmatmul.mubr.bf16.gmra.mrb[0].mxu0 %v3829
    %v3871 = vpop.f32.mrb[0].mxu0
    %v3872 = vadd.f32 0.0, %v3871
    %v3873 = vpop.f32.mrb[0].mxu0
    %v3874 = vpop.f32.mrb[0].mxu0
    %v3875 = vadd.f32 0.0, %v3874
    %v3876 = vpop.f32.mrb[0].mxu0
    %3877 = vmatprep.mubr.bf16.mxu0 0
    %3878 = vmatmul.mubr.bf16.gmra.mrb[0].mxu0 %v3832
    %v3879 = vpop.f32.mrb[0].mxu0
    %v3880 = vadd.f32 0.0, %v3879
    %v3881 = vpop.f32.mrb[0].mxu0
    %v3882 = vpop.f32.mrb[0].mxu0
    %v3883 = vadd.f32 0.0, %v3882
    %v3884 = vpop.f32.mrb[0].mxu0
    %3885 = vmatprep.mubr.bf16.mxu0 0
    %3886 = vmatmul.mubr.bf16.gmra.mrb[0].mxu0 %v3835
    %v3887 = vpop.f32.mrb[0].mxu0
    %v3888 = vadd.f32 0.0, %v3887
    %v3889 = vpop.f32.mrb[0].mxu0
    %v3890 = vpop.f32.mrb[0].mxu0
    %v3891 = vadd.f32 0.0, %v3890
    %v3892 = vpop.f32.mrb[0].mxu0
    %3893 = vdwg.mxu0
    %3900 = vrot.lane.b32.xlu0 %v3872, 8
    %v3901 = vpop.permute.xlu0 %3900
    %3902 = vrot.lane.b32.xlu0 %v3875, 8
    %v3903 = vpop.permute.xlu0 %3902
    %3904 = vrot.lane.b32.xlu0 %v3880, 8
    %v3905 = vpop.permute.xlu0 %3904
    %3906 = vrot.lane.b32.xlu0 %v3883, 8
    %v3907 = vpop.permute.xlu0 %3906
    %3908 = vrot.lane.b32.xlu0 %v3888, 8
    %v3909 = vpop.permute.xlu0 %3908
    %3910 = vrot.lane.b32.xlu0 %v3891, 8
    %v3911 = vpop.permute.xlu0 %3910
    %3918 = vst.msk [vmem:[#allocation2] sm:$0xff] %vm894, %v3901
    %3919 = vst.msk [vmem:[#allocation2 + $0x8] sm:$0xff] %vm894, %v3903
    %3920 = vst.msk [vmem:[#allocation2 + $0x10] sm:$0xff] %vm894, %v3905
    %3921 = vst.msk [vmem:[#allocation2 + $0x18] sm:$0xff] %vm894, %v3907
    %3922 = vst.msk [vmem:[#allocation2 + $0x20] sm:$0xff] %vm894, %v3909
    %3923 = vst.msk [vmem:[#allocation2 + $0x28] sm:$0xff] %vm894, %v3911
    %3924 = vrot.lane.b32.xlu0 %v3426, 112
    %v3925 = vpop.permute.xlu0 %3924
    %3926 = vrot.lane.b32.xlu0 %v3427, 112
    %v3927 = vpop.permute.xlu0 %3926
    %3928 = vrot.lane.b32.xlu0 %v3428, 112
    %v3929 = vpop.permute.xlu0 %3928
    %3930 = vrot.lane.b32.xlu0 %v3426, 80
    %v3931 = vpop.permute.xlu0 %3930
    %3932 = vrot.lane.b32.xlu0 %v3427, 80
    %v3933 = vpop.permute.xlu0 %3932
    %3934 = vrot.lane.b32.xlu0 %v3428, 80
    %v3935 = vpop.permute.xlu0 %3934
    %v3937 = vsel %vm412, %v3925, 0
    %v3940 = vsel %vm412, %v3927, 0
    %v3943 = vsel %vm412, %v3929, 0
    %v3946 = vsel %vm412, %v3931, 0
    %v3949 = vsel %vm412, %v3933, 0
    %v3952 = vsel %vm412, %v3935, 0
    %3954 = vmatprep.subr.bf16.mxu0 0
    %3955 = vmatpush1.bf16.xpose.msra.mxu0 %v3946
    %3956 = vmatprep.subr.bf16.mxu0 0
    %3957 = vmatpush1.bf16.xpose.msra.mxu0 %v3949
    %3958 = vmatprep.subr.bf16.mxu0 0
    %3959 = vmatpush1.bf16.xpose.msra.mxu0 %v3952
    %3960 = vmatprep.subr.bf16.mxu0 0
    %3961 = vmatpush1.bf16.xpose.msra.mxu0 0
    %3962 = vmatprep.subr.bf16.mxu0 0
    %3963 = vmatpush1.bf16.xpose.msra.mxu0 0
    %3964 = vmatprep.subr.bf16.mxu0 0
    %3965 = vmatpush1.bf16.xpose.msra.mxu0 0
    %3966 = vmatprep.subr.bf16.mxu0 0
    %3967 = vmatpush1.bf16.xpose.msra.mxu0 0
    %3968 = vmatprep.subr.bf16.mxu0 0
    %3969 = vmatpush1.bf16.xpose.msra.mxu0 0
    %3970 = vmatprep.subr.bf16.mxu0 0
    %3971 = vmatpush1.bf16.xpose.msra.mxu0 0
    %3972 = vmatprep.subr.bf16.mxu0 0
    %3973 = vmatpush1.bf16.xpose.msra.mxu0 0
    %3974 = vmatprep.subr.bf16.mxu0 0
    %3975 = vmatpush1.bf16.xpose.msra.mxu0 0
    %3976 = vmatprep.subr.bf16.mxu0 0
    %3977 = vmatpush1.bf16.xpose.msra.mxu0 0
    %3978 = vmatprep.subr.bf16.mxu0 0
    %3979 = vmatpush1.bf16.xpose.msra.mxu0 0
    %3980 = vmatprep.subr.bf16.mxu0 0
    %3981 = vmatpush1.bf16.xpose.msra.mxu0 0
    %3982 = vmatprep.subr.bf16.mxu0 0
    %3983 = vmatpush1.bf16.xpose.msra.mxu0 0
    %3984 = vmatprep.subr.bf16.mxu0 0
    %3985 = vmatpush1.bf16.xpose.msra.mxu0 0
    %3986 = vmatprep.mubr.bf16.mxu0 0
    %3987 = vmatmul.mubr.bf16.gmra.mrb[0].mxu0 %v3937
    %v3988 = vpop.f32.mrb[0].mxu0
    %v3989 = vadd.f32 0.0, %v3988
    %v3990 = vpop.f32.mrb[0].mxu0
    %v3991 = vpop.f32.mrb[0].mxu0
    %v3992 = vadd.f32 0.0, %v3991
    %v3993 = vpop.f32.mrb[0].mxu0
    %3994 = vmatprep.mubr.bf16.mxu0 0
    %3995 = vmatmul.mubr.bf16.gmra.mrb[0].mxu0 %v3940
    %v3996 = vpop.f32.mrb[0].mxu0
    %v3997 = vadd.f32 0.0, %v3996
    %v3998 = vpop.f32.mrb[0].mxu0
    %v3999 = vpop.f32.mrb[0].mxu0
    %v4000 = vadd.f32 0.0, %v3999
    %v4001 = vpop.f32.mrb[0].mxu0
    %4002 = vmatprep.mubr.bf16.mxu0 0
    %4003 = vmatmul.mubr.bf16.gmra.mrb[0].mxu0 %v3943
    %v4004 = vpop.f32.mrb[0].mxu0
    %v4005 = vadd.f32 0.0, %v4004
    %v4006 = vpop.f32.mrb[0].mxu0
    %v4007 = vpop.f32.mrb[0].mxu0
    %v4008 = vadd.f32 0.0, %v4007
    %v4009 = vpop.f32.mrb[0].mxu0
    %4010 = vdwg.mxu0
    %v4011 = vsel %vm488, %v3989, -inf
    %4012 = vmax.xlane.f32.xlu0 %v4011
    %v4013 = vpop.xlane.xlu0 %4012
    %v4014 = vsel %vm488, %v3992, -inf
    %4015 = vmax.xlane.f32.xlu0 %v4014
    %v4016 = vpop.xlane.xlu0 %4015
    %v4017 = vsel %vm488, %v3997, -inf
    %4018 = vmax.xlane.f32.xlu0 %v4017
    %v4019 = vpop.xlane.xlu0 %4018
    %v4020 = vsel %vm488, %v4000, -inf
    %4021 = vmax.xlane.f32.xlu0 %v4020
    %v4022 = vpop.xlane.xlu0 %4021
    %v4023 = vsel %vm488, %v4005, -inf
    %4024 = vmax.xlane.f32.xlu0 %v4023
    %v4025 = vpop.xlane.xlu0 %4024
    %v4026 = vsel %vm488, %v4008, -inf
    %4027 = vmax.xlane.f32.xlu0 %v4026
    %v4028 = vpop.xlane.xlu0 %4027
    %v4029 = vsub.f32 %v3989, %v4013
    %v4030 = vsub.f32 %v3992, %v4016
    %v4031 = vsub.f32 %v3997, %v4019
    %v4032 = vsub.f32 %v4000, %v4022
    %v4033 = vsub.f32 %v4005, %v4025
    %v4034 = vsub.f32 %v4008, %v4028
    %v4035 = vmul.f32 %v4029, 1.442695
    %v4036 = vpow.pop %v4035
    %v4037 = vmul.f32 %v4030, 1.442695
    %v4038 = vpow.pop %v4037
    %v4039 = vmul.f32 %v4031, 1.442695
    %v4040 = vpow.pop %v4039
    %v4041 = vmul.f32 %v4032, 1.442695
    %v4042 = vpow.pop %v4041
    %v4043 = vmul.f32 %v4033, 1.442695
    %v4044 = vpow.pop %v4043
    %v4045 = vmul.f32 %v4034, 1.442695
    %v4046 = vpow.pop %v4045
    %v4047 = vsel %vm488, %v4036, 0.0
    %4048 = vadd.xlane.f32.xlu0 %v4047
    %v4049 = vpop.xlane.xlu0 %4048
    %v4050 = vsel %vm488, %v4038, 0.0
    %4051 = vadd.xlane.f32.xlu0 %v4050
    %v4052 = vpop.xlane.xlu0 %4051
    %v4053 = vsel %vm488, %v4040, 0.0
    %4054 = vadd.xlane.f32.xlu0 %v4053
    %v4055 = vpop.xlane.xlu0 %4054
    %v4056 = vsel %vm488, %v4042, 0.0
    %4057 = vadd.xlane.f32.xlu0 %v4056
    %v4058 = vpop.xlane.xlu0 %4057
    %v4059 = vsel %vm488, %v4044, 0.0
    %4060 = vadd.xlane.f32.xlu0 %v4059
    %v4061 = vpop.xlane.xlu0 %4060
    %v4062 = vsel %vm488, %v4046, 0.0
    %4063 = vadd.xlane.f32.xlu0 %v4062
    %v4064 = vpop.xlane.xlu0 %4063
    %v4065 = vrcp.pop %v4049
    %v4066 = vrcp.pop %v4052
    %v4067 = vrcp.pop %v4055
    %v4068 = vrcp.pop %v4058
    %v4069 = vrcp.pop %v4061
    %v4070 = vrcp.pop %v4064
    %v4071 = vmul.f32 %v4036, %v4065
    %v4072 = vmul.f32 %v4038, %v4066
    %v4073 = vmul.f32 %v4040, %v4067
    %v4074 = vmul.f32 %v4042, %v4068
    %v4075 = vmul.f32 %v4044, %v4069
    %v4076 = vmul.f32 %v4046, %v4070
    %v4077 = vpack.c.bf16 %v4072, %v4071
    %v4078 = vpack.c.bf16 %v4074, %v4073
    %v4079 = vpack.c.bf16 %v4076, %v4075
    %4080 = vrot.lane.b32.xlu0 %v3426, 48
    %v4081 = vpop.permute.xlu0 %4080
    %4082 = vrot.lane.b32.xlu0 %v3427, 48
    %v4083 = vpop.permute.xlu0 %4082
    %4084 = vrot.lane.b32.xlu0 %v3428, 48
    %v4085 = vpop.permute.xlu0 %4084
    %v4090 = vsel %vm488, %v4077, 0
    %v4093 = vsel %vm488, %v4078, 0
    %v4096 = vsel %vm488, %v4079, 0
    %4098 = vmatprep.subr.bf16.mxu0 0
    %4099 = vmatpush1.bf16.msra.mxu0 %v4081
    %4100 = vmatprep.subr.bf16.mxu0 0
    %4101 = vmatpush1.bf16.msra.mxu0 %v4083
    %4102 = vmatprep.subr.bf16.mxu0 0
    %4103 = vmatpush1.bf16.msra.mxu0 %v4085
    %4104 = vmatprep.subr.bf16.mxu0 0
    %4105 = vmatpush1.bf16.msra.mxu0 0
    %4106 = vmatprep.subr.bf16.mxu0 0
    %4107 = vmatpush1.bf16.msra.mxu0 0
    %4108 = vmatprep.subr.bf16.mxu0 0
    %4109 = vmatpush1.bf16.msra.mxu0 0
    %4110 = vmatprep.subr.bf16.mxu0 0
    %4111 = vmatpush1.bf16.msra.mxu0 0
    %4112 = vmatprep.subr.bf16.mxu0 0
    %4113 = vmatpush1.bf16.msra.mxu0 0
    %4114 = vmatprep.subr.bf16.mxu0 0
    %4115 = vmatpush1.bf16.msra.mxu0 0
    %4116 = vmatprep.subr.bf16.mxu0 0
    %4117 = vmatpush1.bf16.msra.mxu0 0
    %4118 = vmatprep.subr.bf16.mxu0 0
    %4119 = vmatpush1.bf16.msra.mxu0 0
    %4120 = vmatprep.subr.bf16.mxu0 0
    %4121 = vmatpush1.bf16.msra.mxu0 0
    %4122 = vmatprep.subr.bf16.mxu0 0
    %4123 = vmatpush1.bf16.msra.mxu0 0
    %4124 = vmatprep.subr.bf16.mxu0 0
    %4125 = vmatpush1.bf16.msra.mxu0 0
    %4126 = vmatprep.subr.bf16.mxu0 0
    %4127 = vmatpush1.bf16.msra.mxu0 0
    %4128 = vmatprep.subr.bf16.mxu0 0
    %4129 = vmatpush1.bf16.msra.mxu0 0
    %4130 = vmatprep.mubr.bf16.mxu0 0
    %4131 = vmatmul.mubr.bf16.gmra.mrb[0].mxu0 %v4090
    %v4132 = vpop.f32.mrb[0].mxu0
    %v4133 = vadd.f32 0.0, %v4132
    %v4134 = vpop.f32.mrb[0].mxu0
    %v4135 = vpop.f32.mrb[0].mxu0
    %v4136 = vadd.f32 0.0, %v4135
    %v4137 = vpop.f32.mrb[0].mxu0
    %4138 = vmatprep.mubr.bf16.mxu0 0
    %4139 = vmatmul.mubr.bf16.gmra.mrb[0].mxu0 %v4093
    %v4140 = vpop.f32.mrb[0].mxu0
    %v4141 = vadd.f32 0.0, %v4140
    %v4142 = vpop.f32.mrb[0].mxu0
    %v4143 = vpop.f32.mrb[0].mxu0
    %v4144 = vadd.f32 0.0, %v4143
    %v4145 = vpop.f32.mrb[0].mxu0
    %4146 = vmatprep.mubr.bf16.mxu0 0
    %4147 = vmatmul.mubr.bf16.gmra.mrb[0].mxu0 %v4096
    %v4148 = vpop.f32.mrb[0].mxu0
    %v4149 = vadd.f32 0.0, %v4148
    %v4150 = vpop.f32.mrb[0].mxu0
    %v4151 = vpop.f32.mrb[0].mxu0
    %v4152 = vadd.f32 0.0, %v4151
    %v4153 = vpop.f32.mrb[0].mxu0
    %4154 = vdwg.mxu0
    %4161 = vrot.lane.b32.xlu0 %v4133, 16
    %v4162 = vpop.permute.xlu0 %4161
    %4163 = vrot.lane.b32.xlu0 %v4136, 16
    %v4164 = vpop.permute.xlu0 %4163
    %4165 = vrot.lane.b32.xlu0 %v4141, 16
    %v4166 = vpop.permute.xlu0 %4165
    %4167 = vrot.lane.b32.xlu0 %v4144, 16
    %v4168 = vpop.permute.xlu0 %4167
    %4169 = vrot.lane.b32.xlu0 %v4149, 16
    %v4170 = vpop.permute.xlu0 %4169
    %4171 = vrot.lane.b32.xlu0 %v4152, 16
    %v4172 = vpop.permute.xlu0 %4171
    %4179 = vst.msk [vmem:[#allocation2] sm:$0xff] %vm1156, %v4162
    %4180 = vst.msk [vmem:[#allocation2 + $0x8] sm:$0xff] %vm1156, %v4164
    %4181 = vst.msk [vmem:[#allocation2 + $0x10] sm:$0xff] %vm1156, %v4166
    %4182 = vst.msk [vmem:[#allocation2 + $0x18] sm:$0xff] %vm1156, %v4168
    %4183 = vst.msk [vmem:[#allocation2 + $0x20] sm:$0xff] %vm1156, %v4170
    %4184 = vst.msk [vmem:[#allocation2 + $0x28] sm:$0xff] %vm1156, %v4172
    %4185 = vrot.lane.b32.xlu0 %v3426, 104
    %v4186 = vpop.permute.xlu0 %4185
    %4187 = vrot.lane.b32.xlu0 %v3427, 104
    %v4188 = vpop.permute.xlu0 %4187
    %4189 = vrot.lane.b32.xlu0 %v3428, 104
    %v4190 = vpop.permute.xlu0 %4189
    %4191 = vrot.lane.b32.xlu0 %v3426, 72
    %v4192 = vpop.permute.xlu0 %4191
    %4193 = vrot.lane.b32.xlu0 %v3427, 72
    %v4194 = vpop.permute.xlu0 %4193
    %4195 = vrot.lane.b32.xlu0 %v3428, 72
    %v4196 = vpop.permute.xlu0 %4195
    %v4198 = vsel %vm412, %v4186, 0
    %v4201 = vsel %vm412, %v4188, 0
    %v4204 = vsel %vm412, %v4190, 0
    %v4207 = vsel %vm412, %v4192, 0
    %v4210 = vsel %vm412, %v4194, 0
    %v4213 = vsel %vm412, %v4196, 0
    %4215 = vmatprep.subr.bf16.mxu0 0
    %4216 = vmatpush1.bf16.xpose.msra.mxu0 %v4207
    %4217 = vmatprep.subr.bf16.mxu0 0
    %4218 = vmatpush1.bf16.xpose.msra.mxu0 %v4210
    %4219 = vmatprep.subr.bf16.mxu0 0
    %4220 = vmatpush1.bf16.xpose.msra.mxu0 %v4213
    %4221 = vmatprep.subr.bf16.mxu0 0
    %4222 = vmatpush1.bf16.xpose.msra.mxu0 0
    %4223 = vmatprep.subr.bf16.mxu0 0
    %4224 = vmatpush1.bf16.xpose.msra.mxu0 0
    %4225 = vmatprep.subr.bf16.mxu0 0
    %4226 = vmatpush1.bf16.xpose.msra.mxu0 0
    %4227 = vmatprep.subr.bf16.mxu0 0
    %4228 = vmatpush1.bf16.xpose.msra.mxu0 0
    %4229 = vmatprep.subr.bf16.mxu0 0
    %4230 = vmatpush1.bf16.xpose.msra.mxu0 0
    %4231 = vmatprep.subr.bf16.mxu0 0
    %4232 = vmatpush1.bf16.xpose.msra.mxu0 0
    %4233 = vmatprep.subr.bf16.mxu0 0
    %4234 = vmatpush1.bf16.xpose.msra.mxu0 0
    %4235 = vmatprep.subr.bf16.mxu0 0
    %4236 = vmatpush1.bf16.xpose.msra.mxu0 0
    %4237 = vmatprep.subr.bf16.mxu0 0
    %4238 = vmatpush1.bf16.xpose.msra.mxu0 0
    %4239 = vmatprep.subr.bf16.mxu0 0
    %4240 = vmatpush1.bf16.xpose.msra.mxu0 0
    %4241 = vmatprep.subr.bf16.mxu0 0
    %4242 = vmatpush1.bf16.xpose.msra.mxu0 0
    %4243 = vmatprep.subr.bf16.mxu0 0
    %4244 = vmatpush1.bf16.xpose.msra.mxu0 0
    %4245 = vmatprep.subr.bf16.mxu0 0
    %4246 = vmatpush1.bf16.xpose.msra.mxu0 0
    %4247 = vmatprep.mubr.bf16.mxu0 0
    %4248 = vmatmul.mubr.bf16.gmra.mrb[0].mxu0 %v4198
    %v4249 = vpop.f32.mrb[0].mxu0
    %v4250 = vadd.f32 0.0, %v4249
    %v4251 = vpop.f32.mrb[0].mxu0
    %v4252 = vpop.f32.mrb[0].mxu0
    %v4253 = vadd.f32 0.0, %v4252
    %v4254 = vpop.f32.mrb[0].mxu0
    %4255 = vmatprep.mubr.bf16.mxu0 0
    %4256 = vmatmul.mubr.bf16.gmra.mrb[0].mxu0 %v4201
    %v4257 = vpop.f32.mrb[0].mxu0
    %v4258 = vadd.f32 0.0, %v4257
    %v4259 = vpop.f32.mrb[0].mxu0
    %v4260 = vpop.f32.mrb[0].mxu0
    %v4261 = vadd.f32 0.0, %v4260
    %v4262 = vpop.f32.mrb[0].mxu0
    %4263 = vmatprep.mubr.bf16.mxu0 0
    %4264 = vmatmul.mubr.bf16.gmra.mrb[0].mxu0 %v4204
    %v4265 = vpop.f32.mrb[0].mxu0
    %v4266 = vadd.f32 0.0, %v4265
    %v4267 = vpop.f32.mrb[0].mxu0
    %v4268 = vpop.f32.mrb[0].mxu0
    %v4269 = vadd.f32 0.0, %v4268
    %v4270 = vpop.f32.mrb[0].mxu0
    %4271 = vdwg.mxu0
    %v4272 = vsel %vm488, %v4250, -inf
    %4273 = vmax.xlane.f32.xlu0 %v4272
    %v4274 = vpop.xlane.xlu0 %4273
    %v4275 = vsel %vm488, %v4253, -inf
    %4276 = vmax.xlane.f32.xlu0 %v4275
    %v4277 = vpop.xlane.xlu0 %4276
    %v4278 = vsel %vm488, %v4258, -inf
    %4279 = vmax.xlane.f32.xlu0 %v4278
    %v4280 = vpop.xlane.xlu0 %4279
    %v4281 = vsel %vm488, %v4261, -inf
    %4282 = vmax.xlane.f32.xlu0 %v4281
    %v4283 = vpop.xlane.xlu0 %4282
    %v4284 = vsel %vm488, %v4266, -inf
    %4285 = vmax.xlane.f32.xlu0 %v4284
    %v4286 = vpop.xlane.xlu0 %4285
    %v4287 = vsel %vm488, %v4269, -inf
    %4288 = vmax.xlane.f32.xlu0 %v4287
    %v4289 = vpop.xlane.xlu0 %4288
    %v4290 = vsub.f32 %v4250, %v4274
    %v4291 = vsub.f32 %v4253, %v4277
    %v4292 = vsub.f32 %v4258, %v4280
    %v4293 = vsub.f32 %v4261, %v4283
    %v4294 = vsub.f32 %v4266, %v4286
    %v4295 = vsub.f32 %v4269, %v4289
    %v4296 = vmul.f32 %v4290, 1.442695
    %v4297 = vpow.pop %v4296
    %v4298 = vmul.f32 %v4291, 1.442695
    %v4299 = vpow.pop %v4298
    %v4300 = vmul.f32 %v4292, 1.442695
    %v4301 = vpow.pop %v4300
    %v4302 = vmul.f32 %v4293, 1.442695
    %v4303 = vpow.pop %v4302
    %v4304 = vmul.f32 %v4294, 1.442695
    %v4305 = vpow.pop %v4304
    %v4306 = vmul.f32 %v4295, 1.442695
    %v4307 = vpow.pop %v4306
    %v4308 = vsel %vm488, %v4297, 0.0
    %4309 = vadd.xlane.f32.xlu0 %v4308
    %v4310 = vpop.xlane.xlu0 %4309
    %v4311 = vsel %vm488, %v4299, 0.0
    %4312 = vadd.xlane.f32.xlu0 %v4311
    %v4313 = vpop.xlane.xlu0 %4312
    %v4314 = vsel %vm488, %v4301, 0.0
    %4315 = vadd.xlane.f32.xlu0 %v4314
    %v4316 = vpop.xlane.xlu0 %4315
    %v4317 = vsel %vm488, %v4303, 0.0
    %4318 = vadd.xlane.f32.xlu0 %v4317
    %v4319 = vpop.xlane.xlu0 %4318
    %v4320 = vsel %vm488, %v4305, 0.0
    %4321 = vadd.xlane.f32.xlu0 %v4320
    %v4322 = vpop.xlane.xlu0 %4321
    %v4323 = vsel %vm488, %v4307, 0.0
    %4324 = vadd.xlane.f32.xlu0 %v4323
    %v4325 = vpop.xlane.xlu0 %4324
    %v4326 = vrcp.pop %v4310
    %v4327 = vrcp.pop %v4313
    %v4328 = vrcp.pop %v4316
    %v4329 = vrcp.pop %v4319
    %v4330 = vrcp.pop %v4322
    %v4331 = vrcp.pop %v4325
    %v4332 = vmul.f32 %v4297, %v4326
    %v4333 = vmul.f32 %v4299, %v4327
    %v4334 = vmul.f32 %v4301, %v4328
    %v4335 = vmul.f32 %v4303, %v4329
    %v4336 = vmul.f32 %v4305, %v4330
    %v4337 = vmul.f32 %v4307, %v4331
    %v4338 = vpack.c.bf16 %v4333, %v4332
    %v4339 = vpack.c.bf16 %v4335, %v4334
    %v4340 = vpack.c.bf16 %v4337, %v4336
    %4341 = vrot.lane.b32.xlu0 %v3426, 40
    %v4342 = vpop.permute.xlu0 %4341
    %4343 = vrot.lane.b32.xlu0 %v3427, 40
    %v4344 = vpop.permute.xlu0 %4343
    %4345 = vrot.lane.b32.xlu0 %v3428, 40
    %v4346 = vpop.permute.xlu0 %4345
    %v4351 = vsel %vm488, %v4338, 0
    %v4354 = vsel %vm488, %v4339, 0
    %v4357 = vsel %vm488, %v4340, 0
    %4359 = vmatprep.subr.bf16.mxu0 0
    %4360 = vmatpush1.bf16.msra.mxu0 %v4342
    %4361 = vmatprep.subr.bf16.mxu0 0
    %4362 = vmatpush1.bf16.msra.mxu0 %v4344
    %4363 = vmatprep.subr.bf16.mxu0 0
    %4364 = vmatpush1.bf16.msra.mxu0 %v4346
    %4365 = vmatprep.subr.bf16.mxu0 0
    %4366 = vmatpush1.bf16.msra.mxu0 0
    %4367 = vmatprep.subr.bf16.mxu0 0
    %4368 = vmatpush1.bf16.msra.mxu0 0
    %4369 = vmatprep.subr.bf16.mxu0 0
    %4370 = vmatpush1.bf16.msra.mxu0 0
    %4371 = vmatprep.subr.bf16.mxu0 0
    %4372 = vmatpush1.bf16.msra.mxu0 0
    %4373 = vmatprep.subr.bf16.mxu0 0
    %4374 = vmatpush1.bf16.msra.mxu0 0
    %4375 = vmatprep.subr.bf16.mxu0 0
    %4376 = vmatpush1.bf16.msra.mxu0 0
    %4377 = vmatprep.subr.bf16.mxu0 0
    %4378 = vmatpush1.bf16.msra.mxu0 0
    %4379 = vmatprep.subr.bf16.mxu0 0
    %4380 = vmatpush1.bf16.msra.mxu0 0
    %4381 = vmatprep.subr.bf16.mxu0 0
    %4382 = vmatpush1.bf16.msra.mxu0 0
    %4383 = vmatprep.subr.bf16.mxu0 0
    %4384 = vmatpush1.bf16.msra.mxu0 0
    %4385 = vmatprep.subr.bf16.mxu0 0
    %4386 = vmatpush1.bf16.msra.mxu0 0
    %4387 = vmatprep.subr.bf16.mxu0 0
    %4388 = vmatpush1.bf16.msra.mxu0 0
    %4389 = vmatprep.subr.bf16.mxu0 0
    %4390 = vmatpush1.bf16.msra.mxu0 0
    %4391 = vmatprep.mubr.bf16.mxu0 0
    %4392 = vmatmul.mubr.bf16.gmra.mrb[0].mxu0 %v4351
    %v4393 = vpop.f32.mrb[0].mxu0
    %v4394 = vadd.f32 0.0, %v4393
    %v4395 = vpop.f32.mrb[0].mxu0
    %v4396 = vpop.f32.mrb[0].mxu0
    %v4397 = vadd.f32 0.0, %v4396
    %v4398 = vpop.f32.mrb[0].mxu0
    %4399 = vmatprep.mubr.bf16.mxu0 0
    %4400 = vmatmul.mubr.bf16.gmra.mrb[0].mxu0 %v4354
    %v4401 = vpop.f32.mrb[0].mxu0
    %v4402 = vadd.f32 0.0, %v4401
    %v4403 = vpop.f32.mrb[0].mxu0
    %v4404 = vpop.f32.mrb[0].mxu0
    %v4405 = vadd.f32 0.0, %v4404
    %v4406 = vpop.f32.mrb[0].mxu0
    %4407 = vmatprep.mubr.bf16.mxu0 0
    %4408 = vmatmul.mubr.bf16.gmra.mrb[0].mxu0 %v4357
    %v4409 = vpop.f32.mrb[0].mxu0
    %v4410 = vadd.f32 0.0, %v4409
    %v4411 = vpop.f32.mrb[0].mxu0
    %v4412 = vpop.f32.mrb[0].mxu0
    %v4413 = vadd.f32 0.0, %v4412
    %v4414 = vpop.f32.mrb[0].mxu0
    %4415 = vdwg.mxu0
    %4422 = vrot.lane.b32.xlu0 %v4394, 24
    %v4423 = vpop.permute.xlu0 %4422
    %4424 = vrot.lane.b32.xlu0 %v4397, 24
    %v4425 = vpop.permute.xlu0 %4424
    %4426 = vrot.lane.b32.xlu0 %v4402, 24
    %v4427 = vpop.permute.xlu0 %4426
    %4428 = vrot.lane.b32.xlu0 %v4405, 24
    %v4429 = vpop.permute.xlu0 %4428
    %4430 = vrot.lane.b32.xlu0 %v4410, 24
    %v4431 = vpop.permute.xlu0 %4430
    %4432 = vrot.lane.b32.xlu0 %v4413, 24
    %v4433 = vpop.permute.xlu0 %4432
    %4440 = vst.msk [vmem:[#allocation2] sm:$0xff] %vm1418, %v4423
    %4441 = vst.msk [vmem:[#allocation2 + $0x8] sm:$0xff] %vm1418, %v4425
    %4442 = vst.msk [vmem:[#allocation2 + $0x10] sm:$0xff] %vm1418, %v4427
    %4443 = vst.msk [vmem:[#allocation2 + $0x18] sm:$0xff] %vm1418, %v4429
    %4444 = vst.msk [vmem:[#allocation2 + $0x20] sm:$0xff] %vm1418, %v4431
    %4445 = vst.msk [vmem:[#allocation2 + $0x28] sm:$0xff] %vm1418, %v4433
    %v4446 = vpack.c.bf16 %v3407, %v3404
    %v4447 = vpack.c.bf16 %v3415, %v3412
    %v4448 = vpack.c.bf16 %v3423, %v3420
    %4452 = vrot.lane.b32.xlu0 %v4446, 96
    %v4453 = vpop.permute.xlu0 %4452
    %4454 = vrot.lane.b32.xlu0 %v4447, 96
    %v4455 = vpop.permute.xlu0 %4454
    %4456 = vrot.lane.b32.xlu0 %v4448, 96
    %v4457 = vpop.permute.xlu0 %4456
    %v4459 = vsel %vm412, %v4446, 0
    %v4462 = vsel %vm412, %v4447, 0
    %v4465 = vsel %vm412, %v4448, 0
    %v4468 = vsel %vm412, %v4453, 0
    %v4471 = vsel %vm412, %v4455, 0
    %v4474 = vsel %vm412, %v4457, 0
    %4476 = vmatprep.subr.bf16.mxu0 0
    %4477 = vmatpush1.bf16.xpose.msra.mxu0 %v4468
    %4478 = vmatprep.subr.bf16.mxu0 0
    %4479 = vmatpush1.bf16.xpose.msra.mxu0 %v4471
    %4480 = vmatprep.subr.bf16.mxu0 0
    %4481 = vmatpush1.bf16.xpose.msra.mxu0 %v4474
    %4482 = vmatprep.subr.bf16.mxu0 0
    %4483 = vmatpush1.bf16.xpose.msra.mxu0 0
    %4484 = vmatprep.subr.bf16.mxu0 0
    %4485 = vmatpush1.bf16.xpose.msra.mxu0 0
    %4486 = vmatprep.subr.bf16.mxu0 0
    %4487 = vmatpush1.bf16.xpose.msra.mxu0 0
    %4488 = vmatprep.subr.bf16.mxu0 0
    %4489 = vmatpush1.bf16.xpose.msra.mxu0 0
    %4490 = vmatprep.subr.bf16.mxu0 0
    %4491 = vmatpush1.bf16.xpose.msra.mxu0 0
    %4492 = vmatprep.subr.bf16.mxu0 0
    %4493 = vmatpush1.bf16.xpose.msra.mxu0 0
    %4494 = vmatprep.subr.bf16.mxu0 0
    %4495 = vmatpush1.bf16.xpose.msra.mxu0 0
    %4496 = vmatprep.subr.bf16.mxu0 0
    %4497 = vmatpush1.bf16.xpose.msra.mxu0 0
    %4498 = vmatprep.subr.bf16.mxu0 0
    %4499 = vmatpush1.bf16.xpose.msra.mxu0 0
    %4500 = vmatprep.subr.bf16.mxu0 0
    %4501 = vmatpush1.bf16.xpose.msra.mxu0 0
    %4502 = vmatprep.subr.bf16.mxu0 0
    %4503 = vmatpush1.bf16.xpose.msra.mxu0 0
    %4504 = vmatprep.subr.bf16.mxu0 0
    %4505 = vmatpush1.bf16.xpose.msra.mxu0 0
    %4506 = vmatprep.subr.bf16.mxu0 0
    %4507 = vmatpush1.bf16.xpose.msra.mxu0 0
    %4508 = vmatprep.mubr.bf16.mxu0 0
    %4509 = vmatmul.mubr.bf16.gmra.mrb[0].mxu0 %v4459
    %v4510 = vpop.f32.mrb[0].mxu0
    %v4511 = vadd.f32 0.0, %v4510
    %v4512 = vpop.f32.mrb[0].mxu0
    %v4513 = vpop.f32.mrb[0].mxu0
    %v4514 = vadd.f32 0.0, %v4513
    %v4515 = vpop.f32.mrb[0].mxu0
    %4516 = vmatprep.mubr.bf16.mxu0 0
    %4517 = vmatmul.mubr.bf16.gmra.mrb[0].mxu0 %v4462
    %v4518 = vpop.f32.mrb[0].mxu0
    %v4519 = vadd.f32 0.0, %v4518
    %v4520 = vpop.f32.mrb[0].mxu0
    %v4521 = vpop.f32.mrb[0].mxu0
    %v4522 = vadd.f32 0.0, %v4521
    %v4523 = vpop.f32.mrb[0].mxu0
    %4524 = vmatprep.mubr.bf16.mxu0 0
    %4525 = vmatmul.mubr.bf16.gmra.mrb[0].mxu0 %v4465
    %v4526 = vpop.f32.mrb[0].mxu0
    %v4527 = vadd.f32 0.0, %v4526
    %v4528 = vpop.f32.mrb[0].mxu0
    %v4529 = vpop.f32.mrb[0].mxu0
    %v4530 = vadd.f32 0.0, %v4529
    %v4531 = vpop.f32.mrb[0].mxu0
    %4532 = vdwg.mxu0
    %v4533 = vsel %vm488, %v4511, -inf
    %4534 = vmax.xlane.f32.xlu0 %v4533
    %v4535 = vpop.xlane.xlu0 %4534
    %v4536 = vsel %vm488, %v4514, -inf
    %4537 = vmax.xlane.f32.xlu0 %v4536
    %v4538 = vpop.xlane.xlu0 %4537
    %v4539 = vsel %vm488, %v4519, -inf
    %4540 = vmax.xlane.f32.xlu0 %v4539
    %v4541 = vpop.xlane.xlu0 %4540
    %v4542 = vsel %vm488, %v4522, -inf
    %4543 = vmax.xlane.f32.xlu0 %v4542
    %v4544 = vpop.xlane.xlu0 %4543
    %v4545 = vsel %vm488, %v4527, -inf
    %4546 = vmax.xlane.f32.xlu0 %v4545
    %v4547 = vpop.xlane.xlu0 %4546
    %v4548 = vsel %vm488, %v4530, -inf
    %4549 = vmax.xlane.f32.xlu0 %v4548
    %v4550 = vpop.xlane.xlu0 %4549
    %v4551 = vsub.f32 %v4511, %v4535
    %v4552 = vsub.f32 %v4514, %v4538
    %v4553 = vsub.f32 %v4519, %v4541
    %v4554 = vsub.f32 %v4522, %v4544
    %v4555 = vsub.f32 %v4527, %v4547
    %v4556 = vsub.f32 %v4530, %v4550
    %v4557 = vmul.f32 %v4551, 1.442695
    %v4558 = vpow.pop %v4557
    %v4559 = vmul.f32 %v4552, 1.442695
    %v4560 = vpow.pop %v4559
    %v4561 = vmul.f32 %v4553, 1.442695
    %v4562 = vpow.pop %v4561
    %v4563 = vmul.f32 %v4554, 1.442695
    %v4564 = vpow.pop %v4563
    %v4565 = vmul.f32 %v4555, 1.442695
    %v4566 = vpow.pop %v4565
    %v4567 = vmul.f32 %v4556, 1.442695
    %v4568 = vpow.pop %v4567
    %v4569 = vsel %vm488, %v4558, 0.0
    %4570 = vadd.xlane.f32.xlu0 %v4569
    %v4571 = vpop.xlane.xlu0 %4570
    %v4572 = vsel %vm488, %v4560, 0.0
    %4573 = vadd.xlane.f32.xlu0 %v4572
    %v4574 = vpop.xlane.xlu0 %4573
    %v4575 = vsel %vm488, %v4562, 0.0
    %4576 = vadd.xlane.f32.xlu0 %v4575
    %v4577 = vpop.xlane.xlu0 %4576
    %v4578 = vsel %vm488, %v4564, 0.0
    %4579 = vadd.xlane.f32.xlu0 %v4578
    %v4580 = vpop.xlane.xlu0 %4579
    %v4581 = vsel %vm488, %v4566, 0.0
    %4582 = vadd.xlane.f32.xlu0 %v4581
    %v4583 = vpop.xlane.xlu0 %4582
    %v4584 = vsel %vm488, %v4568, 0.0
    %4585 = vadd.xlane.f32.xlu0 %v4584
    %v4586 = vpop.xlane.xlu0 %4585
    %v4587 = vrcp.pop %v4571
    %v4588 = vrcp.pop %v4574
    %v4589 = vrcp.pop %v4577
    %v4590 = vrcp.pop %v4580
    %v4591 = vrcp.pop %v4583
    %v4592 = vrcp.pop %v4586
    %v4593 = vmul.f32 %v4558, %v4587
    %v4594 = vmul.f32 %v4560, %v4588
    %v4595 = vmul.f32 %v4562, %v4589
    %v4596 = vmul.f32 %v4564, %v4590
    %v4597 = vmul.f32 %v4566, %v4591
    %v4598 = vmul.f32 %v4568, %v4592
    %v4599 = vpack.c.bf16 %v4594, %v4593
    %v4600 = vpack.c.bf16 %v4596, %v4595
    %v4601 = vpack.c.bf16 %v4598, %v4597
    %4602 = vrot.lane.b32.xlu0 %v4446, 64
    %v4603 = vpop.permute.xlu0 %4602
    %4604 = vrot.lane.b32.xlu0 %v4447, 64
    %v4605 = vpop.permute.xlu0 %4604
    %4606 = vrot.lane.b32.xlu0 %v4448, 64
    %v4607 = vpop.permute.xlu0 %4606
    %v4612 = vsel %vm488, %v4599, 0
    %v4615 = vsel %vm488, %v4600, 0
    %v4618 = vsel %vm488, %v4601, 0
    %4620 = vmatprep.subr.bf16.mxu0 0
    %4621 = vmatpush1.bf16.msra.mxu0 %v4603
    %4622 = vmatprep.subr.bf16.mxu0 0
    %4623 = vmatpush1.bf16.msra.mxu0 %v4605
    %4624 = vmatprep.subr.bf16.mxu0 0
    %4625 = vmatpush1.bf16.msra.mxu0 %v4607
    %4626 = vmatprep.subr.bf16.mxu0 0
    %4627 = vmatpush1.bf16.msra.mxu0 0
    %4628 = vmatprep.subr.bf16.mxu0 0
    %4629 = vmatpush1.bf16.msra.mxu0 0
    %4630 = vmatprep.subr.bf16.mxu0 0
    %4631 = vmatpush1.bf16.msra.mxu0 0
    %4632 = vmatprep.subr.bf16.mxu0 0
    %4633 = vmatpush1.bf16.msra.mxu0 0
    %4634 = vmatprep.subr.bf16.mxu0 0
    %4635 = vmatpush1.bf16.msra.mxu0 0
    %4636 = vmatprep.subr.bf16.mxu0 0
    %4637 = vmatpush1.bf16.msra.mxu0 0
    %4638 = vmatprep.subr.bf16.mxu0 0
    %4639 = vmatpush1.bf16.msra.mxu0 0
    %4640 = vmatprep.subr.bf16.mxu0 0
    %4641 = vmatpush1.bf16.msra.mxu0 0
    %4642 = vmatprep.subr.bf16.mxu0 0
    %4643 = vmatpush1.bf16.msra.mxu0 0
    %4644 = vmatprep.subr.bf16.mxu0 0
    %4645 = vmatpush1.bf16.msra.mxu0 0
    %4646 = vmatprep.subr.bf16.mxu0 0
    %4647 = vmatpush1.bf16.msra.mxu0 0
    %4648 = vmatprep.subr.bf16.mxu0 0
    %4649 = vmatpush1.bf16.msra.mxu0 0
    %4650 = vmatprep.subr.bf16.mxu0 0
    %4651 = vmatpush1.bf16.msra.mxu0 0
    %4652 = vmatprep.mubr.bf16.mxu0 0
    %4653 = vmatmul.mubr.bf16.gmra.mrb[0].mxu0 %v4612
    %v4654 = vpop.f32.mrb[0].mxu0
    %v4655 = vadd.f32 0.0, %v4654
    %v4656 = vpop.f32.mrb[0].mxu0
    %v4657 = vpop.f32.mrb[0].mxu0
    %v4658 = vadd.f32 0.0, %v4657
    %v4659 = vpop.f32.mrb[0].mxu0
    %4660 = vmatprep.mubr.bf16.mxu0 0
    %4661 = vmatmul.mubr.bf16.gmra.mrb[0].mxu0 %v4615
    %v4662 = vpop.f32.mrb[0].mxu0
    %v4663 = vadd.f32 0.0, %v4662
    %v4664 = vpop.f32.mrb[0].mxu0
    %v4665 = vpop.f32.mrb[0].mxu0
    %v4666 = vadd.f32 0.0, %v4665
    %v4667 = vpop.f32.mrb[0].mxu0
    %4668 = vmatprep.mubr.bf16.mxu0 0
    %4669 = vmatmul.mubr.bf16.gmra.mrb[0].mxu0 %v4618
    %v4670 = vpop.f32.mrb[0].mxu0
    %v4671 = vadd.f32 0.0, %v4670
    %v4672 = vpop.f32.mrb[0].mxu0
    %v4673 = vpop.f32.mrb[0].mxu0
    %v4674 = vadd.f32 0.0, %v4673
    %v4675 = vpop.f32.mrb[0].mxu0
    %4676 = vdwg.mxu0
    %4677 = vst.msk [vmem:[#allocation2 + $0x30] sm:$0xff] %vm412, %v4655
    %4678 = vst.msk [vmem:[#allocation2 + $0x38] sm:$0xff] %vm412, %v4658
    %4679 = vst.msk [vmem:[#allocation2 + $0x40] sm:$0xff] %vm412, %v4663
    %4680 = vst.msk [vmem:[#allocation2 + $0x48] sm:$0xff] %vm412, %v4666
    %4681 = vst.msk [vmem:[#allocation2 + $0x50] sm:$0xff] %vm412, %v4671
    %4682 = vst.msk [vmem:[#allocation2 + $0x58] sm:$0xff] %vm412, %v4674
    %4683 = vrot.lane.b32.xlu0 %v4446, 120
    %v4684 = vpop.permute.xlu0 %4683
    %4685 = vrot.lane.b32.xlu0 %v4447, 120
    %v4686 = vpop.permute.xlu0 %4685
    %4687 = vrot.lane.b32.xlu0 %v4448, 120
    %v4688 = vpop.permute.xlu0 %4687
    %4689 = vrot.lane.b32.xlu0 %v4446, 88
    %v4690 = vpop.permute.xlu0 %4689
    %4691 = vrot.lane.b32.xlu0 %v4447, 88
    %v4692 = vpop.permute.xlu0 %4691
    %4693 = vrot.lane.b32.xlu0 %v4448, 88
    %v4694 = vpop.permute.xlu0 %4693
    %v4696 = vsel %vm412, %v4684, 0
    %v4699 = vsel %vm412, %v4686, 0
    %v4702 = vsel %vm412, %v4688, 0
    %v4705 = vsel %vm412, %v4690, 0
    %v4708 = vsel %vm412, %v4692, 0
    %v4711 = vsel %vm412, %v4694, 0
    %4713 = vmatprep.subr.bf16.mxu0 0
    %4714 = vmatpush1.bf16.xpose.msra.mxu0 %v4705
    %4715 = vmatprep.subr.bf16.mxu0 0
    %4716 = vmatpush1.bf16.xpose.msra.mxu0 %v4708
    %4717 = vmatprep.subr.bf16.mxu0 0
    %4718 = vmatpush1.bf16.xpose.msra.mxu0 %v4711
    %4719 = vmatprep.subr.bf16.mxu0 0
    %4720 = vmatpush1.bf16.xpose.msra.mxu0 0
    %4721 = vmatprep.subr.bf16.mxu0 0
    %4722 = vmatpush1.bf16.xpose.msra.mxu0 0
    %4723 = vmatprep.subr.bf16.mxu0 0
    %4724 = vmatpush1.bf16.xpose.msra.mxu0 0
    %4725 = vmatprep.subr.bf16.mxu0 0
    %4726 = vmatpush1.bf16.xpose.msra.mxu0 0
    %4727 = vmatprep.subr.bf16.mxu0 0
    %4728 = vmatpush1.bf16.xpose.msra.mxu0 0
    %4729 = vmatprep.subr.bf16.mxu0 0
    %4730 = vmatpush1.bf16.xpose.msra.mxu0 0
    %4731 = vmatprep.subr.bf16.mxu0 0
    %4732 = vmatpush1.bf16.xpose.msra.mxu0 0
    %4733 = vmatprep.subr.bf16.mxu0 0
    %4734 = vmatpush1.bf16.xpose.msra.mxu0 0
    %4735 = vmatprep.subr.bf16.mxu0 0
    %4736 = vmatpush1.bf16.xpose.msra.mxu0 0
    %4737 = vmatprep.subr.bf16.mxu0 0
    %4738 = vmatpush1.bf16.xpose.msra.mxu0 0
    %4739 = vmatprep.subr.bf16.mxu0 0
    %4740 = vmatpush1.bf16.xpose.msra.mxu0 0
    %4741 = vmatprep.subr.bf16.mxu0 0
    %4742 = vmatpush1.bf16.xpose.msra.mxu0 0
    %4743 = vmatprep.subr.bf16.mxu0 0
    %4744 = vmatpush1.bf16.xpose.msra.mxu0 0
    %4745 = vmatprep.mubr.bf16.mxu0 0
    %4746 = vmatmul.mubr.bf16.gmra.mrb[0].mxu0 %v4696
    %v4747 = vpop.f32.mrb[0].mxu0
    %v4748 = vadd.f32 0.0, %v4747
    %v4749 = vpop.f32.mrb[0].mxu0
    %v4750 = vpop.f32.mrb[0].mxu0
    %v4751 = vadd.f32 0.0, %v4750
    %v4752 = vpop.f32.mrb[0].mxu0
    %4753 = vmatprep.mubr.bf16.mxu0 0
    %4754 = vmatmul.mubr.bf16.gmra.mrb[0].mxu0 %v4699
    %v4755 = vpop.f32.mrb[0].mxu0
    %v4756 = vadd.f32 0.0, %v4755
    %v4757 = vpop.f32.mrb[0].mxu0
    %v4758 = vpop.f32.mrb[0].mxu0
    %v4759 = vadd.f32 0.0, %v4758
    %v4760 = vpop.f32.mrb[0].mxu0
    %4761 = vmatprep.mubr.bf16.mxu0 0
    %4762 = vmatmul.mubr.bf16.gmra.mrb[0].mxu0 %v4702
    %v4763 = vpop.f32.mrb[0].mxu0
    %v4764 = vadd.f32 0.0, %v4763
    %v4765 = vpop.f32.mrb[0].mxu0
    %v4766 = vpop.f32.mrb[0].mxu0
    %v4767 = vadd.f32 0.0, %v4766
    %v4768 = vpop.f32.mrb[0].mxu0
    %4769 = vdwg.mxu0
    %v4770 = vsel %vm488, %v4748, -inf
    %4771 = vmax.xlane.f32.xlu0 %v4770
    %v4772 = vpop.xlane.xlu0 %4771
    %v4773 = vsel %vm488, %v4751, -inf
    %4774 = vmax.xlane.f32.xlu0 %v4773
    %v4775 = vpop.xlane.xlu0 %4774
    %v4776 = vsel %vm488, %v4756, -inf
    %4777 = vmax.xlane.f32.xlu0 %v4776
    %v4778 = vpop.xlane.xlu0 %4777
    %v4779 = vsel %vm488, %v4759, -inf
    %4780 = vmax.xlane.f32.xlu0 %v4779
    %v4781 = vpop.xlane.xlu0 %4780
    %v4782 = vsel %vm488, %v4764, -inf
    %4783 = vmax.xlane.f32.xlu0 %v4782
    %v4784 = vpop.xlane.xlu0 %4783
    %v4785 = vsel %vm488, %v4767, -inf
    %4786 = vmax.xlane.f32.xlu0 %v4785
    %v4787 = vpop.xlane.xlu0 %4786
    %v4788 = vsub.f32 %v4748, %v4772
    %v4789 = vsub.f32 %v4751, %v4775
    %v4790 = vsub.f32 %v4756, %v4778
    %v4791 = vsub.f32 %v4759, %v4781
    %v4792 = vsub.f32 %v4764, %v4784
    %v4793 = vsub.f32 %v4767, %v4787
    %v4794 = vmul.f32 %v4788, 1.442695
    %v4795 = vpow.pop %v4794
    %v4796 = vmul.f32 %v4789, 1.442695
    %v4797 = vpow.pop %v4796
    %v4798 = vmul.f32 %v4790, 1.442695
    %v4799 = vpow.pop %v4798
    %v4800 = vmul.f32 %v4791, 1.442695
    %v4801 = vpow.pop %v4800
    %v4802 = vmul.f32 %v4792, 1.442695
    %v4803 = vpow.pop %v4802
    %v4804 = vmul.f32 %v4793, 1.442695
    %v4805 = vpow.pop %v4804
    %v4806 = vsel %vm488, %v4795, 0.0
    %4807 = vadd.xlane.f32.xlu0 %v4806
    %v4808 = vpop.xlane.xlu0 %4807
    %v4809 = vsel %vm488, %v4797, 0.0
    %4810 = vadd.xlane.f32.xlu0 %v4809
    %v4811 = vpop.xlane.xlu0 %4810
    %v4812 = vsel %vm488, %v4799, 0.0
    %4813 = vadd.xlane.f32.xlu0 %v4812
    %v4814 = vpop.xlane.xlu0 %4813
    %v4815 = vsel %vm488, %v4801, 0.0
    %4816 = vadd.xlane.f32.xlu0 %v4815
    %v4817 = vpop.xlane.xlu0 %4816
    %v4818 = vsel %vm488, %v4803, 0.0
    %4819 = vadd.xlane.f32.xlu0 %v4818
    %v4820 = vpop.xlane.xlu0 %4819
    %v4821 = vsel %vm488, %v4805, 0.0
    %4822 = vadd.xlane.f32.xlu0 %v4821
    %v4823 = vpop.xlane.xlu0 %4822
    %v4824 = vrcp.pop %v4808
    %v4825 = vrcp.pop %v4811
    %v4826 = vrcp.pop %v4814
    %v4827 = vrcp.pop %v4817
    %v4828 = vrcp.pop %v4820
    %v4829 = vrcp.pop %v4823
    %v4830 = vmul.f32 %v4795, %v4824
    %v4831 = vmul.f32 %v4797, %v4825
    %v4832 = vmul.f32 %v4799, %v4826
    %v4833 = vmul.f32 %v4801, %v4827
    %v4834 = vmul.f32 %v4803, %v4828
    %v4835 = vmul.f32 %v4805, %v4829
    %v4836 = vpack.c.bf16 %v4831, %v4830
    %v4837 = vpack.c.bf16 %v4833, %v4832
    %v4838 = vpack.c.bf16 %v4835, %v4834
    %4839 = vrot.lane.b32.xlu0 %v4446, 56
    %v4840 = vpop.permute.xlu0 %4839
    %4841 = vrot.lane.b32.xlu0 %v4447, 56
    %v4842 = vpop.permute.xlu0 %4841
    %4843 = vrot.lane.b32.xlu0 %v4448, 56
    %v4844 = vpop.permute.xlu0 %4843
    %v4849 = vsel %vm488, %v4836, 0
    %v4852 = vsel %vm488, %v4837, 0
    %v4855 = vsel %vm488, %v4838, 0
    %4857 = vmatprep.subr.bf16.mxu0 0
    %4858 = vmatpush1.bf16.msra.mxu0 %v4840
    %4859 = vmatprep.subr.bf16.mxu0 0
    %4860 = vmatpush1.bf16.msra.mxu0 %v4842
    %4861 = vmatprep.subr.bf16.mxu0 0
    %4862 = vmatpush1.bf16.msra.mxu0 %v4844
    %4863 = vmatprep.subr.bf16.mxu0 0
    %4864 = vmatpush1.bf16.msra.mxu0 0
    %4865 = vmatprep.subr.bf16.mxu0 0
    %4866 = vmatpush1.bf16.msra.mxu0 0
    %4867 = vmatprep.subr.bf16.mxu0 0
    %4868 = vmatpush1.bf16.msra.mxu0 0
    %4869 = vmatprep.subr.bf16.mxu0 0
    %4870 = vmatpush1.bf16.msra.mxu0 0
    %4871 = vmatprep.subr.bf16.mxu0 0
    %4872 = vmatpush1.bf16.msra.mxu0 0
    %4873 = vmatprep.subr.bf16.mxu0 0
    %4874 = vmatpush1.bf16.msra.mxu0 0
    %4875 = vmatprep.subr.bf16.mxu0 0
    %4876 = vmatpush1.bf16.msra.mxu0 0
    %4877 = vmatprep.subr.bf16.mxu0 0
    %4878 = vmatpush1.bf16.msra.mxu0 0
    %4879 = vmatprep.subr.bf16.mxu0 0
    %4880 = vmatpush1.bf16.msra.mxu0 0
    %4881 = vmatprep.subr.bf16.mxu0 0
    %4882 = vmatpush1.bf16.msra.mxu0 0
    %4883 = vmatprep.subr.bf16.mxu0 0
    %4884 = vmatpush1.bf16.msra.mxu0 0
    %4885 = vmatprep.subr.bf16.mxu0 0
    %4886 = vmatpush1.bf16.msra.mxu0 0
    %4887 = vmatprep.subr.bf16.mxu0 0
    %4888 = vmatpush1.bf16.msra.mxu0 0
    %4889 = vmatprep.mubr.bf16.mxu0 0
    %4890 = vmatmul.mubr.bf16.gmra.mrb[0].mxu0 %v4849
    %v4891 = vpop.f32.mrb[0].mxu0
    %v4892 = vadd.f32 0.0, %v4891
    %v4893 = vpop.f32.mrb[0].mxu0
    %v4894 = vpop.f32.mrb[0].mxu0
    %v4895 = vadd.f32 0.0, %v4894
    %v4896 = vpop.f32.mrb[0].mxu0
    %4897 = vmatprep.mubr.bf16.mxu0 0
    %4898 = vmatmul.mubr.bf16.gmra.mrb[0].mxu0 %v4852
    %v4899 = vpop.f32.mrb[0].mxu0
    %v4900 = vadd.f32 0.0, %v4899
    %v4901 = vpop.f32.mrb[0].mxu0
    %v4902 = vpop.f32.mrb[0].mxu0
    %v4903 = vadd.f32 0.0, %v4902
    %v4904 = vpop.f32.mrb[0].mxu0
    %4905 = vmatprep.mubr.bf16.mxu0 0
    %4906 = vmatmul.mubr.bf16.gmra.mrb[0].mxu0 %v4855
    %v4907 = vpop.f32.mrb[0].mxu0
    %v4908 = vadd.f32 0.0, %v4907
    %v4909 = vpop.f32.mrb[0].mxu0
    %v4910 = vpop.f32.mrb[0].mxu0
    %v4911 = vadd.f32 0.0, %v4910
    %v4912 = vpop.f32.mrb[0].mxu0
    %4913 = vdwg.mxu0
    %4920 = vrot.lane.b32.xlu0 %v4892, 8
    %v4921 = vpop.permute.xlu0 %4920
    %4922 = vrot.lane.b32.xlu0 %v4895, 8
    %v4923 = vpop.permute.xlu0 %4922
    %4924 = vrot.lane.b32.xlu0 %v4900, 8
    %v4925 = vpop.permute.xlu0 %4924
    %4926 = vrot.lane.b32.xlu0 %v4903, 8
    %v4927 = vpop.permute.xlu0 %4926
    %4928 = vrot.lane.b32.xlu0 %v4908, 8
    %v4929 = vpop.permute.xlu0 %4928
    %4930 = vrot.lane.b32.xlu0 %v4911, 8
    %v4931 = vpop.permute.xlu0 %4930
    %4938 = vst.msk [vmem:[#allocation2 + $0x30] sm:$0xff] %vm894, %v4921
    %4939 = vst.msk [vmem:[#allocation2 + $0x38] sm:$0xff] %vm894, %v4923
    %4940 = vst.msk [vmem:[#allocation2 + $0x40] sm:$0xff] %vm894, %v4925
    %4941 = vst.msk [vmem:[#allocation2 + $0x48] sm:$0xff] %vm894, %v4927
    %4942 = vst.msk [vmem:[#allocation2 + $0x50] sm:$0xff] %vm894, %v4929
    %4943 = vst.msk [vmem:[#allocation2 + $0x58] sm:$0xff] %vm894, %v4931
    %4944 = vrot.lane.b32.xlu0 %v4446, 112
    %v4945 = vpop.permute.xlu0 %4944
    %4946 = vrot.lane.b32.xlu0 %v4447, 112
    %v4947 = vpop.permute.xlu0 %4946
    %4948 = vrot.lane.b32.xlu0 %v4448, 112
    %v4949 = vpop.permute.xlu0 %4948
    %4950 = vrot.lane.b32.xlu0 %v4446, 80
    %v4951 = vpop.permute.xlu0 %4950
    %4952 = vrot.lane.b32.xlu0 %v4447, 80
    %v4953 = vpop.permute.xlu0 %4952
    %4954 = vrot.lane.b32.xlu0 %v4448, 80
    %v4955 = vpop.permute.xlu0 %4954
    %v4957 = vsel %vm412, %v4945, 0
    %v4960 = vsel %vm412, %v4947, 0
    %v4963 = vsel %vm412, %v4949, 0
    %v4966 = vsel %vm412, %v4951, 0
    %v4969 = vsel %vm412, %v4953, 0
    %v4972 = vsel %vm412, %v4955, 0
    %4974 = vmatprep.subr.bf16.mxu0 0
    %4975 = vmatpush1.bf16.xpose.msra.mxu0 %v4966
    %4976 = vmatprep.subr.bf16.mxu0 0
    %4977 = vmatpush1.bf16.xpose.msra.mxu0 %v4969
    %4978 = vmatprep.subr.bf16.mxu0 0
    %4979 = vmatpush1.bf16.xpose.msra.mxu0 %v4972
    %4980 = vmatprep.subr.bf16.mxu0 0
    %4981 = vmatpush1.bf16.xpose.msra.mxu0 0
    %4982 = vmatprep.subr.bf16.mxu0 0
    %4983 = vmatpush1.bf16.xpose.msra.mxu0 0
    %4984 = vmatprep.subr.bf16.mxu0 0
    %4985 = vmatpush1.bf16.xpose.msra.mxu0 0
    %4986 = vmatprep.subr.bf16.mxu0 0
    %4987 = vmatpush1.bf16.xpose.msra.mxu0 0
    %4988 = vmatprep.subr.bf16.mxu0 0
    %4989 = vmatpush1.bf16.xpose.msra.mxu0 0
    %4990 = vmatprep.subr.bf16.mxu0 0
    %4991 = vmatpush1.bf16.xpose.msra.mxu0 0
    %4992 = vmatprep.subr.bf16.mxu0 0
    %4993 = vmatpush1.bf16.xpose.msra.mxu0 0
    %4994 = vmatprep.subr.bf16.mxu0 0
    %4995 = vmatpush1.bf16.xpose.msra.mxu0 0
    %4996 = vmatprep.subr.bf16.mxu0 0
    %4997 = vmatpush1.bf16.xpose.msra.mxu0 0
    %4998 = vmatprep.subr.bf16.mxu0 0
    %4999 = vmatpush1.bf16.xpose.msra.mxu0 0
    %5000 = vmatprep.subr.bf16.mxu0 0
    %5001 = vmatpush1.bf16.xpose.msra.mxu0 0
    %5002 = vmatprep.subr.bf16.mxu0 0
    %5003 = vmatpush1.bf16.xpose.msra.mxu0 0
    %5004 = vmatprep.subr.bf16.mxu0 0
    %5005 = vmatpush1.bf16.xpose.msra.mxu0 0
    %5006 = vmatprep.mubr.bf16.mxu0 0
    %5007 = vmatmul.mubr.bf16.gmra.mrb[0].mxu0 %v4957
    %v5008 = vpop.f32.mrb[0].mxu0
    %v5009 = vadd.f32 0.0, %v5008
    %v5010 = vpop.f32.mrb[0].mxu0
    %v5011 = vpop.f32.mrb[0].mxu0
    %v5012 = vadd.f32 0.0, %v5011
    %v5013 = vpop.f32.mrb[0].mxu0
    %5014 = vmatprep.mubr.bf16.mxu0 0
    %5015 = vmatmul.mubr.bf16.gmra.mrb[0].mxu0 %v4960
    %v5016 = vpop.f32.mrb[0].mxu0
    %v5017 = vadd.f32 0.0, %v5016
    %v5018 = vpop.f32.mrb[0].mxu0
    %v5019 = vpop.f32.mrb[0].mxu0
    %v5020 = vadd.f32 0.0, %v5019
    %v5021 = vpop.f32.mrb[0].mxu0
    %5022 = vmatprep.mubr.bf16.mxu0 0
    %5023 = vmatmul.mubr.bf16.gmra.mrb[0].mxu0 %v4963
    %v5024 = vpop.f32.mrb[0].mxu0
    %v5025 = vadd.f32 0.0, %v5024
    %v5026 = vpop.f32.mrb[0].mxu0
    %v5027 = vpop.f32.mrb[0].mxu0
    %v5028 = vadd.f32 0.0, %v5027
    %v5029 = vpop.f32.mrb[0].mxu0
    %5030 = vdwg.mxu0
    %v5031 = vsel %vm488, %v5009, -inf
    %5032 = vmax.xlane.f32.xlu0 %v5031
    %v5033 = vpop.xlane.xlu0 %5032
    %v5034 = vsel %vm488, %v5012, -inf
    %5035 = vmax.xlane.f32.xlu0 %v5034
    %v5036 = vpop.xlane.xlu0 %5035
    %v5037 = vsel %vm488, %v5017, -inf
    %5038 = vmax.xlane.f32.xlu0 %v5037
    %v5039 = vpop.xlane.xlu0 %5038
    %v5040 = vsel %vm488, %v5020, -inf
    %5041 = vmax.xlane.f32.xlu0 %v5040
    %v5042 = vpop.xlane.xlu0 %5041
    %v5043 = vsel %vm488, %v5025, -inf
    %5044 = vmax.xlane.f32.xlu0 %v5043
    %v5045 = vpop.xlane.xlu0 %5044
    %v5046 = vsel %vm488, %v5028, -inf
    %5047 = vmax.xlane.f32.xlu0 %v5046
    %v5048 = vpop.xlane.xlu0 %5047
    %v5049 = vsub.f32 %v5009, %v5033
    %v5050 = vsub.f32 %v5012, %v5036
    %v5051 = vsub.f32 %v5017, %v5039
    %v5052 = vsub.f32 %v5020, %v5042
    %v5053 = vsub.f32 %v5025, %v5045
    %v5054 = vsub.f32 %v5028, %v5048
    %v5055 = vmul.f32 %v5049, 1.442695
    %v5056 = vpow.pop %v5055
    %v5057 = vmul.f32 %v5050, 1.442695
    %v5058 = vpow.pop %v5057
    %v5059 = vmul.f32 %v5051, 1.442695
    %v5060 = vpow.pop %v5059
    %v5061 = vmul.f32 %v5052, 1.442695
    %v5062 = vpow.pop %v5061
    %v5063 = vmul.f32 %v5053, 1.442695
    %v5064 = vpow.pop %v5063
    %v5065 = vmul.f32 %v5054, 1.442695
    %v5066 = vpow.pop %v5065
    %v5067 = vsel %vm488, %v5056, 0.0
    %5068 = vadd.xlane.f32.xlu0 %v5067
    %v5069 = vpop.xlane.xlu0 %5068
    %v5070 = vsel %vm488, %v5058, 0.0
    %5071 = vadd.xlane.f32.xlu0 %v5070
    %v5072 = vpop.xlane.xlu0 %5071
    %v5073 = vsel %vm488, %v5060, 0.0
    %5074 = vadd.xlane.f32.xlu0 %v5073
    %v5075 = vpop.xlane.xlu0 %5074
    %v5076 = vsel %vm488, %v5062, 0.0
    %5077 = vadd.xlane.f32.xlu0 %v5076
    %v5078 = vpop.xlane.xlu0 %5077
    %v5079 = vsel %vm488, %v5064, 0.0
    %5080 = vadd.xlane.f32.xlu0 %v5079
    %v5081 = vpop.xlane.xlu0 %5080
    %v5082 = vsel %vm488, %v5066, 0.0
    %5083 = vadd.xlane.f32.xlu0 %v5082
    %v5084 = vpop.xlane.xlu0 %5083
    %v5085 = vrcp.pop %v5069
    %v5086 = vrcp.pop %v5072
    %v5087 = vrcp.pop %v5075
    %v5088 = vrcp.pop %v5078
    %v5089 = vrcp.pop %v5081
    %v5090 = vrcp.pop %v5084
    %v5091 = vmul.f32 %v5056, %v5085
    %v5092 = vmul.f32 %v5058, %v5086
    %v5093 = vmul.f32 %v5060, %v5087
    %v5094 = vmul.f32 %v5062, %v5088
    %v5095 = vmul.f32 %v5064, %v5089
    %v5096 = vmul.f32 %v5066, %v5090
    %v5097 = vpack.c.bf16 %v5092, %v5091
    %v5098 = vpack.c.bf16 %v5094, %v5093
    %v5099 = vpack.c.bf16 %v5096, %v5095
    %5100 = vrot.lane.b32.xlu0 %v4446, 48
    %v5101 = vpop.permute.xlu0 %5100
    %5102 = vrot.lane.b32.xlu0 %v4447, 48
    %v5103 = vpop.permute.xlu0 %5102
    %5104 = vrot.lane.b32.xlu0 %v4448, 48
    %v5105 = vpop.permute.xlu0 %5104
    %v5110 = vsel %vm488, %v5097, 0
    %v5113 = vsel %vm488, %v5098, 0
    %v5116 = vsel %vm488, %v5099, 0
    %5118 = vmatprep.subr.bf16.mxu0 0
    %5119 = vmatpush1.bf16.msra.mxu0 %v5101
    %5120 = vmatprep.subr.bf16.mxu0 0
    %5121 = vmatpush1.bf16.msra.mxu0 %v5103
    %5122 = vmatprep.subr.bf16.mxu0 0
    %5123 = vmatpush1.bf16.msra.mxu0 %v5105
    %5124 = vmatprep.subr.bf16.mxu0 0
    %5125 = vmatpush1.bf16.msra.mxu0 0
    %5126 = vmatprep.subr.bf16.mxu0 0
    %5127 = vmatpush1.bf16.msra.mxu0 0
    %5128 = vmatprep.subr.bf16.mxu0 0
    %5129 = vmatpush1.bf16.msra.mxu0 0
    %5130 = vmatprep.subr.bf16.mxu0 0
    %5131 = vmatpush1.bf16.msra.mxu0 0
    %5132 = vmatprep.subr.bf16.mxu0 0
    %5133 = vmatpush1.bf16.msra.mxu0 0
    %5134 = vmatprep.subr.bf16.mxu0 0
    %5135 = vmatpush1.bf16.msra.mxu0 0
    %5136 = vmatprep.subr.bf16.mxu0 0
    %5137 = vmatpush1.bf16.msra.mxu0 0
    %5138 = vmatprep.subr.bf16.mxu0 0
    %5139 = vmatpush1.bf16.msra.mxu0 0
    %5140 = vmatprep.subr.bf16.mxu0 0
    %5141 = vmatpush1.bf16.msra.mxu0 0
    %5142 = vmatprep.subr.bf16.mxu0 0
    %5143 = vmatpush1.bf16.msra.mxu0 0
    %5144 = vmatprep.subr.bf16.mxu0 0
    %5145 = vmatpush1.bf16.msra.mxu0 0
    %5146 = vmatprep.subr.bf16.mxu0 0
    %5147 = vmatpush1.bf16.msra.mxu0 0
    %5148 = vmatprep.subr.bf16.mxu0 0
    %5149 = vmatpush1.bf16.msra.mxu0 0
    %5150 = vmatprep.mubr.bf16.mxu0 0
    %5151 = vmatmul.mubr.bf16.gmra.mrb[0].mxu0 %v5110
    %v5152 = vpop.f32.mrb[0].mxu0
    %v5153 = vadd.f32 0.0, %v5152
    %v5154 = vpop.f32.mrb[0].mxu0
    %v5155 = vpop.f32.mrb[0].mxu0
    %v5156 = vadd.f32 0.0, %v5155
    %v5157 = vpop.f32.mrb[0].mxu0
    %5158 = vmatprep.mubr.bf16.mxu0 0
    %5159 = vmatmul.mubr.bf16.gmra.mrb[0].mxu0 %v5113
    %v5160 = vpop.f32.mrb[0].mxu0
    %v5161 = vadd.f32 0.0, %v5160
    %v5162 = vpop.f32.mrb[0].mxu0
    %v5163 = vpop.f32.mrb[0].mxu0
    %v5164 = vadd.f32 0.0, %v5163
    %v5165 = vpop.f32.mrb[0].mxu0
    %5166 = vmatprep.mubr.bf16.mxu0 0
    %5167 = vmatmul.mubr.bf16.gmra.mrb[0].mxu0 %v5116
    %v5168 = vpop.f32.mrb[0].mxu0
    %v5169 = vadd.f32 0.0, %v5168
    %v5170 = vpop.f32.mrb[0].mxu0
    %v5171 = vpop.f32.mrb[0].mxu0
    %v5172 = vadd.f32 0.0, %v5171
    %v5173 = vpop.f32.mrb[0].mxu0
    %5174 = vdwg.mxu0
    %5181 = vrot.lane.b32.xlu0 %v5153, 16
    %v5182 = vpop.permute.xlu0 %5181
    %5183 = vrot.lane.b32.xlu0 %v5156, 16
    %v5184 = vpop.permute.xlu0 %5183
    %5185 = vrot.lane.b32.xlu0 %v5161, 16
    %v5186 = vpop.permute.xlu0 %5185
    %5187 = vrot.lane.b32.xlu0 %v5164, 16
    %v5188 = vpop.permute.xlu0 %5187
    %5189 = vrot.lane.b32.xlu0 %v5169, 16
    %v5190 = vpop.permute.xlu0 %5189
    %5191 = vrot.lane.b32.xlu0 %v5172, 16
    %v5192 = vpop.permute.xlu0 %5191
    %5199 = vst.msk [vmem:[#allocation2 + $0x30] sm:$0xff] %vm1156, %v5182
    %5200 = vst.msk [vmem:[#allocation2 + $0x38] sm:$0xff] %vm1156, %v5184
    %5201 = vst.msk [vmem:[#allocation2 + $0x40] sm:$0xff] %vm1156, %v5186
    %5202 = vst.msk [vmem:[#allocation2 + $0x48] sm:$0xff] %vm1156, %v5188
    %5203 = vst.msk [vmem:[#allocation2 + $0x50] sm:$0xff] %vm1156, %v5190
    %5204 = vst.msk [vmem:[#allocation2 + $0x58] sm:$0xff] %vm1156, %v5192
    %5205 = vrot.lane.b32.xlu0 %v4446, 104
    %v5206 = vpop.permute.xlu0 %5205
    %5207 = vrot.lane.b32.xlu0 %v4447, 104
    %v5208 = vpop.permute.xlu0 %5207
    %5209 = vrot.lane.b32.xlu0 %v4448, 104
    %v5210 = vpop.permute.xlu0 %5209
    %5211 = vrot.lane.b32.xlu0 %v4446, 72
    %v5212 = vpop.permute.xlu0 %5211
    %5213 = vrot.lane.b32.xlu0 %v4447, 72
    %v5214 = vpop.permute.xlu0 %5213
    %5215 = vrot.lane.b32.xlu0 %v4448, 72
    %v5216 = vpop.permute.xlu0 %5215
    %v5218 = vsel %vm412, %v5206, 0
    %v5221 = vsel %vm412, %v5208, 0
    %v5224 = vsel %vm412, %v5210, 0
    %v5227 = vsel %vm412, %v5212, 0
    %v5230 = vsel %vm412, %v5214, 0
    %v5233 = vsel %vm412, %v5216, 0
    %5235 = vmatprep.subr.bf16.mxu0 0
    %5236 = vmatpush1.bf16.xpose.msra.mxu0 %v5227
    %5237 = vmatprep.subr.bf16.mxu0 0
    %5238 = vmatpush1.bf16.xpose.msra.mxu0 %v5230
    %5239 = vmatprep.subr.bf16.mxu0 0
    %5240 = vmatpush1.bf16.xpose.msra.mxu0 %v5233
    %5241 = vmatprep.subr.bf16.mxu0 0
    %5242 = vmatpush1.bf16.xpose.msra.mxu0 0
    %5243 = vmatprep.subr.bf16.mxu0 0
    %5244 = vmatpush1.bf16.xpose.msra.mxu0 0
    %5245 = vmatprep.subr.bf16.mxu0 0
    %5246 = vmatpush1.bf16.xpose.msra.mxu0 0
    %5247 = vmatprep.subr.bf16.mxu0 0
    %5248 = vmatpush1.bf16.xpose.msra.mxu0 0
    %5249 = vmatprep.subr.bf16.mxu0 0
    %5250 = vmatpush1.bf16.xpose.msra.mxu0 0
    %5251 = vmatprep.subr.bf16.mxu0 0
    %5252 = vmatpush1.bf16.xpose.msra.mxu0 0
    %5253 = vmatprep.subr.bf16.mxu0 0
    %5254 = vmatpush1.bf16.xpose.msra.mxu0 0
    %5255 = vmatprep.subr.bf16.mxu0 0
    %5256 = vmatpush1.bf16.xpose.msra.mxu0 0
    %5257 = vmatprep.subr.bf16.mxu0 0
    %5258 = vmatpush1.bf16.xpose.msra.mxu0 0
    %5259 = vmatprep.subr.bf16.mxu0 0
    %5260 = vmatpush1.bf16.xpose.msra.mxu0 0
    %5261 = vmatprep.subr.bf16.mxu0 0
    %5262 = vmatpush1.bf16.xpose.msra.mxu0 0
    %5263 = vmatprep.subr.bf16.mxu0 0
    %5264 = vmatpush1.bf16.xpose.msra.mxu0 0
    %5265 = vmatprep.subr.bf16.mxu0 0
    %5266 = vmatpush1.bf16.xpose.msra.mxu0 0
    %5267 = vmatprep.mubr.bf16.mxu0 0
    %5268 = vmatmul.mubr.bf16.gmra.mrb[0].mxu0 %v5218
    %v5269 = vpop.f32.mrb[0].mxu0
    %v5270 = vadd.f32 0.0, %v5269
    %v5271 = vpop.f32.mrb[0].mxu0
    %v5272 = vpop.f32.mrb[0].mxu0
    %v5273 = vadd.f32 0.0, %v5272
    %v5274 = vpop.f32.mrb[0].mxu0
    %5275 = vmatprep.mubr.bf16.mxu0 0
    %5276 = vmatmul.mubr.bf16.gmra.mrb[0].mxu0 %v5221
    %v5277 = vpop.f32.mrb[0].mxu0
    %v5278 = vadd.f32 0.0, %v5277
    %v5279 = vpop.f32.mrb[0].mxu0
    %v5280 = vpop.f32.mrb[0].mxu0
    %v5281 = vadd.f32 0.0, %v5280
    %v5282 = vpop.f32.mrb[0].mxu0
    %5283 = vmatprep.mubr.bf16.mxu0 0
    %5284 = vmatmul.mubr.bf16.gmra.mrb[0].mxu0 %v5224
    %v5285 = vpop.f32.mrb[0].mxu0
    %v5286 = vadd.f32 0.0, %v5285
    %v5287 = vpop.f32.mrb[0].mxu0
    %v5288 = vpop.f32.mrb[0].mxu0
    %v5289 = vadd.f32 0.0, %v5288
    %v5290 = vpop.f32.mrb[0].mxu0
    %5291 = vdwg.mxu0
    %v5292 = vsel %vm488, %v5270, -inf
    %5293 = vmax.xlane.f32.xlu0 %v5292
    %v5294 = vpop.xlane.xlu0 %5293
    %v5295 = vsel %vm488, %v5273, -inf
    %5296 = vmax.xlane.f32.xlu0 %v5295
    %v5297 = vpop.xlane.xlu0 %5296
    %v5298 = vsel %vm488, %v5278, -inf
    %5299 = vmax.xlane.f32.xlu0 %v5298
    %v5300 = vpop.xlane.xlu0 %5299
    %v5301 = vsel %vm488, %v5281, -inf
    %5302 = vmax.xlane.f32.xlu0 %v5301
    %v5303 = vpop.xlane.xlu0 %5302
    %v5304 = vsel %vm488, %v5286, -inf
    %5305 = vmax.xlane.f32.xlu0 %v5304
    %v5306 = vpop.xlane.xlu0 %5305
    %v5307 = vsel %vm488, %v5289, -inf
    %5308 = vmax.xlane.f32.xlu0 %v5307
    %v5309 = vpop.xlane.xlu0 %5308
    %v5310 = vsub.f32 %v5270, %v5294
    %v5311 = vsub.f32 %v5273, %v5297
    %v5312 = vsub.f32 %v5278, %v5300
    %v5313 = vsub.f32 %v5281, %v5303
    %v5314 = vsub.f32 %v5286, %v5306
    %v5315 = vsub.f32 %v5289, %v5309
    %v5316 = vmul.f32 %v5310, 1.442695
    %v5317 = vpow.pop %v5316
    %v5318 = vmul.f32 %v5311, 1.442695
    %v5319 = vpow.pop %v5318
    %v5320 = vmul.f32 %v5312, 1.442695
    %v5321 = vpow.pop %v5320
    %v5322 = vmul.f32 %v5313, 1.442695
    %v5323 = vpow.pop %v5322
    %v5324 = vmul.f32 %v5314, 1.442695
    %v5325 = vpow.pop %v5324
    %v5326 = vmul.f32 %v5315, 1.442695
    %v5327 = vpow.pop %v5326
    %v5328 = vsel %vm488, %v5317, 0.0
    %5329 = vadd.xlane.f32.xlu0 %v5328
    %v5330 = vpop.xlane.xlu0 %5329
    %v5331 = vsel %vm488, %v5319, 0.0
    %5332 = vadd.xlane.f32.xlu0 %v5331
    %v5333 = vpop.xlane.xlu0 %5332
    %v5334 = vsel %vm488, %v5321, 0.0
    %5335 = vadd.xlane.f32.xlu0 %v5334
    %v5336 = vpop.xlane.xlu0 %5335
    %v5337 = vsel %vm488, %v5323, 0.0
    %5338 = vadd.xlane.f32.xlu0 %v5337
    %v5339 = vpop.xlane.xlu0 %5338
    %v5340 = vsel %vm488, %v5325, 0.0
    %5341 = vadd.xlane.f32.xlu0 %v5340
    %v5342 = vpop.xlane.xlu0 %5341
    %v5343 = vsel %vm488, %v5327, 0.0
    %5344 = vadd.xlane.f32.xlu0 %v5343
    %v5345 = vpop.xlane.xlu0 %5344
    %v5346 = vrcp.pop %v5330
    %v5347 = vrcp.pop %v5333
    %v5348 = vrcp.pop %v5336
    %v5349 = vrcp.pop %v5339
    %v5350 = vrcp.pop %v5342
    %v5351 = vrcp.pop %v5345
    %v5352 = vmul.f32 %v5317, %v5346
    %v5353 = vmul.f32 %v5319, %v5347
    %v5354 = vmul.f32 %v5321, %v5348
    %v5355 = vmul.f32 %v5323, %v5349
    %v5356 = vmul.f32 %v5325, %v5350
    %v5357 = vmul.f32 %v5327, %v5351
    %v5358 = vpack.c.bf16 %v5353, %v5352
    %v5359 = vpack.c.bf16 %v5355, %v5354
    %v5360 = vpack.c.bf16 %v5357, %v5356
    %5361 = vrot.lane.b32.xlu0 %v4446, 40
    %v5362 = vpop.permute.xlu0 %5361
    %5363 = vrot.lane.b32.xlu0 %v4447, 40
    %v5364 = vpop.permute.xlu0 %5363
    %5365 = vrot.lane.b32.xlu0 %v4448, 40
    %v5366 = vpop.permute.xlu0 %5365
    %v5371 = vsel %vm488, %v5358, 0
    %v5374 = vsel %vm488, %v5359, 0
    %v5377 = vsel %vm488, %v5360, 0
    %5379 = vmatprep.subr.bf16.mxu0 0
    %5380 = vmatpush1.bf16.msra.mxu0 %v5362
    %5381 = vmatprep.subr.bf16.mxu0 0
    %5382 = vmatpush1.bf16.msra.mxu0 %v5364
    %5383 = vmatprep.subr.bf16.mxu0 0
    %5384 = vmatpush1.bf16.msra.mxu0 %v5366
    %5385 = vmatprep.subr.bf16.mxu0 0
    %5386 = vmatpush1.bf16.msra.mxu0 0
    %5387 = vmatprep.subr.bf16.mxu0 0
    %5388 = vmatpush1.bf16.msra.mxu0 0
    %5389 = vmatprep.subr.bf16.mxu0 0
    %5390 = vmatpush1.bf16.msra.mxu0 0
    %5391 = vmatprep.subr.bf16.mxu0 0
    %5392 = vmatpush1.bf16.msra.mxu0 0
    %5393 = vmatprep.subr.bf16.mxu0 0
    %5394 = vmatpush1.bf16.msra.mxu0 0
    %5395 = vmatprep.subr.bf16.mxu0 0
    %5396 = vmatpush1.bf16.msra.mxu0 0
    %5397 = vmatprep.subr.bf16.mxu0 0
    %5398 = vmatpush1.bf16.msra.mxu0 0
    %5399 = vmatprep.subr.bf16.mxu0 0
    %5400 = vmatpush1.bf16.msra.mxu0 0
    %5401 = vmatprep.subr.bf16.mxu0 0
    %5402 = vmatpush1.bf16.msra.mxu0 0
    %5403 = vmatprep.subr.bf16.mxu0 0
    %5404 = vmatpush1.bf16.msra.mxu0 0
    %5405 = vmatprep.subr.bf16.mxu0 0
    %5406 = vmatpush1.bf16.msra.mxu0 0
    %5407 = vmatprep.subr.bf16.mxu0 0
    %5408 = vmatpush1.bf16.msra.mxu0 0
    %5409 = vmatprep.subr.bf16.mxu0 0
    %5410 = vmatpush1.bf16.msra.mxu0 0
    %5411 = vmatprep.mubr.bf16.mxu0 0
    %5412 = vmatmul.mubr.bf16.gmra.mrb[0].mxu0 %v5371
    %v5413 = vpop.f32.mrb[0].mxu0
    %v5414 = vadd.f32 0.0, %v5413
    %v5415 = vpop.f32.mrb[0].mxu0
    %v5416 = vpop.f32.mrb[0].mxu0
    %v5417 = vadd.f32 0.0, %v5416
    %v5418 = vpop.f32.mrb[0].mxu0
    %5419 = vmatprep.mubr.bf16.mxu0 0
    %5420 = vmatmul.mubr.bf16.gmra.mrb[0].mxu0 %v5374
    %v5421 = vpop.f32.mrb[0].mxu0
    %v5422 = vadd.f32 0.0, %v5421
    %v5423 = vpop.f32.mrb[0].mxu0
    %v5424 = vpop.f32.mrb[0].mxu0
    %v5425 = vadd.f32 0.0, %v5424
    %v5426 = vpop.f32.mrb[0].mxu0
    %5427 = vmatprep.mubr.bf16.mxu0 0
    %5428 = vmatmul.mubr.bf16.gmra.mrb[0].mxu0 %v5377
    %v5429 = vpop.f32.mrb[0].mxu0
    %v5430 = vadd.f32 0.0, %v5429
    %v5431 = vpop.f32.mrb[0].mxu0
    %v5432 = vpop.f32.mrb[0].mxu0
    %v5433 = vadd.f32 0.0, %v5432
    %v5434 = vpop.f32.mrb[0].mxu0
    %5435 = vdwg.mxu0
    %5442 = vrot.lane.b32.xlu0 %v5414, 24
    %v5443 = vpop.permute.xlu0 %5442
    %5444 = vrot.lane.b32.xlu0 %v5417, 24
    %v5445 = vpop.permute.xlu0 %5444
    %5446 = vrot.lane.b32.xlu0 %v5422, 24
    %v5447 = vpop.permute.xlu0 %5446
    %5448 = vrot.lane.b32.xlu0 %v5425, 24
    %v5449 = vpop.permute.xlu0 %5448
    %5450 = vrot.lane.b32.xlu0 %v5430, 24
    %v5451 = vpop.permute.xlu0 %5450
    %5452 = vrot.lane.b32.xlu0 %v5433, 24
    %v5453 = vpop.permute.xlu0 %5452
    %5460 = vst.msk [vmem:[#allocation2 + $0x30] sm:$0xff] %vm1418, %v5443
    %5461 = vst.msk [vmem:[#allocation2 + $0x38] sm:$0xff] %vm1418, %v5445
    %5462 = vst.msk [vmem:[#allocation2 + $0x40] sm:$0xff] %vm1418, %v5447
    %5463 = vst.msk [vmem:[#allocation2 + $0x48] sm:$0xff] %vm1418, %v5449
    %5464 = vst.msk [vmem:[#allocation2 + $0x50] sm:$0xff] %vm1418, %v5451
    %5465 = vst.msk [vmem:[#allocation2 + $0x58] sm:$0xff] %vm1418, %v5453
    %v5466 = vld [vmem:[#allocation2] sm:$0xff]
    %v5467 = vld [vmem:[#allocation2 + $0x8] sm:$0xff]
    %v5468 = vld [vmem:[#allocation2 + $0x10] sm:$0xff]
    %v5469 = vld [vmem:[#allocation2 + $0x18] sm:$0xff]
    %v5470 = vld [vmem:[#allocation2 + $0x20] sm:$0xff]
    %v5471 = vld [vmem:[#allocation2 + $0x28] sm:$0xff]
    %v5472 = vld [vmem:[#allocation2 + $0x30] sm:$0xff]
    %v5473 = vld [vmem:[#allocation2 + $0x38] sm:$0xff]
    %v5474 = vld [vmem:[#allocation2 + $0x40] sm:$0xff]
    %v5475 = vld [vmem:[#allocation2 + $0x48] sm:$0xff]
    %v5476 = vld [vmem:[#allocation2 + $0x50] sm:$0xff]
    %v5477 = vld [vmem:[#allocation2 + $0x58] sm:$0xff]
    %v5478 = vpack.c.bf16 %v5467, %v5466
    %v5479 = vpack.c.bf16 %v5469, %v5468
    %v5480 = vpack.c.bf16 %v5471, %v5470
    %v5481 = vpack.c.bf16 %v5473, %v5472
    %v5482 = vpack.c.bf16 %v5475, %v5474
    %v5483 = vpack.c.bf16 %v5477, %v5476
    %s5484 = scalar_lea.vmem %s6, 16
    %v5485 = vld [vmem:[%s5484] sm:$0xf]
    %v5486 = vld [vmem:[%s5484 + $0x4] sm:$0xf]
    %v5487 = vld [vmem:[%s5484 + $0x8] sm:$0xf]
    %v5488 = vld [vmem:[%s5484 + $0xc] sm:$0xf]
    %v5489 = vlaneseq
    %v5490 = vshrl.u32 %v5489, 7
    %v5491 = vsub.s32 0, %v5490
    %v5492 = vrot.slane %v3295, %v5491
    %v5497 = vunpack.c.l.b16 %v5485
    %v5498 = vunpack.c.l.b16 %v5486
    %v5499 = vunpack.c.l.b16 %v5487
    %v5500 = vunpack.c.l.b16 %v5488
    %v5501 = vpack.c.b16 %v5498, %v5497
    %v5502 = vpack.c.b16 %v5500, %v5499
    %v5506 = vsel %vm300, %v5478, 0
    %v5509 = vsel %vm300, %v5479, 0
    %v5512 = vsel %vm300, %v5480, 0
    %v5515 = vsel %vm300, %v5481, 0
    %v5518 = vsel %vm300, %v5482, 0
    %v5521 = vsel %vm300, %v5483, 0
    %5523 = vmatprep.subr.bf16.mxu0 0
    %5524 = vmatpush1.bf16.msra.mxu0 %v5501
    %5525 = vmatprep.subr.bf16.mxu0 0
    %5526 = vmatpush1.bf16.msra.mxu0 %v5502
    %5527 = vmatprep.subr.bf16.mxu0 0
    %5528 = vmatpush1.bf16.msra.mxu0 0
    %5529 = vmatprep.subr.bf16.mxu0 0
    %5530 = vmatpush1.bf16.msra.mxu0 0
    %5531 = vmatprep.subr.bf16.mxu0 0
    %5532 = vmatpush1.bf16.msra.mxu0 0
    %5533 = vmatprep.subr.bf16.mxu0 0
    %5534 = vmatpush1.bf16.msra.mxu0 0
    %5535 = vmatprep.subr.bf16.mxu0 0
    %5536 = vmatpush1.bf16.msra.mxu0 0
    %5537 = vmatprep.subr.bf16.mxu0 0
    %5538 = vmatpush1.bf16.msra.mxu0 0
    %5539 = vmatprep.subr.bf16.mxu0 0
    %5540 = vmatpush1.bf16.msra.mxu0 0
    %5541 = vmatprep.subr.bf16.mxu0 0
    %5542 = vmatpush1.bf16.msra.mxu0 0
    %5543 = vmatprep.subr.bf16.mxu0 0
    %5544 = vmatpush1.bf16.msra.mxu0 0
    %5545 = vmatprep.subr.bf16.mxu0 0
    %5546 = vmatpush1.bf16.msra.mxu0 0
    %5547 = vmatprep.subr.bf16.mxu0 0
    %5548 = vmatpush1.bf16.msra.mxu0 0
    %5549 = vmatprep.subr.bf16.mxu0 0
    %5550 = vmatpush1.bf16.msra.mxu0 0
    %5551 = vmatprep.subr.bf16.mxu0 0
    %5552 = vmatpush1.bf16.msra.mxu0 0
    %5553 = vmatprep.subr.bf16.mxu0 0
    %5554 = vmatpush1.bf16.msra.mxu0 0
    %5555 = vmatprep.mubr.bf16.mxu0 0
    %5556 = vmatmul.mubr.bf16.gmra.mrb[0].mxu0 %v5506
    %v5557 = vpop.f32.mrb[0].mxu0
    %v5558 = vadd.f32 %v5492, %v5557
    %v5559 = vpop.f32.mrb[0].mxu0
    %v5560 = vpop.f32.mrb[0].mxu0
    %v5561 = vadd.f32 %v5492, %v5560
    %v5562 = vpop.f32.mrb[0].mxu0
    %5563 = vmatprep.mubr.bf16.mxu0 0
    %5564 = vmatmul.mubr.bf16.gmra.mrb[0].mxu0 %v5509
    %v5565 = vpop.f32.mrb[0].mxu0
    %v5566 = vadd.f32 %v5492, %v5565
    %v5567 = vpop.f32.mrb[0].mxu0
    %v5568 = vpop.f32.mrb[0].mxu0
    %v5569 = vadd.f32 %v5492, %v5568
    %v5570 = vpop.f32.mrb[0].mxu0
    %5571 = vmatprep.mubr.bf16.mxu0 0
    %5572 = vmatmul.mubr.bf16.gmra.mrb[0].mxu0 %v5512
    %v5573 = vpop.f32.mrb[0].mxu0
    %v5574 = vadd.f32 %v5492, %v5573
    %v5575 = vpop.f32.mrb[0].mxu0
    %v5576 = vpop.f32.mrb[0].mxu0
    %v5577 = vadd.f32 %v5492, %v5576
    %v5578 = vpop.f32.mrb[0].mxu0
    %5579 = vmatprep.mubr.bf16.mxu0 0
    %5580 = vmatmul.mubr.bf16.gmra.mrb[0].mxu0 %v5515
    %v5581 = vpop.f32.mrb[0].mxu0
    %v5582 = vadd.f32 %v5492, %v5581
    %v5583 = vpop.f32.mrb[0].mxu0
    %v5584 = vpop.f32.mrb[0].mxu0
    %v5585 = vadd.f32 %v5492, %v5584
    %v5586 = vpop.f32.mrb[0].mxu0
    %5587 = vmatprep.mubr.bf16.mxu0 0
    %5588 = vmatmul.mubr.bf16.gmra.mrb[0].mxu0 %v5518
    %v5589 = vpop.f32.mrb[0].mxu0
    %v5590 = vadd.f32 %v5492, %v5589
    %v5591 = vpop.f32.mrb[0].mxu0
    %v5592 = vpop.f32.mrb[0].mxu0
    %v5593 = vadd.f32 %v5492, %v5592
    %v5594 = vpop.f32.mrb[0].mxu0
    %5595 = vmatprep.mubr.bf16.mxu0 0
    %5596 = vmatmul.mubr.bf16.gmra.mrb[0].mxu0 %v5521
    %v5597 = vpop.f32.mrb[0].mxu0
    %v5598 = vadd.f32 %v5492, %v5597
    %v5599 = vpop.f32.mrb[0].mxu0
    %v5600 = vpop.f32.mrb[0].mxu0
    %v5601 = vadd.f32 %v5492, %v5600
    %v5602 = vpop.f32.mrb[0].mxu0
    %5603 = vdwg.mxu0
    %v5604 = vadd.f32 %v3282, %v5558
    %v5605 = vadd.f32 %v3283, %v5561
    %v5606 = vadd.f32 %v3284, %v5566
    %v5607 = vadd.f32 %v3285, %v5569
    %v5608 = vadd.f32 %v3286, %v5574
    %v5609 = vadd.f32 %v3287, %v5577
    %v5610 = vadd.f32 %v3288, %v5582
    %v5611 = vadd.f32 %v3289, %v5585
    %v5612 = vadd.f32 %v3290, %v5590
    %v5613 = vadd.f32 %v3291, %v5593
    %v5614 = vadd.f32 %v3292, %v5598
    %v5615 = vadd.f32 %v3293, %v5601
    %v5616 = vsel %vm300, %v5604, 0.0
    %5617 = vadd.xlane.f32.xlu0 %v5616
    %v5618 = vpop.xlane.xlu0 %5617
    %v5619 = vsel %vm300, %v5605, 0.0
    %5620 = vadd.xlane.f32.xlu0 %v5619
    %v5621 = vpop.xlane.xlu0 %5620
    %v5622 = vsel %vm300, %v5606, 0.0
    %5623 = vadd.xlane.f32.xlu0 %v5622
    %v5624 = vpop.xlane.xlu0 %5623
    %v5625 = vsel %vm300, %v5607, 0.0
    %5626 = vadd.xlane.f32.xlu0 %v5625
    %v5627 = vpop.xlane.xlu0 %5626
    %v5628 = vsel %vm300, %v5608, 0.0
    %5629 = vadd.xlane.f32.xlu0 %v5628
    %v5630 = vpop.xlane.xlu0 %5629
    %v5631 = vsel %vm300, %v5609, 0.0
    %5632 = vadd.xlane.f32.xlu0 %v5631
    %v5633 = vpop.xlane.xlu0 %5632
    %v5634 = vsel %vm300, %v5610, 0.0
    %5635 = vadd.xlane.f32.xlu0 %v5634
    %v5636 = vpop.xlane.xlu0 %5635
    %v5637 = vsel %vm300, %v5611, 0.0
    %5638 = vadd.xlane.f32.xlu0 %v5637
    %v5639 = vpop.xlane.xlu0 %5638
    %v5640 = vsel %vm300, %v5612, 0.0
    %5641 = vadd.xlane.f32.xlu0 %v5640
    %v5642 = vpop.xlane.xlu0 %5641
    %v5643 = vsel %vm300, %v5613, 0.0
    %5644 = vadd.xlane.f32.xlu0 %v5643
    %v5645 = vpop.xlane.xlu0 %5644
    %v5646 = vsel %vm300, %v5614, 0.0
    %5647 = vadd.xlane.f32.xlu0 %v5646
    %v5648 = vpop.xlane.xlu0 %5647
    %v5649 = vsel %vm300, %v5615, 0.0
    %5650 = vadd.xlane.f32.xlu0 %v5649
    %v5651 = vpop.xlane.xlu0 %5650
    %v5652 = vmul.f32 %v5618, %v2630
    %v5653 = vmul.f32 %v5621, %v2630
    %v5654 = vmul.f32 %v5624, %v2630
    %v5655 = vmul.f32 %v5627, %v2630
    %v5656 = vmul.f32 %v5630, %v2630
    %v5657 = vmul.f32 %v5633, %v2630
    %v5658 = vmul.f32 %v5636, %v2630
    %v5659 = vmul.f32 %v5639, %v2630
    %v5660 = vmul.f32 %v5642, %v2630
    %v5661 = vmul.f32 %v5645, %v2630
    %v5662 = vmul.f32 %v5648, %v2630
    %v5663 = vmul.f32 %v5651, %v2630
    %v5664 = vmul.f32 %v5604, %v5604
    %v5665 = vmul.f32 %v5605, %v5605
    %v5666 = vmul.f32 %v5606, %v5606
    %v5667 = vmul.f32 %v5607, %v5607
    %v5668 = vmul.f32 %v5608, %v5608
    %v5669 = vmul.f32 %v5609, %v5609
    %v5670 = vmul.f32 %v5610, %v5610
    %v5671 = vmul.f32 %v5611, %v5611
    %v5672 = vmul.f32 %v5612, %v5612
    %v5673 = vmul.f32 %v5613, %v5613
    %v5674 = vmul.f32 %v5614, %v5614
    %v5675 = vmul.f32 %v5615, %v5615
    %v5676 = vsel %vm300, %v5664, 0.0
    %5677 = vadd.xlane.f32.xlu0 %v5676
    %v5678 = vpop.xlane.xlu0 %5677
    %v5679 = vsel %vm300, %v5665, 0.0
    %5680 = vadd.xlane.f32.xlu0 %v5679
    %v5681 = vpop.xlane.xlu0 %5680
    %v5682 = vsel %vm300, %v5666, 0.0
    %5683 = vadd.xlane.f32.xlu0 %v5682
    %v5684 = vpop.xlane.xlu0 %5683
    %v5685 = vsel %vm300, %v5667, 0.0
    %5686 = vadd.xlane.f32.xlu0 %v5685
    %v5687 = vpop.xlane.xlu0 %5686
    %v5688 = vsel %vm300, %v5668, 0.0
    %5689 = vadd.xlane.f32.xlu0 %v5688
    %v5690 = vpop.xlane.xlu0 %5689
    %v5691 = vsel %vm300, %v5669, 0.0
    %5692 = vadd.xlane.f32.xlu0 %v5691
    %v5693 = vpop.xlane.xlu0 %5692
    %v5694 = vsel %vm300, %v5670, 0.0
    %5695 = vadd.xlane.f32.xlu0 %v5694
    %v5696 = vpop.xlane.xlu0 %5695
    %v5697 = vsel %vm300, %v5671, 0.0
    %5698 = vadd.xlane.f32.xlu0 %v5697
    %v5699 = vpop.xlane.xlu0 %5698
    %v5700 = vsel %vm300, %v5672, 0.0
    %5701 = vadd.xlane.f32.xlu0 %v5700
    %v5702 = vpop.xlane.xlu0 %5701
    %v5703 = vsel %vm300, %v5673, 0.0
    %5704 = vadd.xlane.f32.xlu0 %v5703
    %v5705 = vpop.xlane.xlu0 %5704
    %v5706 = vsel %vm300, %v5674, 0.0
    %5707 = vadd.xlane.f32.xlu0 %v5706
    %v5708 = vpop.xlane.xlu0 %5707
    %v5709 = vsel %vm300, %v5675, 0.0
    %5710 = vadd.xlane.f32.xlu0 %v5709
    %v5711 = vpop.xlane.xlu0 %5710
    %v5712 = vmul.f32 %v5678, %v2630
    %v5713 = vmul.f32 %v5681, %v2630
    %v5714 = vmul.f32 %v5684, %v2630
    %v5715 = vmul.f32 %v5687, %v2630
    %v5716 = vmul.f32 %v5690, %v2630
    %v5717 = vmul.f32 %v5693, %v2630
    %v5718 = vmul.f32 %v5696, %v2630
    %v5719 = vmul.f32 %v5699, %v2630
    %v5720 = vmul.f32 %v5702, %v2630
    %v5721 = vmul.f32 %v5705, %v2630
    %v5722 = vmul.f32 %v5708, %v2630
    %v5723 = vmul.f32 %v5711, %v2630
    %v5724 = vmul.f32 %v5652, %v5652
    %v5725 = vmul.f32 %v5653, %v5653
    %v5726 = vmul.f32 %v5654, %v5654
    %v5727 = vmul.f32 %v5655, %v5655
    %v5728 = vmul.f32 %v5656, %v5656
    %v5729 = vmul.f32 %v5657, %v5657
    %v5730 = vmul.f32 %v5658, %v5658
    %v5731 = vmul.f32 %v5659, %v5659
    %v5732 = vmul.f32 %v5660, %v5660
    %v5733 = vmul.f32 %v5661, %v5661
    %v5734 = vmul.f32 %v5662, %v5662
    %v5735 = vmul.f32 %v5663, %v5663
    %v5736 = vsub.f32 %v5712, %v5724
    %v5737 = vsub.f32 %v5713, %v5725
    %v5738 = vsub.f32 %v5714, %v5726
    %v5739 = vsub.f32 %v5715, %v5727
    %v5740 = vsub.f32 %v5716, %v5728
    %v5741 = vsub.f32 %v5717, %v5729
    %v5742 = vsub.f32 %v5718, %v5730
    %v5743 = vsub.f32 %v5719, %v5731
    %v5744 = vsub.f32 %v5720, %v5732
    %v5745 = vsub.f32 %v5721, %v5733
    %v5746 = vsub.f32 %v5722, %v5734
    %v5747 = vsub.f32 %v5723, %v5735
    %v5748 = vsub.f32 %v5604, %v5652
    %v5749 = vsub.f32 %v5605, %v5653
    %v5750 = vsub.f32 %v5606, %v5654
    %v5751 = vsub.f32 %v5607, %v5655
    %v5752 = vsub.f32 %v5608, %v5656
    %v5753 = vsub.f32 %v5609, %v5657
    %v5754 = vsub.f32 %v5610, %v5658
    %v5755 = vsub.f32 %v5611, %v5659
    %v5756 = vsub.f32 %v5612, %v5660
    %v5757 = vsub.f32 %v5613, %v5661
    %v5758 = vsub.f32 %v5614, %v5662
    %v5759 = vsub.f32 %v5615, %v5663
    %v5760 = vadd.f32 %v5736, 1e-05
    %v5761 = vadd.f32 %v5737, 1e-05
    %v5762 = vadd.f32 %v5738, 1e-05
    %v5763 = vadd.f32 %v5739, 1e-05
    %v5764 = vadd.f32 %v5740, 1e-05
    %v5765 = vadd.f32 %v5741, 1e-05
    %v5766 = vadd.f32 %v5742, 1e-05
    %v5767 = vadd.f32 %v5743, 1e-05
    %v5768 = vadd.f32 %v5744, 1e-05
    %v5769 = vadd.f32 %v5745, 1e-05
    %v5770 = vadd.f32 %v5746, 1e-05
    %v5771 = vadd.f32 %v5747, 1e-05
    %v5772 = vrsqrt.pop %v5760
    %v5773 = vrsqrt.pop %v5761
    %v5774 = vrsqrt.pop %v5762
    %v5775 = vrsqrt.pop %v5763
    %v5776 = vrsqrt.pop %v5764
    %v5777 = vrsqrt.pop %v5765
    %v5778 = vrsqrt.pop %v5766
    %v5779 = vrsqrt.pop %v5767
    %v5780 = vrsqrt.pop %v5768
    %v5781 = vrsqrt.pop %v5769
    %v5782 = vrsqrt.pop %v5770
    %v5783 = vrsqrt.pop %v5771
    %v5784 = vmul.f32 %v5748, %v5772
    %v5785 = vmul.f32 %v5749, %v5773
    %v5786 = vmul.f32 %v5750, %v5774
    %v5787 = vmul.f32 %v5751, %v5775
    %v5788 = vmul.f32 %v5752, %v5776
    %v5789 = vmul.f32 %v5753, %v5777
    %v5790 = vmul.f32 %v5754, %v5778
    %v5791 = vmul.f32 %v5755, %v5779
    %v5792 = vmul.f32 %v5756, %v5780
    %v5793 = vmul.f32 %v5757, %v5781
    %v5794 = vmul.f32 %v5758, %v5782
    %v5795 = vmul.f32 %v5759, %v5783
    %v5796 = vlaneseq
    %v5797 = vshrl.u32 %v5796, 7
    %v5798 = vsub.s32 1, %v5797
    %v5799 = vrot.slane %v3295, %v5798
    %v5800 = vmul.f32 %v5784, %v5799
    %v5801 = vmul.f32 %v5785, %v5799
    %v5802 = vmul.f32 %v5786, %v5799
    %v5803 = vmul.f32 %v5787, %v5799
    %v5804 = vmul.f32 %v5788, %v5799
    %v5805 = vmul.f32 %v5789, %v5799
    %v5806 = vmul.f32 %v5790, %v5799
    %v5807 = vmul.f32 %v5791, %v5799
    %v5808 = vmul.f32 %v5792, %v5799
    %v5809 = vmul.f32 %v5793, %v5799
    %v5810 = vmul.f32 %v5794, %v5799
    %v5811 = vmul.f32 %v5795, %v5799
    %v5812 = vlaneseq
    %v5813 = vshrl.u32 %v5812, 7
    %v5814 = vsub.s32 2, %v5813
    %v5815 = vrot.slane %v3295, %v5814
    %v5816 = vadd.f32 %v5800, %v5815
    %v5817 = vadd.f32 %v5801, %v5815
    %v5818 = vadd.f32 %v5802, %v5815
    %v5819 = vadd.f32 %v5803, %v5815
    %v5820 = vadd.f32 %v5804, %v5815
    %v5821 = vadd.f32 %v5805, %v5815
    %v5822 = vadd.f32 %v5806, %v5815
    %v5823 = vadd.f32 %v5807, %v5815
    %v5824 = vadd.f32 %v5808, %v5815
    %v5825 = vadd.f32 %v5809, %v5815
    %v5826 = vadd.f32 %v5810, %v5815
    %v5827 = vadd.f32 %v5811, %v5815
    %v5828 = vpack.c.bf16 %v5817, %v5816
    %v5829 = vpack.c.bf16 %v5819, %v5818
    %v5830 = vpack.c.bf16 %v5821, %v5820
    %v5831 = vpack.c.bf16 %v5823, %v5822
    %v5832 = vpack.c.bf16 %v5825, %v5824
    %v5833 = vpack.c.bf16 %v5827, %v5826
    %s5834 = scalar_lea.vmem %s7, 32
    %v5835 = vld [vmem:[%s5834] sm:$0xf]
    %v5836 = vld [vmem:[%s5834 + $0x4] sm:$0xf]
    %v5837 = vld [vmem:[%s5834 + $0x8] sm:$0xf]
    %v5838 = vld [vmem:[%s5834 + $0xc] sm:$0xf]
    %v5839 = vlaneseq
    %v5840 = vshrl.u32 %v5839, 7
    %v5841 = vsub.s32 3, %v5840
    %v5842 = vrot.slane %v3295, %v5841
    %v5847 = vunpack.c.l.b16 %v5835
    %v5848 = vunpack.c.l.b16 %v5836
    %v5849 = vunpack.c.l.b16 %v5837
    %v5850 = vunpack.c.l.b16 %v5838
    %v5851 = vpack.c.b16 %v5848, %v5847
    %v5852 = vpack.c.b16 %v5850, %v5849
    %v5856 = vsel %vm300, %v5828, 0
    %v5859 = vsel %vm300, %v5829, 0
    %v5862 = vsel %vm300, %v5830, 0
    %v5865 = vsel %vm300, %v5831, 0
    %v5868 = vsel %vm300, %v5832, 0
    %v5871 = vsel %vm300, %v5833, 0
    %5873 = vmatprep.subr.bf16.mxu0 0
    %5874 = vmatpush1.bf16.msra.mxu0 %v5851
    %5875 = vmatprep.subr.bf16.mxu0 0
    %5876 = vmatpush1.bf16.msra.mxu0 %v5852
    %5877 = vmatprep.subr.bf16.mxu0 0
    %5878 = vmatpush1.bf16.msra.mxu0 0
    %5879 = vmatprep.subr.bf16.mxu0 0
    %5880 = vmatpush1.bf16.msra.mxu0 0
    %5881 = vmatprep.subr.bf16.mxu0 0
    %5882 = vmatpush1.bf16.msra.mxu0 0
    %5883 = vmatprep.subr.bf16.mxu0 0
    %5884 = vmatpush1.bf16.msra.mxu0 0
    %5885 = vmatprep.subr.bf16.mxu0 0
    %5886 = vmatpush1.bf16.msra.mxu0 0
    %5887 = vmatprep.subr.bf16.mxu0 0
    %5888 = vmatpush1.bf16.msra.mxu0 0
    %5889 = vmatprep.subr.bf16.mxu0 0
    %5890 = vmatpush1.bf16.msra.mxu0 0
    %5891 = vmatprep.subr.bf16.mxu0 0
    %5892 = vmatpush1.bf16.msra.mxu0 0
    %5893 = vmatprep.subr.bf16.mxu0 0
    %5894 = vmatpush1.bf16.msra.mxu0 0
    %5895 = vmatprep.subr.bf16.mxu0 0
    %5896 = vmatpush1.bf16.msra.mxu0 0
    %5897 = vmatprep.subr.bf16.mxu0 0
    %5898 = vmatpush1.bf16.msra.mxu0 0
    %5899 = vmatprep.subr.bf16.mxu0 0
    %5900 = vmatpush1.bf16.msra.mxu0 0
    %5901 = vmatprep.subr.bf16.mxu0 0
    %5902 = vmatpush1.bf16.msra.mxu0 0
    %5903 = vmatprep.subr.bf16.mxu0 0
    %5904 = vmatpush1.bf16.msra.mxu0 0
    %5905 = vmatprep.mubr.bf16.mxu0 0
    %5906 = vmatmul.mubr.bf16.gmra.mrb[0].mxu0 %v5856
    %v5907 = vpop.f32.mrb[0].mxu0
    %v5908 = vadd.f32 %v5842, %v5907
    %v5909 = vpop.f32.mrb[0].mxu0
    %v5910 = vpop.f32.mrb[0].mxu0
    %v5911 = vadd.f32 %v5842, %v5910
    %v5912 = vpop.f32.mrb[0].mxu0
    %5913 = vmatprep.mubr.bf16.mxu0 0
    %5914 = vmatmul.mubr.bf16.gmra.mrb[0].mxu0 %v5859
    %v5915 = vpop.f32.mrb[0].mxu0
    %v5916 = vadd.f32 %v5842, %v5915
    %v5917 = vpop.f32.mrb[0].mxu0
    %v5918 = vpop.f32.mrb[0].mxu0
    %v5919 = vadd.f32 %v5842, %v5918
    %v5920 = vpop.f32.mrb[0].mxu0
    %5921 = vmatprep.mubr.bf16.mxu0 0
    %5922 = vmatmul.mubr.bf16.gmra.mrb[0].mxu0 %v5862
    %v5923 = vpop.f32.mrb[0].mxu0
    %v5924 = vadd.f32 %v5842, %v5923
    %v5925 = vpop.f32.mrb[0].mxu0
    %v5926 = vpop.f32.mrb[0].mxu0
    %v5927 = vadd.f32 %v5842, %v5926
    %v5928 = vpop.f32.mrb[0].mxu0
    %5929 = vmatprep.mubr.bf16.mxu0 0
    %5930 = vmatmul.mubr.bf16.gmra.mrb[0].mxu0 %v5865
    %v5931 = vpop.f32.mrb[0].mxu0
    %v5932 = vadd.f32 %v5842, %v5931
    %v5933 = vpop.f32.mrb[0].mxu0
    %v5934 = vpop.f32.mrb[0].mxu0
    %v5935 = vadd.f32 %v5842, %v5934
    %v5936 = vpop.f32.mrb[0].mxu0
    %5937 = vmatprep.mubr.bf16.mxu0 0
    %5938 = vmatmul.mubr.bf16.gmra.mrb[0].mxu0 %v5868
    %v5939 = vpop.f32.mrb[0].mxu0
    %v5940 = vadd.f32 %v5842, %v5939
    %v5941 = vpop.f32.mrb[0].mxu0
    %v5942 = vpop.f32.mrb[0].mxu0
    %v5943 = vadd.f32 %v5842, %v5942
    %v5944 = vpop.f32.mrb[0].mxu0
    %5945 = vmatprep.mubr.bf16.mxu0 0
    %5946 = vmatmul.mubr.bf16.gmra.mrb[0].mxu0 %v5871
    %v5947 = vpop.f32.mrb[0].mxu0
    %v5948 = vadd.f32 %v5842, %v5947
    %v5949 = vpop.f32.mrb[0].mxu0
    %v5950 = vpop.f32.mrb[0].mxu0
    %v5951 = vadd.f32 %v5842, %v5950
    %v5952 = vpop.f32.mrb[0].mxu0
    %5953 = vdwg.mxu0
    %v5954 = vmax.f32 %v5908, 0.0
    %v5955 = vmax.f32 %v5911, 0.0
    %v5956 = vmax.f32 %v5916, 0.0
    %v5957 = vmax.f32 %v5919, 0.0
    %v5958 = vmax.f32 %v5924, 0.0
    %v5959 = vmax.f32 %v5927, 0.0
    %v5960 = vmax.f32 %v5932, 0.0
    %v5961 = vmax.f32 %v5935, 0.0
    %v5962 = vmax.f32 %v5940, 0.0
    %v5963 = vmax.f32 %v5943, 0.0
    %v5964 = vmax.f32 %v5948, 0.0
    %v5965 = vmax.f32 %v5951, 0.0
    %v5966 = vpack.c.bf16 %v5955, %v5954
    %v5967 = vpack.c.bf16 %v5957, %v5956
    %v5968 = vpack.c.bf16 %v5959, %v5958
    %v5969 = vpack.c.bf16 %v5961, %v5960
    %v5970 = vpack.c.bf16 %v5963, %v5962
    %v5971 = vpack.c.bf16 %v5965, %v5964
    %s5972 = scalar_lea.vmem %s7, 48
    %v5973 = vld [vmem:[%s5972] sm:$0xf]
    %v5974 = vld [vmem:[%s5972 + $0x4] sm:$0xf]
    %v5975 = vld [vmem:[%s5972 + $0x8] sm:$0xf]
    %v5976 = vld [vmem:[%s5972 + $0xc] sm:$0xf]
    %v5977 = vlaneseq
    %v5978 = vshrl.u32 %v5977, 7
    %v5979 = vsub.s32 4, %v5978
    %v5980 = vrot.slane %v3295, %v5979
    %v5985 = vunpack.c.l.b16 %v5973
    %v5986 = vunpack.c.l.b16 %v5974
    %v5987 = vunpack.c.l.b16 %v5975
    %v5988 = vunpack.c.l.b16 %v5976
    %v5989 = vpack.c.b16 %v5986, %v5985
    %v5990 = vpack.c.b16 %v5988, %v5987
    %v5994 = vsel %vm300, %v5966, 0
    %v5997 = vsel %vm300, %v5967, 0
    %v6000 = vsel %vm300, %v5968, 0
    %v6003 = vsel %vm300, %v5969, 0
    %v6006 = vsel %vm300, %v5970, 0
    %v6009 = vsel %vm300, %v5971, 0
    %6011 = vmatprep.subr.bf16.mxu0 0
    %6012 = vmatpush1.bf16.msra.mxu0 %v5989
    %6013 = vmatprep.subr.bf16.mxu0 0
    %6014 = vmatpush1.bf16.msra.mxu0 %v5990
    %6015 = vmatprep.subr.bf16.mxu0 0
    %6016 = vmatpush1.bf16.msra.mxu0 0
    %6017 = vmatprep.subr.bf16.mxu0 0
    %6018 = vmatpush1.bf16.msra.mxu0 0
    %6019 = vmatprep.subr.bf16.mxu0 0
    %6020 = vmatpush1.bf16.msra.mxu0 0
    %6021 = vmatprep.subr.bf16.mxu0 0
    %6022 = vmatpush1.bf16.msra.mxu0 0
    %6023 = vmatprep.subr.bf16.mxu0 0
    %6024 = vmatpush1.bf16.msra.mxu0 0
    %6025 = vmatprep.subr.bf16.mxu0 0
    %6026 = vmatpush1.bf16.msra.mxu0 0
    %6027 = vmatprep.subr.bf16.mxu0 0
    %6028 = vmatpush1.bf16.msra.mxu0 0
    %6029 = vmatprep.subr.bf16.mxu0 0
    %6030 = vmatpush1.bf16.msra.mxu0 0
    %6031 = vmatprep.subr.bf16.mxu0 0
    %6032 = vmatpush1.bf16.msra.mxu0 0
    %6033 = vmatprep.subr.bf16.mxu0 0
    %6034 = vmatpush1.bf16.msra.mxu0 0
    %6035 = vmatprep.subr.bf16.mxu0 0
    %6036 = vmatpush1.bf16.msra.mxu0 0
    %6037 = vmatprep.subr.bf16.mxu0 0
    %6038 = vmatpush1.bf16.msra.mxu0 0
    %6039 = vmatprep.subr.bf16.mxu0 0
    %6040 = vmatpush1.bf16.msra.mxu0 0
    %6041 = vmatprep.subr.bf16.mxu0 0
    %6042 = vmatpush1.bf16.msra.mxu0 0
    %6043 = vmatprep.mubr.bf16.mxu0 0
    %6044 = vmatmul.mubr.bf16.gmra.mrb[0].mxu0 %v5994
    %v6045 = vpop.f32.mrb[0].mxu0
    %v6046 = vadd.f32 %v5980, %v6045
    %v6047 = vpop.f32.mrb[0].mxu0
    %v6048 = vpop.f32.mrb[0].mxu0
    %v6049 = vadd.f32 %v5980, %v6048
    %v6050 = vpop.f32.mrb[0].mxu0
    %6051 = vmatprep.mubr.bf16.mxu0 0
    %6052 = vmatmul.mubr.bf16.gmra.mrb[0].mxu0 %v5997
    %v6053 = vpop.f32.mrb[0].mxu0
    %v6054 = vadd.f32 %v5980, %v6053
    %v6055 = vpop.f32.mrb[0].mxu0
    %v6056 = vpop.f32.mrb[0].mxu0
    %v6057 = vadd.f32 %v5980, %v6056
    %v6058 = vpop.f32.mrb[0].mxu0
    %6059 = vmatprep.mubr.bf16.mxu0 0
    %6060 = vmatmul.mubr.bf16.gmra.mrb[0].mxu0 %v6000
    %v6061 = vpop.f32.mrb[0].mxu0
    %v6062 = vadd.f32 %v5980, %v6061
    %v6063 = vpop.f32.mrb[0].mxu0
    %v6064 = vpop.f32.mrb[0].mxu0
    %v6065 = vadd.f32 %v5980, %v6064
    %v6066 = vpop.f32.mrb[0].mxu0
    %6067 = vmatprep.mubr.bf16.mxu0 0
    %6068 = vmatmul.mubr.bf16.gmra.mrb[0].mxu0 %v6003
    %v6069 = vpop.f32.mrb[0].mxu0
    %v6070 = vadd.f32 %v5980, %v6069
    %v6071 = vpop.f32.mrb[0].mxu0
    %v6072 = vpop.f32.mrb[0].mxu0
    %v6073 = vadd.f32 %v5980, %v6072
    %v6074 = vpop.f32.mrb[0].mxu0
    %6075 = vmatprep.mubr.bf16.mxu0 0
    %6076 = vmatmul.mubr.bf16.gmra.mrb[0].mxu0 %v6006
    %v6077 = vpop.f32.mrb[0].mxu0
    %v6078 = vadd.f32 %v5980, %v6077
    %v6079 = vpop.f32.mrb[0].mxu0
    %v6080 = vpop.f32.mrb[0].mxu0
    %v6081 = vadd.f32 %v5980, %v6080
    %v6082 = vpop.f32.mrb[0].mxu0
    %6083 = vmatprep.mubr.bf16.mxu0 0
    %6084 = vmatmul.mubr.bf16.gmra.mrb[0].mxu0 %v6009
    %v6085 = vpop.f32.mrb[0].mxu0
    %v6086 = vadd.f32 %v5980, %v6085
    %v6087 = vpop.f32.mrb[0].mxu0
    %v6088 = vpop.f32.mrb[0].mxu0
    %v6089 = vadd.f32 %v5980, %v6088
    %v6090 = vpop.f32.mrb[0].mxu0
    %6091 = vdwg.mxu0
    %v6092 = vadd.f32 %v5816, %v6046
    %v6093 = vadd.f32 %v5817, %v6049
    %v6094 = vadd.f32 %v5818, %v6054
    %v6095 = vadd.f32 %v5819, %v6057
    %v6096 = vadd.f32 %v5820, %v6062
    %v6097 = vadd.f32 %v5821, %v6065
    %v6098 = vadd.f32 %v5822, %v6070
    %v6099 = vadd.f32 %v5823, %v6073
    %v6100 = vadd.f32 %v5824, %v6078
    %v6101 = vadd.f32 %v5825, %v6081
    %v6102 = vadd.f32 %v5826, %v6086
    %v6103 = vadd.f32 %v5827, %v6089
    %v6104 = vsel %vm300, %v6092, 0.0
    %6105 = vadd.xlane.f32.xlu0 %v6104
    %v6106 = vpop.xlane.xlu0 %6105
    %v6107 = vsel %vm300, %v6093, 0.0
    %6108 = vadd.xlane.f32.xlu0 %v6107
    %v6109 = vpop.xlane.xlu0 %6108
    %v6110 = vsel %vm300, %v6094, 0.0
    %6111 = vadd.xlane.f32.xlu0 %v6110
    %v6112 = vpop.xlane.xlu0 %6111
    %v6113 = vsel %vm300, %v6095, 0.0
    %6114 = vadd.xlane.f32.xlu0 %v6113
    %v6115 = vpop.xlane.xlu0 %6114
    %v6116 = vsel %vm300, %v6096, 0.0
    %6117 = vadd.xlane.f32.xlu0 %v6116
    %v6118 = vpop.xlane.xlu0 %6117
    %v6119 = vsel %vm300, %v6097, 0.0
    %6120 = vadd.xlane.f32.xlu0 %v6119
    %v6121 = vpop.xlane.xlu0 %6120
    %v6122 = vsel %vm300, %v6098, 0.0
    %6123 = vadd.xlane.f32.xlu0 %v6122
    %v6124 = vpop.xlane.xlu0 %6123
    %v6125 = vsel %vm300, %v6099, 0.0
    %6126 = vadd.xlane.f32.xlu0 %v6125
    %v6127 = vpop.xlane.xlu0 %6126
    %v6128 = vsel %vm300, %v6100, 0.0
    %6129 = vadd.xlane.f32.xlu0 %v6128
    %v6130 = vpop.xlane.xlu0 %6129
    %v6131 = vsel %vm300, %v6101, 0.0
    %6132 = vadd.xlane.f32.xlu0 %v6131
    %v6133 = vpop.xlane.xlu0 %6132
    %v6134 = vsel %vm300, %v6102, 0.0
    %6135 = vadd.xlane.f32.xlu0 %v6134
    %v6136 = vpop.xlane.xlu0 %6135
    %v6137 = vsel %vm300, %v6103, 0.0
    %6138 = vadd.xlane.f32.xlu0 %v6137
    %v6139 = vpop.xlane.xlu0 %6138
    %v6140 = vmul.f32 %v6106, %v2630
    %v6141 = vmul.f32 %v6109, %v2630
    %v6142 = vmul.f32 %v6112, %v2630
    %v6143 = vmul.f32 %v6115, %v2630
    %v6144 = vmul.f32 %v6118, %v2630
    %v6145 = vmul.f32 %v6121, %v2630
    %v6146 = vmul.f32 %v6124, %v2630
    %v6147 = vmul.f32 %v6127, %v2630
    %v6148 = vmul.f32 %v6130, %v2630
    %v6149 = vmul.f32 %v6133, %v2630
    %v6150 = vmul.f32 %v6136, %v2630
    %v6151 = vmul.f32 %v6139, %v2630
    %v6152 = vmul.f32 %v6092, %v6092
    %v6153 = vmul.f32 %v6093, %v6093
    %v6154 = vmul.f32 %v6094, %v6094
    %v6155 = vmul.f32 %v6095, %v6095
    %v6156 = vmul.f32 %v6096, %v6096
    %v6157 = vmul.f32 %v6097, %v6097
    %v6158 = vmul.f32 %v6098, %v6098
    %v6159 = vmul.f32 %v6099, %v6099
    %v6160 = vmul.f32 %v6100, %v6100
    %v6161 = vmul.f32 %v6101, %v6101
    %v6162 = vmul.f32 %v6102, %v6102
    %v6163 = vmul.f32 %v6103, %v6103
    %v6164 = vsel %vm300, %v6152, 0.0
    %6165 = vadd.xlane.f32.xlu0 %v6164
    %v6166 = vpop.xlane.xlu0 %6165
    %v6167 = vsel %vm300, %v6153, 0.0
    %6168 = vadd.xlane.f32.xlu0 %v6167
    %v6169 = vpop.xlane.xlu0 %6168
    %v6170 = vsel %vm300, %v6154, 0.0
    %6171 = vadd.xlane.f32.xlu0 %v6170
    %v6172 = vpop.xlane.xlu0 %6171
    %v6173 = vsel %vm300, %v6155, 0.0
    %6174 = vadd.xlane.f32.xlu0 %v6173
    %v6175 = vpop.xlane.xlu0 %6174
    %v6176 = vsel %vm300, %v6156, 0.0
    %6177 = vadd.xlane.f32.xlu0 %v6176
    %v6178 = vpop.xlane.xlu0 %6177
    %v6179 = vsel %vm300, %v6157, 0.0
    %6180 = vadd.xlane.f32.xlu0 %v6179
    %v6181 = vpop.xlane.xlu0 %6180
    %v6182 = vsel %vm300, %v6158, 0.0
    %6183 = vadd.xlane.f32.xlu0 %v6182
    %v6184 = vpop.xlane.xlu0 %6183
    %v6185 = vsel %vm300, %v6159, 0.0
    %6186 = vadd.xlane.f32.xlu0 %v6185
    %v6187 = vpop.xlane.xlu0 %6186
    %v6188 = vsel %vm300, %v6160, 0.0
    %6189 = vadd.xlane.f32.xlu0 %v6188
    %v6190 = vpop.xlane.xlu0 %6189
    %v6191 = vsel %vm300, %v6161, 0.0
    %6192 = vadd.xlane.f32.xlu0 %v6191
    %v6193 = vpop.xlane.xlu0 %6192
    %v6194 = vsel %vm300, %v6162, 0.0
    %6195 = vadd.xlane.f32.xlu0 %v6194
    %v6196 = vpop.xlane.xlu0 %6195
    %v6197 = vsel %vm300, %v6163, 0.0
    %6198 = vadd.xlane.f32.xlu0 %v6197
    %v6199 = vpop.xlane.xlu0 %6198
    %v6200 = vmul.f32 %v6166, %v2630
    %v6201 = vmul.f32 %v6169, %v2630
    %v6202 = vmul.f32 %v6172, %v2630
    %v6203 = vmul.f32 %v6175, %v2630
    %v6204 = vmul.f32 %v6178, %v2630
    %v6205 = vmul.f32 %v6181, %v2630
    %v6206 = vmul.f32 %v6184, %v2630
    %v6207 = vmul.f32 %v6187, %v2630
    %v6208 = vmul.f32 %v6190, %v2630
    %v6209 = vmul.f32 %v6193, %v2630
    %v6210 = vmul.f32 %v6196, %v2630
    %v6211 = vmul.f32 %v6199, %v2630
    %v6212 = vmul.f32 %v6140, %v6140
    %v6213 = vmul.f32 %v6141, %v6141
    %v6214 = vmul.f32 %v6142, %v6142
    %v6215 = vmul.f32 %v6143, %v6143
    %v6216 = vmul.f32 %v6144, %v6144
    %v6217 = vmul.f32 %v6145, %v6145
    %v6218 = vmul.f32 %v6146, %v6146
    %v6219 = vmul.f32 %v6147, %v6147
    %v6220 = vmul.f32 %v6148, %v6148
    %v6221 = vmul.f32 %v6149, %v6149
    %v6222 = vmul.f32 %v6150, %v6150
    %v6223 = vmul.f32 %v6151, %v6151
    %v6224 = vsub.f32 %v6200, %v6212
    %v6225 = vsub.f32 %v6201, %v6213
    %v6226 = vsub.f32 %v6202, %v6214
    %v6227 = vsub.f32 %v6203, %v6215
    %v6228 = vsub.f32 %v6204, %v6216
    %v6229 = vsub.f32 %v6205, %v6217
    %v6230 = vsub.f32 %v6206, %v6218
    %v6231 = vsub.f32 %v6207, %v6219
    %v6232 = vsub.f32 %v6208, %v6220
    %v6233 = vsub.f32 %v6209, %v6221
    %v6234 = vsub.f32 %v6210, %v6222
    %v6235 = vsub.f32 %v6211, %v6223
    %v6236 = vsub.f32 %v6092, %v6140
    %v6237 = vsub.f32 %v6093, %v6141
    %v6238 = vsub.f32 %v6094, %v6142
    %v6239 = vsub.f32 %v6095, %v6143
    %v6240 = vsub.f32 %v6096, %v6144
    %v6241 = vsub.f32 %v6097, %v6145
    %v6242 = vsub.f32 %v6098, %v6146
    %v6243 = vsub.f32 %v6099, %v6147
    %v6244 = vsub.f32 %v6100, %v6148
    %v6245 = vsub.f32 %v6101, %v6149
    %v6246 = vsub.f32 %v6102, %v6150
    %v6247 = vsub.f32 %v6103, %v6151
    %v6248 = vadd.f32 %v6224, 1e-05
    %v6249 = vadd.f32 %v6225, 1e-05
    %v6250 = vadd.f32 %v6226, 1e-05
    %v6251 = vadd.f32 %v6227, 1e-05
    %v6252 = vadd.f32 %v6228, 1e-05
    %v6253 = vadd.f32 %v6229, 1e-05
    %v6254 = vadd.f32 %v6230, 1e-05
    %v6255 = vadd.f32 %v6231, 1e-05
    %v6256 = vadd.f32 %v6232, 1e-05
    %v6257 = vadd.f32 %v6233, 1e-05
    %v6258 = vadd.f32 %v6234, 1e-05
    %v6259 = vadd.f32 %v6235, 1e-05
    %v6260 = vrsqrt.pop %v6248
    %v6261 = vrsqrt.pop %v6249
    %v6262 = vrsqrt.pop %v6250
    %v6263 = vrsqrt.pop %v6251
    %v6264 = vrsqrt.pop %v6252
    %v6265 = vrsqrt.pop %v6253
    %v6266 = vrsqrt.pop %v6254
    %v6267 = vrsqrt.pop %v6255
    %v6268 = vrsqrt.pop %v6256
    %v6269 = vrsqrt.pop %v6257
    %v6270 = vrsqrt.pop %v6258
    %v6271 = vrsqrt.pop %v6259
    %v6272 = vmul.f32 %v6236, %v6260
    %v6273 = vmul.f32 %v6237, %v6261
    %v6274 = vmul.f32 %v6238, %v6262
    %v6275 = vmul.f32 %v6239, %v6263
    %v6276 = vmul.f32 %v6240, %v6264
    %v6277 = vmul.f32 %v6241, %v6265
    %v6278 = vmul.f32 %v6242, %v6266
    %v6279 = vmul.f32 %v6243, %v6267
    %v6280 = vmul.f32 %v6244, %v6268
    %v6281 = vmul.f32 %v6245, %v6269
    %v6282 = vmul.f32 %v6246, %v6270
    %v6283 = vmul.f32 %v6247, %v6271
    %v6284 = vlaneseq
    %v6285 = vshrl.u32 %v6284, 7
    %v6286 = vsub.s32 5, %v6285
    %v6287 = vrot.slane %v3295, %v6286
    %v6288 = vmul.f32 %v6272, %v6287
    %v6289 = vmul.f32 %v6273, %v6287
    %v6290 = vmul.f32 %v6274, %v6287
    %v6291 = vmul.f32 %v6275, %v6287
    %v6292 = vmul.f32 %v6276, %v6287
    %v6293 = vmul.f32 %v6277, %v6287
    %v6294 = vmul.f32 %v6278, %v6287
    %v6295 = vmul.f32 %v6279, %v6287
    %v6296 = vmul.f32 %v6280, %v6287
    %v6297 = vmul.f32 %v6281, %v6287
    %v6298 = vmul.f32 %v6282, %v6287
    %v6299 = vmul.f32 %v6283, %v6287
    %v6300 = vlaneseq
    %v6301 = vshrl.u32 %v6300, 7
    %v6302 = vsub.s32 6, %v6301
    %v6303 = vrot.slane %v3295, %v6302
    %v6304 = vadd.f32 %v6288, %v6303
    %v6305 = vadd.f32 %v6289, %v6303
    %v6306 = vadd.f32 %v6290, %v6303
    %v6307 = vadd.f32 %v6291, %v6303
    %v6308 = vadd.f32 %v6292, %v6303
    %v6309 = vadd.f32 %v6293, %v6303
    %v6310 = vadd.f32 %v6294, %v6303
    %v6311 = vadd.f32 %v6295, %v6303
    %v6312 = vadd.f32 %v6296, %v6303
    %v6313 = vadd.f32 %v6297, %v6303
    %v6314 = vadd.f32 %v6298, %v6303
    %v6315 = vadd.f32 %v6299, %v6303
    %v6316 = vld [vmem:[%s2] sm:$0x3]
    %vm6317 = vcmask 785408
    %v6319 = vsel %vm6317, %v6316, 0
    %6321 = vmatprep.subr.mxu0 0.0
    %6322 = vmatpush1.msra.mxu0 %v6304
    %6323 = vmatprep.subr.mxu0 0.0
    %6324 = vmatpush1.msra.mxu0 %v6305
    %6325 = vmatprep.subr.mxu0 0.0
    %6326 = vmatpush1.msra.mxu0 %v6306
    %6327 = vmatprep.subr.mxu0 0.0
    %6328 = vmatpush1.msra.mxu0 %v6307
    %6329 = vmatprep.subr.mxu0 0.0
    %6330 = vmatpush1.msra.mxu0 %v6308
    %6331 = vmatprep.subr.mxu0 0.0
    %6332 = vmatpush1.msra.mxu0 %v6309
    %6333 = vmatprep.subr.mxu0 0.0
    %6334 = vmatpush1.msra.mxu0 %v6310
    %6335 = vmatprep.subr.mxu0 0.0
    %6336 = vmatpush1.msra.mxu0 %v6311
    %6337 = vmatprep.subr.mxu0 0.0
    %6338 = vmatpush1.msra.mxu0 %v6312
    %6339 = vmatprep.subr.mxu0 0.0
    %6340 = vmatpush1.msra.mxu0 %v6313
    %6341 = vmatprep.subr.mxu0 0.0
    %6342 = vmatpush1.msra.mxu0 %v6314
    %6343 = vmatprep.subr.mxu0 0.0
    %6344 = vmatpush1.msra.mxu0 %v6315
    %6345 = vmatprep.subr.mxu0 0.0
    %6346 = vmatpush1.msra.mxu0 0.0
    %6347 = vmatprep.subr.mxu0 0.0
    %6348 = vmatpush1.msra.mxu0 0.0
    %6349 = vmatprep.subr.mxu0 0.0
    %6350 = vmatpush1.msra.mxu0 0.0
    %6351 = vmatprep.subr.mxu0 0.0
    %6352 = vmatpush1.msra.mxu0 0.0
    %6353 = vmatprep.subr.mxu0 0.0
    %6354 = vmatpush1.msra.mxu0 0.0
    %6355 = vmatprep.subr.mxu0 0.0
    %6356 = vmatpush1.msra.mxu0 0.0
    %6357 = vmatprep.subr.mxu0 0.0
    %6358 = vmatpush1.msra.mxu0 0.0
    %6359 = vmatprep.subr.mxu0 0.0
    %6360 = vmatpush1.msra.mxu0 0.0
    %6361 = vmatprep.subr.mxu0 0.0
    %6362 = vmatpush1.msra.mxu0 0.0
    %6363 = vmatprep.subr.mxu0 0.0
    %6364 = vmatpush1.msra.mxu0 0.0
    %6365 = vmatprep.subr.mxu0 0.0
    %6366 = vmatpush1.msra.mxu0 0.0
    %6367 = vmatprep.subr.mxu0 0.0
    %6368 = vmatpush1.msra.mxu0 0.0
    %6369 = vmatprep.subr.mxu0 0.0
    %6370 = vmatpush1.msra.mxu0 0.0
    %6371 = vmatprep.subr.mxu0 0.0
    %6372 = vmatpush1.msra.mxu0 0.0
    %6373 = vmatprep.subr.mxu0 0.0
    %6374 = vmatpush1.msra.mxu0 0.0
    %6375 = vmatprep.subr.mxu0 0.0
    %6376 = vmatpush1.msra.mxu0 0.0
    %6377 = vmatprep.subr.mxu0 0.0
    %6378 = vmatpush1.msra.mxu0 0.0
    %6379 = vmatprep.subr.mxu0 0.0
    %6380 = vmatpush1.msra.mxu0 0.0
    %6381 = vmatprep.subr.mxu0 0.0
    %6382 = vmatpush1.msra.mxu0 0.0
    %6383 = vmatprep.subr.mxu0 0.0
    %6384 = vmatpush1.msra.mxu0 0.0
    %6385 = vmatprep.mubr.f32.mxu0 0.0
    %6386 = vmatmul.mubr.f32.gmra.mrb[0].mxu0 %v6319
    %v6387 = vpop.f32.mrb[0].mxu0
    %v6388 = vadd.f32 0.0, %v6387
    %v6389 = vpop.f32.mrb[0].mxu0
    %6390 = vdwg.mxu0
    %vm6391 = vcmask 254976
    %6392 = vst.msk [vmem:[#allocation3] sm:$0x3] %vm6391, %v6388
    // Predicated region
    $region38: #{tpu_custom_call.1} parent=1 // pred_check
      _
    $region39: #{tpu_custom_call.1} parent=1 // pred_check_branch
      %6394 = sbr.rel (0) target = $region41
    $region40: #{tpu_custom_call.1} parent=1 // pred_region
      %s6396 = ssub.s32 32, 32
      %6397 = vsyncadd [#allocation4], %s6396
      %s6399 = sshll.u32 [#allocation3], 4
      %s6400 = int_to_ptr.vmem [resolvable:$true] %s6399
      %6402 = dma.vmem_to_hbm [thread:$0]  %s6400, 32, %s9, [#allocation4]
    $region41: #{tpu_custom_call.1} parent=1 // pred_fallthru
      _
    // Predicated region
    $region42: #{tpu_custom_call.1} parent=1 // pred_check
      _
    $region43: #{tpu_custom_call.1} parent=1 // pred_check_branch
      %6404 = sbr.rel (0) target = $region45
    $region44: #{tpu_custom_call.1} parent=1 // pred_region
      %6405 = dma.done [#allocation4], 32
    $region45: #{tpu_custom_call.1} parent=1 // pred_fallthru
      _
    %6406 = vsyncpa [#allocation4], 1

</llo_original>
